<compile_context>
chip_gen: v7x
topology: tpu7x:2x2x1
jax: 0.10.0
libtpu: 0.0.40
codegen_flags: <defaults>
</compile_context>

<pallas_src>
import math

import jax
import jax.numpy as jnp
from jax.experimental import pallas as pl
from jax.experimental.pallas import tpu as pltpu


def _round_up(v, m):
    return (v + m - 1) // m * m


# --------------------------------------------------------------------------------------
# Kernel 1: ConvTranspose2d(Cin, Cout, 2, stride=2) + folded BN + ReLU as one fused
#           matmul  (columns = (ky, kx, cout), output bf16, single grid step)
# --------------------------------------------------------------------------------------
def _upconv_matmul_kernel(x_ref, w_ref, b_ref, o_ref):
    acc = jnp.dot(x_ref[...], w_ref[...], preferred_element_type=jnp.float32)
    o_ref[...] = jnp.maximum(acc + b_ref[...], 0.0).astype(o_ref.dtype)


def upconv_matmul(x2d_bf16, w4_bf16, bias4_f32):
    """x:(M,K) bf16, w:(K,4*Cout) bf16 (BN scale folded), bias:(1,4*Cout) f32 -> bf16."""
    M, K = x2d_bf16.shape
    Kw, Ncols = w4_bf16.shape
    assert K == Kw
    m_orig = M
    pad = (-M) % 8
    if pad:
        x2d_bf16 = jnp.pad(x2d_bf16, ((0, pad), (0, 0)))
        M += pad
    out = pl.pallas_call(
        _upconv_matmul_kernel,
        out_shape=jax.ShapeDtypeStruct((M, Ncols), jnp.bfloat16),
        grid_spec=pltpu.PrefetchScalarGridSpec(
            num_scalar_prefetch=0,
            grid=(1,),   # tiny problem: one step, per-grid-step overhead dominates
            in_specs=[
                pl.BlockSpec((M, K), lambda i: (0, 0)),
                pl.BlockSpec((K, Ncols), lambda i: (0, 0)),
                pl.BlockSpec((1, Ncols), lambda i: (0, 0)),
            ],
            out_specs=pl.BlockSpec((M, Ncols), lambda i: (0, 0)),
        ),
        compiler_params=pltpu.CompilerParams(dimension_semantics=("arbitrary",)),
    )(x2d_bf16, w4_bf16, bias4_f32)
    return out[:m_orig] if pad else out


# --------------------------------------------------------------------------------------
# Kernel 2 (fused tail): grid_sample(affine_grid) + concat + conv3x3/BN/ReLU x 2,
#           one grid step per batch element, all intermediates stay in VMEM.
# --------------------------------------------------------------------------------------
def _tail_kernel(coord_ref, ixy_ref, up_ref, xp_ref, w1_ref, b1_ref, w2_ref, b2_ref,
                 o_ref, catp_ref, patch_ref, hp_ref):
    HO, WO, Cup = up_ref.shape[1], up_ref.shape[2], up_ref.shape[3]
    P = HO * WO
    Ck = catp_ref.shape[2]          # padded concat channels (multiple of 128)
    Mid = w1_ref.shape[1]
    MidK = hp_ref.shape[2]          # padded mid channels (multiple of 128)
    Cout = o_ref.shape[3]
    K1 = w1_ref.shape[0]
    K2 = w2_ref.shape[0]

    # ---- grid_sample (bilinear, zeros padding, align_corners=False) as one MXU dot ----
    sx = coord_ref[0, :, 0:1]               # (P,1) sample x in input-pixel space
    sy = coord_ref[0, :, 1:2]               # (P,1)
    ix = ixy_ref[0, 0:1, :]                 # (1,P) input pixel-center x (precomputed)
    iy = ixy_ref[0, 1:2, :]                 # (1,P)
    wgt = (jnp.maximum(1.0 - jnp.abs(sx - ix), 0.0) *
           jnp.maximum(1.0 - jnp.abs(sy - iy), 0.0)).astype(jnp.bfloat16)  # (P,P)
    xp_flat = xp_ref[0].reshape(P, Cup)                                     # bf16
    x_trans = jnp.dot(wgt, xp_flat, preferred_element_type=jnp.float32)     # (P,Cup) f32

    # ---- concat fused into the zero-padded conv1 input (no HBM concat round trip) ----
    catp_ref[...] = jnp.zeros_like(catp_ref)                # border + K-pad channels
    catp_ref[1:1 + HO, 1:1 + WO, 0:Cup] = up_ref[0].astype(jnp.float32)
    catp_ref[1:1 + HO, 1:1 + WO, Cup:2 * Cup] = x_trans.reshape(HO, WO, Cup)
    catp_ref[1:1 + HO, 1:1 + WO, 2 * Cup:3 * Cup] = xp_ref[0].astype(jnp.float32)

    # ---- conv1: im2col patch built once in VMEM, one long-K MXU dot ----
    for dx in range(3):                      # only 3 sublane-shifted W slices per conv
        xdx = catp_ref[:, dx:dx + WO, :].astype(jnp.bfloat16)      # (HO+2, WO, Ck)
        for dy in range(3):                  # H slices are third-minor (cheap)
            t = dy * 3 + dx
            patch_ref[:, t * Ck:(t + 1) * Ck] = xdx[dy:dy + HO].reshape(P, Ck)
    h = jnp.maximum(
        jnp.dot(patch_ref[:, 0:K1], w1_ref[...], preferred_element_type=jnp.float32)
        + b1_ref[...], 0.0)                                         # (P, Mid) f32

    # ---- conv2: same structure on h (h never leaves VMEM) ----
    hp_ref[...] = jnp.zeros_like(hp_ref)
    hp_ref[1:1 + HO, 1:1 + WO, 0:Mid] = h.reshape(HO, WO, Mid)
    for dx in range(3):
        xdx = hp_ref[:, dx:dx + WO, :].astype(jnp.bfloat16)
        for dy in range(3):
            t = dy * 3 + dx
            patch_ref[:, t * MidK:(t + 1) * MidK] = xdx[dy:dy + HO].reshape(P, MidK)
    out = jnp.maximum(
        jnp.dot(patch_ref[:, 0:K2], w2_ref[...], preferred_element_type=jnp.float32)
        + b2_ref[...], 0.0)                                         # (P, Cout) f32
    o_ref[0] = out.reshape(HO, WO, Cout)


# --------------------------------------------------------------------------------------
# Layer wrapper (glue is layout plumbing + folding only)
# --------------------------------------------------------------------------------------
def up_affine_with_relu(x, x_prev, theta, params):
    """x:(N,Cin,H,W), x_prev:(N,Cin//2,2H,2W), theta:(N,2,3) -> (N,Cout,2H,2W) f32."""
    N, Cin, H, W = x.shape
    half = Cin // 2
    Ho, Wo = 2 * H, 2 * W
    P = Ho * Wo
    Mid = params["c1_w"].shape[-1]
    Cout = params["c2_w"].shape[-1]
    Cat = 3 * half

    # one-time bf16 cast + NHWC layout
    x_nhwc = jnp.transpose(x, (0, 2, 3, 1)).astype(jnp.bfloat16)        # (N,H,W,Cin)
    xp_nhwc = jnp.transpose(x_prev, (0, 2, 3, 1)).astype(jnp.bfloat16)  # (N,Ho,Wo,half)

    # ---- up-conv: ConvTranspose2d + BN + ReLU folded into one matmul ----
    w4 = (params["up_w"] * params["up_scale"].reshape(1, 1, 1, half)
          ).reshape(Cin, 4 * half).astype(jnp.bfloat16)                 # cols=(ky,kx,co)
    bias4 = jnp.tile(params["up_shift"], 4).reshape(1, 4 * half).astype(jnp.float32)
    y4 = upconv_matmul(x_nhwc.reshape(N * H * W, Cin), w4, bias4)       # (NHW,4*half) bf16
    # pixel shuffle on bf16 (tiny relayout).
    # TODO(synk): fold this relayout into the tail kernel's patch build to remove the pass.
    up = (y4.reshape(N, H, W, 2, 2, half)
            .transpose(0, 1, 3, 2, 4, 5)
            .reshape(N, Ho, Wo, half))                                  # bf16

    # ---- affine_grid coords (align_corners=False) unnormalized to input-pixel space ----
    xs = (2.0 * jnp.arange(Wo, dtype=jnp.float32) + 1.0) / Wo - 1.0
    ys = (2.0 * jnp.arange(Ho, dtype=jnp.float32) + 1.0) / Ho - 1.0
    xn = jnp.tile(xs[None, :], (Ho, 1)).reshape(P)
    yn = jnp.tile(ys[:, None], (1, Wo)).reshape(P)
    base = jnp.stack([xn, yn, jnp.ones((P,), jnp.float32)], axis=-1)    # (P,3)
    g = jnp.einsum("pk,njk->npj", base, theta)                          # (N,P,2)
    sx = ((g[..., 0] + 1.0) * Wo - 1.0) * 0.5
    sy = ((g[..., 1] + 1.0) * Ho - 1.0) * 0.5
    coords = jnp.stack([sx, sy], axis=-1).astype(jnp.float32)           # (N,P,2)
    qx = jnp.tile(jnp.arange(Wo, dtype=jnp.float32)[None, :], (Ho, 1)).reshape(P)
    qy = jnp.tile(jnp.arange(Ho, dtype=jnp.float32)[:, None], (1, Wo)).reshape(P)
    ixy = jnp.stack([qx, qy], axis=0)[None]                             # (1,2,P)

    # ---- fold BN into the 3x3 convs; pad K channels to the 128-lane boundary ----
    Ck = _round_up(Cat, 128)
    MidK = _round_up(Mid, 128)
    w1 = params["c1_w"] * params["c1_scale"].reshape(1, 1, 1, Mid)
    w1 = jnp.pad(w1, ((0, 0), (0, 0), (0, Ck - Cat), (0, 0)))
    w1 = w1.reshape(9 * Ck, Mid).astype(jnp.bfloat16)
    b1 = params["c1_shift"].reshape(1, Mid).astype(jnp.float32)
    w2 = params["c2_w"] * params["c2_scale"].reshape(1, 1, 1, Cout)
    w2 = jnp.pad(w2, ((0, 0), (0, 0), (0, MidK - Mid), (0, 0)))
    w2 = w2.reshape(9 * MidK, Cout).astype(jnp.bfloat16)
    b2 = params["c2_shift"].reshape(1, Cout).astype(jnp.float32)

    KP = 9 * max(Ck, MidK)

    out_nhwc = pl.pallas_call(
        _tail_kernel,
        out_shape=jax.ShapeDtypeStruct((N, Ho, Wo, Cout), jnp.float32),
        grid_spec=pltpu.PrefetchScalarGridSpec(
            num_scalar_prefetch=0,
            grid=(N,),
            in_specs=[
                pl.BlockSpec((1, P, 2), lambda b: (b, 0, 0)),            # coords
                pl.BlockSpec((1, 2, P), lambda b: (0, 0, 0)),            # ix/iy rows
                pl.BlockSpec((1, Ho, Wo, half), lambda b: (b, 0, 0, 0)),  # up (bf16)
                pl.BlockSpec((1, Ho, Wo, half), lambda b: (b, 0, 0, 0)),  # x_prev (bf16)
                pl.BlockSpec((9 * Ck, Mid), lambda b: (0, 0)),           # w1
                pl.BlockSpec((1, Mid), lambda b: (0, 0)),                # b1
                pl.BlockSpec((9 * MidK, Cout), lambda b: (0, 0)),        # w2
                pl.BlockSpec((1, Cout), lambda b: (0, 0)),               # b2
            ],
            out_specs=pl.BlockSpec((1, Ho, Wo, Cout), lambda b: (b, 0, 0, 0)),
            scratch_shapes=[
                pltpu.VMEM((Ho + 2, Wo + 2, Ck), jnp.float32),    # padded concat image
                pltpu.VMEM((P, KP), jnp.bfloat16),                # im2col patch (reused)
                pltpu.VMEM((Ho + 2, Wo + 2, MidK), jnp.float32),  # padded hidden image
            ],
        ),
        # TODO(synk): for large decoder resolutions add an output-row-tile grid axis with
        # a 2-row halo and an explicit vmem_limit_bytes so the resident padded block fits
        # v7x's 64 MiB VMEM.
        compiler_params=pltpu.CompilerParams(dimension_semantics=("parallel",)),
    )(coords, ixy, up, xp_nhwc, w1, b1, w2, b2)

    return jnp.transpose(out_nhwc, (0, 3, 1, 2))


# --------------------------------------------------------------------------------------
# Deterministic synthetic parameters (inference-mode BN folded to scale/shift)
# --------------------------------------------------------------------------------------
def init_params(key, in_ch, mid_ch, out_ch, eps=1e-5):
    cnt = [0]

    def nk():
        cnt[0] += 1
        return jax.random.fold_in(key, cnt[0])

    def conv_w(shape, fan_in):
        return jax.random.normal(nk(), shape, jnp.float32) / math.sqrt(fan_in)

    def bn(c):
        gamma = 1.0 + 0.1 * jax.random.normal(nk(), (c,), jnp.float32)
        beta = 0.1 * jax.random.normal(nk(), (c,), jnp.float32)
        mean = 0.1 * jax.random.normal(nk(), (c,), jnp.float32)
        var = 1.0 + 0.1 * jax.random.uniform(nk(), (c,), jnp.float32)
        return gamma, beta, mean, var

    def fold(bias, bn_p):
        gamma, beta, mean, var = bn_p
        scale = gamma * jax.lax.rsqrt(var + eps)
        shift = (bias - mean) * scale + beta
        return scale, shift

    half = in_ch // 2
    cat_ch = 3 * in_ch // 2

    up_w = conv_w((in_ch, 2, 2, half), in_ch * 4)
    up_b = 0.01 * jax.random.normal(nk(), (half,), jnp.float32)
    up_scale, up_shift = fold(up_b, bn(half))

    c1_w = conv_w((3, 3, cat_ch, mid_ch), 9 * cat_ch)
    c1_b = 0.01 * jax.random.normal(nk(), (mid_ch,), jnp.float32)
    c1_scale, c1_shift = fold(c1_b, bn(mid_ch))

    c2_w = conv_w((3, 3, mid_ch, out_ch), 9 * mid_ch)
    c2_b = 0.01 * jax.random.normal(nk(), (out_ch,), jnp.float32)
    c2_scale, c2_shift = fold(c2_b, bn(out_ch))

    return dict(up_w=up_w, up_scale=up_scale, up_shift=up_shift,
                c1_w=c1_w, c1_scale=c1_scale, c1_shift=c1_shift,
                c2_w=c2_w, c2_scale=c2_scale, c2_shift=c2_shift)


# --------------------------------------------------------------------------------------
if __name__ == "__main__":
    key = jax.random.PRNGKey(0)
    k1, k2, k3, kp = jax.random.split(key, 4)

    N, Cin, H, W = 2, 64, 8, 8          # x: (N, Cin, H, W)
    mid_ch, out_ch = 128, 128           # DoubleConv2(3*Cin//2, mid, out)

    x = jax.random.normal(k1, (N, Cin, H, W), jnp.float32)
    x_prev = jax.random.normal(k2, (N, Cin // 2, 2 * H, 2 * W), jnp.float32)
    theta = (jnp.tile(jnp.array([[1.0, 0.0, 0.0], [0.0, 1.0, 0.0]], jnp.float32),
                      (N, 1, 1))
             + 0.05 * jax.random.normal(k3, (N, 2, 3), jnp.float32))

    params = init_params(kp, Cin, mid_ch, out_ch)

    fwd = jax.jit(up_affine_with_relu)
    y = jax.block_until_ready(fwd(x, x_prev, theta, params))

    assert y.shape == (N, out_ch, 2 * H, 2 * W), y.shape
    assert y.dtype == jnp.float32
    assert bool(jnp.all(jnp.isfinite(y)))
    print("KERNEL_OK")
</pallas_src>

<mosaic_0001>
module attributes {stable_mosaic.version = 11 : i64} {
  func.func @_upconv_matmul_kernel(%arg0: i32, %arg1: memref<128x64xbf16, #tpu.memory_space<vmem>>, %arg2: memref<64x128xbf16, #tpu.memory_space<vmem>>, %arg3: memref<1x128xf32, #tpu.memory_space<vmem>>, %arg4: memref<128x128xbf16, #tpu.memory_space<vmem>>) attributes {dimension_semantics = [#tpu.dimension_semantics<arbitrary>], iteration_bounds = array<i64: 1>, scalar_prefetch = 0 : i64, scratch_operands = 0 : i64, tpu.core_type = #tpu.core_type<tc>, window_params = [{pipeline_mode = #tpu.pipeline_mode<synchronous>, transform_indices = @transform_0, window_bounds = array<i64: 128, 64>}, {pipeline_mode = #tpu.pipeline_mode<synchronous>, transform_indices = @transform_1, window_bounds = array<i64: 64, 128>}, {pipeline_mode = #tpu.pipeline_mode<synchronous>, transform_indices = @transform_2, window_bounds = array<i64: 1, 128>}, {pipeline_mode = #tpu.pipeline_mode<synchronous>, transform_indices = @transform_3, window_bounds = array<i64: 128, 128>}]} {
    %c0 = arith.constant 0 : index
    %c0_0 = arith.constant 0 : index
    %0 = vector.load %arg1[%c0, %c0_0] : memref<128x64xbf16, #tpu.memory_space<vmem>>, vector<128x64xbf16>
    %c0_1 = arith.constant 0 : index
    %c0_2 = arith.constant 0 : index
    %1 = vector.load %arg2[%c0_1, %c0_2] : memref<64x128xbf16, #tpu.memory_space<vmem>>, vector<64x128xbf16>
    %cst = arith.constant dense<0.000000e+00> : vector<128x128xf32>
    %2 = tpu.matmul %0, %1, %cst {dimension_numbers = #tpu.dot_dimension_numbers<[1], [0], [0], [1], [0, 0, 1, 1], [], []>} : vector<128x64xbf16>, vector<64x128xbf16>, vector<128x128xf32> -> vector<128x128xf32>
    %c0_3 = arith.constant 0 : index
    %c0_4 = arith.constant 0 : index
    %3 = vector.load %arg3[%c0_3, %c0_4] : memref<1x128xf32, #tpu.memory_space<vmem>>, vector<1x128xf32>
    %4 = vector.broadcast %3 : vector<1x128xf32> to vector<128x128xf32>
    %5 = arith.addf %2, %4 : vector<128x128xf32>
    %cst_5 = arith.constant 0.000000e+00 : f32
    %6 = vector.broadcast %cst_5 : f32 to vector<128x128xf32>
    %7 = arith.maximumf %5, %6 : vector<128x128xf32>
    %8 = arith.truncf %7 : vector<128x128xf32> to vector<128x128xbf16>
    %c0_6 = arith.constant 0 : index
    %c0_7 = arith.constant 0 : index
    %9 = vector.load %arg4[%c0_6, %c0_7] : memref<128x128xbf16, #tpu.memory_space<vmem>>, vector<128x128xbf16>
    tpu.vector_store %arg4[%c0_6, %c0_7], %8 {strides = array<i32>} : memref<128x128xbf16, #tpu.memory_space<vmem>>, vector<128x128xbf16>,
    return
  }
  func.func @transform_0(%arg0: i32) -> (i32, i32) {
    %c0_i32 = arith.constant 0 : i32
    %c0_i32_0 = arith.constant 0 : i32
    %c0_i32_1 = arith.constant 0 : i32
    return %c0_i32, %c0_i32_0 : i32, i32
  }
  func.func @transform_1(%arg0: i32) -> (i32, i32) {
    %c0_i32 = arith.constant 0 : i32
    %c0_i32_0 = arith.constant 0 : i32
    %c0_i32_1 = arith.constant 0 : i32
    return %c0_i32, %c0_i32_0 : i32, i32
  }
  func.func @transform_2(%arg0: i32) -> (i32, i32) {
    %c0_i32 = arith.constant 0 : i32
    %c0_i32_0 = arith.constant 0 : i32
    %c0_i32_1 = arith.constant 0 : i32
    return %c0_i32, %c0_i32_0 : i32, i32
  }
  func.func @transform_3(%arg0: i32) -> (i32, i32) {
    %c0_i32 = arith.constant 0 : i32
    %c0_i32_0 = arith.constant 0 : i32
    %c0_i32_1 = arith.constant 0 : i32
    return %c0_i32, %c0_i32_0 : i32, i32
  }
}

module attributes {stable_mosaic.version = 11 : i64} {
  func.func @_tail_kernel(%arg0: i32, %arg1: memref<1x256x2xf32, #tpu.memory_space<vmem>>, %arg2: memref<1x2x256xf32, #tpu.memory_space<vmem>>, %arg3: memref<1x16x16x32xbf16, #tpu.memory_space<vmem>>, %arg4: memref<1x16x16x32xbf16, #tpu.memory_space<vmem>>, %arg5: memref<1152x128xbf16, #tpu.memory_space<vmem>>, %arg6: memref<1x128xf32, #tpu.memory_space<vmem>>, %arg7: memref<1152x128xbf16, #tpu.memory_space<vmem>>, %arg8: memref<1x128xf32, #tpu.memory_space<vmem>>, %arg9: memref<1x16x16x128xf32, #tpu.memory_space<vmem>>, %arg10: memref<18x18x128xf32, #tpu.memory_space<vmem>>, %arg11: memref<256x1152xbf16, #tpu.memory_space<vmem>>, %arg12: memref<18x18x128xf32, #tpu.memory_space<vmem>>) attributes {dimension_semantics = [#tpu.dimension_semantics<parallel>], iteration_bounds = array<i64: 2>, scalar_prefetch = 0 : i64, scratch_operands = 3 : i64, tpu.core_type = #tpu.core_type<tc>, window_params = [{transform_indices = @transform_0, window_bounds = array<i64: 1, 256, 2>}, {pipeline_mode = #tpu.pipeline_mode<synchronous>, transform_indices = @transform_1, window_bounds = array<i64: 1, 2, 256>}, {transform_indices = @transform_2, window_bounds = array<i64: 1, 16, 16, 32>}, {transform_indices = @transform_3, window_bounds = array<i64: 1, 16, 16, 32>}, {pipeline_mode = #tpu.pipeline_mode<synchronous>, transform_indices = @transform_4, window_bounds = array<i64: 1152, 128>}, {pipeline_mode = #tpu.pipeline_mode<synchronous>, transform_indices = @transform_5, window_bounds = array<i64: 1, 128>}, {pipeline_mode = #tpu.pipeline_mode<synchronous>, transform_indices = @transform_6, window_bounds = array<i64: 1152, 128>}, {pipeline_mode = #tpu.pipeline_mode<synchronous>, transform_indices = @transform_7, window_bounds = array<i64: 1, 128>}, {transform_indices = @transform_8, window_bounds = array<i64: 1, 16, 16, 128>}]} {
    %c0 = arith.constant 0 : index
    %c0_0 = arith.constant 0 : index
    %c0_1 = arith.constant 0 : index
    %0 = vector.load %arg1[%c0, %c0_0, %c0_1] : memref<1x256x2xf32, #tpu.memory_space<vmem>>, vector<1x256x1xf32>
    %1 = vector.shape_cast %0 : vector<1x256x1xf32> to vector<256x1xf32>
    %c0_2 = arith.constant 0 : index
    %c0_3 = arith.constant 0 : index
    %c1 = arith.constant 1 : index
    %2 = vector.load %arg1[%c0_2, %c0_3, %c1] : memref<1x256x2xf32, #tpu.memory_space<vmem>>, vector<1x256x1xf32>
    %3 = vector.shape_cast %2 : vector<1x256x1xf32> to vector<256x1xf32>
    %c0_4 = arith.constant 0 : index
    %c0_5 = arith.constant 0 : index
    %c0_6 = arith.constant 0 : index
    %4 = vector.load %arg2[%c0_4, %c0_5, %c0_6] : memref<1x2x256xf32, #tpu.memory_space<vmem>>, vector<1x1x256xf32>
    %5 = vector.shape_cast %4 : vector<1x1x256xf32> to vector<1x256xf32>
    %c0_7 = arith.constant 0 : index
    %c1_8 = arith.constant 1 : index
    %c0_9 = arith.constant 0 : index
    %6 = vector.load %arg2[%c0_7, %c1_8, %c0_9] : memref<1x2x256xf32, #tpu.memory_space<vmem>>, vector<1x1x256xf32>
    %7 = vector.shape_cast %6 : vector<1x1x256xf32> to vector<1x256xf32>
    %8 = vector.broadcast %1 : vector<256x1xf32> to vector<256x256xf32>
    %9 = vector.broadcast %5 : vector<1x256xf32> to vector<256x256xf32>
    %10 = arith.subf %8, %9 : vector<256x256xf32>
    %11 = math.absf %10 : vector<256x256xf32>
    %cst = arith.constant 1.000000e+00 : f32
    %12 = vector.broadcast %cst : f32 to vector<256x256xf32>
    %13 = arith.subf %12, %11 : vector<256x256xf32>
    %cst_10 = arith.constant 0.000000e+00 : f32
    %14 = vector.broadcast %cst_10 : f32 to vector<256x256xf32>
    %15 = arith.maximumf %13, %14 : vector<256x256xf32>
    %16 = vector.broadcast %3 : vector<256x1xf32> to vector<256x256xf32>
    %17 = vector.broadcast %7 : vector<1x256xf32> to vector<256x256xf32>
    %18 = arith.subf %16, %17 : vector<256x256xf32>
    %19 = math.absf %18 : vector<256x256xf32>
    %cst_11 = arith.constant 1.000000e+00 : f32
    %20 = vector.broadcast %cst_11 : f32 to vector<256x256xf32>
    %21 = arith.subf %20, %19 : vector<256x256xf32>
    %cst_12 = arith.constant 0.000000e+00 : f32
    %22 = vector.broadcast %cst_12 : f32 to vector<256x256xf32>
    %23 = arith.maximumf %21, %22 : vector<256x256xf32>
    %24 = arith.mulf %15, %23 : vector<256x256xf32>
    %25 = arith.truncf %24 : vector<256x256xf32> to vector<256x256xbf16>
    %c0_13 = arith.constant 0 : index
    %c0_14 = arith.constant 0 : index
    %c0_15 = arith.constant 0 : index
    %c0_16 = arith.constant 0 : index
    %26 = vector.load %arg4[%c0_13, %c0_14, %c0_15, %c0_16] : memref<1x16x16x32xbf16, #tpu.memory_space<vmem>>, vector<1x16x16x32xbf16>
    %27 = vector.shape_cast %26 : vector<1x16x16x32xbf16> to vector<16x16x32xbf16>
    %28 = vector.shape_cast %27 : vector<16x16x32xbf16> to vector<256x32xbf16>
    %cst_17 = arith.constant dense<0.000000e+00> : vector<256x32xf32>
    %29 = tpu.matmul %25, %28, %cst_17 {dimension_numbers = #tpu.dot_dimension_numbers<[1], [0], [0], [1], [0, 0, 1, 1], [], []>} : vector<256x256xbf16>, vector<256x32xbf16>, vector<256x32xf32> -> vector<256x32xf32>
    %cst_18 = arith.constant 0.000000e+00 : f32
    %30 = vector.broadcast %cst_18 : f32 to vector<18x18x128xf32>
    %c0_19 = arith.constant 0 : index
    %c0_20 = arith.constant 0 : index
    %c0_21 = arith.constant 0 : index
    %31 = vector.load %arg10[%c0_19, %c0_20, %c0_21] : memref<18x18x128xf32, #tpu.memory_space<vmem>>, vector<18x18x128xf32>
    tpu.vector_store %arg10[%c0_19, %c0_20, %c0_21], %30 {strides = array<i32>} : memref<18x18x128xf32, #tpu.memory_space<vmem>>, vector<18x18x128xf32>,
    %c0_22 = arith.constant 0 : index
    %c0_23 = arith.constant 0 : index
    %c0_24 = arith.constant 0 : index
    %c0_25 = arith.constant 0 : index
    %32 = vector.load %arg3[%c0_22, %c0_23, %c0_24, %c0_25] : memref<1x16x16x32xbf16, #tpu.memory_space<vmem>>, vector<1x16x16x32xbf16>
    %33 = vector.shape_cast %32 : vector<1x16x16x32xbf16> to vector<16x16x32xbf16>
    %34 = arith.extf %33 : vector<16x16x32xbf16> to vector<16x16x32xf32>
    %c1_26 = arith.constant 1 : index
    %c1_27 = arith.constant 1 : index
    %c0_28 = arith.constant 0 : index
    %35 = vector.load %arg10[%c1_26, %c1_27, %c0_28] : memref<18x18x128xf32, #tpu.memory_space<vmem>>, vector<16x16x32xf32>
    tpu.vector_store %arg10[%c1_26, %c1_27, %c0_28], %34 {strides = array<i32>} : memref<18x18x128xf32, #tpu.memory_space<vmem>>, vector<16x16x32xf32>,
    %36 = vector.shape_cast %29 : vector<256x32xf32> to vector<16x16x32xf32>
    %c1_29 = arith.constant 1 : index
    %c1_30 = arith.constant 1 : index
    %c32 = arith.constant 32 : index
    %37 = vector.load %arg10[%c1_29, %c1_30, %c32] : memref<18x18x128xf32, #tpu.memory_space<vmem>>, vector<16x16x32xf32>
    tpu.vector_store %arg10[%c1_29, %c1_30, %c32], %36 {strides = array<i32>} : memref<18x18x128xf32, #tpu.memory_space<vmem>>, vector<16x16x32xf32>,
    %c0_31 = arith.constant 0 : index
    %c0_32 = arith.constant 0 : index
    %c0_33 = arith.constant 0 : index
    %c0_34 = arith.constant 0 : index
    %38 = vector.load %arg4[%c0_31, %c0_32, %c0_33, %c0_34] : memref<1x16x16x32xbf16, #tpu.memory_space<vmem>>, vector<1x16x16x32xbf16>
    %39 = vector.shape_cast %38 : vector<1x16x16x32xbf16> to vector<16x16x32xbf16>
    %40 = arith.extf %39 : vector<16x16x32xbf16> to vector<16x16x32xf32>
    %c1_35 = arith.constant 1 : index
    %c1_36 = arith.constant 1 : index
    %c64 = arith.constant 64 : index
    %41 = vector.load %arg10[%c1_35, %c1_36, %c64] : memref<18x18x128xf32, #tpu.memory_space<vmem>>, vector<16x16x32xf32>
    tpu.vector_store %arg10[%c1_35, %c1_36, %c64], %40 {strides = array<i32>} : memref<18x18x128xf32, #tpu.memory_space<vmem>>, vector<16x16x32xf32>,
    %c0_37 = arith.constant 0 : index
    %c0_38 = arith.constant 0 : index
    %c0_39 = arith.constant 0 : index
    %42 = vector.load %arg10[%c0_37, %c0_38, %c0_39] : memref<18x18x128xf32, #tpu.memory_space<vmem>>, vector<18x16x128xf32>
    %43 = arith.truncf %42 : vector<18x16x128xf32> to vector<18x16x128xbf16>
    %44 = vector.extract_strided_slice %43 {offsets = [0, 0, 0], sizes = [16, 16, 128], strides = [1, 1, 1]} : vector<18x16x128xbf16> to vector<16x16x128xbf16>
    %45 = vector.shape_cast %44 : vector<16x16x128xbf16> to vector<256x128xbf16>
    %c0_40 = arith.constant 0 : index
    %c0_41 = arith.constant 0 : index
    %46 = vector.load %arg11[%c0_40, %c0_41] : memref<256x1152xbf16, #tpu.memory_space<vmem>>, vector<256x128xbf16>
    tpu.vector_store %arg11[%c0_40, %c0_41], %45 {strides = array<i32>} : memref<256x1152xbf16, #tpu.memory_space<vmem>>, vector<256x128xbf16>,
    %47 = vector.extract_strided_slice %43 {offsets = [1, 0, 0], sizes = [16, 16, 128], strides = [1, 1, 1]} : vector<18x16x128xbf16> to vector<16x16x128xbf16>
    %48 = vector.shape_cast %47 : vector<16x16x128xbf16> to vector<256x128xbf16>
    %c0_42 = arith.constant 0 : index
    %c384 = arith.constant 384 : index
    %49 = vector.load %arg11[%c0_42, %c384] : memref<256x1152xbf16, #tpu.memory_space<vmem>>, vector<256x128xbf16>
    tpu.vector_store %arg11[%c0_42, %c384], %48 {strides = array<i32>} : memref<256x1152xbf16, #tpu.memory_space<vmem>>, vector<256x128xbf16>,
    %50 = vector.extract_strided_slice %43 {offsets = [2, 0, 0], sizes = [16, 16, 128], strides = [1, 1, 1]} : vector<18x16x128xbf16> to vector<16x16x128xbf16>
    %51 = vector.shape_cast %50 : vector<16x16x128xbf16> to vector<256x128xbf16>
    %c0_43 = arith.constant 0 : index
    %c768 = arith.constant 768 : index
    %52 = vector.load %arg11[%c0_43, %c768] : memref<256x1152xbf16, #tpu.memory_space<vmem>>, vector<256x128xbf16>
    tpu.vector_store %arg11[%c0_43, %c768], %51 {strides = array<i32>} : memref<256x1152xbf16, #tpu.memory_space<vmem>>, vector<256x128xbf16>,
    %c0_44 = arith.constant 0 : index
    %c1_45 = arith.constant 1 : index
    %c0_46 = arith.constant 0 : index
    %53 = vector.load %arg10[%c0_44, %c1_45, %c0_46] : memref<18x18x128xf32, #tpu.memory_space<vmem>>, vector<18x16x128xf32>
    %54 = arith.truncf %53 : vector<18x16x128xf32> to vector<18x16x128xbf16>
    %55 = vector.extract_strided_slice %54 {offsets = [0, 0, 0], sizes = [16, 16, 128], strides = [1, 1, 1]} : vector<18x16x128xbf16> to vector<16x16x128xbf16>
    %56 = vector.shape_cast %55 : vector<16x16x128xbf16> to vector<256x128xbf16>
    %c0_47 = arith.constant 0 : index
    %c128 = arith.constant 128 : index
    %57 = vector.load %arg11[%c0_47, %c128] : memref<256x1152xbf16, #tpu.memory_space<vmem>>, vector<256x128xbf16>
    tpu.vector_store %arg11[%c0_47, %c128], %56 {strides = array<i32>} : memref<256x1152xbf16, #tpu.memory_space<vmem>>, vector<256x128xbf16>,
    %58 = vector.extract_strided_slice %54 {offsets = [1, 0, 0], sizes = [16, 16, 128], strides = [1, 1, 1]} : vector<18x16x128xbf16> to vector<16x16x128xbf16>
    %59 = vector.shape_cast %58 : vector<16x16x128xbf16> to vector<256x128xbf16>
    %c0_48 = arith.constant 0 : index
    %c512 = arith.constant 512 : index
    %60 = vector.load %arg11[%c0_48, %c512] : memref<256x1152xbf16, #tpu.memory_space<vmem>>, vector<256x128xbf16>
    tpu.vector_store %arg11[%c0_48, %c512], %59 {strides = array<i32>} : memref<256x1152xbf16, #tpu.memory_space<vmem>>, vector<256x128xbf16>,
    %61 = vector.extract_strided_slice %54 {offsets = [2, 0, 0], sizes = [16, 16, 128], strides = [1, 1, 1]} : vector<18x16x128xbf16> to vector<16x16x128xbf16>
    %62 = vector.shape_cast %61 : vector<16x16x128xbf16> to vector<256x128xbf16>
    %c0_49 = arith.constant 0 : index
    %c896 = arith.constant 896 : index
    %63 = vector.load %arg11[%c0_49, %c896] : memref<256x1152xbf16, #tpu.memory_space<vmem>>, vector<256x128xbf16>
    tpu.vector_store %arg11[%c0_49, %c896], %62 {strides = array<i32>} : memref<256x1152xbf16, #tpu.memory_space<vmem>>, vector<256x128xbf16>,
    %c0_50 = arith.constant 0 : index
    %c2 = arith.constant 2 : index
    %c0_51 = arith.constant 0 : index
    %64 = vector.load %arg10[%c0_50, %c2, %c0_51] : memref<18x18x128xf32, #tpu.memory_space<vmem>>, vector<18x16x128xf32>
    %65 = arith.truncf %64 : vector<18x16x128xf32> to vector<18x16x128xbf16>
    %66 = vector.extract_strided_slice %65 {offsets = [0, 0, 0], sizes = [16, 16, 128], strides = [1, 1, 1]} : vector<18x16x128xbf16> to vector<16x16x128xbf16>
    %67 = vector.shape_cast %66 : vector<16x16x128xbf16> to vector<256x128xbf16>
    %c0_52 = arith.constant 0 : index
    %c256 = arith.constant 256 : index
    %68 = vector.load %arg11[%c0_52, %c256] : memref<256x1152xbf16, #tpu.memory_space<vmem>>, vector<256x128xbf16>
    tpu.vector_store %arg11[%c0_52, %c256], %67 {strides = array<i32>} : memref<256x1152xbf16, #tpu.memory_space<vmem>>, vector<256x128xbf16>,
    %69 = vector.extract_strided_slice %65 {offsets = [1, 0, 0], sizes = [16, 16, 128], strides = [1, 1, 1]} : vector<18x16x128xbf16> to vector<16x16x128xbf16>
    %70 = vector.shape_cast %69 : vector<16x16x128xbf16> to vector<256x128xbf16>
    %c0_53 = arith.constant 0 : index
    %c640 = arith.constant 640 : index
    %71 = vector.load %arg11[%c0_53, %c640] : memref<256x1152xbf16, #tpu.memory_space<vmem>>, vector<256x128xbf16>
    tpu.vector_store %arg11[%c0_53, %c640], %70 {strides = array<i32>} : memref<256x1152xbf16, #tpu.memory_space<vmem>>, vector<256x128xbf16>,
    %72 = vector.extract_strided_slice %65 {offsets = [2, 0, 0], sizes = [16, 16, 128], strides = [1, 1, 1]} : vector<18x16x128xbf16> to vector<16x16x128xbf16>
    %73 = vector.shape_cast %72 : vector<16x16x128xbf16> to vector<256x128xbf16>
    %c0_54 = arith.constant 0 : index
    %c1024 = arith.constant 1024 : index
    %74 = vector.load %arg11[%c0_54, %c1024] : memref<256x1152xbf16, #tpu.memory_space<vmem>>, vector<256x128xbf16>
    tpu.vector_store %arg11[%c0_54, %c1024], %73 {strides = array<i32>} : memref<256x1152xbf16, #tpu.memory_space<vmem>>, vector<256x128xbf16>,
    %c0_55 = arith.constant 0 : index
    %c0_56 = arith.constant 0 : index
    %75 = vector.load %arg11[%c0_55, %c0_56] : memref<256x1152xbf16, #tpu.memory_space<vmem>>, vector<256x1152xbf16>
    %c0_57 = arith.constant 0 : index
    %c0_58 = arith.constant 0 : index
    %76 = vector.load %arg5[%c0_57, %c0_58] : memref<1152x128xbf16, #tpu.memory_space<vmem>>, vector<1152x128xbf16>
    %cst_59 = arith.constant dense<0.000000e+00> : vector<256x128xf32>
    %77 = tpu.matmul %75, %76, %cst_59 {dimension_numbers = #tpu.dot_dimension_numbers<[1], [0], [0], [1], [0, 0, 1, 1], [], []>} : vector<256x1152xbf16>, vector<1152x128xbf16>, vector<256x128xf32> -> vector<256x128xf32>
    %c0_60 = arith.constant 0 : index
    %c0_61 = arith.constant 0 : index
    %78 = vector.load %arg6[%c0_60, %c0_61] : memref<1x128xf32, #tpu.memory_space<vmem>>, vector<1x128xf32>
    %79 = vector.broadcast %78 : vector<1x128xf32> to vector<256x128xf32>
    %80 = arith.addf %77, %79 : vector<256x128xf32>
    %cst_62 = arith.constant 0.000000e+00 : f32
    %81 = vector.broadcast %cst_62 : f32 to vector<256x128xf32>
    %82 = arith.maximumf %80, %81 : vector<256x128xf32>
    %cst_63 = arith.constant 0.000000e+00 : f32
    %83 = vector.broadcast %cst_63 : f32 to vector<18x18x128xf32>
    %c0_64 = arith.constant 0 : index
    %c0_65 = arith.constant 0 : index
    %c0_66 = arith.constant 0 : index
    %84 = vector.load %arg12[%c0_64, %c0_65, %c0_66] : memref<18x18x128xf32, #tpu.memory_space<vmem>>, vector<18x18x128xf32>
    tpu.vector_store %arg12[%c0_64, %c0_65, %c0_66], %83 {strides = array<i32>} : memref<18x18x128xf32, #tpu.memory_space<vmem>>, vector<18x18x128xf32>,
    %85 = vector.shape_cast %82 : vector<256x128xf32> to vector<16x16x128xf32>
    %c1_67 = arith.constant 1 : index
    %c1_68 = arith.constant 1 : index
    %c0_69 = arith.constant 0 : index
    %86 = vector.load %arg12[%c1_67, %c1_68, %c0_69] : memref<18x18x128xf32, #tpu.memory_space<vmem>>, vector<16x16x128xf32>
    tpu.vector_store %arg12[%c1_67, %c1_68, %c0_69], %85 {strides = array<i32>} : memref<18x18x128xf32, #tpu.memory_space<vmem>>, vector<16x16x128xf32>,
    %c0_70 = arith.constant 0 : index
    %c0_71 = arith.constant 0 : index
    %c0_72 = arith.constant 0 : index
    %87 = vector.load %arg12[%c0_70, %c0_71, %c0_72] : memref<18x18x128xf32, #tpu.memory_space<vmem>>, vector<18x16x128xf32>
    %88 = arith.truncf %87 : vector<18x16x128xf32> to vector<18x16x128xbf16>
    %89 = vector.extract_strided_slice %88 {offsets = [0, 0, 0], sizes = [16, 16, 128], strides = [1, 1, 1]} : vector<18x16x128xbf16> to vector<16x16x128xbf16>
    %90 = vector.shape_cast %89 : vector<16x16x128xbf16> to vector<256x128xbf16>
    %c0_73 = arith.constant 0 : index
    %c0_74 = arith.constant 0 : index
    %91 = vector.load %arg11[%c0_73, %c0_74] : memref<256x1152xbf16, #tpu.memory_space<vmem>>, vector<256x128xbf16>
    tpu.vector_store %arg11[%c0_73, %c0_74], %90 {strides = array<i32>} : memref<256x1152xbf16, #tpu.memory_space<vmem>>, vector<256x128xbf16>,
    %92 = vector.extract_strided_slice %88 {offsets = [1, 0, 0], sizes = [16, 16, 128], strides = [1, 1, 1]} : vector<18x16x128xbf16> to vector<16x16x128xbf16>
    %93 = vector.shape_cast %92 : vector<16x16x128xbf16> to vector<256x128xbf16>
    %c0_75 = arith.constant 0 : index
    %c384_76 = arith.constant 384 : index
    %94 = vector.load %arg11[%c0_75, %c384_76] : memref<256x1152xbf16, #tpu.memory_space<vmem>>, vector<256x128xbf16>
    tpu.vector_store %arg11[%c0_75, %c384_76], %93 {strides = array<i32>} : memref<256x1152xbf16, #tpu.memory_space<vmem>>, vector<256x128xbf16>,
    %95 = vector.extract_strided_slice %88 {offsets = [2, 0, 0], sizes = [16, 16, 128], strides = [1, 1, 1]} : vector<18x16x128xbf16> to vector<16x16x128xbf16>
    %96 = vector.shape_cast %95 : vector<16x16x128xbf16> to vector<256x128xbf16>
    %c0_77 = arith.constant 0 : index
    %c768_78 = arith.constant 768 : index
    %97 = vector.load %arg11[%c0_77, %c768_78] : memref<256x1152xbf16, #tpu.memory_space<vmem>>, vector<256x128xbf16>
    tpu.vector_store %arg11[%c0_77, %c768_78], %96 {strides = array<i32>} : memref<256x1152xbf16, #tpu.memory_space<vmem>>, vector<256x128xbf16>,
    %c0_79 = arith.constant 0 : index
    %c1_80 = arith.constant 1 : index
    %c0_81 = arith.constant 0 : index
    %98 = vector.load %arg12[%c0_79, %c1_80, %c0_81] : memref<18x18x128xf32, #tpu.memory_space<vmem>>, vector<18x16x128xf32>
    %99 = arith.truncf %98 : vector<18x16x128xf32> to vector<18x16x128xbf16>
    %100 = vector.extract_strided_slice %99 {offsets = [0, 0, 0], sizes = [16, 16, 128], strides = [1, 1, 1]} : vector<18x16x128xbf16> to vector<16x16x128xbf16>
    %101 = vector.shape_cast %100 : vector<16x16x128xbf16> to vector<256x128xbf16>
    %c0_82 = arith.constant 0 : index
    %c128_83 = arith.constant 128 : index
    %102 = vector.load %arg11[%c0_82, %c128_83] : memref<256x1152xbf16, #tpu.memory_space<vmem>>, vector<256x128xbf16>
    tpu.vector_store %arg11[%c0_82, %c128_83], %101 {strides = array<i32>} : memref<256x1152xbf16, #tpu.memory_space<vmem>>, vector<256x128xbf16>,
    %103 = vector.extract_strided_slice %99 {offsets = [1, 0, 0], sizes = [16, 16, 128], strides = [1, 1, 1]} : vector<18x16x128xbf16> to vector<16x16x128xbf16>
    %104 = vector.shape_cast %103 : vector<16x16x128xbf16> to vector<256x128xbf16>
    %c0_84 = arith.constant 0 : index
    %c512_85 = arith.constant 512 : index
    %105 = vector.load %arg11[%c0_84, %c512_85] : memref<256x1152xbf16, #tpu.memory_space<vmem>>, vector<256x128xbf16>
    tpu.vector_store %arg11[%c0_84, %c512_85], %104 {strides = array<i32>} : memref<256x1152xbf16, #tpu.memory_space<vmem>>, vector<256x128xbf16>,
    %106 = vector.extract_strided_slice %99 {offsets = [2, 0, 0], sizes = [16, 16, 128], strides = [1, 1, 1]} : vector<18x16x128xbf16> to vector<16x16x128xbf16>
    %107 = vector.shape_cast %106 : vector<16x16x128xbf16> to vector<256x128xbf16>
    %c0_86 = arith.constant 0 : index
    %c896_87 = arith.constant 896 : index
    %108 = vector.load %arg11[%c0_86, %c896_87] : memref<256x1152xbf16, #tpu.memory_space<vmem>>, vector<256x128xbf16>
    tpu.vector_store %arg11[%c0_86, %c896_87], %107 {strides = array<i32>} : memref<256x1152xbf16, #tpu.memory_space<vmem>>, vector<256x128xbf16>,
    %c0_88 = arith.constant 0 : index
    %c2_89 = arith.constant 2 : index
    %c0_90 = arith.constant 0 : index
    %109 = vector.load %arg12[%c0_88, %c2_89, %c0_90] : memref<18x18x128xf32, #tpu.memory_space<vmem>>, vector<18x16x128xf32>
    %110 = arith.truncf %109 : vector<18x16x128xf32> to vector<18x16x128xbf16>
    %111 = vector.extract_strided_slice %110 {offsets = [0, 0, 0], sizes = [16, 16, 128], strides = [1, 1, 1]} : vector<18x16x128xbf16> to vector<16x16x128xbf16>
    %112 = vector.shape_cast %111 : vector<16x16x128xbf16> to vector<256x128xbf16>
    %c0_91 = arith.constant 0 : index
    %c256_92 = arith.constant 256 : index
    %113 = vector.load %arg11[%c0_91, %c256_92] : memref<256x1152xbf16, #tpu.memory_space<vmem>>, vector<256x128xbf16>
    tpu.vector_store %arg11[%c0_91, %c256_92], %112 {strides = array<i32>} : memref<256x1152xbf16, #tpu.memory_space<vmem>>, vector<256x128xbf16>,
    %114 = vector.extract_strided_slice %110 {offsets = [1, 0, 0], sizes = [16, 16, 128], strides = [1, 1, 1]} : vector<18x16x128xbf16> to vector<16x16x128xbf16>
    %115 = vector.shape_cast %114 : vector<16x16x128xbf16> to vector<256x128xbf16>
    %c0_93 = arith.constant 0 : index
    %c640_94 = arith.constant 640 : index
    %116 = vector.load %arg11[%c0_93, %c640_94] : memref<256x1152xbf16, #tpu.memory_space<vmem>>, vector<256x128xbf16>
    tpu.vector_store %arg11[%c0_93, %c640_94], %115 {strides = array<i32>} : memref<256x1152xbf16, #tpu.memory_space<vmem>>, vector<256x128xbf16>,
    %117 = vector.extract_strided_slice %110 {offsets = [2, 0, 0], sizes = [16, 16, 128], strides = [1, 1, 1]} : vector<18x16x128xbf16> to vector<16x16x128xbf16>
    %118 = vector.shape_cast %117 : vector<16x16x128xbf16> to vector<256x128xbf16>
    %c0_95 = arith.constant 0 : index
    %c1024_96 = arith.constant 1024 : index
    %119 = vector.load %arg11[%c0_95, %c1024_96] : memref<256x1152xbf16, #tpu.memory_space<vmem>>, vector<256x128xbf16>
    tpu.vector_store %arg11[%c0_95, %c1024_96], %118 {strides = array<i32>} : memref<256x1152xbf16, #tpu.memory_space<vmem>>, vector<256x128xbf16>,
    %c0_97 = arith.constant 0 : index
    %c0_98 = arith.constant 0 : index
    %120 = vector.load %arg11[%c0_97, %c0_98] : memref<256x1152xbf16, #tpu.memory_space<vmem>>, vector<256x1152xbf16>
    %c0_99 = arith.constant 0 : index
    %c0_100 = arith.constant 0 : index
    %121 = vector.load %arg7[%c0_99, %c0_100] : memref<1152x128xbf16, #tpu.memory_space<vmem>>, vector<1152x128xbf16>
    %cst_101 = arith.constant dense<0.000000e+00> : vector<256x128xf32>
    %122 = tpu.matmul %120, %121, %cst_101 {dimension_numbers = #tpu.dot_dimension_numbers<[1], [0], [0], [1], [0, 0, 1, 1], [], []>} : vector<256x1152xbf16>, vector<1152x128xbf16>, vector<256x128xf32> -> vector<256x128xf32>
    %c0_102 = arith.constant 0 : index
    %c0_103 = arith.constant 0 : index
    %123 = vector.load %arg8[%c0_102, %c0_103] : memref<1x128xf32, #tpu.memory_space<vmem>>, vector<1x128xf32>
    %124 = vector.broadcast %123 : vector<1x128xf32> to vector<256x128xf32>
    %125 = arith.addf %122, %124 : vector<256x128xf32>
    %cst_104 = arith.constant 0.000000e+00 : f32
    %126 = vector.broadcast %cst_104 : f32 to vector<256x128xf32>
    %127 = arith.maximumf %125, %126 : vector<256x128xf32>
    %128 = vector.shape_cast %127 : vector<256x128xf32> to vector<16x16x128xf32>
    %c0_105 = arith.constant 0 : index
    %c0_106 = arith.constant 0 : index
    %c0_107 = arith.constant 0 : index
    %c0_108 = arith.constant 0 : index
    %129 = vector.load %arg9[%c0_105, %c0_106, %c0_107, %c0_108] : memref<1x16x16x128xf32, #tpu.memory_space<vmem>>, vector<1x16x16x128xf32>
    %130 = vector.shape_cast %129 : vector<1x16x16x128xf32> to vector<16x16x128xf32>
    %131 = vector.shape_cast %128 : vector<16x16x128xf32> to vector<1x16x16x128xf32>
    tpu.vector_store %arg9[%c0_105, %c0_106, %c0_107, %c0_108], %131 {strides = array<i32>} : memref<1x16x16x128xf32, #tpu.memory_space<vmem>>, vector<1x16x16x128xf32>,
    return
  }
  func.func @transform_0(%arg0: i32) -> (i32, i32, i32) {
    %c0_i32 = arith.constant 0 : i32
    %c0_i32_0 = arith.constant 0 : i32
    %c0_i32_1 = arith.constant 0 : i32
    return %arg0, %c0_i32, %c0_i32_0 : i32, i32, i32
  }
  func.func @transform_1(%arg0: i32) -> (i32, i32, i32) {
    %c0_i32 = arith.constant 0 : i32
    %c0_i32_0 = arith.constant 0 : i32
    %c0_i32_1 = arith.constant 0 : i32
    %c0_i32_2 = arith.constant 0 : i32
    return %c0_i32, %c0_i32_0, %c0_i32_1 : i32, i32, i32
  }
  func.func @transform_2(%arg0: i32) -> (i32, i32, i32, i32) {
    %c0_i32 = arith.constant 0 : i32
    %c0_i32_0 = arith.constant 0 : i32
    %c0_i32_1 = arith.constant 0 : i32
    %c0_i32_2 = arith.constant 0 : i32
    return %arg0, %c0_i32, %c0_i32_0, %c0_i32_1 : i32, i32, i32, i32
  }
  func.func @transform_3(%arg0: i32) -> (i32, i32, i32, i32) {
    %c0_i32 = arith.constant 0 : i32
    %c0_i32_0 = arith.constant 0 : i32
    %c0_i32_1 = arith.constant 0 : i32
    %c0_i32_2 = arith.constant 0 : i32
    return %arg0, %c0_i32, %c0_i32_0, %c0_i32_1 : i32, i32, i32, i32
  }
  func.func @transform_4(%arg0: i32) -> (i32, i32) {
    %c0_i32 = arith.constant 0 : i32
    %c0_i32_0 = arith.constant 0 : i32
    %c0_i32_1 = arith.constant 0 : i32
    return %c0_i32, %c0_i32_0 : i32, i32
  }
  func.func @transform_5(%arg0: i32) -> (i32, i32) {
    %c0_i32 = arith.constant 0 : i32
    %c0_i32_0 = arith.constant 0 : i32
    %c0_i32_1 = arith.constant 0 : i32
    return %c0_i32, %c0_i32_0 : i32, i32
  }
  func.func @transform_6(%arg0: i32) -> (i32, i32) {
    %c0_i32 = arith.constant 0 : i32
    %c0_i32_0 = arith.constant 0 : i32
    %c0_i32_1 = arith.constant 0 : i32
    return %c0_i32, %c0_i32_0 : i32, i32
  }
  func.func @transform_7(%arg0: i32) -> (i32, i32) {
    %c0_i32 = arith.constant 0 : i32
    %c0_i32_0 = arith.constant 0 : i32
    %c0_i32_1 = arith.constant 0 : i32
    return %c0_i32, %c0_i32_0 : i32, i32
  }
  func.func @transform_8(%arg0: i32) -> (i32, i32, i32, i32) {
    %c0_i32 = arith.constant 0 : i32
    %c0_i32_0 = arith.constant 0 : i32
    %c0_i32_1 = arith.constant 0 : i32
    %c0_i32_2 = arith.constant 0 : i32
    return %arg0, %c0_i32, %c0_i32_0, %c0_i32_1 : i32, i32, i32, i32
  }
}

</mosaic_0001>

<llo_original>
// kernel: tile.24
$region0: #{tile.24}
  #allocation0 [shape = 's32[1]{0}', space=sflag, size = 0x4, scoped, tag = 'scoped memory for tile.24']
  %s0 = inlined_call_operand.vmem [shape: f32[32], index: 0, kind: input, shape index: {}]
  %s1 = inlined_call_operand.vmem [shape: f32[4,32], index: 1, kind: output, shape index: {}]
  // Predicated region
  $region2: #{tile.24} parent=0 // pred_check
    _
  $region3: #{tile.24} parent=0 // pred_check_branch
    %3 = sbr.rel (0) target = $region5
  $region4: #{tile.24} parent=0 // pred_region
    _
  $region5: #{tile.24} parent=0 // pred_fallthru
    _
  %v4 = vld [vmem:[%s0] ss:$0 sm:$0xff]
  %5 = vst [vmem:[%s1] sm:$0xf] %v4

// kernel: tile.25
$region0: #{tile.25}
  %s0 = inlined_call_operand.vmem [shape: f32[4,32], index: 0, kind: input, shape index: {}]
  %s1 = inlined_call_operand.vmem [shape: f32[1,128], index: 1, kind: output, shape index: {}]
  $region1: #{tile.25} parent=0
    #allocation0 [shape = 'u8[4096]{0}', space=vmem, size = 0x1000, scoped, tag = 'scoped mem for output reshape']
    #allocation1 [shape = 'u8[4096]{0}', space=vmem, size = 0x1000, scoped, tag = 'scoped mem for input reshape']
    %s3 = sshllo.u32 0, 4
    %v4 = vld [vmem:[%s0] sm:%s3]
    %5 = vst [vmem:[#allocation1] sm:%s3] %v4
    %v6 = vld [vmem:[#allocation1] sm:$0x1]
    %vm7 = vcmask 261120
    %8 = vst.msk [vmem:[#allocation0] sm:$0x1] %vm7, %v6
    %s9 = scalar_lea.vmem [#allocation1], 3
    %v10 = vld [vmem:[%s9] sm:$0x1]
    %11 = vrot.lane.b32.xlu0 %v10, 96
    %v12 = vpop.permute.xlu0 %11
    %vm13 = vcmask 1048320
    %14 = vst.msk [vmem:[#allocation0] sm:$0x1] %vm13, %v12
    %s15 = scalar_lea.vmem [#allocation1], 2
    %v16 = vld [vmem:[%s15] sm:$0x1]
    %17 = vrot.lane.b32.xlu0 %v16, 64
    %v18 = vpop.permute.xlu0 %17
    %vm19 = vcmask 785920
    %20 = vst.msk [vmem:[#allocation0] sm:$0x1] %vm19, %v18
    %s21 = scalar_lea.vmem [#allocation1], 1
    %v22 = vld [vmem:[%s21] sm:$0x1]
    %23 = vrot.lane.b32.xlu0 %v22, 32
    %v24 = vpop.permute.xlu0 %23
    %vm25 = vcmask 523520
    %26 = vst.msk [vmem:[#allocation0] sm:$0x1] %vm25, %v24
    %s28 = sshllo.u32 0, 1
    %v30 = vld [vmem:[#allocation0] sm:%s28]
    %s31 = sshllo.u32 0, 1
    %32 = vst [vmem:[%s1] sm:%s31] %v30

// kernel: tile.28
$region0: #{tile.28}
  #allocation0 [shape = 's32[1]{0}', space=sflag, size = 0x4, scoped, tag = 'scoped memory for tile.28']
  %s0 = inlined_call_operand.vmem [shape: bf16[16], index: 0, kind: input, shape index: {}]
  %s1 = inlined_call_operand.vmem [shape: bf16[16,1,1,16], index: 1, kind: output, shape index: {}]
  // Predicated region
  $region2: #{tile.28} parent=0 // pred_check
    _
  $region3: #{tile.28} parent=0 // pred_check_branch
    %3 = sbr.rel (0) target = $region5
  $region4: #{tile.28} parent=0 // pred_region
    _
  $region5: #{tile.28} parent=0 // pred_fallthru
    _
  %v4 = vld [vmem:[%s0] ss:$0 sm:$0xff]
  %v5 = vunpack.i.l.bf16 %v4
  %v7 = vunpack.i.h.bf16 %v4
  %v9 = vpack.c.bf16 0.0, %v5
  %10 = vst [vmem:[%s1] sm:$0xf] %v9
  %s11 = scalar_lea.vmem %s1, 4
  %v12 = vpack.c.bf16 0.0, %v5
  %13 = vst [vmem:[%s11] sm:$0xf] %v12

// kernel: tile.32
$region0: #{tile.32}
  %s0 = inlined_call_operand.vmem [shape: bf16[16,1,1,16], index: 0, kind: input, shape index: {}]
  %s1 = inlined_call_operand.vmem [shape: bf16[256,1], index: 1, kind: output, shape index: {}]
  $region1: #{tile.32} parent=0
    #allocation0 [shape = 'u8[8192]{0}', space=vmem, size = 0x2000, scoped, tag = 'scoped mem for output reshape']
    #allocation1 [shape = 'u8[8192]{0}', space=vmem, size = 0x2000, scoped, tag = 'scoped mem for input reshape']
    %s3 = smul.u32 4, 2
    %s4 = sshllo.u32 0, %s3
    %s5 = scalar_lea.vmem %s0, 4
    %s6 = sshrl.u32 %s4, 1
    %s7 = sor.u32 %s4, %s6
    %s8 = sand.u32 %s7, 85
    %s9 = sshrl.u32 %s8, 1
    %s10 = sor.u32 %s8, %s9
    %s11 = sand.u32 51, %s10
    %s12 = sshrl.u32 %s11, 2
    %s13 = sor.u32 %s11, %s12
    %s14 = sand.u32 15, %s13
    %v15 = vld [vmem:[%s5] sm:%s14]
    %v16 = vunpack.c.l.bf16 %v15
    %v17 = vunpack.c.h.bf16 %v15
    %s18 = scalar_lea.vmem [#allocation1], 8
    %19 = vst [vmem:[%s18] sm:%s4] %v16
    %s20 = sshrl.u32 %s4, 1
    %s21 = sor.u32 %s4, %s20
    %s22 = sand.u32 %s21, 85
    %s23 = sshrl.u32 %s22, 1
    %s24 = sor.u32 %s22, %s23
    %s25 = sand.u32 51, %s24
    %s26 = sshrl.u32 %s25, 2
    %s27 = sor.u32 %s25, %s26
    %s28 = sand.u32 15, %s27
    %v29 = vld [vmem:[%s0] sm:%s28]
    %v30 = vunpack.c.l.bf16 %v29
    %v31 = vunpack.c.h.bf16 %v29
    %32 = vst [vmem:[#allocation1] sm:%s4] %v30
    %s33 = smov 3
    %v34 = vld [vmem:[#allocation1] ss:$8 sm:%s33]
    %vm35 = vcmask 130048
    %36 = vst.msk [vmem:[#allocation0] ss:$8 sm:$0x3] %vm35, %v34
    %s37 = scalar_lea.vmem [#allocation1], 7
    %s38 = smov 3
    %v39 = vld [vmem:[%s37] ss:$8 sm:%s38]
    %40 = vrot.lane.b32.xlu0 %v39, 112
    %v41 = vpop.permute.xlu0 %40
    %vm42 = vcmask 1048448
    %43 = vst.msk [vmem:[#allocation0] ss:$8 sm:$0x3] %vm42, %v41
    %s44 = scalar_lea.vmem [#allocation1], 6
    %s45 = smov 3
    %v46 = vld [vmem:[%s44] ss:$8 sm:%s45]
    %47 = vrot.lane.b32.xlu0 %v46, 96
    %v48 = vpop.permute.xlu0 %47
    %vm49 = vcmask 917248
    %50 = vst.msk [vmem:[#allocation0] ss:$8 sm:$0x3] %vm49, %v48
    %s51 = scalar_lea.vmem [#allocation1], 5
    %s52 = smov 3
    %v53 = vld [vmem:[%s51] ss:$8 sm:%s52]
    %54 = vrot.lane.b32.xlu0 %v53, 80
    %v55 = vpop.permute.xlu0 %54
    %vm56 = vcmask 786048
    %57 = vst.msk [vmem:[#allocation0] ss:$8 sm:$0x3] %vm56, %v55
    %s58 = scalar_lea.vmem [#allocation1], 4
    %s59 = smov 3
    %v60 = vld [vmem:[%s58] ss:$8 sm:%s59]
    %61 = vrot.lane.b32.xlu0 %v60, 64
    %v62 = vpop.permute.xlu0 %61
    %vm63 = vcmask 654848
    %64 = vst.msk [vmem:[#allocation0] ss:$8 sm:$0x3] %vm63, %v62
    %s65 = scalar_lea.vmem [#allocation1], 3
    %s66 = smov 3
    %v67 = vld [vmem:[%s65] ss:$8 sm:%s66]
    %68 = vrot.lane.b32.xlu0 %v67, 48
    %v69 = vpop.permute.xlu0 %68
    %vm70 = vcmask 523648
    %71 = vst.msk [vmem:[#allocation0] ss:$8 sm:$0x3] %vm70, %v69
    %s72 = scalar_lea.vmem [#allocation1], 2
    %s73 = smov 3
    %v74 = vld [vmem:[%s72] ss:$8 sm:%s73]
    %75 = vrot.lane.b32.xlu0 %v74, 32
    %v76 = vpop.permute.xlu0 %75
    %vm77 = vcmask 392448
    %78 = vst.msk [vmem:[#allocation0] ss:$8 sm:$0x3] %vm77, %v76
    %s79 = scalar_lea.vmem [#allocation1], 1
    %s80 = smov 3
    %v81 = vld [vmem:[%s79] ss:$8 sm:%s80]
    %82 = vrot.lane.b32.xlu0 %v81, 16
    %v83 = vpop.permute.xlu0 %82
    %vm84 = vcmask 261248
    %85 = vst.msk [vmem:[#allocation0] ss:$8 sm:$0x3] %vm84, %v83
    %s87 = smul.u32 1, 2
    %s88 = sshllo.u32 0, %s87
    %s89 = sshrl.u32 %s87, 1
    %v90 = vld [vmem:[#allocation0] sm:%s88]
    %v91 = vpack.c.bf16 0.0, %v90
    %s92 = sshllo.u32 0, %s89
    %93 = vst [vmem:[%s1] sm:%s92] %v91
    %s94 = scalar_lea.vmem [#allocation0], 8
    %v95 = vld [vmem:[%s94] sm:%s88]
    %v96 = vpack.c.bf16 0.0, %v95
    %s97 = sshllo.u32 0, %s89
    %s98 = scalar_lea.vmem %s1, 1
    %99 = vst [vmem:[%s98] sm:%s97] %v96

// kernel: tile.40
$region0: #{tile.40}
  %s0 = inlined_call_operand.vmem [shape: f32[16,1,1,16], index: 0, kind: input, shape index: {}]
  %s1 = inlined_call_operand.vmem [shape: f32[1,256], index: 1, kind: output, shape index: {}]
  $region1: #{tile.40} parent=0
    #allocation0 [shape = 'u8[8192]{0}', space=vmem, size = 0x2000, scoped, tag = 'scoped mem for output reshape']
    %s2 = smov 3
    %v3 = vld [vmem:[%s0] ss:$8 sm:%s2]
    %vm4 = vcmask 130048
    %5 = vst.msk [vmem:[#allocation0] ss:$8 sm:$0x3] %vm4, %v3
    %s6 = scalar_lea.vmem %s0, 7
    %s7 = smov 3
    %v8 = vld [vmem:[%s6] ss:$8 sm:%s7]
    %9 = vrot.lane.b32.xlu0 %v8, 112
    %v10 = vpop.permute.xlu0 %9
    %vm11 = vcmask 1048448
    %12 = vst.msk [vmem:[#allocation0] ss:$8 sm:$0x3] %vm11, %v10
    %s13 = scalar_lea.vmem %s0, 6
    %s14 = smov 3
    %v15 = vld [vmem:[%s13] ss:$8 sm:%s14]
    %16 = vrot.lane.b32.xlu0 %v15, 96
    %v17 = vpop.permute.xlu0 %16
    %vm18 = vcmask 917248
    %19 = vst.msk [vmem:[#allocation0] ss:$8 sm:$0x3] %vm18, %v17
    %s20 = scalar_lea.vmem %s0, 5
    %s21 = smov 3
    %v22 = vld [vmem:[%s20] ss:$8 sm:%s21]
    %23 = vrot.lane.b32.xlu0 %v22, 80
    %v24 = vpop.permute.xlu0 %23
    %vm25 = vcmask 786048
    %26 = vst.msk [vmem:[#allocation0] ss:$8 sm:$0x3] %vm25, %v24
    %s27 = scalar_lea.vmem %s0, 4
    %s28 = smov 3
    %v29 = vld [vmem:[%s27] ss:$8 sm:%s28]
    %30 = vrot.lane.b32.xlu0 %v29, 64
    %v31 = vpop.permute.xlu0 %30
    %vm32 = vcmask 654848
    %33 = vst.msk [vmem:[#allocation0] ss:$8 sm:$0x3] %vm32, %v31
    %s34 = scalar_lea.vmem %s0, 3
    %s35 = smov 3
    %v36 = vld [vmem:[%s34] ss:$8 sm:%s35]
    %37 = vrot.lane.b32.xlu0 %v36, 48
    %v38 = vpop.permute.xlu0 %37
    %vm39 = vcmask 523648
    %40 = vst.msk [vmem:[#allocation0] ss:$8 sm:$0x3] %vm39, %v38
    %s41 = scalar_lea.vmem %s0, 2
    %s42 = smov 3
    %v43 = vld [vmem:[%s41] ss:$8 sm:%s42]
    %44 = vrot.lane.b32.xlu0 %v43, 32
    %v45 = vpop.permute.xlu0 %44
    %vm46 = vcmask 392448
    %47 = vst.msk [vmem:[#allocation0] ss:$8 sm:$0x3] %vm46, %v45
    %s48 = scalar_lea.vmem %s0, 1
    %s49 = smov 3
    %v50 = vld [vmem:[%s48] ss:$8 sm:%s49]
    %51 = vrot.lane.b32.xlu0 %v50, 16
    %v52 = vpop.permute.xlu0 %51
    %vm53 = vcmask 261248
    %54 = vst.msk [vmem:[#allocation0] ss:$8 sm:$0x3] %vm53, %v52
    %s56 = sshllo.u32 0, 1
    %v58 = vld [vmem:[#allocation0] sm:%s56]
    %s59 = sshllo.u32 0, 1
    %60 = vst [vmem:[%s1] sm:%s59] %v58
    %s61 = scalar_lea.vmem [#allocation0], 8
    %v62 = vld [vmem:[%s61] sm:%s56]
    %s63 = sshllo.u32 0, 1
    %s64 = scalar_lea.vmem %s1, 1
    %65 = vst [vmem:[%s64] sm:%s63] %v62

// kernel: up_affine_with_relu.2
$region0: #{up_affine_with_relu.2}
  #allocation0 [shape = 'u32[]', space=smem, size = 0x4, offset = 0x4, fixed_abs, tag = 'smem constant byte address 0x4 - core index']
  #allocation1 [shape = 'u32[144,128]{1,0:T(1,128)}', space=vmem, size = 0x12000, scoped, tag = 'internal scratch']
  %s0 = inlined_call_operand.vmem [shape: bf16[128,64], index: 0, kind: input, shape index: {}]
  %s1 = inlined_call_operand.vmem [shape: bf16[64,128], index: 1, kind: input, shape index: {}]
  %s2 = inlined_call_operand.vmem [shape: f32[1,128], index: 2, kind: input, shape index: {}]
  %s3 = inlined_call_operand.vmem [shape: bf16[128,128], index: 3, kind: output, shape index: {}]
  %s4 = sld [smem:[#allocation0]]
  $region22: #{up_affine_with_relu.2} parent=0
    _
  %s6 = ssub.s32 1, %s4
  %s7 = scalar_select 0, %s6, %s4
  // Predicated region
  $region2: #{up_affine_with_relu.2} parent=0 // pred_check
    _
  $region3: #{up_affine_with_relu.2} parent=0 // pred_check_branch
    %9 = sbr.rel (0) target = $region5
  $region4: #{up_affine_with_relu.2} parent=0 // pred_region
    _
  $region5: #{up_affine_with_relu.2} parent=0 // pred_fallthru
    _
  // Predicated region
  $region6: #{up_affine_with_relu.2} parent=0 // pred_check
    _
  $region7: #{up_affine_with_relu.2} parent=0 // pred_check_branch
    %11 = sbr.rel (0) target = $region9
  $region8: #{up_affine_with_relu.2} parent=0 // pred_region
    _
  $region9: #{up_affine_with_relu.2} parent=0 // pred_fallthru
    _
  // Predicated region
  $region10: #{up_affine_with_relu.2} parent=0 // pred_check
    _
  $region11: #{up_affine_with_relu.2} parent=0 // pred_check_branch
    %13 = sbr.rel (0) target = $region13
  $region12: #{up_affine_with_relu.2} parent=0 // pred_region
    _
  $region13: #{up_affine_with_relu.2} parent=0 // pred_fallthru
    _
  %v15 = vld [vmem:[%s0] sm:$0xf]
  %v16 = vld [vmem:[%s0 + $0x4] sm:$0xf]
  %v17 = vld [vmem:[%s0 + $0x8] sm:$0xf]
  %v18 = vld [vmem:[%s0 + $0xc] sm:$0xf]
  %v19 = vld [vmem:[%s0 + $0x10] sm:$0xf]
  %v20 = vld [vmem:[%s0 + $0x14] sm:$0xf]
  %v21 = vld [vmem:[%s0 + $0x18] sm:$0xf]
  %v22 = vld [vmem:[%s0 + $0x1c] sm:$0xf]
  %v23 = vld [vmem:[%s0 + $0x20] sm:$0xf]
  %v24 = vld [vmem:[%s0 + $0x24] sm:$0xf]
  %v25 = vld [vmem:[%s0 + $0x28] sm:$0xf]
  %v26 = vld [vmem:[%s0 + $0x2c] sm:$0xf]
  %v27 = vld [vmem:[%s0 + $0x30] sm:$0xf]
  %v28 = vld [vmem:[%s0 + $0x34] sm:$0xf]
  %v29 = vld [vmem:[%s0 + $0x38] sm:$0xf]
  %v30 = vld [vmem:[%s0 + $0x3c] sm:$0xf]
  %v31 = vld [vmem:[%s1] sm:$0xf]
  %v32 = vld [vmem:[%s1 + $0x4] sm:$0xf]
  %v33 = vld [vmem:[%s1 + $0x8] sm:$0xf]
  %v34 = vld [vmem:[%s1 + $0xc] sm:$0xf]
  %v35 = vld [vmem:[%s1 + $0x10] sm:$0xf]
  %v36 = vld [vmem:[%s1 + $0x14] sm:$0xf]
  %v37 = vld [vmem:[%s1 + $0x18] sm:$0xf]
  %v38 = vld [vmem:[%s1 + $0x1c] sm:$0xf]
  %v39 = vld [vmem:[%s2] sm:$0x1]
  %v41 = vlaneseq
  %v42 = vshrl.u32 %v41, 7
  %v43 = vsub.s32 0, %v42
  %v44 = vrot.slane %v39, %v43
  %v62 = vunpack.c.l.b16 %v15
  %v63 = vunpack.c.l.b16 %v16
  %v64 = vunpack.c.l.b16 %v17
  %v65 = vunpack.c.l.b16 %v18
  %v66 = vunpack.c.l.b16 %v19
  %v67 = vunpack.c.l.b16 %v20
  %v68 = vunpack.c.l.b16 %v21
  %v69 = vunpack.c.l.b16 %v22
  %v70 = vunpack.c.l.b16 %v23
  %v71 = vunpack.c.l.b16 %v24
  %v72 = vunpack.c.l.b16 %v25
  %v73 = vunpack.c.l.b16 %v26
  %v74 = vunpack.c.l.b16 %v27
  %v75 = vunpack.c.l.b16 %v28
  %v76 = vunpack.c.l.b16 %v29
  %v77 = vunpack.c.l.b16 %v30
  %v78 = vpack.c.b16 %v63, %v62
  %v79 = vpack.c.b16 %v65, %v64
  %v80 = vpack.c.b16 %v67, %v66
  %v81 = vpack.c.b16 %v69, %v68
  %v82 = vpack.c.b16 %v71, %v70
  %v83 = vpack.c.b16 %v73, %v72
  %v84 = vpack.c.b16 %v75, %v74
  %v85 = vpack.c.b16 %v77, %v76
  %v94 = vunpack.c.l.b16 %v31
  %v95 = vunpack.c.l.b16 %v32
  %v96 = vunpack.c.l.b16 %v33
  %v97 = vunpack.c.l.b16 %v34
  %v98 = vunpack.c.l.b16 %v35
  %v99 = vunpack.c.l.b16 %v36
  %v100 = vunpack.c.l.b16 %v37
  %v101 = vunpack.c.l.b16 %v38
  %v102 = vpack.c.b16 %v95, %v94
  %v103 = vpack.c.b16 %v97, %v96
  %v104 = vpack.c.b16 %v99, %v98
  %v105 = vpack.c.b16 %v101, %v100
  %vm110 = vcmask 523264
  %v112 = vsel %vm110, %v78, 0
  %v115 = vsel %vm110, %v79, 0
  %v118 = vsel %vm110, %v80, 0
  %v121 = vsel %vm110, %v81, 0
  %v124 = vsel %vm110, %v82, 0
  %v127 = vsel %vm110, %v83, 0
  %v130 = vsel %vm110, %v84, 0
  %v133 = vsel %vm110, %v85, 0
  %135 = vmatprep.subr.bf16.mxu0 0
  %136 = vmatpush1.bf16.msra.mxu0 %v102
  %137 = vmatprep.subr.bf16.mxu0 0
  %138 = vmatpush1.bf16.msra.mxu0 %v103
  %139 = vmatprep.subr.bf16.mxu0 0
  %140 = vmatpush1.bf16.msra.mxu0 %v104
  %141 = vmatprep.subr.bf16.mxu0 0
  %142 = vmatpush1.bf16.msra.mxu0 %v105
  %143 = vmatprep.subr.bf16.mxu0 0
  %144 = vmatpush1.bf16.msra.mxu0 0
  %145 = vmatprep.subr.bf16.mxu0 0
  %146 = vmatpush1.bf16.msra.mxu0 0
  %147 = vmatprep.subr.bf16.mxu0 0
  %148 = vmatpush1.bf16.msra.mxu0 0
  %149 = vmatprep.subr.bf16.mxu0 0
  %150 = vmatpush1.bf16.msra.mxu0 0
  %151 = vmatprep.subr.bf16.mxu0 0
  %152 = vmatpush1.bf16.msra.mxu0 0
  %153 = vmatprep.subr.bf16.mxu0 0
  %154 = vmatpush1.bf16.msra.mxu0 0
  %155 = vmatprep.subr.bf16.mxu0 0
  %156 = vmatpush1.bf16.msra.mxu0 0
  %157 = vmatprep.subr.bf16.mxu0 0
  %158 = vmatpush1.bf16.msra.mxu0 0
  %159 = vmatprep.subr.bf16.mxu0 0
  %160 = vmatpush1.bf16.msra.mxu0 0
  %161 = vmatprep.subr.bf16.mxu0 0
  %162 = vmatpush1.bf16.msra.mxu0 0
  %163 = vmatprep.subr.bf16.mxu0 0
  %164 = vmatpush1.bf16.msra.mxu0 0
  %165 = vmatprep.subr.bf16.mxu0 0
  %166 = vmatpush1.bf16.msra.mxu0 0
  %167 = vmatprep.mubr.bf16.mxu0 0
  %168 = vmatmul.mubr.bf16.gmra.mrb[0].mxu0 %v112
  %v169 = vpop.f32.mrb[0].mxu0
  %v170 = vadd.f32 %v44, %v169
  %v171 = vpop.f32.mrb[0].mxu0
  %v172 = vpop.f32.mrb[0].mxu0
  %v173 = vadd.f32 %v44, %v172
  %v174 = vpop.f32.mrb[0].mxu0
  %175 = vmatprep.mubr.bf16.mxu0 0
  %176 = vmatmul.mubr.bf16.gmra.mrb[0].mxu0 %v115
  %v177 = vpop.f32.mrb[0].mxu0
  %v178 = vadd.f32 %v44, %v177
  %v179 = vpop.f32.mrb[0].mxu0
  %v180 = vpop.f32.mrb[0].mxu0
  %v181 = vadd.f32 %v44, %v180
  %v182 = vpop.f32.mrb[0].mxu0
  %183 = vmatprep.mubr.bf16.mxu0 0
  %184 = vmatmul.mubr.bf16.gmra.mrb[0].mxu0 %v118
  %v185 = vpop.f32.mrb[0].mxu0
  %v186 = vadd.f32 %v44, %v185
  %v187 = vpop.f32.mrb[0].mxu0
  %v188 = vpop.f32.mrb[0].mxu0
  %v189 = vadd.f32 %v44, %v188
  %v190 = vpop.f32.mrb[0].mxu0
  %191 = vmatprep.mubr.bf16.mxu0 0
  %192 = vmatmul.mubr.bf16.gmra.mrb[0].mxu0 %v121
  %v193 = vpop.f32.mrb[0].mxu0
  %v194 = vadd.f32 %v44, %v193
  %v195 = vpop.f32.mrb[0].mxu0
  %v196 = vpop.f32.mrb[0].mxu0
  %v197 = vadd.f32 %v44, %v196
  %v198 = vpop.f32.mrb[0].mxu0
  %199 = vmatprep.mubr.bf16.mxu0 0
  %200 = vmatmul.mubr.bf16.gmra.mrb[0].mxu0 %v124
  %v201 = vpop.f32.mrb[0].mxu0
  %v202 = vadd.f32 %v44, %v201
  %v203 = vpop.f32.mrb[0].mxu0
  %v204 = vpop.f32.mrb[0].mxu0
  %v205 = vadd.f32 %v44, %v204
  %v206 = vpop.f32.mrb[0].mxu0
  %207 = vmatprep.mubr.bf16.mxu0 0
  %208 = vmatmul.mubr.bf16.gmra.mrb[0].mxu0 %v127
  %v209 = vpop.f32.mrb[0].mxu0
  %v210 = vadd.f32 %v44, %v209
  %v211 = vpop.f32.mrb[0].mxu0
  %v212 = vpop.f32.mrb[0].mxu0
  %v213 = vadd.f32 %v44, %v212
  %v214 = vpop.f32.mrb[0].mxu0
  %215 = vmatprep.mubr.bf16.mxu0 0
  %216 = vmatmul.mubr.bf16.gmra.mrb[0].mxu0 %v130
  %v217 = vpop.f32.mrb[0].mxu0
  %v218 = vadd.f32 %v44, %v217
  %v219 = vpop.f32.mrb[0].mxu0
  %v220 = vpop.f32.mrb[0].mxu0
  %v221 = vadd.f32 %v44, %v220
  %v222 = vpop.f32.mrb[0].mxu0
  %223 = vmatprep.mubr.bf16.mxu0 0
  %224 = vmatmul.mubr.bf16.gmra.mrb[0].mxu0 %v133
  %v225 = vpop.f32.mrb[0].mxu0
  %v226 = vadd.f32 %v44, %v225
  %v227 = vpop.f32.mrb[0].mxu0
  %v228 = vpop.f32.mrb[0].mxu0
  %v229 = vadd.f32 %v44, %v228
  %v230 = vpop.f32.mrb[0].mxu0
  %231 = vdwg.mxu0
  %v232 = vmax.f32 %v170, 0.0
  %v233 = vmax.f32 %v173, 0.0
  %v234 = vmax.f32 %v178, 0.0
  %v235 = vmax.f32 %v181, 0.0
  %v236 = vmax.f32 %v186, 0.0
  %v237 = vmax.f32 %v189, 0.0
  %v238 = vmax.f32 %v194, 0.0
  %v239 = vmax.f32 %v197, 0.0
  %v240 = vmax.f32 %v202, 0.0
  %v241 = vmax.f32 %v205, 0.0
  %v242 = vmax.f32 %v210, 0.0
  %v243 = vmax.f32 %v213, 0.0
  %v244 = vmax.f32 %v218, 0.0
  %v245 = vmax.f32 %v221, 0.0
  %v246 = vmax.f32 %v226, 0.0
  %v247 = vmax.f32 %v229, 0.0
  %v248 = vpack.c.bf16 %v233, %v232
  %v249 = vpack.c.bf16 %v235, %v234
  %v250 = vpack.c.bf16 %v237, %v236
  %v251 = vpack.c.bf16 %v239, %v238
  %v252 = vpack.c.bf16 %v241, %v240
  %v253 = vpack.c.bf16 %v243, %v242
  %v254 = vpack.c.bf16 %v245, %v244
  %v255 = vpack.c.bf16 %v247, %v246
  %v264 = vunpack.c.l.b16 %v248
  %v265 = vunpack.c.h.b16 %v248
  %v266 = vunpack.c.l.b16 %v249
  %v267 = vunpack.c.h.b16 %v249
  %v268 = vunpack.c.l.b16 %v250
  %v269 = vunpack.c.h.b16 %v250
  %v270 = vunpack.c.l.b16 %v251
  %v271 = vunpack.c.h.b16 %v251
  %v272 = vunpack.c.l.b16 %v252
  %v273 = vunpack.c.h.b16 %v252
  %v274 = vunpack.c.l.b16 %v253
  %v275 = vunpack.c.h.b16 %v253
  %v276 = vunpack.c.l.b16 %v254
  %v277 = vunpack.c.h.b16 %v254
  %v278 = vunpack.c.l.b16 %v255
  %v279 = vunpack.c.h.b16 %v255
  %v280 = vpack.c.b16 %v264, %v264
  %v281 = vpack.c.b16 %v265, %v265
  %v282 = vpack.c.b16 %v266, %v266
  %v283 = vpack.c.b16 %v267, %v267
  %v284 = vpack.c.b16 %v268, %v268
  %v285 = vpack.c.b16 %v269, %v269
  %v286 = vpack.c.b16 %v270, %v270
  %v287 = vpack.c.b16 %v271, %v271
  %v288 = vpack.c.b16 %v272, %v272
  %v289 = vpack.c.b16 %v273, %v273
  %v290 = vpack.c.b16 %v274, %v274
  %v291 = vpack.c.b16 %v275, %v275
  %v292 = vpack.c.b16 %v276, %v276
  %v293 = vpack.c.b16 %v277, %v277
  %v294 = vpack.c.b16 %v278, %v278
  %v295 = vpack.c.b16 %v279, %v279
  %312 = vst [vmem:[%s3] sm:$0xf] %v280
  %313 = vst [vmem:[%s3 + $0x4] sm:$0xf] %v281
  %314 = vst [vmem:[%s3 + $0x8] sm:$0xf] %v282
  %315 = vst [vmem:[%s3 + $0xc] sm:$0xf] %v283
  %316 = vst [vmem:[%s3 + $0x10] sm:$0xf] %v284
  %317 = vst [vmem:[%s3 + $0x14] sm:$0xf] %v285
  %318 = vst [vmem:[%s3 + $0x18] sm:$0xf] %v286
  %319 = vst [vmem:[%s3 + $0x1c] sm:$0xf] %v287
  %320 = vst [vmem:[%s3 + $0x20] sm:$0xf] %v288
  %321 = vst [vmem:[%s3 + $0x24] sm:$0xf] %v289
  %322 = vst [vmem:[%s3 + $0x28] sm:$0xf] %v290
  %323 = vst [vmem:[%s3 + $0x2c] sm:$0xf] %v291
  %324 = vst [vmem:[%s3 + $0x30] sm:$0xf] %v292
  %325 = vst [vmem:[%s3 + $0x34] sm:$0xf] %v293
  %326 = vst [vmem:[%s3 + $0x38] sm:$0xf] %v294
  %327 = vst [vmem:[%s3 + $0x3c] sm:$0xf] %v295
  // Predicated region
  $region14: #{up_affine_with_relu.2} parent=0 // pred_check
    _
  $region15: #{up_affine_with_relu.2} parent=0 // pred_check_branch
    %329 = sbr.rel (0) target = $region17
  $region16: #{up_affine_with_relu.2} parent=0 // pred_region
    _
  $region17: #{up_affine_with_relu.2} parent=0 // pred_fallthru
    _
  // Predicated region
  $region18: #{up_affine_with_relu.2} parent=0 // pred_check
    _
  $region19: #{up_affine_with_relu.2} parent=0 // pred_check_branch
    %331 = sbr.rel (0) target = $region21
  $region20: #{up_affine_with_relu.2} parent=0 // pred_region
    _
  $region21: #{up_affine_with_relu.2} parent=0 // pred_fallthru
    _

// kernel: up_affine_with_relu.3
$region0: #{up_affine_with_relu.3}
  #allocation0 [shape = 'u32[]', space=smem, size = 0x4, offset = 0x4, fixed_abs, tag = 'smem constant byte address 0x4 - core index']
  #allocation1 [shape = 'u32[144,128]{1,0:T(1,128)}', space=vmem, size = 0x12000, scoped, tag = 'internal scratch']
  #allocation2 [shape = 'f32[18,18,128]{2,1,0:T(8,128)}', space=vmem, size = 0x36000, scoped, tag = 'scratch operand']
  #allocation3 [shape = 'bf16[256,1152]{1,0:T(16,128)(2,1)}', space=vmem, size = 0x90000, scoped, tag = 'scratch operand']
  #allocation4 [shape = 'f32[18,18,128]{2,1,0:T(8,128)}', space=vmem, size = 0x36000, scoped, tag = 'scratch operand']
  %s0 = inlined_call_operand.vmem [shape: f32[2,256,2], index: 0, kind: input, shape index: {}]
  %s1 = inlined_call_operand.vmem [shape: f32[1,2,256], index: 1, kind: input, shape index: {}]
  %s2 = inlined_call_operand.vmem [shape: bf16[2,16,16,32], index: 2, kind: input, shape index: {}]
  %s3 = inlined_call_operand.vmem [shape: bf16[2,16,16,32], index: 3, kind: input, shape index: {}]
  %s4 = inlined_call_operand.vmem [shape: bf16[1152,128], index: 4, kind: input, shape index: {}]
  %s5 = inlined_call_operand.vmem [shape: f32[1,128], index: 5, kind: input, shape index: {}]
  %s6 = inlined_call_operand.vmem [shape: bf16[1152,128], index: 6, kind: input, shape index: {}]
  %s7 = inlined_call_operand.vmem [shape: f32[1,128], index: 7, kind: input, shape index: {}]
  %s8 = inlined_call_operand.hbm [shape: f32[2,16,16,128], index: 8, kind: output, shape index: {}]
  %s9 = sld [smem:[#allocation0]]
  $region65: #{up_affine_with_relu.3} parent=0
    _
  %s11 = ssub.s32 1, %s9
  %s12 = scalar_select 0, %s11, %s9
  $region1: #{up_affine_with_relu.3} parent=0
    #allocation5 [shape = 'u8[262144]{0}', space=vmem, size = 0x40000, scoped, tag = 'output window, operand 0']
    #allocation6 [shape = 's32[2]{0}', space=sflag, size = 0x8, scoped, tag = 'scoped memory for up_affine_with_relu.3']
    %13 = vsyncpa [#allocation6], 0
    %s14 = scalar_lea.sflag [#allocation6], 1
    %15 = vsyncpa %s14, 0
    loop: start=0, step=1, limit=4
    $region2: #{up_affine_with_relu.3} parent=1 // loop_pre_header
      _
    $region3: #{up_affine_with_relu.3} parent=1 // loop_header
      %s17 = sphi 0, %s21
      %p18 = scmp.ge.s32.totalorder %s17, 4
      %s27 = sphi 0, %s29
      %s30 = sphi 0, %s27
      %s31 = sphi 0, %s30
      %s47 = sphi 0, %s31
      %s51 = sphi 0, %s51
      %s53 = sphi 0, %s51
      %s54 = sphi 0, %s53
      %s68 = sphi 0, %s54
      %s74 = sphi 0, %s76
      %s77 = sphi 0, %s74
      %s78 = sphi 0, %s77
      %s94 = sphi 0, %s78
      %s100 = sphi 0, %s102
      %s103 = sphi 0, %s100
      %s104 = sphi 0, %s103
      %s120 = sphi 0, %s104
      %s124 = sphi 0, %s124
      %s126 = sphi 0, %s124
      %s127 = sphi 0, %s126
      %s141 = sphi 0, %s127
      %s145 = sphi 0, %s145
      %s147 = sphi 0, %s145
      %s148 = sphi 0, %s147
      %s162 = sphi 0, %s148
      %s166 = sphi 0, %s166
      %s168 = sphi 0, %s166
      %s169 = sphi 0, %s168
      %s183 = sphi 0, %s169
      %s187 = sphi 0, %s187
      %s189 = sphi 0, %s187
      %s190 = sphi 0, %s189
      %s204 = sphi 0, %s190
      %s210 = sphi 0, %s212
      %s213 = sphi 0, %s210
      %s214 = sphi 0, %s213
      %s230 = sphi 0, %s214
    $region4: #{up_affine_with_relu.3} parent=1 // loop_header_branch
      %20 = sbr.rel (%p18) target = $region8
    $region5: #{up_affine_with_relu.3} parent=1 // loop_body
      %s22 = ssub.s32 %s17, 1
      %s23 = ssub.s32 %s17, 2
      %s24 = sadd.s32 %s17, 1
      %s25 = ssub.s32 %s17, %s24
      %p26 = scmp.eq.s32.totalorder %s25, 0
      %s28 = sadd.s32 %s27, 1
      %s29 = scalar_select %p26, %s27, %s28
      %p32 = pneg %p26
      %p33 = scmp.eq.s32.totalorder %s17, 1
      %p34 = por %p32, %p33
      %p35 = scmp.ne.s32.totalorder %s27, %s30
      %p36 = scmp.eq.s32.totalorder %s17, 0
      %p37 = por %p35, %p36
      %p38 = scmp.ne.s32.totalorder %s27, %s30
      %p39 = scmp.eq.s32.totalorder %s22, 1
      %p40 = por %p38, %p39
      %p41 = scmp.ne.s32.totalorder %s30, %s31
      %p42 = scmp.eq.s32.totalorder %s22, 0
      %p43 = por %p41, %p42
      %p44 = scmp.ne.s32.totalorder %s30, %s31
      %p45 = scmp.eq.s32.totalorder %s23, 1
      %p46 = por %p44, %p45
      %p48 = scmp.ne.s32.totalorder %s31, %s47
      %p49 = scmp.eq.s32.totalorder %s23, 0
      %p50 = por %p48, %p49
      %s52 = sadd.s32 %s51, 1
      %p55 = scmp.eq.s32.totalorder %s17, 1
      %p56 = scmp.ne.s32.totalorder %s51, %s53
      %p57 = scmp.eq.s32.totalorder %s17, 0
      %p58 = por %p56, %p57
      %p59 = scmp.ne.s32.totalorder %s51, %s53
      %p60 = scmp.eq.s32.totalorder %s22, 1
      %p61 = por %p59, %p60
      %p62 = scmp.ne.s32.totalorder %s53, %s54
      %p63 = scmp.eq.s32.totalorder %s22, 0
      %p64 = por %p62, %p63
      %p65 = scmp.ne.s32.totalorder %s53, %s54
      %p66 = scmp.eq.s32.totalorder %s23, 1
      %p67 = por %p65, %p66
      %p69 = scmp.ne.s32.totalorder %s54, %s68
      %p70 = scmp.eq.s32.totalorder %s23, 0
      %p71 = por %p69, %p70
      %s72 = ssub.s32 %s17, %s24
      %p73 = scmp.eq.s32.totalorder %s72, 0
      %s75 = sadd.s32 %s74, 1
      %s76 = scalar_select %p73, %s74, %s75
      %p79 = pneg %p73
      %p80 = scmp.eq.s32.totalorder %s17, 1
      %p81 = por %p79, %p80
      %p82 = scmp.ne.s32.totalorder %s74, %s77
      %p83 = scmp.eq.s32.totalorder %s17, 0
      %p84 = por %p82, %p83
      %p85 = scmp.ne.s32.totalorder %s74, %s77
      %p86 = scmp.eq.s32.totalorder %s22, 1
      %p87 = por %p85, %p86
      %p88 = scmp.ne.s32.totalorder %s77, %s78
      %p89 = scmp.eq.s32.totalorder %s22, 0
      %p90 = por %p88, %p89
      %p91 = scmp.ne.s32.totalorder %s77, %s78
      %p92 = scmp.eq.s32.totalorder %s23, 1
      %p93 = por %p91, %p92
      %p95 = scmp.ne.s32.totalorder %s78, %s94
      %p96 = scmp.eq.s32.totalorder %s23, 0
      %p97 = por %p95, %p96
      %s98 = ssub.s32 %s17, %s24
      %p99 = scmp.eq.s32.totalorder %s98, 0
      %s101 = sadd.s32 %s100, 1
      %s102 = scalar_select %p99, %s100, %s101
      %p105 = pneg %p99
      %p106 = scmp.eq.s32.totalorder %s17, 1
      %p107 = por %p105, %p106
      %p108 = scmp.ne.s32.totalorder %s100, %s103
      %p109 = scmp.eq.s32.totalorder %s17, 0
      %p110 = por %p108, %p109
      %p111 = scmp.ne.s32.totalorder %s100, %s103
      %p112 = scmp.eq.s32.totalorder %s22, 1
      %p113 = por %p111, %p112
      %p114 = scmp.ne.s32.totalorder %s103, %s104
      %p115 = scmp.eq.s32.totalorder %s22, 0
      %p116 = por %p114, %p115
      %p117 = scmp.ne.s32.totalorder %s103, %s104
      %p118 = scmp.eq.s32.totalorder %s23, 1
      %p119 = por %p117, %p118
      %p121 = scmp.ne.s32.totalorder %s104, %s120
      %p122 = scmp.eq.s32.totalorder %s23, 0
      %p123 = por %p121, %p122
      %s125 = sadd.s32 %s124, 1
      %p128 = scmp.eq.s32.totalorder %s17, 1
      %p129 = scmp.ne.s32.totalorder %s124, %s126
      %p130 = scmp.eq.s32.totalorder %s17, 0
      %p131 = por %p129, %p130
      %p132 = scmp.ne.s32.totalorder %s124, %s126
      %p133 = scmp.eq.s32.totalorder %s22, 1
      %p134 = por %p132, %p133
      %p135 = scmp.ne.s32.totalorder %s126, %s127
      %p136 = scmp.eq.s32.totalorder %s22, 0
      %p137 = por %p135, %p136
      %p138 = scmp.ne.s32.totalorder %s126, %s127
      %p139 = scmp.eq.s32.totalorder %s23, 1
      %p140 = por %p138, %p139
      %p142 = scmp.ne.s32.totalorder %s127, %s141
      %p143 = scmp.eq.s32.totalorder %s23, 0
      %p144 = por %p142, %p143
      %s146 = sadd.s32 %s145, 1
      %p149 = scmp.eq.s32.totalorder %s17, 1
      %p150 = scmp.ne.s32.totalorder %s145, %s147
      %p151 = scmp.eq.s32.totalorder %s17, 0
      %p152 = por %p150, %p151
      %p153 = scmp.ne.s32.totalorder %s145, %s147
      %p154 = scmp.eq.s32.totalorder %s22, 1
      %p155 = por %p153, %p154
      %p156 = scmp.ne.s32.totalorder %s147, %s148
      %p157 = scmp.eq.s32.totalorder %s22, 0
      %p158 = por %p156, %p157
      %p159 = scmp.ne.s32.totalorder %s147, %s148
      %p160 = scmp.eq.s32.totalorder %s23, 1
      %p161 = por %p159, %p160
      %p163 = scmp.ne.s32.totalorder %s148, %s162
      %p164 = scmp.eq.s32.totalorder %s23, 0
      %p165 = por %p163, %p164
      %s167 = sadd.s32 %s166, 1
      %p170 = scmp.eq.s32.totalorder %s17, 1
      %p171 = scmp.ne.s32.totalorder %s166, %s168
      %p172 = scmp.eq.s32.totalorder %s17, 0
      %p173 = por %p171, %p172
      %p174 = scmp.ne.s32.totalorder %s166, %s168
      %p175 = scmp.eq.s32.totalorder %s22, 1
      %p176 = por %p174, %p175
      %p177 = scmp.ne.s32.totalorder %s168, %s169
      %p178 = scmp.eq.s32.totalorder %s22, 0
      %p179 = por %p177, %p178
      %p180 = scmp.ne.s32.totalorder %s168, %s169
      %p181 = scmp.eq.s32.totalorder %s23, 1
      %p182 = por %p180, %p181
      %p184 = scmp.ne.s32.totalorder %s169, %s183
      %p185 = scmp.eq.s32.totalorder %s23, 0
      %p186 = por %p184, %p185
      %s188 = sadd.s32 %s187, 1
      %p191 = scmp.eq.s32.totalorder %s17, 1
      %p192 = scmp.ne.s32.totalorder %s187, %s189
      %p193 = scmp.eq.s32.totalorder %s17, 0
      %p194 = por %p192, %p193
      %p195 = scmp.ne.s32.totalorder %s187, %s189
      %p196 = scmp.eq.s32.totalorder %s22, 1
      %p197 = por %p195, %p196
      %p198 = scmp.ne.s32.totalorder %s189, %s190
      %p199 = scmp.eq.s32.totalorder %s22, 0
      %p200 = por %p198, %p199
      %p201 = scmp.ne.s32.totalorder %s189, %s190
      %p202 = scmp.eq.s32.totalorder %s23, 1
      %p203 = por %p201, %p202
      %p205 = scmp.ne.s32.totalorder %s190, %s204
      %p206 = scmp.eq.s32.totalorder %s23, 0
      %p207 = por %p205, %p206
      %s208 = ssub.s32 %s17, %s24
      %p209 = scmp.eq.s32.totalorder %s208, 0
      %s211 = sadd.s32 %s210, 1
      %s212 = scalar_select %p209, %s210, %s211
      %p215 = pneg %p209
      %p216 = scmp.eq.s32.totalorder %s17, 1
      %p217 = por %p215, %p216
      %p218 = scmp.ne.s32.totalorder %s210, %s213
      %p219 = scmp.eq.s32.totalorder %s17, 0
      %p220 = por %p218, %p219
      %p221 = scmp.ne.s32.totalorder %s210, %s213
      %p222 = scmp.eq.s32.totalorder %s22, 1
      %p223 = por %p221, %p222
      %p224 = scmp.ne.s32.totalorder %s213, %s214
      %p225 = scmp.eq.s32.totalorder %s22, 0
      %p226 = por %p224, %p225
      %p227 = scmp.ne.s32.totalorder %s213, %s214
      %p228 = scmp.eq.s32.totalorder %s23, 1
      %p229 = por %p227, %p228
      %p231 = scmp.ne.s32.totalorder %s214, %s230
      %p232 = scmp.eq.s32.totalorder %s23, 0
      %p233 = por %p231, %p232
      %p234 = scmp.le.s32.totalorder 1, %s17
      %p235 = scmp.lt.s32.totalorder %s17, 3
      %p236 = pnand %p234, %p235
      %p237 = pneg %p236
      // Predicated region
      $region9: #{up_affine_with_relu.3} parent=5 // pred_check
        _
      $region10: #{up_affine_with_relu.3} parent=5 // pred_check_branch
        %239 = sbr.rel (%p236) target = $region12
      $region11: #{up_affine_with_relu.3} parent=5 // pred_region
        %s240 = ssub.s32 %s17, 1
        // Predicated region
        $region13: #{up_affine_with_relu.3} parent=11 // pred_check
          %p241 = pneg %p64
        $region14: #{up_affine_with_relu.3} parent=11 // pred_check_branch
          %243 = sbr.rel (%p241) target = $region16
        $region15: #{up_affine_with_relu.3} parent=11 // pred_region
          _
        $region16: #{up_affine_with_relu.3} parent=11 // pred_fallthru
          _
        // Predicated region
        $region17: #{up_affine_with_relu.3} parent=11 // pred_check
          %p244 = pneg %p137
        $region18: #{up_affine_with_relu.3} parent=11 // pred_check_branch
          %246 = sbr.rel (%p244) target = $region20
        $region19: #{up_affine_with_relu.3} parent=11 // pred_region
          _
        $region20: #{up_affine_with_relu.3} parent=11 // pred_fallthru
          _
        // Predicated region
        $region21: #{up_affine_with_relu.3} parent=11 // pred_check
          %p247 = pneg %p158
        $region22: #{up_affine_with_relu.3} parent=11 // pred_check_branch
          %249 = sbr.rel (%p247) target = $region24
        $region23: #{up_affine_with_relu.3} parent=11 // pred_region
          _
        $region24: #{up_affine_with_relu.3} parent=11 // pred_fallthru
          _
        // Predicated region
        $region25: #{up_affine_with_relu.3} parent=11 // pred_check
          %p250 = pneg %p179
        $region26: #{up_affine_with_relu.3} parent=11 // pred_check_branch
          %252 = sbr.rel (%p250) target = $region28
        $region27: #{up_affine_with_relu.3} parent=11 // pred_region
          _
        $region28: #{up_affine_with_relu.3} parent=11 // pred_fallthru
          _
        // Predicated region
        $region29: #{up_affine_with_relu.3} parent=11 // pred_check
          %p253 = pneg %p200
        $region30: #{up_affine_with_relu.3} parent=11 // pred_check_branch
          %255 = sbr.rel (%p253) target = $region32
        $region31: #{up_affine_with_relu.3} parent=11 // pred_region
          _
        $region32: #{up_affine_with_relu.3} parent=11 // pred_fallthru
          _
      $region12: #{up_affine_with_relu.3} parent=5 // pred_fallthru
        _
      %p256 = scmp.lt.s32.totalorder %s17, 2
      // Predicated region
      $region33: #{up_affine_with_relu.3} parent=5 // pred_check
        %p257 = pneg %p256
      $region34: #{up_affine_with_relu.3} parent=5 // pred_check_branch
        %259 = sbr.rel (%p257) target = $region36
      $region35: #{up_affine_with_relu.3} parent=5 // pred_region
        // Predicated region
        $region37: #{up_affine_with_relu.3} parent=35 // pred_check
          %p260 = pneg %p37
        $region38: #{up_affine_with_relu.3} parent=35 // pred_check_branch
          %262 = sbr.rel (%p260) target = $region40
        $region39: #{up_affine_with_relu.3} parent=35 // pred_region
          %p263 = scmp.lt.s32.totalorder %s17, 1
          %s264 = scalar_select %p263, %s17, 1
          %s265 = smul.addr %s264, 32
          %s266 = smul.addr %s265, 8
          %s267 = scalar_lea.vmem %s0, %s266
        $region40: #{up_affine_with_relu.3} parent=35 // pred_fallthru
          _
        // Predicated region
        $region41: #{up_affine_with_relu.3} parent=35 // pred_check
          %p268 = pneg %p84
        $region42: #{up_affine_with_relu.3} parent=35 // pred_check_branch
          %270 = sbr.rel (%p268) target = $region44
        $region43: #{up_affine_with_relu.3} parent=35 // pred_region
          %p271 = scmp.lt.s32.totalorder %s17, 1
          %s272 = scalar_select %p271, %s17, 1
          %s273 = smul.addr %s272, 32
          %s274 = smul.addr %s273, 4
          %s275 = scalar_lea.vmem %s2, %s274
        $region44: #{up_affine_with_relu.3} parent=35 // pred_fallthru
          _
        // Predicated region
        $region45: #{up_affine_with_relu.3} parent=35 // pred_check
          %p276 = pneg %p110
        $region46: #{up_affine_with_relu.3} parent=35 // pred_check_branch
          %278 = sbr.rel (%p276) target = $region48
        $region47: #{up_affine_with_relu.3} parent=35 // pred_region
          %p279 = scmp.lt.s32.totalorder %s17, 1
          %s280 = scalar_select %p279, %s17, 1
          %s281 = smul.addr %s280, 32
          %s282 = smul.addr %s281, 4
          %s283 = scalar_lea.vmem %s3, %s282
        $region48: #{up_affine_with_relu.3} parent=35 // pred_fallthru
          _
      $region36: #{up_affine_with_relu.3} parent=5 // pred_fallthru
        _
      %p284 = scmp.le.s32.totalorder 1, %s17
      %p285 = scmp.lt.s32.totalorder %s17, 3
      %p286 = pnand %p284, %p285
      %p287 = pneg %p286
      // Predicated region
      $region49: #{up_affine_with_relu.3} parent=5 // pred_check
        _
      $region50: #{up_affine_with_relu.3} parent=5 // pred_check_branch
        %289 = sbr.rel (%p286) target = $region52
      $region51: #{up_affine_with_relu.3} parent=5 // pred_region
        %s290 = ssub.s32 %s17, 1
        %p291 = scmp.lt.s32.totalorder %s22, 1
        %s292 = scalar_select %p291, %s22, 1
        %s293 = smul.addr %s292, 32
        %s294 = smul.addr %s293, 8
        %s295 = scalar_lea.vmem %s0, %s294
        %p296 = pneg %p43
        %p297 = pneg %p40
        %p298 = pneg %p64
        %p299 = pneg %p61
        %p300 = scmp.lt.s32.totalorder %s22, 1
        %s301 = scalar_select %p300, %s22, 1
        %s302 = smul.addr %s301, 32
        %s303 = smul.addr %s302, 4
        %s304 = scalar_lea.vmem %s2, %s303
        %p305 = pneg %p90
        %p306 = pneg %p87
        %p307 = scmp.lt.s32.totalorder %s22, 1
        %s308 = scalar_select %p307, %s22, 1
        %s309 = smul.addr %s308, 32
        %s310 = smul.addr %s309, 4
        %s311 = scalar_lea.vmem %s3, %s310
        %p312 = pneg %p116
        %p313 = pneg %p113
        %p314 = pneg %p137
        %p315 = pneg %p134
        %p316 = pneg %p158
        %p317 = pneg %p155
        %p318 = pneg %p179
        %p319 = pneg %p176
        %p320 = pneg %p200
        %p321 = pneg %p197
        %p322 = pneg %p226
        %p323 = pneg %p223
        %s324 = sand.u32 %s213, 1
        %s325 = scalar_lea.sflag [#allocation6], %s324
        %s326 = sand.u32 %s213, 1
        %s327 = smul.addr %s326, 256
        %s328 = scalar_lea.vmem [#allocation5], %s327
        %p329 = scmp.lt.s32.totalorder %s22, 1
        %s330 = scalar_select %p329, %s22, 1
        %s331 = smul.addr %s330, 32
        %s332 = smul.addr %s331, 8
        %s333 = scalar_lea.vmem %s0, %s332
        %p334 = scmp.lt.s32.totalorder %s22, 1
        %s335 = scalar_select %p334, %s22, 1
        %s336 = smul.addr %s335, 32
        %s337 = smul.addr %s336, 4
        %s338 = scalar_lea.vmem %s2, %s337
        %p339 = scmp.lt.s32.totalorder %s22, 1
        %s340 = scalar_select %p339, %s22, 1
        %s341 = smul.addr %s340, 32
        %s342 = smul.addr %s341, 4
        %s343 = scalar_lea.vmem %s3, %s342
        %v345 = vld [vmem:[%s333] sm:$0xff]
        %v346 = vld [vmem:[%s333 + $0x8] sm:$0xff]
        %v347 = vld [vmem:[%s333 + $0x10] sm:$0xff]
        %v348 = vld [vmem:[%s333 + $0x18] sm:$0xff]
        %v349 = vld [vmem:[%s333 + $0x20] sm:$0xff]
        %v350 = vld [vmem:[%s333 + $0x28] sm:$0xff]
        %v351 = vld [vmem:[%s333 + $0x30] sm:$0xff]
        %v352 = vld [vmem:[%s333 + $0x38] sm:$0xff]
        %v353 = vld [vmem:[%s333 + $0x40] sm:$0xff]
        %v354 = vld [vmem:[%s333 + $0x48] sm:$0xff]
        %v355 = vld [vmem:[%s333 + $0x50] sm:$0xff]
        %v356 = vld [vmem:[%s333 + $0x58] sm:$0xff]
        %v357 = vld [vmem:[%s333 + $0x60] sm:$0xff]
        %v358 = vld [vmem:[%s333 + $0x68] sm:$0xff]
        %v359 = vld [vmem:[%s333 + $0x70] sm:$0xff]
        %v360 = vld [vmem:[%s333 + $0x78] sm:$0xff]
        %v361 = vld [vmem:[%s333 + $0x80] sm:$0xff]
        %v362 = vld [vmem:[%s333 + $0x88] sm:$0xff]
        %v363 = vld [vmem:[%s333 + $0x90] sm:$0xff]
        %v364 = vld [vmem:[%s333 + $0x98] sm:$0xff]
        %v365 = vld [vmem:[%s333 + $0xa0] sm:$0xff]
        %v366 = vld [vmem:[%s333 + $0xa8] sm:$0xff]
        %v367 = vld [vmem:[%s333 + $0xb0] sm:$0xff]
        %v368 = vld [vmem:[%s333 + $0xb8] sm:$0xff]
        %v369 = vld [vmem:[%s333 + $0xc0] sm:$0xff]
        %v370 = vld [vmem:[%s333 + $0xc8] sm:$0xff]
        %v371 = vld [vmem:[%s333 + $0xd0] sm:$0xff]
        %v372 = vld [vmem:[%s333 + $0xd8] sm:$0xff]
        %v373 = vld [vmem:[%s333 + $0xe0] sm:$0xff]
        %v374 = vld [vmem:[%s333 + $0xe8] sm:$0xff]
        %v375 = vld [vmem:[%s333 + $0xf0] sm:$0xff]
        %v376 = vld [vmem:[%s333 + $0xf8] sm:$0xff]
        %v377 = vld [vmem:[%s1] ss:$2 sm:$0x3]
        %s378 = scalar_lea.vmem %s1, 1
        %v379 = vld [vmem:[%s378] ss:$2 sm:$0x3]
        %381 = vset.pattern.permute.xlu0 0
        %382 = vperm.xlu0 %381, %v345
        %v383 = vpop.permute.xlu0 %382
        %386 = vset.pattern.permute.xlu0 0
        %387 = vperm.xlu0 %386, %v346
        %v388 = vpop.permute.xlu0 %387
        %391 = vset.pattern.permute.xlu0 0
        %392 = vperm.xlu0 %391, %v347
        %v393 = vpop.permute.xlu0 %392
        %396 = vset.pattern.permute.xlu0 0
        %397 = vperm.xlu0 %396, %v348
        %v398 = vpop.permute.xlu0 %397
        %401 = vset.pattern.permute.xlu0 0
        %402 = vperm.xlu0 %401, %v349
        %v403 = vpop.permute.xlu0 %402
        %406 = vset.pattern.permute.xlu0 0
        %407 = vperm.xlu0 %406, %v350
        %v408 = vpop.permute.xlu0 %407
        %411 = vset.pattern.permute.xlu0 0
        %412 = vperm.xlu0 %411, %v351
        %v413 = vpop.permute.xlu0 %412
        %416 = vset.pattern.permute.xlu0 0
        %417 = vperm.xlu0 %416, %v352
        %v418 = vpop.permute.xlu0 %417
        %421 = vset.pattern.permute.xlu0 0
        %422 = vperm.xlu0 %421, %v353
        %v423 = vpop.permute.xlu0 %422
        %426 = vset.pattern.permute.xlu0 0
        %427 = vperm.xlu0 %426, %v354
        %v428 = vpop.permute.xlu0 %427
        %431 = vset.pattern.permute.xlu0 0
        %432 = vperm.xlu0 %431, %v355
        %v433 = vpop.permute.xlu0 %432
        %436 = vset.pattern.permute.xlu0 0
        %437 = vperm.xlu0 %436, %v356
        %v438 = vpop.permute.xlu0 %437
        %441 = vset.pattern.permute.xlu0 0
        %442 = vperm.xlu0 %441, %v357
        %v443 = vpop.permute.xlu0 %442
        %446 = vset.pattern.permute.xlu0 0
        %447 = vperm.xlu0 %446, %v358
        %v448 = vpop.permute.xlu0 %447
        %451 = vset.pattern.permute.xlu0 0
        %452 = vperm.xlu0 %451, %v359
        %v453 = vpop.permute.xlu0 %452
        %456 = vset.pattern.permute.xlu0 0
        %457 = vperm.xlu0 %456, %v360
        %v458 = vpop.permute.xlu0 %457
        %461 = vset.pattern.permute.xlu0 0
        %462 = vperm.xlu0 %461, %v361
        %v463 = vpop.permute.xlu0 %462
        %466 = vset.pattern.permute.xlu0 0
        %467 = vperm.xlu0 %466, %v362
        %v468 = vpop.permute.xlu0 %467
        %471 = vset.pattern.permute.xlu0 0
        %472 = vperm.xlu0 %471, %v363
        %v473 = vpop.permute.xlu0 %472
        %476 = vset.pattern.permute.xlu0 0
        %477 = vperm.xlu0 %476, %v364
        %v478 = vpop.permute.xlu0 %477
        %481 = vset.pattern.permute.xlu0 0
        %482 = vperm.xlu0 %481, %v365
        %v483 = vpop.permute.xlu0 %482
        %486 = vset.pattern.permute.xlu0 0
        %487 = vperm.xlu0 %486, %v366
        %v488 = vpop.permute.xlu0 %487
        %491 = vset.pattern.permute.xlu0 0
        %492 = vperm.xlu0 %491, %v367
        %v493 = vpop.permute.xlu0 %492
        %496 = vset.pattern.permute.xlu0 0
        %497 = vperm.xlu0 %496, %v368
        %v498 = vpop.permute.xlu0 %497
        %501 = vset.pattern.permute.xlu0 0
        %502 = vperm.xlu0 %501, %v369
        %v503 = vpop.permute.xlu0 %502
        %506 = vset.pattern.permute.xlu0 0
        %507 = vperm.xlu0 %506, %v370
        %v508 = vpop.permute.xlu0 %507
        %511 = vset.pattern.permute.xlu0 0
        %512 = vperm.xlu0 %511, %v371
        %v513 = vpop.permute.xlu0 %512
        %516 = vset.pattern.permute.xlu0 0
        %517 = vperm.xlu0 %516, %v372
        %v518 = vpop.permute.xlu0 %517
        %521 = vset.pattern.permute.xlu0 0
        %522 = vperm.xlu0 %521, %v373
        %v523 = vpop.permute.xlu0 %522
        %526 = vset.pattern.permute.xlu0 0
        %527 = vperm.xlu0 %526, %v374
        %v528 = vpop.permute.xlu0 %527
        %531 = vset.pattern.permute.xlu0 0
        %532 = vperm.xlu0 %531, %v375
        %v533 = vpop.permute.xlu0 %532
        %536 = vset.pattern.permute.xlu0 0
        %537 = vperm.xlu0 %536, %v376
        %v538 = vpop.permute.xlu0 %537
        %v541 = vlaneseq
        %v542 = vshrl.u32 %v541, 7
        %v543 = vsub.s32 0, %v542
        %v544 = vrot.slane %v377, %v543
        %v545 = vlaneseq
        %v546 = vshrl.u32 %v545, 7
        %v547 = vsub.s32 1, %v546
        %v548 = vrot.slane %v377, %v547
        %v551 = vsub.f32 %v383, %v544
        %v552 = vsub.f32 %v383, %v548
        %v553 = vsub.f32 %v388, %v544
        %v554 = vsub.f32 %v388, %v548
        %v555 = vsub.f32 %v393, %v544
        %v556 = vsub.f32 %v393, %v548
        %v557 = vsub.f32 %v398, %v544
        %v558 = vsub.f32 %v398, %v548
        %v559 = vsub.f32 %v403, %v544
        %v560 = vsub.f32 %v403, %v548
        %v561 = vsub.f32 %v408, %v544
        %v562 = vsub.f32 %v408, %v548
        %v563 = vsub.f32 %v413, %v544
        %v564 = vsub.f32 %v413, %v548
        %v565 = vsub.f32 %v418, %v544
        %v566 = vsub.f32 %v418, %v548
        %v567 = vsub.f32 %v423, %v544
        %v568 = vsub.f32 %v423, %v548
        %v569 = vsub.f32 %v428, %v544
        %v570 = vsub.f32 %v428, %v548
        %v571 = vsub.f32 %v433, %v544
        %v572 = vsub.f32 %v433, %v548
        %v573 = vsub.f32 %v438, %v544
        %v574 = vsub.f32 %v438, %v548
        %v575 = vsub.f32 %v443, %v544
        %v576 = vsub.f32 %v443, %v548
        %v577 = vsub.f32 %v448, %v544
        %v578 = vsub.f32 %v448, %v548
        %v579 = vsub.f32 %v453, %v544
        %v580 = vsub.f32 %v453, %v548
        %v581 = vsub.f32 %v458, %v544
        %v582 = vsub.f32 %v458, %v548
        %v583 = vsub.f32 %v463, %v544
        %v584 = vsub.f32 %v463, %v548
        %v585 = vsub.f32 %v468, %v544
        %v586 = vsub.f32 %v468, %v548
        %v587 = vsub.f32 %v473, %v544
        %v588 = vsub.f32 %v473, %v548
        %v589 = vsub.f32 %v478, %v544
        %v590 = vsub.f32 %v478, %v548
        %v591 = vsub.f32 %v483, %v544
        %v592 = vsub.f32 %v483, %v548
        %v593 = vsub.f32 %v488, %v544
        %v594 = vsub.f32 %v488, %v548
        %v595 = vsub.f32 %v493, %v544
        %v596 = vsub.f32 %v493, %v548
        %v597 = vsub.f32 %v498, %v544
        %v598 = vsub.f32 %v498, %v548
        %v599 = vsub.f32 %v503, %v544
        %v600 = vsub.f32 %v503, %v548
        %v601 = vsub.f32 %v508, %v544
        %v602 = vsub.f32 %v508, %v548
        %v603 = vsub.f32 %v513, %v544
        %v604 = vsub.f32 %v513, %v548
        %v605 = vsub.f32 %v518, %v544
        %v606 = vsub.f32 %v518, %v548
        %v607 = vsub.f32 %v523, %v544
        %v608 = vsub.f32 %v523, %v548
        %v609 = vsub.f32 %v528, %v544
        %v610 = vsub.f32 %v528, %v548
        %v611 = vsub.f32 %v533, %v544
        %v612 = vsub.f32 %v533, %v548
        %v613 = vsub.f32 %v538, %v544
        %v614 = vsub.f32 %v538, %v548
        %v615 = vand.u32 2147483647, %v551
        %v616 = vand.u32 2147483647, %v552
        %v617 = vand.u32 2147483647, %v553
        %v618 = vand.u32 2147483647, %v554
        %v619 = vand.u32 2147483647, %v555
        %v620 = vand.u32 2147483647, %v556
        %v621 = vand.u32 2147483647, %v557
        %v622 = vand.u32 2147483647, %v558
        %v623 = vand.u32 2147483647, %v559
        %v624 = vand.u32 2147483647, %v560
        %v625 = vand.u32 2147483647, %v561
        %v626 = vand.u32 2147483647, %v562
        %v627 = vand.u32 2147483647, %v563
        %v628 = vand.u32 2147483647, %v564
        %v629 = vand.u32 2147483647, %v565
        %v630 = vand.u32 2147483647, %v566
        %v631 = vand.u32 2147483647, %v567
        %v632 = vand.u32 2147483647, %v568
        %v633 = vand.u32 2147483647, %v569
        %v634 = vand.u32 2147483647, %v570
        %v635 = vand.u32 2147483647, %v571
        %v636 = vand.u32 2147483647, %v572
        %v637 = vand.u32 2147483647, %v573
        %v638 = vand.u32 2147483647, %v574
        %v639 = vand.u32 2147483647, %v575
        %v640 = vand.u32 2147483647, %v576
        %v641 = vand.u32 2147483647, %v577
        %v642 = vand.u32 2147483647, %v578
        %v643 = vand.u32 2147483647, %v579
        %v644 = vand.u32 2147483647, %v580
        %v645 = vand.u32 2147483647, %v581
        %v646 = vand.u32 2147483647, %v582
        %v647 = vand.u32 2147483647, %v583
        %v648 = vand.u32 2147483647, %v584
        %v649 = vand.u32 2147483647, %v585
        %v650 = vand.u32 2147483647, %v586
        %v651 = vand.u32 2147483647, %v587
        %v652 = vand.u32 2147483647, %v588
        %v653 = vand.u32 2147483647, %v589
        %v654 = vand.u32 2147483647, %v590
        %v655 = vand.u32 2147483647, %v591
        %v656 = vand.u32 2147483647, %v592
        %v657 = vand.u32 2147483647, %v593
        %v658 = vand.u32 2147483647, %v594
        %v659 = vand.u32 2147483647, %v595
        %v660 = vand.u32 2147483647, %v596
        %v661 = vand.u32 2147483647, %v597
        %v662 = vand.u32 2147483647, %v598
        %v663 = vand.u32 2147483647, %v599
        %v664 = vand.u32 2147483647, %v600
        %v665 = vand.u32 2147483647, %v601
        %v666 = vand.u32 2147483647, %v602
        %v667 = vand.u32 2147483647, %v603
        %v668 = vand.u32 2147483647, %v604
        %v669 = vand.u32 2147483647, %v605
        %v670 = vand.u32 2147483647, %v606
        %v671 = vand.u32 2147483647, %v607
        %v672 = vand.u32 2147483647, %v608
        %v673 = vand.u32 2147483647, %v609
        %v674 = vand.u32 2147483647, %v610
        %v675 = vand.u32 2147483647, %v611
        %v676 = vand.u32 2147483647, %v612
        %v677 = vand.u32 2147483647, %v613
        %v678 = vand.u32 2147483647, %v614
        %v679 = vsub.f32 1.0, %v615
        %v680 = vsub.f32 1.0, %v616
        %v681 = vsub.f32 1.0, %v617
        %v682 = vsub.f32 1.0, %v618
        %v683 = vsub.f32 1.0, %v619
        %v684 = vsub.f32 1.0, %v620
        %v685 = vsub.f32 1.0, %v621
        %v686 = vsub.f32 1.0, %v622
        %v687 = vsub.f32 1.0, %v623
        %v688 = vsub.f32 1.0, %v624
        %v689 = vsub.f32 1.0, %v625
        %v690 = vsub.f32 1.0, %v626
        %v691 = vsub.f32 1.0, %v627
        %v692 = vsub.f32 1.0, %v628
        %v693 = vsub.f32 1.0, %v629
        %v694 = vsub.f32 1.0, %v630
        %v695 = vsub.f32 1.0, %v631
        %v696 = vsub.f32 1.0, %v632
        %v697 = vsub.f32 1.0, %v633
        %v698 = vsub.f32 1.0, %v634
        %v699 = vsub.f32 1.0, %v635
        %v700 = vsub.f32 1.0, %v636
        %v701 = vsub.f32 1.0, %v637
        %v702 = vsub.f32 1.0, %v638
        %v703 = vsub.f32 1.0, %v639
        %v704 = vsub.f32 1.0, %v640
        %v705 = vsub.f32 1.0, %v641
        %v706 = vsub.f32 1.0, %v642
        %v707 = vsub.f32 1.0, %v643
        %v708 = vsub.f32 1.0, %v644
        %v709 = vsub.f32 1.0, %v645
        %v710 = vsub.f32 1.0, %v646
        %v711 = vsub.f32 1.0, %v647
        %v712 = vsub.f32 1.0, %v648
        %v713 = vsub.f32 1.0, %v649
        %v714 = vsub.f32 1.0, %v650
        %v715 = vsub.f32 1.0, %v651
        %v716 = vsub.f32 1.0, %v652
        %v717 = vsub.f32 1.0, %v653
        %v718 = vsub.f32 1.0, %v654
        %v719 = vsub.f32 1.0, %v655
        %v720 = vsub.f32 1.0, %v656
        %v721 = vsub.f32 1.0, %v657
        %v722 = vsub.f32 1.0, %v658
        %v723 = vsub.f32 1.0, %v659
        %v724 = vsub.f32 1.0, %v660
        %v725 = vsub.f32 1.0, %v661
        %v726 = vsub.f32 1.0, %v662
        %v727 = vsub.f32 1.0, %v663
        %v728 = vsub.f32 1.0, %v664
        %v729 = vsub.f32 1.0, %v665
        %v730 = vsub.f32 1.0, %v666
        %v731 = vsub.f32 1.0, %v667
        %v732 = vsub.f32 1.0, %v668
        %v733 = vsub.f32 1.0, %v669
        %v734 = vsub.f32 1.0, %v670
        %v735 = vsub.f32 1.0, %v671
        %v736 = vsub.f32 1.0, %v672
        %v737 = vsub.f32 1.0, %v673
        %v738 = vsub.f32 1.0, %v674
        %v739 = vsub.f32 1.0, %v675
        %v740 = vsub.f32 1.0, %v676
        %v741 = vsub.f32 1.0, %v677
        %v742 = vsub.f32 1.0, %v678
        %v743 = vmax.f32 %v679, 0.0
        %v744 = vmax.f32 %v680, 0.0
        %v745 = vmax.f32 %v681, 0.0
        %v746 = vmax.f32 %v682, 0.0
        %v747 = vmax.f32 %v683, 0.0
        %v748 = vmax.f32 %v684, 0.0
        %v749 = vmax.f32 %v685, 0.0
        %v750 = vmax.f32 %v686, 0.0
        %v751 = vmax.f32 %v687, 0.0
        %v752 = vmax.f32 %v688, 0.0
        %v753 = vmax.f32 %v689, 0.0
        %v754 = vmax.f32 %v690, 0.0
        %v755 = vmax.f32 %v691, 0.0
        %v756 = vmax.f32 %v692, 0.0
        %v757 = vmax.f32 %v693, 0.0
        %v758 = vmax.f32 %v694, 0.0
        %v759 = vmax.f32 %v695, 0.0
        %v760 = vmax.f32 %v696, 0.0
        %v761 = vmax.f32 %v697, 0.0
        %v762 = vmax.f32 %v698, 0.0
        %v763 = vmax.f32 %v699, 0.0
        %v764 = vmax.f32 %v700, 0.0
        %v765 = vmax.f32 %v701, 0.0
        %v766 = vmax.f32 %v702, 0.0
        %v767 = vmax.f32 %v703, 0.0
        %v768 = vmax.f32 %v704, 0.0
        %v769 = vmax.f32 %v705, 0.0
        %v770 = vmax.f32 %v706, 0.0
        %v771 = vmax.f32 %v707, 0.0
        %v772 = vmax.f32 %v708, 0.0
        %v773 = vmax.f32 %v709, 0.0
        %v774 = vmax.f32 %v710, 0.0
        %v775 = vmax.f32 %v711, 0.0
        %v776 = vmax.f32 %v712, 0.0
        %v777 = vmax.f32 %v713, 0.0
        %v778 = vmax.f32 %v714, 0.0
        %v779 = vmax.f32 %v715, 0.0
        %v780 = vmax.f32 %v716, 0.0
        %v781 = vmax.f32 %v717, 0.0
        %v782 = vmax.f32 %v718, 0.0
        %v783 = vmax.f32 %v719, 0.0
        %v784 = vmax.f32 %v720, 0.0
        %v785 = vmax.f32 %v721, 0.0
        %v786 = vmax.f32 %v722, 0.0
        %v787 = vmax.f32 %v723, 0.0
        %v788 = vmax.f32 %v724, 0.0
        %v789 = vmax.f32 %v725, 0.0
        %v790 = vmax.f32 %v726, 0.0
        %v791 = vmax.f32 %v727, 0.0
        %v792 = vmax.f32 %v728, 0.0
        %v793 = vmax.f32 %v729, 0.0
        %v794 = vmax.f32 %v730, 0.0
        %v795 = vmax.f32 %v731, 0.0
        %v796 = vmax.f32 %v732, 0.0
        %v797 = vmax.f32 %v733, 0.0
        %v798 = vmax.f32 %v734, 0.0
        %v799 = vmax.f32 %v735, 0.0
        %v800 = vmax.f32 %v736, 0.0
        %v801 = vmax.f32 %v737, 0.0
        %v802 = vmax.f32 %v738, 0.0
        %v803 = vmax.f32 %v739, 0.0
        %v804 = vmax.f32 %v740, 0.0
        %v805 = vmax.f32 %v741, 0.0
        %v806 = vmax.f32 %v742, 0.0
        %807 = vset.pattern.permute.xlu0 1
        %808 = vperm.xlu0 %807, %v345
        %v809 = vpop.permute.xlu0 %808
        %811 = vset.pattern.permute.xlu0 1
        %812 = vperm.xlu0 %811, %v346
        %v813 = vpop.permute.xlu0 %812
        %815 = vset.pattern.permute.xlu0 1
        %816 = vperm.xlu0 %815, %v347
        %v817 = vpop.permute.xlu0 %816
        %819 = vset.pattern.permute.xlu0 1
        %820 = vperm.xlu0 %819, %v348
        %v821 = vpop.permute.xlu0 %820
        %823 = vset.pattern.permute.xlu0 1
        %824 = vperm.xlu0 %823, %v349
        %v825 = vpop.permute.xlu0 %824
        %827 = vset.pattern.permute.xlu0 1
        %828 = vperm.xlu0 %827, %v350
        %v829 = vpop.permute.xlu0 %828
        %831 = vset.pattern.permute.xlu0 1
        %832 = vperm.xlu0 %831, %v351
        %v833 = vpop.permute.xlu0 %832
        %835 = vset.pattern.permute.xlu0 1
        %836 = vperm.xlu0 %835, %v352
        %v837 = vpop.permute.xlu0 %836
        %839 = vset.pattern.permute.xlu0 1
        %840 = vperm.xlu0 %839, %v353
        %v841 = vpop.permute.xlu0 %840
        %843 = vset.pattern.permute.xlu0 1
        %844 = vperm.xlu0 %843, %v354
        %v845 = vpop.permute.xlu0 %844
        %847 = vset.pattern.permute.xlu0 1
        %848 = vperm.xlu0 %847, %v355
        %v849 = vpop.permute.xlu0 %848
        %851 = vset.pattern.permute.xlu0 1
        %852 = vperm.xlu0 %851, %v356
        %v853 = vpop.permute.xlu0 %852
        %855 = vset.pattern.permute.xlu0 1
        %856 = vperm.xlu0 %855, %v357
        %v857 = vpop.permute.xlu0 %856
        %859 = vset.pattern.permute.xlu0 1
        %860 = vperm.xlu0 %859, %v358
        %v861 = vpop.permute.xlu0 %860
        %863 = vset.pattern.permute.xlu0 1
        %864 = vperm.xlu0 %863, %v359
        %v865 = vpop.permute.xlu0 %864
        %867 = vset.pattern.permute.xlu0 1
        %868 = vperm.xlu0 %867, %v360
        %v869 = vpop.permute.xlu0 %868
        %871 = vset.pattern.permute.xlu0 1
        %872 = vperm.xlu0 %871, %v361
        %v873 = vpop.permute.xlu0 %872
        %875 = vset.pattern.permute.xlu0 1
        %876 = vperm.xlu0 %875, %v362
        %v877 = vpop.permute.xlu0 %876
        %879 = vset.pattern.permute.xlu0 1
        %880 = vperm.xlu0 %879, %v363
        %v881 = vpop.permute.xlu0 %880
        %883 = vset.pattern.permute.xlu0 1
        %884 = vperm.xlu0 %883, %v364
        %v885 = vpop.permute.xlu0 %884
        %887 = vset.pattern.permute.xlu0 1
        %888 = vperm.xlu0 %887, %v365
        %v889 = vpop.permute.xlu0 %888
        %891 = vset.pattern.permute.xlu0 1
        %892 = vperm.xlu0 %891, %v366
        %v893 = vpop.permute.xlu0 %892
        %895 = vset.pattern.permute.xlu0 1
        %896 = vperm.xlu0 %895, %v367
        %v897 = vpop.permute.xlu0 %896
        %899 = vset.pattern.permute.xlu0 1
        %900 = vperm.xlu0 %899, %v368
        %v901 = vpop.permute.xlu0 %900
        %903 = vset.pattern.permute.xlu0 1
        %904 = vperm.xlu0 %903, %v369
        %v905 = vpop.permute.xlu0 %904
        %907 = vset.pattern.permute.xlu0 1
        %908 = vperm.xlu0 %907, %v370
        %v909 = vpop.permute.xlu0 %908
        %911 = vset.pattern.permute.xlu0 1
        %912 = vperm.xlu0 %911, %v371
        %v913 = vpop.permute.xlu0 %912
        %915 = vset.pattern.permute.xlu0 1
        %916 = vperm.xlu0 %915, %v372
        %v917 = vpop.permute.xlu0 %916
        %919 = vset.pattern.permute.xlu0 1
        %920 = vperm.xlu0 %919, %v373
        %v921 = vpop.permute.xlu0 %920
        %923 = vset.pattern.permute.xlu0 1
        %924 = vperm.xlu0 %923, %v374
        %v925 = vpop.permute.xlu0 %924
        %927 = vset.pattern.permute.xlu0 1
        %928 = vperm.xlu0 %927, %v375
        %v929 = vpop.permute.xlu0 %928
        %931 = vset.pattern.permute.xlu0 1
        %932 = vperm.xlu0 %931, %v376
        %v933 = vpop.permute.xlu0 %932
        %v936 = vlaneseq
        %v937 = vshrl.u32 %v936, 7
        %v938 = vsub.s32 0, %v937
        %v939 = vrot.slane %v379, %v938
        %v940 = vlaneseq
        %v941 = vshrl.u32 %v940, 7
        %v942 = vsub.s32 1, %v941
        %v943 = vrot.slane %v379, %v942
        %v946 = vsub.f32 %v809, %v939
        %v947 = vsub.f32 %v809, %v943
        %v948 = vsub.f32 %v813, %v939
        %v949 = vsub.f32 %v813, %v943
        %v950 = vsub.f32 %v817, %v939
        %v951 = vsub.f32 %v817, %v943
        %v952 = vsub.f32 %v821, %v939
        %v953 = vsub.f32 %v821, %v943
        %v954 = vsub.f32 %v825, %v939
        %v955 = vsub.f32 %v825, %v943
        %v956 = vsub.f32 %v829, %v939
        %v957 = vsub.f32 %v829, %v943
        %v958 = vsub.f32 %v833, %v939
        %v959 = vsub.f32 %v833, %v943
        %v960 = vsub.f32 %v837, %v939
        %v961 = vsub.f32 %v837, %v943
        %v962 = vsub.f32 %v841, %v939
        %v963 = vsub.f32 %v841, %v943
        %v964 = vsub.f32 %v845, %v939
        %v965 = vsub.f32 %v845, %v943
        %v966 = vsub.f32 %v849, %v939
        %v967 = vsub.f32 %v849, %v943
        %v968 = vsub.f32 %v853, %v939
        %v969 = vsub.f32 %v853, %v943
        %v970 = vsub.f32 %v857, %v939
        %v971 = vsub.f32 %v857, %v943
        %v972 = vsub.f32 %v861, %v939
        %v973 = vsub.f32 %v861, %v943
        %v974 = vsub.f32 %v865, %v939
        %v975 = vsub.f32 %v865, %v943
        %v976 = vsub.f32 %v869, %v939
        %v977 = vsub.f32 %v869, %v943
        %v978 = vsub.f32 %v873, %v939
        %v979 = vsub.f32 %v873, %v943
        %v980 = vsub.f32 %v877, %v939
        %v981 = vsub.f32 %v877, %v943
        %v982 = vsub.f32 %v881, %v939
        %v983 = vsub.f32 %v881, %v943
        %v984 = vsub.f32 %v885, %v939
        %v985 = vsub.f32 %v885, %v943
        %v986 = vsub.f32 %v889, %v939
        %v987 = vsub.f32 %v889, %v943
        %v988 = vsub.f32 %v893, %v939
        %v989 = vsub.f32 %v893, %v943
        %v990 = vsub.f32 %v897, %v939
        %v991 = vsub.f32 %v897, %v943
        %v992 = vsub.f32 %v901, %v939
        %v993 = vsub.f32 %v901, %v943
        %v994 = vsub.f32 %v905, %v939
        %v995 = vsub.f32 %v905, %v943
        %v996 = vsub.f32 %v909, %v939
        %v997 = vsub.f32 %v909, %v943
        %v998 = vsub.f32 %v913, %v939
        %v999 = vsub.f32 %v913, %v943
        %v1000 = vsub.f32 %v917, %v939
        %v1001 = vsub.f32 %v917, %v943
        %v1002 = vsub.f32 %v921, %v939
        %v1003 = vsub.f32 %v921, %v943
        %v1004 = vsub.f32 %v925, %v939
        %v1005 = vsub.f32 %v925, %v943
        %v1006 = vsub.f32 %v929, %v939
        %v1007 = vsub.f32 %v929, %v943
        %v1008 = vsub.f32 %v933, %v939
        %v1009 = vsub.f32 %v933, %v943
        %v1010 = vand.u32 2147483647, %v946
        %v1011 = vand.u32 2147483647, %v947
        %v1012 = vand.u32 2147483647, %v948
        %v1013 = vand.u32 2147483647, %v949
        %v1014 = vand.u32 2147483647, %v950
        %v1015 = vand.u32 2147483647, %v951
        %v1016 = vand.u32 2147483647, %v952
        %v1017 = vand.u32 2147483647, %v953
        %v1018 = vand.u32 2147483647, %v954
        %v1019 = vand.u32 2147483647, %v955
        %v1020 = vand.u32 2147483647, %v956
        %v1021 = vand.u32 2147483647, %v957
        %v1022 = vand.u32 2147483647, %v958
        %v1023 = vand.u32 2147483647, %v959
        %v1024 = vand.u32 2147483647, %v960
        %v1025 = vand.u32 2147483647, %v961
        %v1026 = vand.u32 2147483647, %v962
        %v1027 = vand.u32 2147483647, %v963
        %v1028 = vand.u32 2147483647, %v964
        %v1029 = vand.u32 2147483647, %v965
        %v1030 = vand.u32 2147483647, %v966
        %v1031 = vand.u32 2147483647, %v967
        %v1032 = vand.u32 2147483647, %v968
        %v1033 = vand.u32 2147483647, %v969
        %v1034 = vand.u32 2147483647, %v970
        %v1035 = vand.u32 2147483647, %v971
        %v1036 = vand.u32 2147483647, %v972
        %v1037 = vand.u32 2147483647, %v973
        %v1038 = vand.u32 2147483647, %v974
        %v1039 = vand.u32 2147483647, %v975
        %v1040 = vand.u32 2147483647, %v976
        %v1041 = vand.u32 2147483647, %v977
        %v1042 = vand.u32 2147483647, %v978
        %v1043 = vand.u32 2147483647, %v979
        %v1044 = vand.u32 2147483647, %v980
        %v1045 = vand.u32 2147483647, %v981
        %v1046 = vand.u32 2147483647, %v982
        %v1047 = vand.u32 2147483647, %v983
        %v1048 = vand.u32 2147483647, %v984
        %v1049 = vand.u32 2147483647, %v985
        %v1050 = vand.u32 2147483647, %v986
        %v1051 = vand.u32 2147483647, %v987
        %v1052 = vand.u32 2147483647, %v988
        %v1053 = vand.u32 2147483647, %v989
        %v1054 = vand.u32 2147483647, %v990
        %v1055 = vand.u32 2147483647, %v991
        %v1056 = vand.u32 2147483647, %v992
        %v1057 = vand.u32 2147483647, %v993
        %v1058 = vand.u32 2147483647, %v994
        %v1059 = vand.u32 2147483647, %v995
        %v1060 = vand.u32 2147483647, %v996
        %v1061 = vand.u32 2147483647, %v997
        %v1062 = vand.u32 2147483647, %v998
        %v1063 = vand.u32 2147483647, %v999
        %v1064 = vand.u32 2147483647, %v1000
        %v1065 = vand.u32 2147483647, %v1001
        %v1066 = vand.u32 2147483647, %v1002
        %v1067 = vand.u32 2147483647, %v1003
        %v1068 = vand.u32 2147483647, %v1004
        %v1069 = vand.u32 2147483647, %v1005
        %v1070 = vand.u32 2147483647, %v1006
        %v1071 = vand.u32 2147483647, %v1007
        %v1072 = vand.u32 2147483647, %v1008
        %v1073 = vand.u32 2147483647, %v1009
        %v1074 = vsub.f32 1.0, %v1010
        %v1075 = vsub.f32 1.0, %v1011
        %v1076 = vsub.f32 1.0, %v1012
        %v1077 = vsub.f32 1.0, %v1013
        %v1078 = vsub.f32 1.0, %v1014
        %v1079 = vsub.f32 1.0, %v1015
        %v1080 = vsub.f32 1.0, %v1016
        %v1081 = vsub.f32 1.0, %v1017
        %v1082 = vsub.f32 1.0, %v1018
        %v1083 = vsub.f32 1.0, %v1019
        %v1084 = vsub.f32 1.0, %v1020
        %v1085 = vsub.f32 1.0, %v1021
        %v1086 = vsub.f32 1.0, %v1022
        %v1087 = vsub.f32 1.0, %v1023
        %v1088 = vsub.f32 1.0, %v1024
        %v1089 = vsub.f32 1.0, %v1025
        %v1090 = vsub.f32 1.0, %v1026
        %v1091 = vsub.f32 1.0, %v1027
        %v1092 = vsub.f32 1.0, %v1028
        %v1093 = vsub.f32 1.0, %v1029
        %v1094 = vsub.f32 1.0, %v1030
        %v1095 = vsub.f32 1.0, %v1031
        %v1096 = vsub.f32 1.0, %v1032
        %v1097 = vsub.f32 1.0, %v1033
        %v1098 = vsub.f32 1.0, %v1034
        %v1099 = vsub.f32 1.0, %v1035
        %v1100 = vsub.f32 1.0, %v1036
        %v1101 = vsub.f32 1.0, %v1037
        %v1102 = vsub.f32 1.0, %v1038
        %v1103 = vsub.f32 1.0, %v1039
        %v1104 = vsub.f32 1.0, %v1040
        %v1105 = vsub.f32 1.0, %v1041
        %v1106 = vsub.f32 1.0, %v1042
        %v1107 = vsub.f32 1.0, %v1043
        %v1108 = vsub.f32 1.0, %v1044
        %v1109 = vsub.f32 1.0, %v1045
        %v1110 = vsub.f32 1.0, %v1046
        %v1111 = vsub.f32 1.0, %v1047
        %v1112 = vsub.f32 1.0, %v1048
        %v1113 = vsub.f32 1.0, %v1049
        %v1114 = vsub.f32 1.0, %v1050
        %v1115 = vsub.f32 1.0, %v1051
        %v1116 = vsub.f32 1.0, %v1052
        %v1117 = vsub.f32 1.0, %v1053
        %v1118 = vsub.f32 1.0, %v1054
        %v1119 = vsub.f32 1.0, %v1055
        %v1120 = vsub.f32 1.0, %v1056
        %v1121 = vsub.f32 1.0, %v1057
        %v1122 = vsub.f32 1.0, %v1058
        %v1123 = vsub.f32 1.0, %v1059
        %v1124 = vsub.f32 1.0, %v1060
        %v1125 = vsub.f32 1.0, %v1061
        %v1126 = vsub.f32 1.0, %v1062
        %v1127 = vsub.f32 1.0, %v1063
        %v1128 = vsub.f32 1.0, %v1064
        %v1129 = vsub.f32 1.0, %v1065
        %v1130 = vsub.f32 1.0, %v1066
        %v1131 = vsub.f32 1.0, %v1067
        %v1132 = vsub.f32 1.0, %v1068
        %v1133 = vsub.f32 1.0, %v1069
        %v1134 = vsub.f32 1.0, %v1070
        %v1135 = vsub.f32 1.0, %v1071
        %v1136 = vsub.f32 1.0, %v1072
        %v1137 = vsub.f32 1.0, %v1073
        %v1138 = vmax.f32 %v1074, 0.0
        %v1139 = vmax.f32 %v1075, 0.0
        %v1140 = vmax.f32 %v1076, 0.0
        %v1141 = vmax.f32 %v1077, 0.0
        %v1142 = vmax.f32 %v1078, 0.0
        %v1143 = vmax.f32 %v1079, 0.0
        %v1144 = vmax.f32 %v1080, 0.0
        %v1145 = vmax.f32 %v1081, 0.0
        %v1146 = vmax.f32 %v1082, 0.0
        %v1147 = vmax.f32 %v1083, 0.0
        %v1148 = vmax.f32 %v1084, 0.0
        %v1149 = vmax.f32 %v1085, 0.0
        %v1150 = vmax.f32 %v1086, 0.0
        %v1151 = vmax.f32 %v1087, 0.0
        %v1152 = vmax.f32 %v1088, 0.0
        %v1153 = vmax.f32 %v1089, 0.0
        %v1154 = vmax.f32 %v1090, 0.0
        %v1155 = vmax.f32 %v1091, 0.0
        %v1156 = vmax.f32 %v1092, 0.0
        %v1157 = vmax.f32 %v1093, 0.0
        %v1158 = vmax.f32 %v1094, 0.0
        %v1159 = vmax.f32 %v1095, 0.0
        %v1160 = vmax.f32 %v1096, 0.0
        %v1161 = vmax.f32 %v1097, 0.0
        %v1162 = vmax.f32 %v1098, 0.0
        %v1163 = vmax.f32 %v1099, 0.0
        %v1164 = vmax.f32 %v1100, 0.0
        %v1165 = vmax.f32 %v1101, 0.0
        %v1166 = vmax.f32 %v1102, 0.0
        %v1167 = vmax.f32 %v1103, 0.0
        %v1168 = vmax.f32 %v1104, 0.0
        %v1169 = vmax.f32 %v1105, 0.0
        %v1170 = vmax.f32 %v1106, 0.0
        %v1171 = vmax.f32 %v1107, 0.0
        %v1172 = vmax.f32 %v1108, 0.0
        %v1173 = vmax.f32 %v1109, 0.0
        %v1174 = vmax.f32 %v1110, 0.0
        %v1175 = vmax.f32 %v1111, 0.0
        %v1176 = vmax.f32 %v1112, 0.0
        %v1177 = vmax.f32 %v1113, 0.0
        %v1178 = vmax.f32 %v1114, 0.0
        %v1179 = vmax.f32 %v1115, 0.0
        %v1180 = vmax.f32 %v1116, 0.0
        %v1181 = vmax.f32 %v1117, 0.0
        %v1182 = vmax.f32 %v1118, 0.0
        %v1183 = vmax.f32 %v1119, 0.0
        %v1184 = vmax.f32 %v1120, 0.0
        %v1185 = vmax.f32 %v1121, 0.0
        %v1186 = vmax.f32 %v1122, 0.0
        %v1187 = vmax.f32 %v1123, 0.0
        %v1188 = vmax.f32 %v1124, 0.0
        %v1189 = vmax.f32 %v1125, 0.0
        %v1190 = vmax.f32 %v1126, 0.0
        %v1191 = vmax.f32 %v1127, 0.0
        %v1192 = vmax.f32 %v1128, 0.0
        %v1193 = vmax.f32 %v1129, 0.0
        %v1194 = vmax.f32 %v1130, 0.0
        %v1195 = vmax.f32 %v1131, 0.0
        %v1196 = vmax.f32 %v1132, 0.0
        %v1197 = vmax.f32 %v1133, 0.0
        %v1198 = vmax.f32 %v1134, 0.0
        %v1199 = vmax.f32 %v1135, 0.0
        %v1200 = vmax.f32 %v1136, 0.0
        %v1201 = vmax.f32 %v1137, 0.0
        %v1202 = vmul.f32 %v743, %v1138
        %v1203 = vmul.f32 %v744, %v1139
        %v1204 = vmul.f32 %v745, %v1140
        %v1205 = vmul.f32 %v746, %v1141
        %v1206 = vmul.f32 %v747, %v1142
        %v1207 = vmul.f32 %v748, %v1143
        %v1208 = vmul.f32 %v749, %v1144
        %v1209 = vmul.f32 %v750, %v1145
        %v1210 = vmul.f32 %v751, %v1146
        %v1211 = vmul.f32 %v752, %v1147
        %v1212 = vmul.f32 %v753, %v1148
        %v1213 = vmul.f32 %v754, %v1149
        %v1214 = vmul.f32 %v755, %v1150
        %v1215 = vmul.f32 %v756, %v1151
        %v1216 = vmul.f32 %v757, %v1152
        %v1217 = vmul.f32 %v758, %v1153
        %v1218 = vmul.f32 %v759, %v1154
        %v1219 = vmul.f32 %v760, %v1155
        %v1220 = vmul.f32 %v761, %v1156
        %v1221 = vmul.f32 %v762, %v1157
        %v1222 = vmul.f32 %v763, %v1158
        %v1223 = vmul.f32 %v764, %v1159
        %v1224 = vmul.f32 %v765, %v1160
        %v1225 = vmul.f32 %v766, %v1161
        %v1226 = vmul.f32 %v767, %v1162
        %v1227 = vmul.f32 %v768, %v1163
        %v1228 = vmul.f32 %v769, %v1164
        %v1229 = vmul.f32 %v770, %v1165
        %v1230 = vmul.f32 %v771, %v1166
        %v1231 = vmul.f32 %v772, %v1167
        %v1232 = vmul.f32 %v773, %v1168
        %v1233 = vmul.f32 %v774, %v1169
        %v1234 = vmul.f32 %v775, %v1170
        %v1235 = vmul.f32 %v776, %v1171
        %v1236 = vmul.f32 %v777, %v1172
        %v1237 = vmul.f32 %v778, %v1173
        %v1238 = vmul.f32 %v779, %v1174
        %v1239 = vmul.f32 %v780, %v1175
        %v1240 = vmul.f32 %v781, %v1176
        %v1241 = vmul.f32 %v782, %v1177
        %v1242 = vmul.f32 %v783, %v1178
        %v1243 = vmul.f32 %v784, %v1179
        %v1244 = vmul.f32 %v785, %v1180
        %v1245 = vmul.f32 %v786, %v1181
        %v1246 = vmul.f32 %v787, %v1182
        %v1247 = vmul.f32 %v788, %v1183
        %v1248 = vmul.f32 %v789, %v1184
        %v1249 = vmul.f32 %v790, %v1185
        %v1250 = vmul.f32 %v791, %v1186
        %v1251 = vmul.f32 %v792, %v1187
        %v1252 = vmul.f32 %v793, %v1188
        %v1253 = vmul.f32 %v794, %v1189
        %v1254 = vmul.f32 %v795, %v1190
        %v1255 = vmul.f32 %v796, %v1191
        %v1256 = vmul.f32 %v797, %v1192
        %v1257 = vmul.f32 %v798, %v1193
        %v1258 = vmul.f32 %v799, %v1194
        %v1259 = vmul.f32 %v800, %v1195
        %v1260 = vmul.f32 %v801, %v1196
        %v1261 = vmul.f32 %v802, %v1197
        %v1262 = vmul.f32 %v803, %v1198
        %v1263 = vmul.f32 %v804, %v1199
        %v1264 = vmul.f32 %v805, %v1200
        %v1265 = vmul.f32 %v806, %v1201
        %v1266 = vpack.c.bf16 %v1204, %v1202
        %v1267 = vpack.c.bf16 %v1205, %v1203
        %v1268 = vpack.c.bf16 %v1208, %v1206
        %v1269 = vpack.c.bf16 %v1209, %v1207
        %v1270 = vpack.c.bf16 %v1212, %v1210
        %v1271 = vpack.c.bf16 %v1213, %v1211
        %v1272 = vpack.c.bf16 %v1216, %v1214
        %v1273 = vpack.c.bf16 %v1217, %v1215
        %v1274 = vpack.c.bf16 %v1220, %v1218
        %v1275 = vpack.c.bf16 %v1221, %v1219
        %v1276 = vpack.c.bf16 %v1224, %v1222
        %v1277 = vpack.c.bf16 %v1225, %v1223
        %v1278 = vpack.c.bf16 %v1228, %v1226
        %v1279 = vpack.c.bf16 %v1229, %v1227
        %v1280 = vpack.c.bf16 %v1232, %v1230
        %v1281 = vpack.c.bf16 %v1233, %v1231
        %v1282 = vpack.c.bf16 %v1236, %v1234
        %v1283 = vpack.c.bf16 %v1237, %v1235
        %v1284 = vpack.c.bf16 %v1240, %v1238
        %v1285 = vpack.c.bf16 %v1241, %v1239
        %v1286 = vpack.c.bf16 %v1244, %v1242
        %v1287 = vpack.c.bf16 %v1245, %v1243
        %v1288 = vpack.c.bf16 %v1248, %v1246
        %v1289 = vpack.c.bf16 %v1249, %v1247
        %v1290 = vpack.c.bf16 %v1252, %v1250
        %v1291 = vpack.c.bf16 %v1253, %v1251
        %v1292 = vpack.c.bf16 %v1256, %v1254
        %v1293 = vpack.c.bf16 %v1257, %v1255
        %v1294 = vpack.c.bf16 %v1260, %v1258
        %v1295 = vpack.c.bf16 %v1261, %v1259
        %v1296 = vpack.c.bf16 %v1264, %v1262
        %v1297 = vpack.c.bf16 %v1265, %v1263
        %v1298 = vld [vmem:[%s343] sm:$0xf]
        %v1299 = vld [vmem:[%s343 + $0x4] sm:$0xf]
        %v1300 = vld [vmem:[%s343 + $0x8] sm:$0xf]
        %v1301 = vld [vmem:[%s343 + $0xc] sm:$0xf]
        %v1302 = vld [vmem:[%s343 + $0x10] sm:$0xf]
        %v1303 = vld [vmem:[%s343 + $0x14] sm:$0xf]
        %v1304 = vld [vmem:[%s343 + $0x18] sm:$0xf]
        %v1305 = vld [vmem:[%s343 + $0x1c] sm:$0xf]
        %v1306 = vld [vmem:[%s343 + $0x20] sm:$0xf]
        %v1307 = vld [vmem:[%s343 + $0x24] sm:$0xf]
        %v1308 = vld [vmem:[%s343 + $0x28] sm:$0xf]
        %v1309 = vld [vmem:[%s343 + $0x2c] sm:$0xf]
        %v1310 = vld [vmem:[%s343 + $0x30] sm:$0xf]
        %v1311 = vld [vmem:[%s343 + $0x34] sm:$0xf]
        %v1312 = vld [vmem:[%s343 + $0x38] sm:$0xf]
        %v1313 = vld [vmem:[%s343 + $0x3c] sm:$0xf]
        %v1314 = vld [vmem:[%s343 + $0x40] sm:$0xf]
        %v1315 = vld [vmem:[%s343 + $0x44] sm:$0xf]
        %v1316 = vld [vmem:[%s343 + $0x48] sm:$0xf]
        %v1317 = vld [vmem:[%s343 + $0x4c] sm:$0xf]
        %v1318 = vld [vmem:[%s343 + $0x50] sm:$0xf]
        %v1319 = vld [vmem:[%s343 + $0x54] sm:$0xf]
        %v1320 = vld [vmem:[%s343 + $0x58] sm:$0xf]
        %v1321 = vld [vmem:[%s343 + $0x5c] sm:$0xf]
        %v1322 = vld [vmem:[%s343 + $0x60] sm:$0xf]
        %v1323 = vld [vmem:[%s343 + $0x64] sm:$0xf]
        %v1324 = vld [vmem:[%s343 + $0x68] sm:$0xf]
        %v1325 = vld [vmem:[%s343 + $0x6c] sm:$0xf]
        %v1326 = vld [vmem:[%s343 + $0x70] sm:$0xf]
        %v1327 = vld [vmem:[%s343 + $0x74] sm:$0xf]
        %v1328 = vld [vmem:[%s343 + $0x78] sm:$0xf]
        %v1329 = vld [vmem:[%s343 + $0x7c] sm:$0xf]
        %v1362 = vunpack.c.l.b16 %v1298
        %v1363 = vunpack.c.l.b16 %v1299
        %v1364 = vunpack.c.l.b16 %v1300
        %v1365 = vunpack.c.l.b16 %v1301
        %v1366 = vunpack.c.l.b16 %v1302
        %v1367 = vunpack.c.l.b16 %v1303
        %v1368 = vunpack.c.l.b16 %v1304
        %v1369 = vunpack.c.l.b16 %v1305
        %v1370 = vunpack.c.l.b16 %v1306
        %v1371 = vunpack.c.l.b16 %v1307
        %v1372 = vunpack.c.l.b16 %v1308
        %v1373 = vunpack.c.l.b16 %v1309
        %v1374 = vunpack.c.l.b16 %v1310
        %v1375 = vunpack.c.l.b16 %v1311
        %v1376 = vunpack.c.l.b16 %v1312
        %v1377 = vunpack.c.l.b16 %v1313
        %v1378 = vunpack.c.l.b16 %v1314
        %v1379 = vunpack.c.l.b16 %v1315
        %v1380 = vunpack.c.l.b16 %v1316
        %v1381 = vunpack.c.l.b16 %v1317
        %v1382 = vunpack.c.l.b16 %v1318
        %v1383 = vunpack.c.l.b16 %v1319
        %v1384 = vunpack.c.l.b16 %v1320
        %v1385 = vunpack.c.l.b16 %v1321
        %v1386 = vunpack.c.l.b16 %v1322
        %v1387 = vunpack.c.l.b16 %v1323
        %v1388 = vunpack.c.l.b16 %v1324
        %v1389 = vunpack.c.l.b16 %v1325
        %v1390 = vunpack.c.l.b16 %v1326
        %v1391 = vunpack.c.l.b16 %v1327
        %v1392 = vunpack.c.l.b16 %v1328
        %v1393 = vunpack.c.l.b16 %v1329
        %v1394 = vpack.c.b16 %v1363, %v1362
        %v1395 = vpack.c.b16 %v1365, %v1364
        %v1396 = vpack.c.b16 %v1367, %v1366
        %v1397 = vpack.c.b16 %v1369, %v1368
        %v1398 = vpack.c.b16 %v1371, %v1370
        %v1399 = vpack.c.b16 %v1373, %v1372
        %v1400 = vpack.c.b16 %v1375, %v1374
        %v1401 = vpack.c.b16 %v1377, %v1376
        %v1402 = vpack.c.b16 %v1379, %v1378
        %v1403 = vpack.c.b16 %v1381, %v1380
        %v1404 = vpack.c.b16 %v1383, %v1382
        %v1405 = vpack.c.b16 %v1385, %v1384
        %v1406 = vpack.c.b16 %v1387, %v1386
        %v1407 = vpack.c.b16 %v1389, %v1388
        %v1408 = vpack.c.b16 %v1391, %v1390
        %v1409 = vpack.c.b16 %v1393, %v1392
        %1426 = vmatprep.subr.bf16.mxu0 0
        %1427 = vmatpush1.bf16.msra.mxu0 %v1394
        %1428 = vmatprep.subr.bf16.mxu0 0
        %1429 = vmatpush1.bf16.msra.mxu0 %v1395
        %1430 = vmatprep.subr.bf16.mxu0 0
        %1431 = vmatpush1.bf16.msra.mxu0 %v1396
        %1432 = vmatprep.subr.bf16.mxu0 0
        %1433 = vmatpush1.bf16.msra.mxu0 %v1397
        %1434 = vmatprep.subr.bf16.mxu0 0
        %1435 = vmatpush1.bf16.msra.mxu0 %v1398
        %1436 = vmatprep.subr.bf16.mxu0 0
        %1437 = vmatpush1.bf16.msra.mxu0 %v1399
        %1438 = vmatprep.subr.bf16.mxu0 0
        %1439 = vmatpush1.bf16.msra.mxu0 %v1400
        %1440 = vmatprep.subr.bf16.mxu0 0
        %1441 = vmatpush1.bf16.msra.mxu0 %v1401
        %1442 = vmatprep.subr.bf16.mxu0 0
        %1443 = vmatpush1.bf16.msra.mxu0 %v1402
        %1444 = vmatprep.subr.bf16.mxu0 0
        %1445 = vmatpush1.bf16.msra.mxu0 %v1403
        %1446 = vmatprep.subr.bf16.mxu0 0
        %1447 = vmatpush1.bf16.msra.mxu0 %v1404
        %1448 = vmatprep.subr.bf16.mxu0 0
        %1449 = vmatpush1.bf16.msra.mxu0 %v1405
        %1450 = vmatprep.subr.bf16.mxu0 0
        %1451 = vmatpush1.bf16.msra.mxu0 %v1406
        %1452 = vmatprep.subr.bf16.mxu0 0
        %1453 = vmatpush1.bf16.msra.mxu0 %v1407
        %1454 = vmatprep.subr.bf16.mxu0 0
        %1455 = vmatpush1.bf16.msra.mxu0 %v1408
        %1456 = vmatprep.subr.bf16.mxu0 0
        %1457 = vmatpush1.bf16.msra.mxu0 %v1409
        %1458 = vmatprep.mubr.bf16.mxu0 %v1267
        %1459 = vmatmul.mubr.bf16.gmra.mrb[0].mxu0 %v1266
        %v1460 = vpop.f32.mrb[0].mxu0
        %v1461 = vadd.f32 0.0, %v1460
        %v1462 = vpop.f32.mrb[0].mxu0
        %v1463 = vpop.f32.mrb[0].mxu0
        %v1464 = vadd.f32 0.0, %v1463
        %v1465 = vpop.f32.mrb[0].mxu0
        %1466 = vmatprep.mubr.bf16.mxu0 %v1269
        %1467 = vmatmul.mubr.bf16.gmra.mrb[0].mxu0 %v1268
        %v1468 = vpop.f32.mrb[0].mxu0
        %v1469 = vadd.f32 0.0, %v1468
        %v1470 = vpop.f32.mrb[0].mxu0
        %v1471 = vpop.f32.mrb[0].mxu0
        %v1472 = vadd.f32 0.0, %v1471
        %v1473 = vpop.f32.mrb[0].mxu0
        %1474 = vmatprep.mubr.bf16.mxu0 %v1271
        %1475 = vmatmul.mubr.bf16.gmra.mrb[0].mxu0 %v1270
        %v1476 = vpop.f32.mrb[0].mxu0
        %v1477 = vadd.f32 0.0, %v1476
        %v1478 = vpop.f32.mrb[0].mxu0
        %v1479 = vpop.f32.mrb[0].mxu0
        %v1480 = vadd.f32 0.0, %v1479
        %v1481 = vpop.f32.mrb[0].mxu0
        %1482 = vmatprep.mubr.bf16.mxu0 %v1273
        %1483 = vmatmul.mubr.bf16.gmra.mrb[0].mxu0 %v1272
        %v1484 = vpop.f32.mrb[0].mxu0
        %v1485 = vadd.f32 0.0, %v1484
        %v1486 = vpop.f32.mrb[0].mxu0
        %v1487 = vpop.f32.mrb[0].mxu0
        %v1488 = vadd.f32 0.0, %v1487
        %v1489 = vpop.f32.mrb[0].mxu0
        %1490 = vmatprep.mubr.bf16.mxu0 %v1275
        %1491 = vmatmul.mubr.bf16.gmra.mrb[0].mxu0 %v1274
        %v1492 = vpop.f32.mrb[0].mxu0
        %v1493 = vadd.f32 0.0, %v1492
        %v1494 = vpop.f32.mrb[0].mxu0
        %v1495 = vpop.f32.mrb[0].mxu0
        %v1496 = vadd.f32 0.0, %v1495
        %v1497 = vpop.f32.mrb[0].mxu0
        %1498 = vmatprep.mubr.bf16.mxu0 %v1277
        %1499 = vmatmul.mubr.bf16.gmra.mrb[0].mxu0 %v1276
        %v1500 = vpop.f32.mrb[0].mxu0
        %v1501 = vadd.f32 0.0, %v1500
        %v1502 = vpop.f32.mrb[0].mxu0
        %v1503 = vpop.f32.mrb[0].mxu0
        %v1504 = vadd.f32 0.0, %v1503
        %v1505 = vpop.f32.mrb[0].mxu0
        %1506 = vmatprep.mubr.bf16.mxu0 %v1279
        %1507 = vmatmul.mubr.bf16.gmra.mrb[0].mxu0 %v1278
        %v1508 = vpop.f32.mrb[0].mxu0
        %v1509 = vadd.f32 0.0, %v1508
        %v1510 = vpop.f32.mrb[0].mxu0
        %v1511 = vpop.f32.mrb[0].mxu0
        %v1512 = vadd.f32 0.0, %v1511
        %v1513 = vpop.f32.mrb[0].mxu0
        %1514 = vmatprep.mubr.bf16.mxu0 %v1281
        %1515 = vmatmul.mubr.bf16.gmra.mrb[0].mxu0 %v1280
        %v1516 = vpop.f32.mrb[0].mxu0
        %v1517 = vadd.f32 0.0, %v1516
        %v1518 = vpop.f32.mrb[0].mxu0
        %v1519 = vpop.f32.mrb[0].mxu0
        %v1520 = vadd.f32 0.0, %v1519
        %v1521 = vpop.f32.mrb[0].mxu0
        %1522 = vmatprep.mubr.bf16.mxu0 %v1283
        %1523 = vmatmul.mubr.bf16.gmra.mrb[0].mxu0 %v1282
        %v1524 = vpop.f32.mrb[0].mxu0
        %v1525 = vadd.f32 0.0, %v1524
        %v1526 = vpop.f32.mrb[0].mxu0
        %v1527 = vpop.f32.mrb[0].mxu0
        %v1528 = vadd.f32 0.0, %v1527
        %v1529 = vpop.f32.mrb[0].mxu0
        %1530 = vmatprep.mubr.bf16.mxu0 %v1285
        %1531 = vmatmul.mubr.bf16.gmra.mrb[0].mxu0 %v1284
        %v1532 = vpop.f32.mrb[0].mxu0
        %v1533 = vadd.f32 0.0, %v1532
        %v1534 = vpop.f32.mrb[0].mxu0
        %v1535 = vpop.f32.mrb[0].mxu0
        %v1536 = vadd.f32 0.0, %v1535
        %v1537 = vpop.f32.mrb[0].mxu0
        %1538 = vmatprep.mubr.bf16.mxu0 %v1287
        %1539 = vmatmul.mubr.bf16.gmra.mrb[0].mxu0 %v1286
        %v1540 = vpop.f32.mrb[0].mxu0
        %v1541 = vadd.f32 0.0, %v1540
        %v1542 = vpop.f32.mrb[0].mxu0
        %v1543 = vpop.f32.mrb[0].mxu0
        %v1544 = vadd.f32 0.0, %v1543
        %v1545 = vpop.f32.mrb[0].mxu0
        %1546 = vmatprep.mubr.bf16.mxu0 %v1289
        %1547 = vmatmul.mubr.bf16.gmra.mrb[0].mxu0 %v1288
        %v1548 = vpop.f32.mrb[0].mxu0
        %v1549 = vadd.f32 0.0, %v1548
        %v1550 = vpop.f32.mrb[0].mxu0
        %v1551 = vpop.f32.mrb[0].mxu0
        %v1552 = vadd.f32 0.0, %v1551
        %v1553 = vpop.f32.mrb[0].mxu0
        %1554 = vmatprep.mubr.bf16.mxu0 %v1291
        %1555 = vmatmul.mubr.bf16.gmra.mrb[0].mxu0 %v1290
        %v1556 = vpop.f32.mrb[0].mxu0
        %v1557 = vadd.f32 0.0, %v1556
        %v1558 = vpop.f32.mrb[0].mxu0
        %v1559 = vpop.f32.mrb[0].mxu0
        %v1560 = vadd.f32 0.0, %v1559
        %v1561 = vpop.f32.mrb[0].mxu0
        %1562 = vmatprep.mubr.bf16.mxu0 %v1293
        %1563 = vmatmul.mubr.bf16.gmra.mrb[0].mxu0 %v1292
        %v1564 = vpop.f32.mrb[0].mxu0
        %v1565 = vadd.f32 0.0, %v1564
        %v1566 = vpop.f32.mrb[0].mxu0
        %v1567 = vpop.f32.mrb[0].mxu0
        %v1568 = vadd.f32 0.0, %v1567
        %v1569 = vpop.f32.mrb[0].mxu0
        %1570 = vmatprep.mubr.bf16.mxu0 %v1295
        %1571 = vmatmul.mubr.bf16.gmra.mrb[0].mxu0 %v1294
        %v1572 = vpop.f32.mrb[0].mxu0
        %v1573 = vadd.f32 0.0, %v1572
        %v1574 = vpop.f32.mrb[0].mxu0
        %v1575 = vpop.f32.mrb[0].mxu0
        %v1576 = vadd.f32 0.0, %v1575
        %v1577 = vpop.f32.mrb[0].mxu0
        %1578 = vmatprep.mubr.bf16.mxu0 %v1297
        %1579 = vmatmul.mubr.bf16.gmra.mrb[0].mxu0 %v1296
        %v1580 = vpop.f32.mrb[0].mxu0
        %v1581 = vadd.f32 0.0, %v1580
        %v1582 = vpop.f32.mrb[0].mxu0
        %v1583 = vpop.f32.mrb[0].mxu0
        %v1584 = vadd.f32 0.0, %v1583
        %v1585 = vpop.f32.mrb[0].mxu0
        %1586 = vdwg.mxu0
        %1587 = vst [vmem:[#allocation2] sm:$0xff] 0.0
        %1588 = vst [vmem:[#allocation2 + $0x8] sm:$0xff] 0.0
        %1589 = vst [vmem:[#allocation2 + $0x10] sm:$0x3] 0.0
        %1590 = vst [vmem:[#allocation2 + $0x18] sm:$0xff] 0.0
        %1591 = vst [vmem:[#allocation2 + $0x20] sm:$0xff] 0.0
        %1592 = vst [vmem:[#allocation2 + $0x28] sm:$0x3] 0.0
        %1593 = vst [vmem:[#allocation2 + $0x30] sm:$0xff] 0.0
        %1594 = vst [vmem:[#allocation2 + $0x38] sm:$0xff] 0.0
        %1595 = vst [vmem:[#allocation2 + $0x40] sm:$0x3] 0.0
        %1596 = vst [vmem:[#allocation2 + $0x48] sm:$0xff] 0.0
        %1597 = vst [vmem:[#allocation2 + $0x50] sm:$0xff] 0.0
        %1598 = vst [vmem:[#allocation2 + $0x58] sm:$0x3] 0.0
        %1599 = vst [vmem:[#allocation2 + $0x60] sm:$0xff] 0.0
        %1600 = vst [vmem:[#allocation2 + $0x68] sm:$0xff] 0.0
        %1601 = vst [vmem:[#allocation2 + $0x70] sm:$0x3] 0.0
        %1602 = vst [vmem:[#allocation2 + $0x78] sm:$0xff] 0.0
        %1603 = vst [vmem:[#allocation2 + $0x80] sm:$0xff] 0.0
        %1604 = vst [vmem:[#allocation2 + $0x88] sm:$0x3] 0.0
        %1605 = vst [vmem:[#allocation2 + $0x90] sm:$0xff] 0.0
        %1606 = vst [vmem:[#allocation2 + $0x98] sm:$0xff] 0.0
        %1607 = vst [vmem:[#allocation2 + $0xa0] sm:$0x3] 0.0
        %1608 = vst [vmem:[#allocation2 + $0xa8] sm:$0xff] 0.0
        %1609 = vst [vmem:[#allocation2 + $0xb0] sm:$0xff] 0.0
        %1610 = vst [vmem:[#allocation2 + $0xb8] sm:$0x3] 0.0
        %1611 = vst [vmem:[#allocation2 + $0xc0] sm:$0xff] 0.0
        %1612 = vst [vmem:[#allocation2 + $0xc8] sm:$0xff] 0.0
        %1613 = vst [vmem:[#allocation2 + $0xd0] sm:$0x3] 0.0
        %1614 = vst [vmem:[#allocation2 + $0xd8] sm:$0xff] 0.0
        %1615 = vst [vmem:[#allocation2 + $0xe0] sm:$0xff] 0.0
        %1616 = vst [vmem:[#allocation2 + $0xe8] sm:$0x3] 0.0
        %1617 = vst [vmem:[#allocation2 + $0xf0] sm:$0xff] 0.0
        %1618 = vst [vmem:[#allocation2 + $0xf8] sm:$0xff] 0.0
        %1619 = vst [vmem:[#allocation2 + $0x100] sm:$0x3] 0.0
        %1620 = vst [vmem:[#allocation2 + $0x108] sm:$0xff] 0.0
        %1621 = vst [vmem:[#allocation2 + $0x110] sm:$0xff] 0.0
        %1622 = vst [vmem:[#allocation2 + $0x118] sm:$0x3] 0.0
        %1623 = vst [vmem:[#allocation2 + $0x120] sm:$0xff] 0.0
        %1624 = vst [vmem:[#allocation2 + $0x128] sm:$0xff] 0.0
        %1625 = vst [vmem:[#allocation2 + $0x130] sm:$0x3] 0.0
        %1626 = vst [vmem:[#allocation2 + $0x138] sm:$0xff] 0.0
        %1627 = vst [vmem:[#allocation2 + $0x140] sm:$0xff] 0.0
        %1628 = vst [vmem:[#allocation2 + $0x148] sm:$0x3] 0.0
        %1629 = vst [vmem:[#allocation2 + $0x150] sm:$0xff] 0.0
        %1630 = vst [vmem:[#allocation2 + $0x158] sm:$0xff] 0.0
        %1631 = vst [vmem:[#allocation2 + $0x160] sm:$0x3] 0.0
        %1632 = vst [vmem:[#allocation2 + $0x168] sm:$0xff] 0.0
        %1633 = vst [vmem:[#allocation2 + $0x170] sm:$0xff] 0.0
        %1634 = vst [vmem:[#allocation2 + $0x178] sm:$0x3] 0.0
        %1635 = vst [vmem:[#allocation2 + $0x180] sm:$0xff] 0.0
        %1636 = vst [vmem:[#allocation2 + $0x188] sm:$0xff] 0.0
        %1637 = vst [vmem:[#allocation2 + $0x190] sm:$0x3] 0.0
        %1638 = vst [vmem:[#allocation2 + $0x198] sm:$0xff] 0.0
        %1639 = vst [vmem:[#allocation2 + $0x1a0] sm:$0xff] 0.0
        %1640 = vst [vmem:[#allocation2 + $0x1a8] sm:$0x3] 0.0
        %v1641 = vld [vmem:[%s338] sm:$0xf]
        %v1642 = vld [vmem:[%s338 + $0x4] sm:$0xf]
        %v1643 = vld [vmem:[%s338 + $0x8] sm:$0xf]
        %v1644 = vld [vmem:[%s338 + $0xc] sm:$0xf]
        %v1645 = vld [vmem:[%s338 + $0x10] sm:$0xf]
        %v1646 = vld [vmem:[%s338 + $0x14] sm:$0xf]
        %v1647 = vld [vmem:[%s338 + $0x18] sm:$0xf]
        %v1648 = vld [vmem:[%s338 + $0x1c] sm:$0xf]
        %v1649 = vld [vmem:[%s338 + $0x20] sm:$0xf]
        %v1650 = vld [vmem:[%s338 + $0x24] sm:$0xf]
        %v1651 = vld [vmem:[%s338 + $0x28] sm:$0xf]
        %v1652 = vld [vmem:[%s338 + $0x2c] sm:$0xf]
        %v1653 = vld [vmem:[%s338 + $0x30] sm:$0xf]
        %v1654 = vld [vmem:[%s338 + $0x34] sm:$0xf]
        %v1655 = vld [vmem:[%s338 + $0x38] sm:$0xf]
        %v1656 = vld [vmem:[%s338 + $0x3c] sm:$0xf]
        %v1657 = vld [vmem:[%s338 + $0x40] sm:$0xf]
        %v1658 = vld [vmem:[%s338 + $0x44] sm:$0xf]
        %v1659 = vld [vmem:[%s338 + $0x48] sm:$0xf]
        %v1660 = vld [vmem:[%s338 + $0x4c] sm:$0xf]
        %v1661 = vld [vmem:[%s338 + $0x50] sm:$0xf]
        %v1662 = vld [vmem:[%s338 + $0x54] sm:$0xf]
        %v1663 = vld [vmem:[%s338 + $0x58] sm:$0xf]
        %v1664 = vld [vmem:[%s338 + $0x5c] sm:$0xf]
        %v1665 = vld [vmem:[%s338 + $0x60] sm:$0xf]
        %v1666 = vld [vmem:[%s338 + $0x64] sm:$0xf]
        %v1667 = vld [vmem:[%s338 + $0x68] sm:$0xf]
        %v1668 = vld [vmem:[%s338 + $0x6c] sm:$0xf]
        %v1669 = vld [vmem:[%s338 + $0x70] sm:$0xf]
        %v1670 = vld [vmem:[%s338 + $0x74] sm:$0xf]
        %v1671 = vld [vmem:[%s338 + $0x78] sm:$0xf]
        %v1672 = vld [vmem:[%s338 + $0x7c] sm:$0xf]
        %v1673 = vunpack.c.l.bf16 %v1641
        %v1674 = vunpack.c.l.bf16 %v1642
        %v1675 = vunpack.c.l.bf16 %v1643
        %v1676 = vunpack.c.l.bf16 %v1644
        %v1677 = vunpack.c.l.bf16 %v1645
        %v1678 = vunpack.c.l.bf16 %v1646
        %v1679 = vunpack.c.l.bf16 %v1647
        %v1680 = vunpack.c.l.bf16 %v1648
        %v1681 = vunpack.c.l.bf16 %v1649
        %v1682 = vunpack.c.l.bf16 %v1650
        %v1683 = vunpack.c.l.bf16 %v1651
        %v1684 = vunpack.c.l.bf16 %v1652
        %v1685 = vunpack.c.l.bf16 %v1653
        %v1686 = vunpack.c.l.bf16 %v1654
        %v1687 = vunpack.c.l.bf16 %v1655
        %v1688 = vunpack.c.l.bf16 %v1656
        %v1689 = vunpack.c.l.bf16 %v1657
        %v1690 = vunpack.c.l.bf16 %v1658
        %v1691 = vunpack.c.l.bf16 %v1659
        %v1692 = vunpack.c.l.bf16 %v1660
        %v1693 = vunpack.c.l.bf16 %v1661
        %v1694 = vunpack.c.l.bf16 %v1662
        %v1695 = vunpack.c.l.bf16 %v1663
        %v1696 = vunpack.c.l.bf16 %v1664
        %v1697 = vunpack.c.l.bf16 %v1665
        %v1698 = vunpack.c.l.bf16 %v1666
        %v1699 = vunpack.c.l.bf16 %v1667
        %v1700 = vunpack.c.l.bf16 %v1668
        %v1701 = vunpack.c.l.bf16 %v1669
        %v1702 = vunpack.c.l.bf16 %v1670
        %v1703 = vunpack.c.l.bf16 %v1671
        %v1704 = vunpack.c.l.bf16 %v1672
        %s1705 = scalar_lea.vmem [#allocation2], 24
        %vm1706 = vcmask 261120
        %1707 = vst.msk [vmem:[%s1705 + $0x1] sm:$0xff] %vm1706, %v1673
        %1708 = vst.msk [vmem:[%s1705 + $0x9] sm:$0xff] %vm1706, %v1674
        %1709 = vst.msk [vmem:[%s1705 + $0x19] sm:$0xff] %vm1706, %v1675
        %1710 = vst.msk [vmem:[%s1705 + $0x21] sm:$0xff] %vm1706, %v1676
        %1711 = vst.msk [vmem:[%s1705 + $0x31] sm:$0xff] %vm1706, %v1677
        %1712 = vst.msk [vmem:[%s1705 + $0x39] sm:$0xff] %vm1706, %v1678
        %1713 = vst.msk [vmem:[%s1705 + $0x49] sm:$0xff] %vm1706, %v1679
        %1714 = vst.msk [vmem:[%s1705 + $0x51] sm:$0xff] %vm1706, %v1680
        %1715 = vst.msk [vmem:[%s1705 + $0x61] sm:$0xff] %vm1706, %v1681
        %1716 = vst.msk [vmem:[%s1705 + $0x69] sm:$0xff] %vm1706, %v1682
        %1717 = vst.msk [vmem:[%s1705 + $0x79] sm:$0xff] %vm1706, %v1683
        %1718 = vst.msk [vmem:[%s1705 + $0x81] sm:$0xff] %vm1706, %v1684
        %1719 = vst.msk [vmem:[%s1705 + $0x91] sm:$0xff] %vm1706, %v1685
        %1720 = vst.msk [vmem:[%s1705 + $0x99] sm:$0xff] %vm1706, %v1686
        %1721 = vst.msk [vmem:[%s1705 + $0xa9] sm:$0xff] %vm1706, %v1687
        %1722 = vst.msk [vmem:[%s1705 + $0xb1] sm:$0xff] %vm1706, %v1688
        %1723 = vst.msk [vmem:[%s1705 + $0xc1] sm:$0xff] %vm1706, %v1689
        %1724 = vst.msk [vmem:[%s1705 + $0xc9] sm:$0xff] %vm1706, %v1690
        %1725 = vst.msk [vmem:[%s1705 + $0xd9] sm:$0xff] %vm1706, %v1691
        %1726 = vst.msk [vmem:[%s1705 + $0xe1] sm:$0xff] %vm1706, %v1692
        %1727 = vst.msk [vmem:[%s1705 + $0xf1] sm:$0xff] %vm1706, %v1693
        %1728 = vst.msk [vmem:[%s1705 + $0xf9] sm:$0xff] %vm1706, %v1694
        %1729 = vst.msk [vmem:[%s1705 + $0x109] sm:$0xff] %vm1706, %v1695
        %1730 = vst.msk [vmem:[%s1705 + $0x111] sm:$0xff] %vm1706, %v1696
        %1731 = vst.msk [vmem:[%s1705 + $0x121] sm:$0xff] %vm1706, %v1697
        %1732 = vst.msk [vmem:[%s1705 + $0x129] sm:$0xff] %vm1706, %v1698
        %1733 = vst.msk [vmem:[%s1705 + $0x139] sm:$0xff] %vm1706, %v1699
        %1734 = vst.msk [vmem:[%s1705 + $0x141] sm:$0xff] %vm1706, %v1700
        %1735 = vst.msk [vmem:[%s1705 + $0x151] sm:$0xff] %vm1706, %v1701
        %1736 = vst.msk [vmem:[%s1705 + $0x159] sm:$0xff] %vm1706, %v1702
        %1737 = vst.msk [vmem:[%s1705 + $0x169] sm:$0xff] %vm1706, %v1703
        %1738 = vst.msk [vmem:[%s1705 + $0x171] sm:$0xff] %vm1706, %v1704
        %1771 = vrot.lane.b32.xlu0 %v1461, 32
        %v1772 = vpop.permute.xlu0 %1771
        %1773 = vrot.lane.b32.xlu0 %v1464, 32
        %v1774 = vpop.permute.xlu0 %1773
        %1775 = vrot.lane.b32.xlu0 %v1469, 32
        %v1776 = vpop.permute.xlu0 %1775
        %1777 = vrot.lane.b32.xlu0 %v1472, 32
        %v1778 = vpop.permute.xlu0 %1777
        %1779 = vrot.lane.b32.xlu0 %v1477, 32
        %v1780 = vpop.permute.xlu0 %1779
        %1781 = vrot.lane.b32.xlu0 %v1480, 32
        %v1782 = vpop.permute.xlu0 %1781
        %1783 = vrot.lane.b32.xlu0 %v1485, 32
        %v1784 = vpop.permute.xlu0 %1783
        %1785 = vrot.lane.b32.xlu0 %v1488, 32
        %v1786 = vpop.permute.xlu0 %1785
        %1787 = vrot.lane.b32.xlu0 %v1493, 32
        %v1788 = vpop.permute.xlu0 %1787
        %1789 = vrot.lane.b32.xlu0 %v1496, 32
        %v1790 = vpop.permute.xlu0 %1789
        %1791 = vrot.lane.b32.xlu0 %v1501, 32
        %v1792 = vpop.permute.xlu0 %1791
        %1793 = vrot.lane.b32.xlu0 %v1504, 32
        %v1794 = vpop.permute.xlu0 %1793
        %1795 = vrot.lane.b32.xlu0 %v1509, 32
        %v1796 = vpop.permute.xlu0 %1795
        %1797 = vrot.lane.b32.xlu0 %v1512, 32
        %v1798 = vpop.permute.xlu0 %1797
        %1799 = vrot.lane.b32.xlu0 %v1517, 32
        %v1800 = vpop.permute.xlu0 %1799
        %1801 = vrot.lane.b32.xlu0 %v1520, 32
        %v1802 = vpop.permute.xlu0 %1801
        %1803 = vrot.lane.b32.xlu0 %v1525, 32
        %v1804 = vpop.permute.xlu0 %1803
        %1805 = vrot.lane.b32.xlu0 %v1528, 32
        %v1806 = vpop.permute.xlu0 %1805
        %1807 = vrot.lane.b32.xlu0 %v1533, 32
        %v1808 = vpop.permute.xlu0 %1807
        %1809 = vrot.lane.b32.xlu0 %v1536, 32
        %v1810 = vpop.permute.xlu0 %1809
        %1811 = vrot.lane.b32.xlu0 %v1541, 32
        %v1812 = vpop.permute.xlu0 %1811
        %1813 = vrot.lane.b32.xlu0 %v1544, 32
        %v1814 = vpop.permute.xlu0 %1813
        %1815 = vrot.lane.b32.xlu0 %v1549, 32
        %v1816 = vpop.permute.xlu0 %1815
        %1817 = vrot.lane.b32.xlu0 %v1552, 32
        %v1818 = vpop.permute.xlu0 %1817
        %1819 = vrot.lane.b32.xlu0 %v1557, 32
        %v1820 = vpop.permute.xlu0 %1819
        %1821 = vrot.lane.b32.xlu0 %v1560, 32
        %v1822 = vpop.permute.xlu0 %1821
        %1823 = vrot.lane.b32.xlu0 %v1565, 32
        %v1824 = vpop.permute.xlu0 %1823
        %1825 = vrot.lane.b32.xlu0 %v1568, 32
        %v1826 = vpop.permute.xlu0 %1825
        %1827 = vrot.lane.b32.xlu0 %v1573, 32
        %v1828 = vpop.permute.xlu0 %1827
        %1829 = vrot.lane.b32.xlu0 %v1576, 32
        %v1830 = vpop.permute.xlu0 %1829
        %1831 = vrot.lane.b32.xlu0 %v1581, 32
        %v1832 = vpop.permute.xlu0 %1831
        %1833 = vrot.lane.b32.xlu0 %v1584, 32
        %v1834 = vpop.permute.xlu0 %1833
        %vm1867 = vcmask 523520
        %1868 = vst.msk [vmem:[%s1705 + $0x1] sm:$0xff] %vm1867, %v1772
        %1869 = vst.msk [vmem:[%s1705 + $0x9] sm:$0xff] %vm1867, %v1774
        %1870 = vst.msk [vmem:[%s1705 + $0x19] sm:$0xff] %vm1867, %v1776
        %1871 = vst.msk [vmem:[%s1705 + $0x21] sm:$0xff] %vm1867, %v1778
        %1872 = vst.msk [vmem:[%s1705 + $0x31] sm:$0xff] %vm1867, %v1780
        %1873 = vst.msk [vmem:[%s1705 + $0x39] sm:$0xff] %vm1867, %v1782
        %1874 = vst.msk [vmem:[%s1705 + $0x49] sm:$0xff] %vm1867, %v1784
        %1875 = vst.msk [vmem:[%s1705 + $0x51] sm:$0xff] %vm1867, %v1786
        %1876 = vst.msk [vmem:[%s1705 + $0x61] sm:$0xff] %vm1867, %v1788
        %1877 = vst.msk [vmem:[%s1705 + $0x69] sm:$0xff] %vm1867, %v1790
        %1878 = vst.msk [vmem:[%s1705 + $0x79] sm:$0xff] %vm1867, %v1792
        %1879 = vst.msk [vmem:[%s1705 + $0x81] sm:$0xff] %vm1867, %v1794
        %1880 = vst.msk [vmem:[%s1705 + $0x91] sm:$0xff] %vm1867, %v1796
        %1881 = vst.msk [vmem:[%s1705 + $0x99] sm:$0xff] %vm1867, %v1798
        %1882 = vst.msk [vmem:[%s1705 + $0xa9] sm:$0xff] %vm1867, %v1800
        %1883 = vst.msk [vmem:[%s1705 + $0xb1] sm:$0xff] %vm1867, %v1802
        %1884 = vst.msk [vmem:[%s1705 + $0xc1] sm:$0xff] %vm1867, %v1804
        %1885 = vst.msk [vmem:[%s1705 + $0xc9] sm:$0xff] %vm1867, %v1806
        %1886 = vst.msk [vmem:[%s1705 + $0xd9] sm:$0xff] %vm1867, %v1808
        %1887 = vst.msk [vmem:[%s1705 + $0xe1] sm:$0xff] %vm1867, %v1810
        %1888 = vst.msk [vmem:[%s1705 + $0xf1] sm:$0xff] %vm1867, %v1812
        %1889 = vst.msk [vmem:[%s1705 + $0xf9] sm:$0xff] %vm1867, %v1814
        %1890 = vst.msk [vmem:[%s1705 + $0x109] sm:$0xff] %vm1867, %v1816
        %1891 = vst.msk [vmem:[%s1705 + $0x111] sm:$0xff] %vm1867, %v1818
        %1892 = vst.msk [vmem:[%s1705 + $0x121] sm:$0xff] %vm1867, %v1820
        %1893 = vst.msk [vmem:[%s1705 + $0x129] sm:$0xff] %vm1867, %v1822
        %1894 = vst.msk [vmem:[%s1705 + $0x139] sm:$0xff] %vm1867, %v1824
        %1895 = vst.msk [vmem:[%s1705 + $0x141] sm:$0xff] %vm1867, %v1826
        %1896 = vst.msk [vmem:[%s1705 + $0x151] sm:$0xff] %vm1867, %v1828
        %1897 = vst.msk [vmem:[%s1705 + $0x159] sm:$0xff] %vm1867, %v1830
        %1898 = vst.msk [vmem:[%s1705 + $0x169] sm:$0xff] %vm1867, %v1832
        %1899 = vst.msk [vmem:[%s1705 + $0x171] sm:$0xff] %vm1867, %v1834
        %v1900 = vld [vmem:[%s343] sm:$0xf]
        %v1901 = vld [vmem:[%s343 + $0x4] sm:$0xf]
        %v1902 = vld [vmem:[%s343 + $0x8] sm:$0xf]
        %v1903 = vld [vmem:[%s343 + $0xc] sm:$0xf]
        %v1904 = vld [vmem:[%s343 + $0x10] sm:$0xf]
        %v1905 = vld [vmem:[%s343 + $0x14] sm:$0xf]
        %v1906 = vld [vmem:[%s343 + $0x18] sm:$0xf]
        %v1907 = vld [vmem:[%s343 + $0x1c] sm:$0xf]
        %v1908 = vld [vmem:[%s343 + $0x20] sm:$0xf]
        %v1909 = vld [vmem:[%s343 + $0x24] sm:$0xf]
        %v1910 = vld [vmem:[%s343 + $0x28] sm:$0xf]
        %v1911 = vld [vmem:[%s343 + $0x2c] sm:$0xf]
        %v1912 = vld [vmem:[%s343 + $0x30] sm:$0xf]
        %v1913 = vld [vmem:[%s343 + $0x34] sm:$0xf]
        %v1914 = vld [vmem:[%s343 + $0x38] sm:$0xf]
        %v1915 = vld [vmem:[%s343 + $0x3c] sm:$0xf]
        %v1916 = vld [vmem:[%s343 + $0x40] sm:$0xf]
        %v1917 = vld [vmem:[%s343 + $0x44] sm:$0xf]
        %v1918 = vld [vmem:[%s343 + $0x48] sm:$0xf]
        %v1919 = vld [vmem:[%s343 + $0x4c] sm:$0xf]
        %v1920 = vld [vmem:[%s343 + $0x50] sm:$0xf]
        %v1921 = vld [vmem:[%s343 + $0x54] sm:$0xf]
        %v1922 = vld [vmem:[%s343 + $0x58] sm:$0xf]
        %v1923 = vld [vmem:[%s343 + $0x5c] sm:$0xf]
        %v1924 = vld [vmem:[%s343 + $0x60] sm:$0xf]
        %v1925 = vld [vmem:[%s343 + $0x64] sm:$0xf]
        %v1926 = vld [vmem:[%s343 + $0x68] sm:$0xf]
        %v1927 = vld [vmem:[%s343 + $0x6c] sm:$0xf]
        %v1928 = vld [vmem:[%s343 + $0x70] sm:$0xf]
        %v1929 = vld [vmem:[%s343 + $0x74] sm:$0xf]
        %v1930 = vld [vmem:[%s343 + $0x78] sm:$0xf]
        %v1931 = vld [vmem:[%s343 + $0x7c] sm:$0xf]
        %v1932 = vunpack.c.l.bf16 %v1900
        %v1933 = vunpack.c.l.bf16 %v1901
        %v1934 = vunpack.c.l.bf16 %v1902
        %v1935 = vunpack.c.l.bf16 %v1903
        %v1936 = vunpack.c.l.bf16 %v1904
        %v1937 = vunpack.c.l.bf16 %v1905
        %v1938 = vunpack.c.l.bf16 %v1906
        %v1939 = vunpack.c.l.bf16 %v1907
        %v1940 = vunpack.c.l.bf16 %v1908
        %v1941 = vunpack.c.l.bf16 %v1909
        %v1942 = vunpack.c.l.bf16 %v1910
        %v1943 = vunpack.c.l.bf16 %v1911
        %v1944 = vunpack.c.l.bf16 %v1912
        %v1945 = vunpack.c.l.bf16 %v1913
        %v1946 = vunpack.c.l.bf16 %v1914
        %v1947 = vunpack.c.l.bf16 %v1915
        %v1948 = vunpack.c.l.bf16 %v1916
        %v1949 = vunpack.c.l.bf16 %v1917
        %v1950 = vunpack.c.l.bf16 %v1918
        %v1951 = vunpack.c.l.bf16 %v1919
        %v1952 = vunpack.c.l.bf16 %v1920
        %v1953 = vunpack.c.l.bf16 %v1921
        %v1954 = vunpack.c.l.bf16 %v1922
        %v1955 = vunpack.c.l.bf16 %v1923
        %v1956 = vunpack.c.l.bf16 %v1924
        %v1957 = vunpack.c.l.bf16 %v1925
        %v1958 = vunpack.c.l.bf16 %v1926
        %v1959 = vunpack.c.l.bf16 %v1927
        %v1960 = vunpack.c.l.bf16 %v1928
        %v1961 = vunpack.c.l.bf16 %v1929
        %v1962 = vunpack.c.l.bf16 %v1930
        %v1963 = vunpack.c.l.bf16 %v1931
        %1996 = vrot.lane.b32.xlu0 %v1932, 64
        %v1997 = vpop.permute.xlu0 %1996
        %1998 = vrot.lane.b32.xlu0 %v1933, 64
        %v1999 = vpop.permute.xlu0 %1998
        %2000 = vrot.lane.b32.xlu0 %v1934, 64
        %v2001 = vpop.permute.xlu0 %2000
        %2002 = vrot.lane.b32.xlu0 %v1935, 64
        %v2003 = vpop.permute.xlu0 %2002
        %2004 = vrot.lane.b32.xlu0 %v1936, 64
        %v2005 = vpop.permute.xlu0 %2004
        %2006 = vrot.lane.b32.xlu0 %v1937, 64
        %v2007 = vpop.permute.xlu0 %2006
        %2008 = vrot.lane.b32.xlu0 %v1938, 64
        %v2009 = vpop.permute.xlu0 %2008
        %2010 = vrot.lane.b32.xlu0 %v1939, 64
        %v2011 = vpop.permute.xlu0 %2010
        %2012 = vrot.lane.b32.xlu0 %v1940, 64
        %v2013 = vpop.permute.xlu0 %2012
        %2014 = vrot.lane.b32.xlu0 %v1941, 64
        %v2015 = vpop.permute.xlu0 %2014
        %2016 = vrot.lane.b32.xlu0 %v1942, 64
        %v2017 = vpop.permute.xlu0 %2016
        %2018 = vrot.lane.b32.xlu0 %v1943, 64
        %v2019 = vpop.permute.xlu0 %2018
        %2020 = vrot.lane.b32.xlu0 %v1944, 64
        %v2021 = vpop.permute.xlu0 %2020
        %2022 = vrot.lane.b32.xlu0 %v1945, 64
        %v2023 = vpop.permute.xlu0 %2022
        %2024 = vrot.lane.b32.xlu0 %v1946, 64
        %v2025 = vpop.permute.xlu0 %2024
        %2026 = vrot.lane.b32.xlu0 %v1947, 64
        %v2027 = vpop.permute.xlu0 %2026
        %2028 = vrot.lane.b32.xlu0 %v1948, 64
        %v2029 = vpop.permute.xlu0 %2028
        %2030 = vrot.lane.b32.xlu0 %v1949, 64
        %v2031 = vpop.permute.xlu0 %2030
        %2032 = vrot.lane.b32.xlu0 %v1950, 64
        %v2033 = vpop.permute.xlu0 %2032
        %2034 = vrot.lane.b32.xlu0 %v1951, 64
        %v2035 = vpop.permute.xlu0 %2034
        %2036 = vrot.lane.b32.xlu0 %v1952, 64
        %v2037 = vpop.permute.xlu0 %2036
        %2038 = vrot.lane.b32.xlu0 %v1953, 64
        %v2039 = vpop.permute.xlu0 %2038
        %2040 = vrot.lane.b32.xlu0 %v1954, 64
        %v2041 = vpop.permute.xlu0 %2040
        %2042 = vrot.lane.b32.xlu0 %v1955, 64
        %v2043 = vpop.permute.xlu0 %2042
        %2044 = vrot.lane.b32.xlu0 %v1956, 64
        %v2045 = vpop.permute.xlu0 %2044
        %2046 = vrot.lane.b32.xlu0 %v1957, 64
        %v2047 = vpop.permute.xlu0 %2046
        %2048 = vrot.lane.b32.xlu0 %v1958, 64
        %v2049 = vpop.permute.xlu0 %2048
        %2050 = vrot.lane.b32.xlu0 %v1959, 64
        %v2051 = vpop.permute.xlu0 %2050
        %2052 = vrot.lane.b32.xlu0 %v1960, 64
        %v2053 = vpop.permute.xlu0 %2052
        %2054 = vrot.lane.b32.xlu0 %v1961, 64
        %v2055 = vpop.permute.xlu0 %2054
        %2056 = vrot.lane.b32.xlu0 %v1962, 64
        %v2057 = vpop.permute.xlu0 %2056
        %2058 = vrot.lane.b32.xlu0 %v1963, 64
        %v2059 = vpop.permute.xlu0 %2058
        %vm2092 = vcmask 785920
        %2093 = vst.msk [vmem:[%s1705 + $0x1] sm:$0xff] %vm2092, %v1997
        %2094 = vst.msk [vmem:[%s1705 + $0x9] sm:$0xff] %vm2092, %v1999
        %2095 = vst.msk [vmem:[%s1705 + $0x19] sm:$0xff] %vm2092, %v2001
        %2096 = vst.msk [vmem:[%s1705 + $0x21] sm:$0xff] %vm2092, %v2003
        %2097 = vst.msk [vmem:[%s1705 + $0x31] sm:$0xff] %vm2092, %v2005
        %2098 = vst.msk [vmem:[%s1705 + $0x39] sm:$0xff] %vm2092, %v2007
        %2099 = vst.msk [vmem:[%s1705 + $0x49] sm:$0xff] %vm2092, %v2009
        %2100 = vst.msk [vmem:[%s1705 + $0x51] sm:$0xff] %vm2092, %v2011
        %2101 = vst.msk [vmem:[%s1705 + $0x61] sm:$0xff] %vm2092, %v2013
        %2102 = vst.msk [vmem:[%s1705 + $0x69] sm:$0xff] %vm2092, %v2015
        %2103 = vst.msk [vmem:[%s1705 + $0x79] sm:$0xff] %vm2092, %v2017
        %2104 = vst.msk [vmem:[%s1705 + $0x81] sm:$0xff] %vm2092, %v2019
        %2105 = vst.msk [vmem:[%s1705 + $0x91] sm:$0xff] %vm2092, %v2021
        %2106 = vst.msk [vmem:[%s1705 + $0x99] sm:$0xff] %vm2092, %v2023
        %2107 = vst.msk [vmem:[%s1705 + $0xa9] sm:$0xff] %vm2092, %v2025
        %2108 = vst.msk [vmem:[%s1705 + $0xb1] sm:$0xff] %vm2092, %v2027
        %2109 = vst.msk [vmem:[%s1705 + $0xc1] sm:$0xff] %vm2092, %v2029
        %2110 = vst.msk [vmem:[%s1705 + $0xc9] sm:$0xff] %vm2092, %v2031
        %2111 = vst.msk [vmem:[%s1705 + $0xd9] sm:$0xff] %vm2092, %v2033
        %2112 = vst.msk [vmem:[%s1705 + $0xe1] sm:$0xff] %vm2092, %v2035
        %2113 = vst.msk [vmem:[%s1705 + $0xf1] sm:$0xff] %vm2092, %v2037
        %2114 = vst.msk [vmem:[%s1705 + $0xf9] sm:$0xff] %vm2092, %v2039
        %2115 = vst.msk [vmem:[%s1705 + $0x109] sm:$0xff] %vm2092, %v2041
        %2116 = vst.msk [vmem:[%s1705 + $0x111] sm:$0xff] %vm2092, %v2043
        %2117 = vst.msk [vmem:[%s1705 + $0x121] sm:$0xff] %vm2092, %v2045
        %2118 = vst.msk [vmem:[%s1705 + $0x129] sm:$0xff] %vm2092, %v2047
        %2119 = vst.msk [vmem:[%s1705 + $0x139] sm:$0xff] %vm2092, %v2049
        %2120 = vst.msk [vmem:[%s1705 + $0x141] sm:$0xff] %vm2092, %v2051
        %2121 = vst.msk [vmem:[%s1705 + $0x151] sm:$0xff] %vm2092, %v2053
        %2122 = vst.msk [vmem:[%s1705 + $0x159] sm:$0xff] %vm2092, %v2055
        %2123 = vst.msk [vmem:[%s1705 + $0x169] sm:$0xff] %vm2092, %v2057
        %2124 = vst.msk [vmem:[%s1705 + $0x171] sm:$0xff] %vm2092, %v2059
        %v2125 = vld [vmem:[#allocation2] sm:$0xff]
        %v2126 = vld [vmem:[#allocation2 + $0x8] sm:$0xff]
        %v2127 = vld [vmem:[#allocation2 + $0x18] sm:$0xff]
        %v2128 = vld [vmem:[#allocation2 + $0x20] sm:$0xff]
        %v2129 = vld [vmem:[#allocation2 + $0x30] sm:$0xff]
        %v2130 = vld [vmem:[#allocation2 + $0x38] sm:$0xff]
        %v2131 = vld [vmem:[#allocation2 + $0x48] sm:$0xff]
        %v2132 = vld [vmem:[#allocation2 + $0x50] sm:$0xff]
        %v2133 = vld [vmem:[#allocation2 + $0x60] sm:$0xff]
        %v2134 = vld [vmem:[#allocation2 + $0x68] sm:$0xff]
        %v2135 = vld [vmem:[#allocation2 + $0x78] sm:$0xff]
        %v2136 = vld [vmem:[#allocation2 + $0x80] sm:$0xff]
        %v2137 = vld [vmem:[#allocation2 + $0x90] sm:$0xff]
        %v2138 = vld [vmem:[#allocation2 + $0x98] sm:$0xff]
        %v2139 = vld [vmem:[#allocation2 + $0xa8] sm:$0xff]
        %v2140 = vld [vmem:[#allocation2 + $0xb0] sm:$0xff]
        %v2141 = vld [vmem:[#allocation2 + $0xc0] sm:$0xff]
        %v2142 = vld [vmem:[#allocation2 + $0xc8] sm:$0xff]
        %v2143 = vld [vmem:[#allocation2 + $0xd8] sm:$0xff]
        %v2144 = vld [vmem:[#allocation2 + $0xe0] sm:$0xff]
        %v2145 = vld [vmem:[#allocation2 + $0xf0] sm:$0xff]
        %v2146 = vld [vmem:[#allocation2 + $0xf8] sm:$0xff]
        %v2147 = vld [vmem:[#allocation2 + $0x108] sm:$0xff]
        %v2148 = vld [vmem:[#allocation2 + $0x110] sm:$0xff]
        %v2149 = vld [vmem:[#allocation2 + $0x120] sm:$0xff]
        %v2150 = vld [vmem:[#allocation2 + $0x128] sm:$0xff]
        %v2151 = vld [vmem:[#allocation2 + $0x138] sm:$0xff]
        %v2152 = vld [vmem:[#allocation2 + $0x140] sm:$0xff]
        %v2153 = vld [vmem:[#allocation2 + $0x150] sm:$0xff]
        %v2154 = vld [vmem:[#allocation2 + $0x158] sm:$0xff]
        %v2155 = vld [vmem:[#allocation2 + $0x168] sm:$0xff]
        %v2156 = vld [vmem:[#allocation2 + $0x170] sm:$0xff]
        %v2157 = vld [vmem:[#allocation2 + $0x180] sm:$0xff]
        %v2158 = vld [vmem:[#allocation2 + $0x188] sm:$0xff]
        %v2159 = vld [vmem:[#allocation2 + $0x198] sm:$0xff]
        %v2160 = vld [vmem:[#allocation2 + $0x1a0] sm:$0xff]
        %v2161 = vpack.c.bf16 %v2126, %v2125
        %v2162 = vpack.c.bf16 %v2128, %v2127
        %v2163 = vpack.c.bf16 %v2130, %v2129
        %v2164 = vpack.c.bf16 %v2132, %v2131
        %v2165 = vpack.c.bf16 %v2134, %v2133
        %v2166 = vpack.c.bf16 %v2136, %v2135
        %v2167 = vpack.c.bf16 %v2138, %v2137
        %v2168 = vpack.c.bf16 %v2140, %v2139
        %v2169 = vpack.c.bf16 %v2142, %v2141
        %v2170 = vpack.c.bf16 %v2144, %v2143
        %v2171 = vpack.c.bf16 %v2146, %v2145
        %v2172 = vpack.c.bf16 %v2148, %v2147
        %v2173 = vpack.c.bf16 %v2150, %v2149
        %v2174 = vpack.c.bf16 %v2152, %v2151
        %v2175 = vpack.c.bf16 %v2154, %v2153
        %v2176 = vpack.c.bf16 %v2156, %v2155
        %v2177 = vpack.c.bf16 %v2158, %v2157
        %v2178 = vpack.c.bf16 %v2160, %v2159
        %2179 = vst [vmem:[#allocation3] sm:$0xff] %v2161
        %2180 = vst [vmem:[#allocation3 + $0x48] sm:$0xff] %v2162
        %2181 = vst [vmem:[#allocation3 + $0x90] sm:$0xff] %v2163
        %2182 = vst [vmem:[#allocation3 + $0xd8] sm:$0xff] %v2164
        %2183 = vst [vmem:[#allocation3 + $0x120] sm:$0xff] %v2165
        %2184 = vst [vmem:[#allocation3 + $0x168] sm:$0xff] %v2166
        %2185 = vst [vmem:[#allocation3 + $0x1b0] sm:$0xff] %v2167
        %2186 = vst [vmem:[#allocation3 + $0x1f8] sm:$0xff] %v2168
        %2187 = vst [vmem:[#allocation3 + $0x240] sm:$0xff] %v2169
        %2188 = vst [vmem:[#allocation3 + $0x288] sm:$0xff] %v2170
        %2189 = vst [vmem:[#allocation3 + $0x2d0] sm:$0xff] %v2171
        %2190 = vst [vmem:[#allocation3 + $0x318] sm:$0xff] %v2172
        %2191 = vst [vmem:[#allocation3 + $0x360] sm:$0xff] %v2173
        %2192 = vst [vmem:[#allocation3 + $0x3a8] sm:$0xff] %v2174
        %2193 = vst [vmem:[#allocation3 + $0x3f0] sm:$0xff] %v2175
        %2194 = vst [vmem:[#allocation3 + $0x438] sm:$0xff] %v2176
        %2195 = vst [vmem:[#allocation3 + $0x18] sm:$0xff] %v2162
        %2196 = vst [vmem:[#allocation3 + $0x60] sm:$0xff] %v2163
        %2197 = vst [vmem:[#allocation3 + $0xa8] sm:$0xff] %v2164
        %2198 = vst [vmem:[#allocation3 + $0xf0] sm:$0xff] %v2165
        %2199 = vst [vmem:[#allocation3 + $0x138] sm:$0xff] %v2166
        %2200 = vst [vmem:[#allocation3 + $0x180] sm:$0xff] %v2167
        %2201 = vst [vmem:[#allocation3 + $0x1c8] sm:$0xff] %v2168
        %2202 = vst [vmem:[#allocation3 + $0x210] sm:$0xff] %v2169
        %2203 = vst [vmem:[#allocation3 + $0x258] sm:$0xff] %v2170
        %2204 = vst [vmem:[#allocation3 + $0x2a0] sm:$0xff] %v2171
        %2205 = vst [vmem:[#allocation3 + $0x2e8] sm:$0xff] %v2172
        %2206 = vst [vmem:[#allocation3 + $0x330] sm:$0xff] %v2173
        %2207 = vst [vmem:[#allocation3 + $0x378] sm:$0xff] %v2174
        %2208 = vst [vmem:[#allocation3 + $0x3c0] sm:$0xff] %v2175
        %2209 = vst [vmem:[#allocation3 + $0x408] sm:$0xff] %v2176
        %2210 = vst [vmem:[#allocation3 + $0x450] sm:$0xff] %v2177
        %2211 = vst [vmem:[#allocation3 + $0x30] sm:$0xff] %v2163
        %2212 = vst [vmem:[#allocation3 + $0x78] sm:$0xff] %v2164
        %2213 = vst [vmem:[#allocation3 + $0xc0] sm:$0xff] %v2165
        %2214 = vst [vmem:[#allocation3 + $0x108] sm:$0xff] %v2166
        %2215 = vst [vmem:[#allocation3 + $0x150] sm:$0xff] %v2167
        %2216 = vst [vmem:[#allocation3 + $0x198] sm:$0xff] %v2168
        %2217 = vst [vmem:[#allocation3 + $0x1e0] sm:$0xff] %v2169
        %2218 = vst [vmem:[#allocation3 + $0x228] sm:$0xff] %v2170
        %2219 = vst [vmem:[#allocation3 + $0x270] sm:$0xff] %v2171
        %2220 = vst [vmem:[#allocation3 + $0x2b8] sm:$0xff] %v2172
        %2221 = vst [vmem:[#allocation3 + $0x300] sm:$0xff] %v2173
        %2222 = vst [vmem:[#allocation3 + $0x348] sm:$0xff] %v2174
        %2223 = vst [vmem:[#allocation3 + $0x390] sm:$0xff] %v2175
        %2224 = vst [vmem:[#allocation3 + $0x3d8] sm:$0xff] %v2176
        %2225 = vst [vmem:[#allocation3 + $0x420] sm:$0xff] %v2177
        %2226 = vst [vmem:[#allocation3 + $0x468] sm:$0xff] %v2178
        %v2227 = vld [vmem:[#allocation2 + $0x1] sm:$0xff]
        %v2228 = vld [vmem:[#allocation2 + $0x9] sm:$0xff]
        %v2229 = vld [vmem:[#allocation2 + $0x19] sm:$0xff]
        %v2230 = vld [vmem:[#allocation2 + $0x21] sm:$0xff]
        %v2231 = vld [vmem:[#allocation2 + $0x31] sm:$0xff]
        %v2232 = vld [vmem:[#allocation2 + $0x39] sm:$0xff]
        %v2233 = vld [vmem:[#allocation2 + $0x49] sm:$0xff]
        %v2234 = vld [vmem:[#allocation2 + $0x51] sm:$0xff]
        %v2235 = vld [vmem:[#allocation2 + $0x61] sm:$0xff]
        %v2236 = vld [vmem:[#allocation2 + $0x69] sm:$0xff]
        %v2237 = vld [vmem:[#allocation2 + $0x79] sm:$0xff]
        %v2238 = vld [vmem:[#allocation2 + $0x81] sm:$0xff]
        %v2239 = vld [vmem:[#allocation2 + $0x91] sm:$0xff]
        %v2240 = vld [vmem:[#allocation2 + $0x99] sm:$0xff]
        %v2241 = vld [vmem:[#allocation2 + $0xa9] sm:$0xff]
        %v2242 = vld [vmem:[#allocation2 + $0xb1] sm:$0xff]
        %v2243 = vld [vmem:[#allocation2 + $0xc1] sm:$0xff]
        %v2244 = vld [vmem:[#allocation2 + $0xc9] sm:$0xff]
        %v2245 = vld [vmem:[#allocation2 + $0xd9] sm:$0xff]
        %v2246 = vld [vmem:[#allocation2 + $0xe1] sm:$0xff]
        %v2247 = vld [vmem:[#allocation2 + $0xf1] sm:$0xff]
        %v2248 = vld [vmem:[#allocation2 + $0xf9] sm:$0xff]
        %v2249 = vld [vmem:[#allocation2 + $0x109] sm:$0xff]
        %v2250 = vld [vmem:[#allocation2 + $0x111] sm:$0xff]
        %v2251 = vld [vmem:[#allocation2 + $0x121] sm:$0xff]
        %v2252 = vld [vmem:[#allocation2 + $0x129] sm:$0xff]
        %v2253 = vld [vmem:[#allocation2 + $0x139] sm:$0xff]
        %v2254 = vld [vmem:[#allocation2 + $0x141] sm:$0xff]
        %v2255 = vld [vmem:[#allocation2 + $0x151] sm:$0xff]
        %v2256 = vld [vmem:[#allocation2 + $0x159] sm:$0xff]
        %v2257 = vld [vmem:[#allocation2 + $0x169] sm:$0xff]
        %v2258 = vld [vmem:[#allocation2 + $0x171] sm:$0xff]
        %v2259 = vld [vmem:[#allocation2 + $0x181] sm:$0xff]
        %v2260 = vld [vmem:[#allocation2 + $0x189] sm:$0xff]
        %v2261 = vld [vmem:[#allocation2 + $0x199] sm:$0xff]
        %v2262 = vld [vmem:[#allocation2 + $0x1a1] sm:$0xff]
        %v2263 = vpack.c.bf16 %v2228, %v2227
        %v2264 = vpack.c.bf16 %v2230, %v2229
        %v2265 = vpack.c.bf16 %v2232, %v2231
        %v2266 = vpack.c.bf16 %v2234, %v2233
        %v2267 = vpack.c.bf16 %v2236, %v2235
        %v2268 = vpack.c.bf16 %v2238, %v2237
        %v2269 = vpack.c.bf16 %v2240, %v2239
        %v2270 = vpack.c.bf16 %v2242, %v2241
        %v2271 = vpack.c.bf16 %v2244, %v2243
        %v2272 = vpack.c.bf16 %v2246, %v2245
        %v2273 = vpack.c.bf16 %v2248, %v2247
        %v2274 = vpack.c.bf16 %v2250, %v2249
        %v2275 = vpack.c.bf16 %v2252, %v2251
        %v2276 = vpack.c.bf16 %v2254, %v2253
        %v2277 = vpack.c.bf16 %v2256, %v2255
        %v2278 = vpack.c.bf16 %v2258, %v2257
        %v2279 = vpack.c.bf16 %v2260, %v2259
        %v2280 = vpack.c.bf16 %v2262, %v2261
        %2281 = vst [vmem:[#allocation3 + $0x8] sm:$0xff] %v2263
        %2282 = vst [vmem:[#allocation3 + $0x50] sm:$0xff] %v2264
        %2283 = vst [vmem:[#allocation3 + $0x98] sm:$0xff] %v2265
        %2284 = vst [vmem:[#allocation3 + $0xe0] sm:$0xff] %v2266
        %2285 = vst [vmem:[#allocation3 + $0x128] sm:$0xff] %v2267
        %2286 = vst [vmem:[#allocation3 + $0x170] sm:$0xff] %v2268
        %2287 = vst [vmem:[#allocation3 + $0x1b8] sm:$0xff] %v2269
        %2288 = vst [vmem:[#allocation3 + $0x200] sm:$0xff] %v2270
        %2289 = vst [vmem:[#allocation3 + $0x248] sm:$0xff] %v2271
        %2290 = vst [vmem:[#allocation3 + $0x290] sm:$0xff] %v2272
        %2291 = vst [vmem:[#allocation3 + $0x2d8] sm:$0xff] %v2273
        %2292 = vst [vmem:[#allocation3 + $0x320] sm:$0xff] %v2274
        %2293 = vst [vmem:[#allocation3 + $0x368] sm:$0xff] %v2275
        %2294 = vst [vmem:[#allocation3 + $0x3b0] sm:$0xff] %v2276
        %2295 = vst [vmem:[#allocation3 + $0x3f8] sm:$0xff] %v2277
        %2296 = vst [vmem:[#allocation3 + $0x440] sm:$0xff] %v2278
        %2297 = vst [vmem:[#allocation3 + $0x20] sm:$0xff] %v2264
        %2298 = vst [vmem:[#allocation3 + $0x68] sm:$0xff] %v2265
        %2299 = vst [vmem:[#allocation3 + $0xb0] sm:$0xff] %v2266
        %2300 = vst [vmem:[#allocation3 + $0xf8] sm:$0xff] %v2267
        %2301 = vst [vmem:[#allocation3 + $0x140] sm:$0xff] %v2268
        %2302 = vst [vmem:[#allocation3 + $0x188] sm:$0xff] %v2269
        %2303 = vst [vmem:[#allocation3 + $0x1d0] sm:$0xff] %v2270
        %2304 = vst [vmem:[#allocation3 + $0x218] sm:$0xff] %v2271
        %2305 = vst [vmem:[#allocation3 + $0x260] sm:$0xff] %v2272
        %2306 = vst [vmem:[#allocation3 + $0x2a8] sm:$0xff] %v2273
        %2307 = vst [vmem:[#allocation3 + $0x2f0] sm:$0xff] %v2274
        %2308 = vst [vmem:[#allocation3 + $0x338] sm:$0xff] %v2275
        %2309 = vst [vmem:[#allocation3 + $0x380] sm:$0xff] %v2276
        %2310 = vst [vmem:[#allocation3 + $0x3c8] sm:$0xff] %v2277
        %2311 = vst [vmem:[#allocation3 + $0x410] sm:$0xff] %v2278
        %2312 = vst [vmem:[#allocation3 + $0x458] sm:$0xff] %v2279
        %2313 = vst [vmem:[#allocation3 + $0x38] sm:$0xff] %v2265
        %2314 = vst [vmem:[#allocation3 + $0x80] sm:$0xff] %v2266
        %2315 = vst [vmem:[#allocation3 + $0xc8] sm:$0xff] %v2267
        %2316 = vst [vmem:[#allocation3 + $0x110] sm:$0xff] %v2268
        %2317 = vst [vmem:[#allocation3 + $0x158] sm:$0xff] %v2269
        %2318 = vst [vmem:[#allocation3 + $0x1a0] sm:$0xff] %v2270
        %2319 = vst [vmem:[#allocation3 + $0x1e8] sm:$0xff] %v2271
        %2320 = vst [vmem:[#allocation3 + $0x230] sm:$0xff] %v2272
        %2321 = vst [vmem:[#allocation3 + $0x278] sm:$0xff] %v2273
        %2322 = vst [vmem:[#allocation3 + $0x2c0] sm:$0xff] %v2274
        %2323 = vst [vmem:[#allocation3 + $0x308] sm:$0xff] %v2275
        %2324 = vst [vmem:[#allocation3 + $0x350] sm:$0xff] %v2276
        %2325 = vst [vmem:[#allocation3 + $0x398] sm:$0xff] %v2277
        %2326 = vst [vmem:[#allocation3 + $0x3e0] sm:$0xff] %v2278
        %2327 = vst [vmem:[#allocation3 + $0x428] sm:$0xff] %v2279
        %2328 = vst [vmem:[#allocation3 + $0x470] sm:$0xff] %v2280
        %v2329 = vld [vmem:[#allocation2 + $0x2] sm:$0xff]
        %v2330 = vld [vmem:[#allocation2 + $0xa] sm:$0xff]
        %v2331 = vld [vmem:[#allocation2 + $0x1a] sm:$0xff]
        %v2332 = vld [vmem:[#allocation2 + $0x22] sm:$0xff]
        %v2333 = vld [vmem:[#allocation2 + $0x32] sm:$0xff]
        %v2334 = vld [vmem:[#allocation2 + $0x3a] sm:$0xff]
        %v2335 = vld [vmem:[#allocation2 + $0x4a] sm:$0xff]
        %v2336 = vld [vmem:[#allocation2 + $0x52] sm:$0xff]
        %v2337 = vld [vmem:[#allocation2 + $0x62] sm:$0xff]
        %v2338 = vld [vmem:[#allocation2 + $0x6a] sm:$0xff]
        %v2339 = vld [vmem:[#allocation2 + $0x7a] sm:$0xff]
        %v2340 = vld [vmem:[#allocation2 + $0x82] sm:$0xff]
        %v2341 = vld [vmem:[#allocation2 + $0x92] sm:$0xff]
        %v2342 = vld [vmem:[#allocation2 + $0x9a] sm:$0xff]
        %v2343 = vld [vmem:[#allocation2 + $0xaa] sm:$0xff]
        %v2344 = vld [vmem:[#allocation2 + $0xb2] sm:$0xff]
        %v2345 = vld [vmem:[#allocation2 + $0xc2] sm:$0xff]
        %v2346 = vld [vmem:[#allocation2 + $0xca] sm:$0xff]
        %v2347 = vld [vmem:[#allocation2 + $0xda] sm:$0xff]
        %v2348 = vld [vmem:[#allocation2 + $0xe2] sm:$0xff]
        %v2349 = vld [vmem:[#allocation2 + $0xf2] sm:$0xff]
        %v2350 = vld [vmem:[#allocation2 + $0xfa] sm:$0xff]
        %v2351 = vld [vmem:[#allocation2 + $0x10a] sm:$0xff]
        %v2352 = vld [vmem:[#allocation2 + $0x112] sm:$0xff]
        %v2353 = vld [vmem:[#allocation2 + $0x122] sm:$0xff]
        %v2354 = vld [vmem:[#allocation2 + $0x12a] sm:$0xff]
        %v2355 = vld [vmem:[#allocation2 + $0x13a] sm:$0xff]
        %v2356 = vld [vmem:[#allocation2 + $0x142] sm:$0xff]
        %v2357 = vld [vmem:[#allocation2 + $0x152] sm:$0xff]
        %v2358 = vld [vmem:[#allocation2 + $0x15a] sm:$0xff]
        %v2359 = vld [vmem:[#allocation2 + $0x16a] sm:$0xff]
        %v2360 = vld [vmem:[#allocation2 + $0x172] sm:$0xff]
        %v2361 = vld [vmem:[#allocation2 + $0x182] sm:$0xff]
        %v2362 = vld [vmem:[#allocation2 + $0x18a] sm:$0xff]
        %v2363 = vld [vmem:[#allocation2 + $0x19a] sm:$0xff]
        %v2364 = vld [vmem:[#allocation2 + $0x1a2] sm:$0xff]
        %v2365 = vpack.c.bf16 %v2330, %v2329
        %v2366 = vpack.c.bf16 %v2332, %v2331
        %v2367 = vpack.c.bf16 %v2334, %v2333
        %v2368 = vpack.c.bf16 %v2336, %v2335
        %v2369 = vpack.c.bf16 %v2338, %v2337
        %v2370 = vpack.c.bf16 %v2340, %v2339
        %v2371 = vpack.c.bf16 %v2342, %v2341
        %v2372 = vpack.c.bf16 %v2344, %v2343
        %v2373 = vpack.c.bf16 %v2346, %v2345
        %v2374 = vpack.c.bf16 %v2348, %v2347
        %v2375 = vpack.c.bf16 %v2350, %v2349
        %v2376 = vpack.c.bf16 %v2352, %v2351
        %v2377 = vpack.c.bf16 %v2354, %v2353
        %v2378 = vpack.c.bf16 %v2356, %v2355
        %v2379 = vpack.c.bf16 %v2358, %v2357
        %v2380 = vpack.c.bf16 %v2360, %v2359
        %v2381 = vpack.c.bf16 %v2362, %v2361
        %v2382 = vpack.c.bf16 %v2364, %v2363
        %2383 = vst [vmem:[#allocation3 + $0x10] sm:$0xff] %v2365
        %2384 = vst [vmem:[#allocation3 + $0x58] sm:$0xff] %v2366
        %2385 = vst [vmem:[#allocation3 + $0xa0] sm:$0xff] %v2367
        %2386 = vst [vmem:[#allocation3 + $0xe8] sm:$0xff] %v2368
        %2387 = vst [vmem:[#allocation3 + $0x130] sm:$0xff] %v2369
        %2388 = vst [vmem:[#allocation3 + $0x178] sm:$0xff] %v2370
        %2389 = vst [vmem:[#allocation3 + $0x1c0] sm:$0xff] %v2371
        %2390 = vst [vmem:[#allocation3 + $0x208] sm:$0xff] %v2372
        %2391 = vst [vmem:[#allocation3 + $0x250] sm:$0xff] %v2373
        %2392 = vst [vmem:[#allocation3 + $0x298] sm:$0xff] %v2374
        %2393 = vst [vmem:[#allocation3 + $0x2e0] sm:$0xff] %v2375
        %2394 = vst [vmem:[#allocation3 + $0x328] sm:$0xff] %v2376
        %2395 = vst [vmem:[#allocation3 + $0x370] sm:$0xff] %v2377
        %2396 = vst [vmem:[#allocation3 + $0x3b8] sm:$0xff] %v2378
        %2397 = vst [vmem:[#allocation3 + $0x400] sm:$0xff] %v2379
        %2398 = vst [vmem:[#allocation3 + $0x448] sm:$0xff] %v2380
        %2399 = vst [vmem:[#allocation3 + $0x28] sm:$0xff] %v2366
        %2400 = vst [vmem:[#allocation3 + $0x70] sm:$0xff] %v2367
        %2401 = vst [vmem:[#allocation3 + $0xb8] sm:$0xff] %v2368
        %2402 = vst [vmem:[#allocation3 + $0x100] sm:$0xff] %v2369
        %2403 = vst [vmem:[#allocation3 + $0x148] sm:$0xff] %v2370
        %2404 = vst [vmem:[#allocation3 + $0x190] sm:$0xff] %v2371
        %2405 = vst [vmem:[#allocation3 + $0x1d8] sm:$0xff] %v2372
        %2406 = vst [vmem:[#allocation3 + $0x220] sm:$0xff] %v2373
        %2407 = vst [vmem:[#allocation3 + $0x268] sm:$0xff] %v2374
        %2408 = vst [vmem:[#allocation3 + $0x2b0] sm:$0xff] %v2375
        %2409 = vst [vmem:[#allocation3 + $0x2f8] sm:$0xff] %v2376
        %2410 = vst [vmem:[#allocation3 + $0x340] sm:$0xff] %v2377
        %2411 = vst [vmem:[#allocation3 + $0x388] sm:$0xff] %v2378
        %2412 = vst [vmem:[#allocation3 + $0x3d0] sm:$0xff] %v2379
        %2413 = vst [vmem:[#allocation3 + $0x418] sm:$0xff] %v2380
        %2414 = vst [vmem:[#allocation3 + $0x460] sm:$0xff] %v2381
        %2415 = vst [vmem:[#allocation3 + $0x40] sm:$0xff] %v2367
        %2416 = vst [vmem:[#allocation3 + $0x88] sm:$0xff] %v2368
        %2417 = vst [vmem:[#allocation3 + $0xd0] sm:$0xff] %v2369
        %2418 = vst [vmem:[#allocation3 + $0x118] sm:$0xff] %v2370
        %2419 = vst [vmem:[#allocation3 + $0x160] sm:$0xff] %v2371
        %2420 = vst [vmem:[#allocation3 + $0x1a8] sm:$0xff] %v2372
        %2421 = vst [vmem:[#allocation3 + $0x1f0] sm:$0xff] %v2373
        %2422 = vst [vmem:[#allocation3 + $0x238] sm:$0xff] %v2374
        %2423 = vst [vmem:[#allocation3 + $0x280] sm:$0xff] %v2375
        %2424 = vst [vmem:[#allocation3 + $0x2c8] sm:$0xff] %v2376
        %2425 = vst [vmem:[#allocation3 + $0x310] sm:$0xff] %v2377
        %2426 = vst [vmem:[#allocation3 + $0x358] sm:$0xff] %v2378
        %2427 = vst [vmem:[#allocation3 + $0x3a0] sm:$0xff] %v2379
        %2428 = vst [vmem:[#allocation3 + $0x3e8] sm:$0xff] %v2380
        %2429 = vst [vmem:[#allocation3 + $0x430] sm:$0xff] %v2381
        %2430 = vst [vmem:[#allocation3 + $0x478] sm:$0xff] %v2382
        %v2431 = vld [vmem:[#allocation3] sm:$0xff]
        %v2432 = vld [vmem:[#allocation3 + $0x8] sm:$0xff]
        %v2433 = vld [vmem:[#allocation3 + $0x10] sm:$0xff]
        %v2434 = vld [vmem:[#allocation3 + $0x18] sm:$0xff]
        %v2435 = vld [vmem:[#allocation3 + $0x20] sm:$0xff]
        %v2436 = vld [vmem:[#allocation3 + $0x28] sm:$0xff]
        %v2437 = vld [vmem:[#allocation3 + $0x30] sm:$0xff]
        %v2438 = vld [vmem:[#allocation3 + $0x38] sm:$0xff]
        %v2439 = vld [vmem:[#allocation3 + $0x40] sm:$0xff]
        %v2440 = vld [vmem:[#allocation3 + $0x48] sm:$0xff]
        %v2441 = vld [vmem:[#allocation3 + $0x50] sm:$0xff]
        %v2442 = vld [vmem:[#allocation3 + $0x58] sm:$0xff]
        %v2443 = vld [vmem:[#allocation3 + $0x60] sm:$0xff]
        %v2444 = vld [vmem:[#allocation3 + $0x68] sm:$0xff]
        %v2445 = vld [vmem:[#allocation3 + $0x70] sm:$0xff]
        %v2446 = vld [vmem:[#allocation3 + $0x78] sm:$0xff]
        %v2447 = vld [vmem:[#allocation3 + $0x80] sm:$0xff]
        %v2448 = vld [vmem:[#allocation3 + $0x88] sm:$0xff]
        %v2449 = vld [vmem:[#allocation3 + $0x90] sm:$0xff]
        %v2450 = vld [vmem:[#allocation3 + $0x98] sm:$0xff]
        %v2451 = vld [vmem:[#allocation3 + $0xa0] sm:$0xff]
        %v2452 = vld [vmem:[#allocation3 + $0xa8] sm:$0xff]
        %v2453 = vld [vmem:[#allocation3 + $0xb0] sm:$0xff]
        %v2454 = vld [vmem:[#allocation3 + $0xb8] sm:$0xff]
        %v2455 = vld [vmem:[#allocation3 + $0xc0] sm:$0xff]
        %v2456 = vld [vmem:[#allocation3 + $0xc8] sm:$0xff]
        %v2457 = vld [vmem:[#allocation3 + $0xd0] sm:$0xff]
        %v2458 = vld [vmem:[#allocation3 + $0xd8] sm:$0xff]
        %v2459 = vld [vmem:[#allocation3 + $0xe0] sm:$0xff]
        %v2460 = vld [vmem:[#allocation3 + $0xe8] sm:$0xff]
        %v2461 = vld [vmem:[#allocation3 + $0xf0] sm:$0xff]
        %v2462 = vld [vmem:[#allocation3 + $0xf8] sm:$0xff]
        %v2463 = vld [vmem:[#allocation3 + $0x100] sm:$0xff]
        %v2464 = vld [vmem:[#allocation3 + $0x108] sm:$0xff]
        %v2465 = vld [vmem:[#allocation3 + $0x110] sm:$0xff]
        %v2466 = vld [vmem:[#allocation3 + $0x118] sm:$0xff]
        %v2467 = vld [vmem:[#allocation3 + $0x120] sm:$0xff]
        %v2468 = vld [vmem:[#allocation3 + $0x128] sm:$0xff]
        %v2469 = vld [vmem:[#allocation3 + $0x130] sm:$0xff]
        %v2470 = vld [vmem:[#allocation3 + $0x138] sm:$0xff]
        %v2471 = vld [vmem:[#allocation3 + $0x140] sm:$0xff]
        %v2472 = vld [vmem:[#allocation3 + $0x148] sm:$0xff]
        %v2473 = vld [vmem:[#allocation3 + $0x150] sm:$0xff]
        %v2474 = vld [vmem:[#allocation3 + $0x158] sm:$0xff]
        %v2475 = vld [vmem:[#allocation3 + $0x160] sm:$0xff]
        %v2476 = vld [vmem:[#allocation3 + $0x168] sm:$0xff]
        %v2477 = vld [vmem:[#allocation3 + $0x170] sm:$0xff]
        %v2478 = vld [vmem:[#allocation3 + $0x178] sm:$0xff]
        %v2479 = vld [vmem:[#allocation3 + $0x180] sm:$0xff]
        %v2480 = vld [vmem:[#allocation3 + $0x188] sm:$0xff]
        %v2481 = vld [vmem:[#allocation3 + $0x190] sm:$0xff]
        %v2482 = vld [vmem:[#allocation3 + $0x198] sm:$0xff]
        %v2483 = vld [vmem:[#allocation3 + $0x1a0] sm:$0xff]
        %v2484 = vld [vmem:[#allocation3 + $0x1a8] sm:$0xff]
        %v2485 = vld [vmem:[#allocation3 + $0x1b0] sm:$0xff]
        %v2486 = vld [vmem:[#allocation3 + $0x1b8] sm:$0xff]
        %v2487 = vld [vmem:[#allocation3 + $0x1c0] sm:$0xff]
        %v2488 = vld [vmem:[#allocation3 + $0x1c8] sm:$0xff]
        %v2489 = vld [vmem:[#allocation3 + $0x1d0] sm:$0xff]
        %v2490 = vld [vmem:[#allocation3 + $0x1d8] sm:$0xff]
        %v2491 = vld [vmem:[#allocation3 + $0x1e0] sm:$0xff]
        %v2492 = vld [vmem:[#allocation3 + $0x1e8] sm:$0xff]
        %v2493 = vld [vmem:[#allocation3 + $0x1f0] sm:$0xff]
        %v2494 = vld [vmem:[#allocation3 + $0x1f8] sm:$0xff]
        %v2495 = vld [vmem:[#allocation3 + $0x200] sm:$0xff]
        %v2496 = vld [vmem:[#allocation3 + $0x208] sm:$0xff]
        %v2497 = vld [vmem:[#allocation3 + $0x210] sm:$0xff]
        %v2498 = vld [vmem:[#allocation3 + $0x218] sm:$0xff]
        %v2499 = vld [vmem:[#allocation3 + $0x220] sm:$0xff]
        %v2500 = vld [vmem:[#allocation3 + $0x228] sm:$0xff]
        %v2501 = vld [vmem:[#allocation3 + $0x230] sm:$0xff]
        %v2502 = vld [vmem:[#allocation3 + $0x238] sm:$0xff]
        %v2503 = vld [vmem:[#allocation3 + $0x240] sm:$0xff]
        %v2504 = vld [vmem:[#allocation3 + $0x248] sm:$0xff]
        %v2505 = vld [vmem:[#allocation3 + $0x250] sm:$0xff]
        %v2506 = vld [vmem:[#allocation3 + $0x258] sm:$0xff]
        %v2507 = vld [vmem:[#allocation3 + $0x260] sm:$0xff]
        %v2508 = vld [vmem:[#allocation3 + $0x268] sm:$0xff]
        %v2509 = vld [vmem:[#allocation3 + $0x270] sm:$0xff]
        %v2510 = vld [vmem:[#allocation3 + $0x278] sm:$0xff]
        %v2511 = vld [vmem:[#allocation3 + $0x280] sm:$0xff]
        %v2512 = vld [vmem:[#allocation3 + $0x288] sm:$0xff]
        %v2513 = vld [vmem:[#allocation3 + $0x290] sm:$0xff]
        %v2514 = vld [vmem:[#allocation3 + $0x298] sm:$0xff]
        %v2515 = vld [vmem:[#allocation3 + $0x2a0] sm:$0xff]
        %v2516 = vld [vmem:[#allocation3 + $0x2a8] sm:$0xff]
        %v2517 = vld [vmem:[#allocation3 + $0x2b0] sm:$0xff]
        %v2518 = vld [vmem:[#allocation3 + $0x2b8] sm:$0xff]
        %v2519 = vld [vmem:[#allocation3 + $0x2c0] sm:$0xff]
        %v2520 = vld [vmem:[#allocation3 + $0x2c8] sm:$0xff]
        %v2521 = vld [vmem:[#allocation3 + $0x2d0] sm:$0xff]
        %v2522 = vld [vmem:[#allocation3 + $0x2d8] sm:$0xff]
        %v2523 = vld [vmem:[#allocation3 + $0x2e0] sm:$0xff]
        %v2524 = vld [vmem:[#allocation3 + $0x2e8] sm:$0xff]
        %v2525 = vld [vmem:[#allocation3 + $0x2f0] sm:$0xff]
        %v2526 = vld [vmem:[#allocation3 + $0x2f8] sm:$0xff]
        %v2527 = vld [vmem:[#allocation3 + $0x300] sm:$0xff]
        %v2528 = vld [vmem:[#allocation3 + $0x308] sm:$0xff]
        %v2529 = vld [vmem:[#allocation3 + $0x310] sm:$0xff]
        %v2530 = vld [vmem:[#allocation3 + $0x318] sm:$0xff]
        %v2531 = vld [vmem:[#allocation3 + $0x320] sm:$0xff]
        %v2532 = vld [vmem:[#allocation3 + $0x328] sm:$0xff]
        %v2533 = vld [vmem:[#allocation3 + $0x330] sm:$0xff]
        %v2534 = vld [vmem:[#allocation3 + $0x338] sm:$0xff]
        %v2535 = vld [vmem:[#allocation3 + $0x340] sm:$0xff]
        %v2536 = vld [vmem:[#allocation3 + $0x348] sm:$0xff]
        %v2537 = vld [vmem:[#allocation3 + $0x350] sm:$0xff]
        %v2538 = vld [vmem:[#allocation3 + $0x358] sm:$0xff]
        %v2539 = vld [vmem:[#allocation3 + $0x360] sm:$0xff]
        %v2540 = vld [vmem:[#allocation3 + $0x368] sm:$0xff]
        %v2541 = vld [vmem:[#allocation3 + $0x370] sm:$0xff]
        %v2542 = vld [vmem:[#allocation3 + $0x378] sm:$0xff]
        %v2543 = vld [vmem:[#allocation3 + $0x380] sm:$0xff]
        %v2544 = vld [vmem:[#allocation3 + $0x388] sm:$0xff]
        %v2545 = vld [vmem:[#allocation3 + $0x390] sm:$0xff]
        %v2546 = vld [vmem:[#allocation3 + $0x398] sm:$0xff]
        %v2547 = vld [vmem:[#allocation3 + $0x3a0] sm:$0xff]
        %v2548 = vld [vmem:[#allocation3 + $0x3a8] sm:$0xff]
        %v2549 = vld [vmem:[#allocation3 + $0x3b0] sm:$0xff]
        %v2550 = vld [vmem:[#allocation3 + $0x3b8] sm:$0xff]
        %v2551 = vld [vmem:[#allocation3 + $0x3c0] sm:$0xff]
        %v2552 = vld [vmem:[#allocation3 + $0x3c8] sm:$0xff]
        %v2553 = vld [vmem:[#allocation3 + $0x3d0] sm:$0xff]
        %v2554 = vld [vmem:[#allocation3 + $0x3d8] sm:$0xff]
        %v2555 = vld [vmem:[#allocation3 + $0x3e0] sm:$0xff]
        %v2556 = vld [vmem:[#allocation3 + $0x3e8] sm:$0xff]
        %v2557 = vld [vmem:[#allocation3 + $0x3f0] sm:$0xff]
        %v2558 = vld [vmem:[#allocation3 + $0x3f8] sm:$0xff]
        %v2559 = vld [vmem:[#allocation3 + $0x400] sm:$0xff]
        %v2560 = vld [vmem:[#allocation3 + $0x408] sm:$0xff]
        %v2561 = vld [vmem:[#allocation3 + $0x410] sm:$0xff]
        %v2562 = vld [vmem:[#allocation3 + $0x418] sm:$0xff]
        %v2563 = vld [vmem:[#allocation3 + $0x420] sm:$0xff]
        %v2564 = vld [vmem:[#allocation3 + $0x428] sm:$0xff]
        %v2565 = vld [vmem:[#allocation3 + $0x430] sm:$0xff]
        %v2566 = vld [vmem:[#allocation3 + $0x438] sm:$0xff]
        %v2567 = vld [vmem:[#allocation3 + $0x440] sm:$0xff]
        %v2568 = vld [vmem:[#allocation3 + $0x448] sm:$0xff]
        %v2569 = vld [vmem:[#allocation3 + $0x450] sm:$0xff]
        %v2570 = vld [vmem:[#allocation3 + $0x458] sm:$0xff]
        %v2571 = vld [vmem:[#allocation3 + $0x460] sm:$0xff]
        %v2572 = vld [vmem:[#allocation3 + $0x468] sm:$0xff]
        %v2573 = vld [vmem:[#allocation3 + $0x470] sm:$0xff]
        %v2574 = vld [vmem:[#allocation3 + $0x478] sm:$0xff]
        %v2575 = vld [vmem:[%s4] sm:$0xf]
        %v2576 = vld [vmem:[%s4 + $0x4] sm:$0xf]
        %v2577 = vld [vmem:[%s4 + $0x8] sm:$0xf]
        %v2578 = vld [vmem:[%s4 + $0xc] sm:$0xf]
        %v2579 = vld [vmem:[%s4 + $0x10] sm:$0xf]
        %v2580 = vld [vmem:[%s4 + $0x14] sm:$0xf]
        %v2581 = vld [vmem:[%s4 + $0x18] sm:$0xf]
        %v2582 = vld [vmem:[%s4 + $0x1c] sm:$0xf]
        %v2583 = vld [vmem:[%s4 + $0x20] sm:$0xf]
        %v2584 = vld [vmem:[%s4 + $0x24] sm:$0xf]
        %v2585 = vld [vmem:[%s4 + $0x28] sm:$0xf]
        %v2586 = vld [vmem:[%s4 + $0x2c] sm:$0xf]
        %v2587 = vld [vmem:[%s4 + $0x30] sm:$0xf]
        %v2588 = vld [vmem:[%s4 + $0x34] sm:$0xf]
        %v2589 = vld [vmem:[%s4 + $0x38] sm:$0xf]
        %v2590 = vld [vmem:[%s4 + $0x3c] sm:$0xf]
        %v2591 = vld [vmem:[%s4 + $0x40] sm:$0xf]
        %v2592 = vld [vmem:[%s4 + $0x44] sm:$0xf]
        %v2593 = vld [vmem:[%s4 + $0x48] sm:$0xf]
        %v2594 = vld [vmem:[%s4 + $0x4c] sm:$0xf]
        %v2595 = vld [vmem:[%s4 + $0x50] sm:$0xf]
        %v2596 = vld [vmem:[%s4 + $0x54] sm:$0xf]
        %v2597 = vld [vmem:[%s4 + $0x58] sm:$0xf]
        %v2598 = vld [vmem:[%s4 + $0x5c] sm:$0xf]
        %v2599 = vld [vmem:[%s4 + $0x60] sm:$0xf]
        %v2600 = vld [vmem:[%s4 + $0x64] sm:$0xf]
        %v2601 = vld [vmem:[%s4 + $0x68] sm:$0xf]
        %v2602 = vld [vmem:[%s4 + $0x6c] sm:$0xf]
        %v2603 = vld [vmem:[%s4 + $0x70] sm:$0xf]
        %v2604 = vld [vmem:[%s4 + $0x74] sm:$0xf]
        %v2605 = vld [vmem:[%s4 + $0x78] sm:$0xf]
        %v2606 = vld [vmem:[%s4 + $0x7c] sm:$0xf]
        %v2607 = vld [vmem:[%s4 + $0x80] sm:$0xf]
        %v2608 = vld [vmem:[%s4 + $0x84] sm:$0xf]
        %v2609 = vld [vmem:[%s4 + $0x88] sm:$0xf]
        %v2610 = vld [vmem:[%s4 + $0x8c] sm:$0xf]
        %v2611 = vld [vmem:[%s4 + $0x90] sm:$0xf]
        %v2612 = vld [vmem:[%s4 + $0x94] sm:$0xf]
        %v2613 = vld [vmem:[%s4 + $0x98] sm:$0xf]
        %v2614 = vld [vmem:[%s4 + $0x9c] sm:$0xf]
        %v2615 = vld [vmem:[%s4 + $0xa0] sm:$0xf]
        %v2616 = vld [vmem:[%s4 + $0xa4] sm:$0xf]
        %v2617 = vld [vmem:[%s4 + $0xa8] sm:$0xf]
        %v2618 = vld [vmem:[%s4 + $0xac] sm:$0xf]
        %v2619 = vld [vmem:[%s4 + $0xb0] sm:$0xf]
        %v2620 = vld [vmem:[%s4 + $0xb4] sm:$0xf]
        %v2621 = vld [vmem:[%s4 + $0xb8] sm:$0xf]
        %v2622 = vld [vmem:[%s4 + $0xbc] sm:$0xf]
        %v2623 = vld [vmem:[%s4 + $0xc0] sm:$0xf]
        %v2624 = vld [vmem:[%s4 + $0xc4] sm:$0xf]
        %v2625 = vld [vmem:[%s4 + $0xc8] sm:$0xf]
        %v2626 = vld [vmem:[%s4 + $0xcc] sm:$0xf]
        %v2627 = vld [vmem:[%s4 + $0xd0] sm:$0xf]
        %v2628 = vld [vmem:[%s4 + $0xd4] sm:$0xf]
        %v2629 = vld [vmem:[%s4 + $0xd8] sm:$0xf]
        %v2630 = vld [vmem:[%s4 + $0xdc] sm:$0xf]
        %v2631 = vld [vmem:[%s4 + $0xe0] sm:$0xf]
        %v2632 = vld [vmem:[%s4 + $0xe4] sm:$0xf]
        %v2633 = vld [vmem:[%s4 + $0xe8] sm:$0xf]
        %v2634 = vld [vmem:[%s4 + $0xec] sm:$0xf]
        %v2635 = vld [vmem:[%s4 + $0xf0] sm:$0xf]
        %v2636 = vld [vmem:[%s4 + $0xf4] sm:$0xf]
        %v2637 = vld [vmem:[%s4 + $0xf8] sm:$0xf]
        %v2638 = vld [vmem:[%s4 + $0xfc] sm:$0xf]
        %v2639 = vld [vmem:[%s4 + $0x100] sm:$0xf]
        %v2640 = vld [vmem:[%s4 + $0x104] sm:$0xf]
        %v2641 = vld [vmem:[%s4 + $0x108] sm:$0xf]
        %v2642 = vld [vmem:[%s4 + $0x10c] sm:$0xf]
        %v2643 = vld [vmem:[%s4 + $0x110] sm:$0xf]
        %v2644 = vld [vmem:[%s4 + $0x114] sm:$0xf]
        %v2645 = vld [vmem:[%s4 + $0x118] sm:$0xf]
        %v2646 = vld [vmem:[%s4 + $0x11c] sm:$0xf]
        %v2647 = vld [vmem:[%s4 + $0x120] sm:$0xf]
        %v2648 = vld [vmem:[%s4 + $0x124] sm:$0xf]
        %v2649 = vld [vmem:[%s4 + $0x128] sm:$0xf]
        %v2650 = vld [vmem:[%s4 + $0x12c] sm:$0xf]
        %v2651 = vld [vmem:[%s4 + $0x130] sm:$0xf]
        %v2652 = vld [vmem:[%s4 + $0x134] sm:$0xf]
        %v2653 = vld [vmem:[%s4 + $0x138] sm:$0xf]
        %v2654 = vld [vmem:[%s4 + $0x13c] sm:$0xf]
        %v2655 = vld [vmem:[%s4 + $0x140] sm:$0xf]
        %v2656 = vld [vmem:[%s4 + $0x144] sm:$0xf]
        %v2657 = vld [vmem:[%s4 + $0x148] sm:$0xf]
        %v2658 = vld [vmem:[%s4 + $0x14c] sm:$0xf]
        %v2659 = vld [vmem:[%s4 + $0x150] sm:$0xf]
        %v2660 = vld [vmem:[%s4 + $0x154] sm:$0xf]
        %v2661 = vld [vmem:[%s4 + $0x158] sm:$0xf]
        %v2662 = vld [vmem:[%s4 + $0x15c] sm:$0xf]
        %v2663 = vld [vmem:[%s4 + $0x160] sm:$0xf]
        %v2664 = vld [vmem:[%s4 + $0x164] sm:$0xf]
        %v2665 = vld [vmem:[%s4 + $0x168] sm:$0xf]
        %v2666 = vld [vmem:[%s4 + $0x16c] sm:$0xf]
        %v2667 = vld [vmem:[%s4 + $0x170] sm:$0xf]
        %v2668 = vld [vmem:[%s4 + $0x174] sm:$0xf]
        %v2669 = vld [vmem:[%s4 + $0x178] sm:$0xf]
        %v2670 = vld [vmem:[%s4 + $0x17c] sm:$0xf]
        %v2671 = vld [vmem:[%s4 + $0x180] sm:$0xf]
        %v2672 = vld [vmem:[%s4 + $0x184] sm:$0xf]
        %v2673 = vld [vmem:[%s4 + $0x188] sm:$0xf]
        %v2674 = vld [vmem:[%s4 + $0x18c] sm:$0xf]
        %v2675 = vld [vmem:[%s4 + $0x190] sm:$0xf]
        %v2676 = vld [vmem:[%s4 + $0x194] sm:$0xf]
        %v2677 = vld [vmem:[%s4 + $0x198] sm:$0xf]
        %v2678 = vld [vmem:[%s4 + $0x19c] sm:$0xf]
        %v2679 = vld [vmem:[%s4 + $0x1a0] sm:$0xf]
        %v2680 = vld [vmem:[%s4 + $0x1a4] sm:$0xf]
        %v2681 = vld [vmem:[%s4 + $0x1a8] sm:$0xf]
        %v2682 = vld [vmem:[%s4 + $0x1ac] sm:$0xf]
        %v2683 = vld [vmem:[%s4 + $0x1b0] sm:$0xf]
        %v2684 = vld [vmem:[%s4 + $0x1b4] sm:$0xf]
        %v2685 = vld [vmem:[%s4 + $0x1b8] sm:$0xf]
        %v2686 = vld [vmem:[%s4 + $0x1bc] sm:$0xf]
        %v2687 = vld [vmem:[%s4 + $0x1c0] sm:$0xf]
        %v2688 = vld [vmem:[%s4 + $0x1c4] sm:$0xf]
        %v2689 = vld [vmem:[%s4 + $0x1c8] sm:$0xf]
        %v2690 = vld [vmem:[%s4 + $0x1cc] sm:$0xf]
        %v2691 = vld [vmem:[%s4 + $0x1d0] sm:$0xf]
        %v2692 = vld [vmem:[%s4 + $0x1d4] sm:$0xf]
        %v2693 = vld [vmem:[%s4 + $0x1d8] sm:$0xf]
        %v2694 = vld [vmem:[%s4 + $0x1dc] sm:$0xf]
        %v2695 = vld [vmem:[%s4 + $0x1e0] sm:$0xf]
        %v2696 = vld [vmem:[%s4 + $0x1e4] sm:$0xf]
        %v2697 = vld [vmem:[%s4 + $0x1e8] sm:$0xf]
        %v2698 = vld [vmem:[%s4 + $0x1ec] sm:$0xf]
        %v2699 = vld [vmem:[%s4 + $0x1f0] sm:$0xf]
        %v2700 = vld [vmem:[%s4 + $0x1f4] sm:$0xf]
        %v2701 = vld [vmem:[%s4 + $0x1f8] sm:$0xf]
        %v2702 = vld [vmem:[%s4 + $0x1fc] sm:$0xf]
        %v2703 = vld [vmem:[%s4 + $0x200] sm:$0xf]
        %v2704 = vld [vmem:[%s4 + $0x204] sm:$0xf]
        %v2705 = vld [vmem:[%s4 + $0x208] sm:$0xf]
        %v2706 = vld [vmem:[%s4 + $0x20c] sm:$0xf]
        %v2707 = vld [vmem:[%s4 + $0x210] sm:$0xf]
        %v2708 = vld [vmem:[%s4 + $0x214] sm:$0xf]
        %v2709 = vld [vmem:[%s4 + $0x218] sm:$0xf]
        %v2710 = vld [vmem:[%s4 + $0x21c] sm:$0xf]
        %v2711 = vld [vmem:[%s4 + $0x220] sm:$0xf]
        %v2712 = vld [vmem:[%s4 + $0x224] sm:$0xf]
        %v2713 = vld [vmem:[%s4 + $0x228] sm:$0xf]
        %v2714 = vld [vmem:[%s4 + $0x22c] sm:$0xf]
        %v2715 = vld [vmem:[%s4 + $0x230] sm:$0xf]
        %v2716 = vld [vmem:[%s4 + $0x234] sm:$0xf]
        %v2717 = vld [vmem:[%s4 + $0x238] sm:$0xf]
        %v2718 = vld [vmem:[%s4 + $0x23c] sm:$0xf]
        %v2719 = vld [vmem:[%s5] sm:$0x1]
        %v2721 = vlaneseq
        %v2722 = vshrl.u32 %v2721, 7
        %v2723 = vsub.s32 0, %v2722
        %v2724 = vrot.slane %v2719, %v2723
        %v2870 = vunpack.c.l.b16 %v2575
        %v2871 = vunpack.c.l.b16 %v2576
        %v2872 = vunpack.c.l.b16 %v2577
        %v2873 = vunpack.c.l.b16 %v2578
        %v2874 = vunpack.c.l.b16 %v2579
        %v2875 = vunpack.c.l.b16 %v2580
        %v2876 = vunpack.c.l.b16 %v2581
        %v2877 = vunpack.c.l.b16 %v2582
        %v2878 = vunpack.c.l.b16 %v2583
        %v2879 = vunpack.c.l.b16 %v2584
        %v2880 = vunpack.c.l.b16 %v2585
        %v2881 = vunpack.c.l.b16 %v2586
        %v2882 = vunpack.c.l.b16 %v2587
        %v2883 = vunpack.c.l.b16 %v2588
        %v2884 = vunpack.c.l.b16 %v2589
        %v2885 = vunpack.c.l.b16 %v2590
        %v2886 = vunpack.c.l.b16 %v2591
        %v2887 = vunpack.c.l.b16 %v2592
        %v2888 = vunpack.c.l.b16 %v2593
        %v2889 = vunpack.c.l.b16 %v2594
        %v2890 = vunpack.c.l.b16 %v2595
        %v2891 = vunpack.c.l.b16 %v2596
        %v2892 = vunpack.c.l.b16 %v2597
        %v2893 = vunpack.c.l.b16 %v2598
        %v2894 = vunpack.c.l.b16 %v2599
        %v2895 = vunpack.c.l.b16 %v2600
        %v2896 = vunpack.c.l.b16 %v2601
        %v2897 = vunpack.c.l.b16 %v2602
        %v2898 = vunpack.c.l.b16 %v2603
        %v2899 = vunpack.c.l.b16 %v2604
        %v2900 = vunpack.c.l.b16 %v2605
        %v2901 = vunpack.c.l.b16 %v2606
        %v2902 = vunpack.c.l.b16 %v2607
        %v2903 = vunpack.c.l.b16 %v2608
        %v2904 = vunpack.c.l.b16 %v2609
        %v2905 = vunpack.c.l.b16 %v2610
        %v2906 = vunpack.c.l.b16 %v2611
        %v2907 = vunpack.c.l.b16 %v2612
        %v2908 = vunpack.c.l.b16 %v2613
        %v2909 = vunpack.c.l.b16 %v2614
        %v2910 = vunpack.c.l.b16 %v2615
        %v2911 = vunpack.c.l.b16 %v2616
        %v2912 = vunpack.c.l.b16 %v2617
        %v2913 = vunpack.c.l.b16 %v2618
        %v2914 = vunpack.c.l.b16 %v2619
        %v2915 = vunpack.c.l.b16 %v2620
        %v2916 = vunpack.c.l.b16 %v2621
        %v2917 = vunpack.c.l.b16 %v2622
        %v2918 = vunpack.c.l.b16 %v2623
        %v2919 = vunpack.c.l.b16 %v2624
        %v2920 = vunpack.c.l.b16 %v2625
        %v2921 = vunpack.c.l.b16 %v2626
        %v2922 = vunpack.c.l.b16 %v2627
        %v2923 = vunpack.c.l.b16 %v2628
        %v2924 = vunpack.c.l.b16 %v2629
        %v2925 = vunpack.c.l.b16 %v2630
        %v2926 = vunpack.c.l.b16 %v2631
        %v2927 = vunpack.c.l.b16 %v2632
        %v2928 = vunpack.c.l.b16 %v2633
        %v2929 = vunpack.c.l.b16 %v2634
        %v2930 = vunpack.c.l.b16 %v2635
        %v2931 = vunpack.c.l.b16 %v2636
        %v2932 = vunpack.c.l.b16 %v2637
        %v2933 = vunpack.c.l.b16 %v2638
        %v2934 = vunpack.c.l.b16 %v2639
        %v2935 = vunpack.c.l.b16 %v2640
        %v2936 = vunpack.c.l.b16 %v2641
        %v2937 = vunpack.c.l.b16 %v2642
        %v2938 = vunpack.c.l.b16 %v2643
        %v2939 = vunpack.c.l.b16 %v2644
        %v2940 = vunpack.c.l.b16 %v2645
        %v2941 = vunpack.c.l.b16 %v2646
        %v2942 = vunpack.c.l.b16 %v2647
        %v2943 = vunpack.c.l.b16 %v2648
        %v2944 = vunpack.c.l.b16 %v2649
        %v2945 = vunpack.c.l.b16 %v2650
        %v2946 = vunpack.c.l.b16 %v2651
        %v2947 = vunpack.c.l.b16 %v2652
        %v2948 = vunpack.c.l.b16 %v2653
        %v2949 = vunpack.c.l.b16 %v2654
        %v2950 = vunpack.c.l.b16 %v2655
        %v2951 = vunpack.c.l.b16 %v2656
        %v2952 = vunpack.c.l.b16 %v2657
        %v2953 = vunpack.c.l.b16 %v2658
        %v2954 = vunpack.c.l.b16 %v2659
        %v2955 = vunpack.c.l.b16 %v2660
        %v2956 = vunpack.c.l.b16 %v2661
        %v2957 = vunpack.c.l.b16 %v2662
        %v2958 = vunpack.c.l.b16 %v2663
        %v2959 = vunpack.c.l.b16 %v2664
        %v2960 = vunpack.c.l.b16 %v2665
        %v2961 = vunpack.c.l.b16 %v2666
        %v2962 = vunpack.c.l.b16 %v2667
        %v2963 = vunpack.c.l.b16 %v2668
        %v2964 = vunpack.c.l.b16 %v2669
        %v2965 = vunpack.c.l.b16 %v2670
        %v2966 = vunpack.c.l.b16 %v2671
        %v2967 = vunpack.c.l.b16 %v2672
        %v2968 = vunpack.c.l.b16 %v2673
        %v2969 = vunpack.c.l.b16 %v2674
        %v2970 = vunpack.c.l.b16 %v2675
        %v2971 = vunpack.c.l.b16 %v2676
        %v2972 = vunpack.c.l.b16 %v2677
        %v2973 = vunpack.c.l.b16 %v2678
        %v2974 = vunpack.c.l.b16 %v2679
        %v2975 = vunpack.c.l.b16 %v2680
        %v2976 = vunpack.c.l.b16 %v2681
        %v2977 = vunpack.c.l.b16 %v2682
        %v2978 = vunpack.c.l.b16 %v2683
        %v2979 = vunpack.c.l.b16 %v2684
        %v2980 = vunpack.c.l.b16 %v2685
        %v2981 = vunpack.c.l.b16 %v2686
        %v2982 = vunpack.c.l.b16 %v2687
        %v2983 = vunpack.c.l.b16 %v2688
        %v2984 = vunpack.c.l.b16 %v2689
        %v2985 = vunpack.c.l.b16 %v2690
        %v2986 = vunpack.c.l.b16 %v2691
        %v2987 = vunpack.c.l.b16 %v2692
        %v2988 = vunpack.c.l.b16 %v2693
        %v2989 = vunpack.c.l.b16 %v2694
        %v2990 = vunpack.c.l.b16 %v2695
        %v2991 = vunpack.c.l.b16 %v2696
        %v2992 = vunpack.c.l.b16 %v2697
        %v2993 = vunpack.c.l.b16 %v2698
        %v2994 = vunpack.c.l.b16 %v2699
        %v2995 = vunpack.c.l.b16 %v2700
        %v2996 = vunpack.c.l.b16 %v2701
        %v2997 = vunpack.c.l.b16 %v2702
        %v2998 = vunpack.c.l.b16 %v2703
        %v2999 = vunpack.c.l.b16 %v2704
        %v3000 = vunpack.c.l.b16 %v2705
        %v3001 = vunpack.c.l.b16 %v2706
        %v3002 = vunpack.c.l.b16 %v2707
        %v3003 = vunpack.c.l.b16 %v2708
        %v3004 = vunpack.c.l.b16 %v2709
        %v3005 = vunpack.c.l.b16 %v2710
        %v3006 = vunpack.c.l.b16 %v2711
        %v3007 = vunpack.c.l.b16 %v2712
        %v3008 = vunpack.c.l.b16 %v2713
        %v3009 = vunpack.c.l.b16 %v2714
        %v3010 = vunpack.c.l.b16 %v2715
        %v3011 = vunpack.c.l.b16 %v2716
        %v3012 = vunpack.c.l.b16 %v2717
        %v3013 = vunpack.c.l.b16 %v2718
        %v3014 = vpack.c.b16 %v2871, %v2870
        %v3015 = vpack.c.b16 %v2873, %v2872
        %v3016 = vpack.c.b16 %v2875, %v2874
        %v3017 = vpack.c.b16 %v2877, %v2876
        %v3018 = vpack.c.b16 %v2879, %v2878
        %v3019 = vpack.c.b16 %v2881, %v2880
        %v3020 = vpack.c.b16 %v2883, %v2882
        %v3021 = vpack.c.b16 %v2885, %v2884
        %v3022 = vpack.c.b16 %v2887, %v2886
        %v3023 = vpack.c.b16 %v2889, %v2888
        %v3024 = vpack.c.b16 %v2891, %v2890
        %v3025 = vpack.c.b16 %v2893, %v2892
        %v3026 = vpack.c.b16 %v2895, %v2894
        %v3027 = vpack.c.b16 %v2897, %v2896
        %v3028 = vpack.c.b16 %v2899, %v2898
        %v3029 = vpack.c.b16 %v2901, %v2900
        %v3030 = vpack.c.b16 %v2903, %v2902
        %v3031 = vpack.c.b16 %v2905, %v2904
        %v3032 = vpack.c.b16 %v2907, %v2906
        %v3033 = vpack.c.b16 %v2909, %v2908
        %v3034 = vpack.c.b16 %v2911, %v2910
        %v3035 = vpack.c.b16 %v2913, %v2912
        %v3036 = vpack.c.b16 %v2915, %v2914
        %v3037 = vpack.c.b16 %v2917, %v2916
        %v3038 = vpack.c.b16 %v2919, %v2918
        %v3039 = vpack.c.b16 %v2921, %v2920
        %v3040 = vpack.c.b16 %v2923, %v2922
        %v3041 = vpack.c.b16 %v2925, %v2924
        %v3042 = vpack.c.b16 %v2927, %v2926
        %v3043 = vpack.c.b16 %v2929, %v2928
        %v3044 = vpack.c.b16 %v2931, %v2930
        %v3045 = vpack.c.b16 %v2933, %v2932
        %v3046 = vpack.c.b16 %v2935, %v2934
        %v3047 = vpack.c.b16 %v2937, %v2936
        %v3048 = vpack.c.b16 %v2939, %v2938
        %v3049 = vpack.c.b16 %v2941, %v2940
        %v3050 = vpack.c.b16 %v2943, %v2942
        %v3051 = vpack.c.b16 %v2945, %v2944
        %v3052 = vpack.c.b16 %v2947, %v2946
        %v3053 = vpack.c.b16 %v2949, %v2948
        %v3054 = vpack.c.b16 %v2951, %v2950
        %v3055 = vpack.c.b16 %v2953, %v2952
        %v3056 = vpack.c.b16 %v2955, %v2954
        %v3057 = vpack.c.b16 %v2957, %v2956
        %v3058 = vpack.c.b16 %v2959, %v2958
        %v3059 = vpack.c.b16 %v2961, %v2960
        %v3060 = vpack.c.b16 %v2963, %v2962
        %v3061 = vpack.c.b16 %v2965, %v2964
        %v3062 = vpack.c.b16 %v2967, %v2966
        %v3063 = vpack.c.b16 %v2969, %v2968
        %v3064 = vpack.c.b16 %v2971, %v2970
        %v3065 = vpack.c.b16 %v2973, %v2972
        %v3066 = vpack.c.b16 %v2975, %v2974
        %v3067 = vpack.c.b16 %v2977, %v2976
        %v3068 = vpack.c.b16 %v2979, %v2978
        %v3069 = vpack.c.b16 %v2981, %v2980
        %v3070 = vpack.c.b16 %v2983, %v2982
        %v3071 = vpack.c.b16 %v2985, %v2984
        %v3072 = vpack.c.b16 %v2987, %v2986
        %v3073 = vpack.c.b16 %v2989, %v2988
        %v3074 = vpack.c.b16 %v2991, %v2990
        %v3075 = vpack.c.b16 %v2993, %v2992
        %v3076 = vpack.c.b16 %v2995, %v2994
        %v3077 = vpack.c.b16 %v2997, %v2996
        %v3078 = vpack.c.b16 %v2999, %v2998
        %v3079 = vpack.c.b16 %v3001, %v3000
        %v3080 = vpack.c.b16 %v3003, %v3002
        %v3081 = vpack.c.b16 %v3005, %v3004
        %v3082 = vpack.c.b16 %v3007, %v3006
        %v3083 = vpack.c.b16 %v3009, %v3008
        %v3084 = vpack.c.b16 %v3011, %v3010
        %v3085 = vpack.c.b16 %v3013, %v3012
        %3158 = vmatprep.subr.bf16.mxu0 0
        %3159 = vmatpush1.bf16.msra.mxu0 %v3014
        %3160 = vmatprep.subr.bf16.mxu0 0
        %3161 = vmatpush1.bf16.msra.mxu0 %v3015
        %3162 = vmatprep.subr.bf16.mxu0 0
        %3163 = vmatpush1.bf16.msra.mxu0 %v3016
        %3164 = vmatprep.subr.bf16.mxu0 0
        %3165 = vmatpush1.bf16.msra.mxu0 %v3017
        %3166 = vmatprep.subr.bf16.mxu0 0
        %3167 = vmatpush1.bf16.msra.mxu0 %v3018
        %3168 = vmatprep.subr.bf16.mxu0 0
        %3169 = vmatpush1.bf16.msra.mxu0 %v3019
        %3170 = vmatprep.subr.bf16.mxu0 0
        %3171 = vmatpush1.bf16.msra.mxu0 %v3020
        %3172 = vmatprep.subr.bf16.mxu0 0
        %3173 = vmatpush1.bf16.msra.mxu0 %v3021
        %3174 = vmatprep.subr.bf16.mxu0 0
        %3175 = vmatpush1.bf16.msra.mxu0 %v3022
        %3176 = vmatprep.subr.bf16.mxu0 0
        %3177 = vmatpush1.bf16.msra.mxu0 %v3023
        %3178 = vmatprep.subr.bf16.mxu0 0
        %3179 = vmatpush1.bf16.msra.mxu0 %v3024
        %3180 = vmatprep.subr.bf16.mxu0 0
        %3181 = vmatpush1.bf16.msra.mxu0 %v3025
        %3182 = vmatprep.subr.bf16.mxu0 0
        %3183 = vmatpush1.bf16.msra.mxu0 %v3026
        %3184 = vmatprep.subr.bf16.mxu0 0
        %3185 = vmatpush1.bf16.msra.mxu0 %v3027
        %3186 = vmatprep.subr.bf16.mxu0 0
        %3187 = vmatpush1.bf16.msra.mxu0 %v3028
        %3188 = vmatprep.subr.bf16.mxu0 0
        %3189 = vmatpush1.bf16.msra.mxu0 %v3029
        %3190 = vmatprep.mubr.bf16.mxu0 %v2432
        %3191 = vmatmul.mubr.bf16.gmra.mrb[0].mxu0 %v2431
        %v3192 = vpop.f32.mrb[0].mxu0
        %v3193 = vadd.f32 %v2724, %v3192
        %v3194 = vpop.f32.mrb[0].mxu0
        %v3195 = vpop.f32.mrb[0].mxu0
        %v3196 = vadd.f32 %v2724, %v3195
        %v3197 = vpop.f32.mrb[0].mxu0
        %3198 = vmatprep.mubr.bf16.mxu0 %v2441
        %3199 = vmatmul.mubr.bf16.gmra.mrb[0].mxu0 %v2440
        %v3200 = vpop.f32.mrb[0].mxu0
        %v3201 = vadd.f32 %v2724, %v3200
        %v3202 = vpop.f32.mrb[0].mxu0
        %v3203 = vpop.f32.mrb[0].mxu0
        %v3204 = vadd.f32 %v2724, %v3203
        %v3205 = vpop.f32.mrb[0].mxu0
        %3206 = vmatprep.mubr.bf16.mxu0 %v2450
        %3207 = vmatmul.mubr.bf16.gmra.mrb[0].mxu0 %v2449
        %v3208 = vpop.f32.mrb[0].mxu0
        %v3209 = vadd.f32 %v2724, %v3208
        %v3210 = vpop.f32.mrb[0].mxu0
        %v3211 = vpop.f32.mrb[0].mxu0
        %v3212 = vadd.f32 %v2724, %v3211
        %v3213 = vpop.f32.mrb[0].mxu0
        %3214 = vmatprep.mubr.bf16.mxu0 %v2459
        %3215 = vmatmul.mubr.bf16.gmra.mrb[0].mxu0 %v2458
        %v3216 = vpop.f32.mrb[0].mxu0
        %v3217 = vadd.f32 %v2724, %v3216
        %v3218 = vpop.f32.mrb[0].mxu0
        %v3219 = vpop.f32.mrb[0].mxu0
        %v3220 = vadd.f32 %v2724, %v3219
        %v3221 = vpop.f32.mrb[0].mxu0
        %3222 = vmatprep.mubr.bf16.mxu0 %v2468
        %3223 = vmatmul.mubr.bf16.gmra.mrb[0].mxu0 %v2467
        %v3224 = vpop.f32.mrb[0].mxu0
        %v3225 = vadd.f32 %v2724, %v3224
        %v3226 = vpop.f32.mrb[0].mxu0
        %v3227 = vpop.f32.mrb[0].mxu0
        %v3228 = vadd.f32 %v2724, %v3227
        %v3229 = vpop.f32.mrb[0].mxu0
        %3230 = vmatprep.mubr.bf16.mxu0 %v2477
        %3231 = vmatmul.mubr.bf16.gmra.mrb[0].mxu0 %v2476
        %v3232 = vpop.f32.mrb[0].mxu0
        %v3233 = vadd.f32 %v2724, %v3232
        %v3234 = vpop.f32.mrb[0].mxu0
        %v3235 = vpop.f32.mrb[0].mxu0
        %v3236 = vadd.f32 %v2724, %v3235
        %v3237 = vpop.f32.mrb[0].mxu0
        %3238 = vmatprep.mubr.bf16.mxu0 %v2486
        %3239 = vmatmul.mubr.bf16.gmra.mrb[0].mxu0 %v2485
        %v3240 = vpop.f32.mrb[0].mxu0
        %v3241 = vadd.f32 %v2724, %v3240
        %v3242 = vpop.f32.mrb[0].mxu0
        %v3243 = vpop.f32.mrb[0].mxu0
        %v3244 = vadd.f32 %v2724, %v3243
        %v3245 = vpop.f32.mrb[0].mxu0
        %3246 = vmatprep.mubr.bf16.mxu0 %v2495
        %3247 = vmatmul.mubr.bf16.gmra.mrb[0].mxu0 %v2494
        %v3248 = vpop.f32.mrb[0].mxu0
        %v3249 = vadd.f32 %v2724, %v3248
        %v3250 = vpop.f32.mrb[0].mxu0
        %v3251 = vpop.f32.mrb[0].mxu0
        %v3252 = vadd.f32 %v2724, %v3251
        %v3253 = vpop.f32.mrb[0].mxu0
        %3254 = vmatprep.mubr.bf16.mxu0 %v2504
        %3255 = vmatmul.mubr.bf16.gmra.mrb[0].mxu0 %v2503
        %v3256 = vpop.f32.mrb[0].mxu0
        %v3257 = vadd.f32 %v2724, %v3256
        %v3258 = vpop.f32.mrb[0].mxu0
        %v3259 = vpop.f32.mrb[0].mxu0
        %v3260 = vadd.f32 %v2724, %v3259
        %v3261 = vpop.f32.mrb[0].mxu0
        %3262 = vmatprep.mubr.bf16.mxu0 %v2513
        %3263 = vmatmul.mubr.bf16.gmra.mrb[0].mxu0 %v2512
        %v3264 = vpop.f32.mrb[0].mxu0
        %v3265 = vadd.f32 %v2724, %v3264
        %v3266 = vpop.f32.mrb[0].mxu0
        %v3267 = vpop.f32.mrb[0].mxu0
        %v3268 = vadd.f32 %v2724, %v3267
        %v3269 = vpop.f32.mrb[0].mxu0
        %3270 = vmatprep.mubr.bf16.mxu0 %v2522
        %3271 = vmatmul.mubr.bf16.gmra.mrb[0].mxu0 %v2521
        %v3272 = vpop.f32.mrb[0].mxu0
        %v3273 = vadd.f32 %v2724, %v3272
        %v3274 = vpop.f32.mrb[0].mxu0
        %v3275 = vpop.f32.mrb[0].mxu0
        %v3276 = vadd.f32 %v2724, %v3275
        %v3277 = vpop.f32.mrb[0].mxu0
        %3278 = vmatprep.mubr.bf16.mxu0 %v2531
        %3279 = vmatmul.mubr.bf16.gmra.mrb[0].mxu0 %v2530
        %v3280 = vpop.f32.mrb[0].mxu0
        %v3281 = vadd.f32 %v2724, %v3280
        %v3282 = vpop.f32.mrb[0].mxu0
        %v3283 = vpop.f32.mrb[0].mxu0
        %v3284 = vadd.f32 %v2724, %v3283
        %v3285 = vpop.f32.mrb[0].mxu0
        %3286 = vmatprep.mubr.bf16.mxu0 %v2540
        %3287 = vmatmul.mubr.bf16.gmra.mrb[0].mxu0 %v2539
        %v3288 = vpop.f32.mrb[0].mxu0
        %v3289 = vadd.f32 %v2724, %v3288
        %v3290 = vpop.f32.mrb[0].mxu0
        %v3291 = vpop.f32.mrb[0].mxu0
        %v3292 = vadd.f32 %v2724, %v3291
        %v3293 = vpop.f32.mrb[0].mxu0
        %3294 = vmatprep.mubr.bf16.mxu0 %v2549
        %3295 = vmatmul.mubr.bf16.gmra.mrb[0].mxu0 %v2548
        %v3296 = vpop.f32.mrb[0].mxu0
        %v3297 = vadd.f32 %v2724, %v3296
        %v3298 = vpop.f32.mrb[0].mxu0
        %v3299 = vpop.f32.mrb[0].mxu0
        %v3300 = vadd.f32 %v2724, %v3299
        %v3301 = vpop.f32.mrb[0].mxu0
        %3302 = vmatprep.mubr.bf16.mxu0 %v2558
        %3303 = vmatmul.mubr.bf16.gmra.mrb[0].mxu0 %v2557
        %v3304 = vpop.f32.mrb[0].mxu0
        %v3305 = vadd.f32 %v2724, %v3304
        %v3306 = vpop.f32.mrb[0].mxu0
        %v3307 = vpop.f32.mrb[0].mxu0
        %v3308 = vadd.f32 %v2724, %v3307
        %v3309 = vpop.f32.mrb[0].mxu0
        %3310 = vmatprep.mubr.bf16.mxu0 %v2567
        %3311 = vmatmul.mubr.bf16.gmra.mrb[0].mxu0 %v2566
        %v3312 = vpop.f32.mrb[0].mxu0
        %v3313 = vadd.f32 %v2724, %v3312
        %v3314 = vpop.f32.mrb[0].mxu0
        %v3315 = vpop.f32.mrb[0].mxu0
        %v3316 = vadd.f32 %v2724, %v3315
        %v3317 = vpop.f32.mrb[0].mxu0
        %3318 = vdwg.mxu0
        %3319 = vmatprep.subr.bf16.mxu0 0
        %3320 = vmatpush1.bf16.msra.mxu0 %v3030
        %3321 = vmatprep.subr.bf16.mxu0 0
        %3322 = vmatpush1.bf16.msra.mxu0 %v3031
        %3323 = vmatprep.subr.bf16.mxu0 0
        %3324 = vmatpush1.bf16.msra.mxu0 %v3032
        %3325 = vmatprep.subr.bf16.mxu0 0
        %3326 = vmatpush1.bf16.msra.mxu0 %v3033
        %3327 = vmatprep.subr.bf16.mxu0 0
        %3328 = vmatpush1.bf16.msra.mxu0 %v3034
        %3329 = vmatprep.subr.bf16.mxu0 0
        %3330 = vmatpush1.bf16.msra.mxu0 %v3035
        %3331 = vmatprep.subr.bf16.mxu0 0
        %3332 = vmatpush1.bf16.msra.mxu0 %v3036
        %3333 = vmatprep.subr.bf16.mxu0 0
        %3334 = vmatpush1.bf16.msra.mxu0 %v3037
        %3335 = vmatprep.subr.bf16.mxu0 0
        %3336 = vmatpush1.bf16.msra.mxu0 %v3038
        %3337 = vmatprep.subr.bf16.mxu0 0
        %3338 = vmatpush1.bf16.msra.mxu0 %v3039
        %3339 = vmatprep.subr.bf16.mxu0 0
        %3340 = vmatpush1.bf16.msra.mxu0 %v3040
        %3341 = vmatprep.subr.bf16.mxu0 0
        %3342 = vmatpush1.bf16.msra.mxu0 %v3041
        %3343 = vmatprep.subr.bf16.mxu0 0
        %3344 = vmatpush1.bf16.msra.mxu0 %v3042
        %3345 = vmatprep.subr.bf16.mxu0 0
        %3346 = vmatpush1.bf16.msra.mxu0 %v3043
        %3347 = vmatprep.subr.bf16.mxu0 0
        %3348 = vmatpush1.bf16.msra.mxu0 %v3044
        %3349 = vmatprep.subr.bf16.mxu0 0
        %3350 = vmatpush1.bf16.msra.mxu0 %v3045
        %3351 = vmatprep.mubr.bf16.mxu0 %v2434
        %3352 = vmatmul.mubr.bf16.gmra.mrb[0].mxu0 %v2433
        %v3353 = vpop.f32.mrb[0].mxu0
        %v3354 = vadd.f32 %v3193, %v3353
        %v3355 = vpop.f32.mrb[0].mxu0
        %v3356 = vpop.f32.mrb[0].mxu0
        %v3357 = vadd.f32 %v3196, %v3356
        %v3358 = vpop.f32.mrb[0].mxu0
        %3359 = vmatprep.mubr.bf16.mxu0 %v2443
        %3360 = vmatmul.mubr.bf16.gmra.mrb[0].mxu0 %v2442
        %v3361 = vpop.f32.mrb[0].mxu0
        %v3362 = vadd.f32 %v3201, %v3361
        %v3363 = vpop.f32.mrb[0].mxu0
        %v3364 = vpop.f32.mrb[0].mxu0
        %v3365 = vadd.f32 %v3204, %v3364
        %v3366 = vpop.f32.mrb[0].mxu0
        %3367 = vmatprep.mubr.bf16.mxu0 %v2452
        %3368 = vmatmul.mubr.bf16.gmra.mrb[0].mxu0 %v2451
        %v3369 = vpop.f32.mrb[0].mxu0
        %v3370 = vadd.f32 %v3209, %v3369
        %v3371 = vpop.f32.mrb[0].mxu0
        %v3372 = vpop.f32.mrb[0].mxu0
        %v3373 = vadd.f32 %v3212, %v3372
        %v3374 = vpop.f32.mrb[0].mxu0
        %3375 = vmatprep.mubr.bf16.mxu0 %v2461
        %3376 = vmatmul.mubr.bf16.gmra.mrb[0].mxu0 %v2460
        %v3377 = vpop.f32.mrb[0].mxu0
        %v3378 = vadd.f32 %v3217, %v3377
        %v3379 = vpop.f32.mrb[0].mxu0
        %v3380 = vpop.f32.mrb[0].mxu0
        %v3381 = vadd.f32 %v3220, %v3380
        %v3382 = vpop.f32.mrb[0].mxu0
        %3383 = vmatprep.mubr.bf16.mxu0 %v2470
        %3384 = vmatmul.mubr.bf16.gmra.mrb[0].mxu0 %v2469
        %v3385 = vpop.f32.mrb[0].mxu0
        %v3386 = vadd.f32 %v3225, %v3385
        %v3387 = vpop.f32.mrb[0].mxu0
        %v3388 = vpop.f32.mrb[0].mxu0
        %v3389 = vadd.f32 %v3228, %v3388
        %v3390 = vpop.f32.mrb[0].mxu0
        %3391 = vmatprep.mubr.bf16.mxu0 %v2479
        %3392 = vmatmul.mubr.bf16.gmra.mrb[0].mxu0 %v2478
        %v3393 = vpop.f32.mrb[0].mxu0
        %v3394 = vadd.f32 %v3233, %v3393
        %v3395 = vpop.f32.mrb[0].mxu0
        %v3396 = vpop.f32.mrb[0].mxu0
        %v3397 = vadd.f32 %v3236, %v3396
        %v3398 = vpop.f32.mrb[0].mxu0
        %3399 = vmatprep.mubr.bf16.mxu0 %v2488
        %3400 = vmatmul.mubr.bf16.gmra.mrb[0].mxu0 %v2487
        %v3401 = vpop.f32.mrb[0].mxu0
        %v3402 = vadd.f32 %v3241, %v3401
        %v3403 = vpop.f32.mrb[0].mxu0
        %v3404 = vpop.f32.mrb[0].mxu0
        %v3405 = vadd.f32 %v3244, %v3404
        %v3406 = vpop.f32.mrb[0].mxu0
        %3407 = vmatprep.mubr.bf16.mxu0 %v2497
        %3408 = vmatmul.mubr.bf16.gmra.mrb[0].mxu0 %v2496
        %v3409 = vpop.f32.mrb[0].mxu0
        %v3410 = vadd.f32 %v3249, %v3409
        %v3411 = vpop.f32.mrb[0].mxu0
        %v3412 = vpop.f32.mrb[0].mxu0
        %v3413 = vadd.f32 %v3252, %v3412
        %v3414 = vpop.f32.mrb[0].mxu0
        %3415 = vmatprep.mubr.bf16.mxu0 %v2506
        %3416 = vmatmul.mubr.bf16.gmra.mrb[0].mxu0 %v2505
        %v3417 = vpop.f32.mrb[0].mxu0
        %v3418 = vadd.f32 %v3257, %v3417
        %v3419 = vpop.f32.mrb[0].mxu0
        %v3420 = vpop.f32.mrb[0].mxu0
        %v3421 = vadd.f32 %v3260, %v3420
        %v3422 = vpop.f32.mrb[0].mxu0
        %3423 = vmatprep.mubr.bf16.mxu0 %v2515
        %3424 = vmatmul.mubr.bf16.gmra.mrb[0].mxu0 %v2514
        %v3425 = vpop.f32.mrb[0].mxu0
        %v3426 = vadd.f32 %v3265, %v3425
        %v3427 = vpop.f32.mrb[0].mxu0
        %v3428 = vpop.f32.mrb[0].mxu0
        %v3429 = vadd.f32 %v3268, %v3428
        %v3430 = vpop.f32.mrb[0].mxu0
        %3431 = vmatprep.mubr.bf16.mxu0 %v2524
        %3432 = vmatmul.mubr.bf16.gmra.mrb[0].mxu0 %v2523
        %v3433 = vpop.f32.mrb[0].mxu0
        %v3434 = vadd.f32 %v3273, %v3433
        %v3435 = vpop.f32.mrb[0].mxu0
        %v3436 = vpop.f32.mrb[0].mxu0
        %v3437 = vadd.f32 %v3276, %v3436
        %v3438 = vpop.f32.mrb[0].mxu0
        %3439 = vmatprep.mubr.bf16.mxu0 %v2533
        %3440 = vmatmul.mubr.bf16.gmra.mrb[0].mxu0 %v2532
        %v3441 = vpop.f32.mrb[0].mxu0
        %v3442 = vadd.f32 %v3281, %v3441
        %v3443 = vpop.f32.mrb[0].mxu0
        %v3444 = vpop.f32.mrb[0].mxu0
        %v3445 = vadd.f32 %v3284, %v3444
        %v3446 = vpop.f32.mrb[0].mxu0
        %3447 = vmatprep.mubr.bf16.mxu0 %v2542
        %3448 = vmatmul.mubr.bf16.gmra.mrb[0].mxu0 %v2541
        %v3449 = vpop.f32.mrb[0].mxu0
        %v3450 = vadd.f32 %v3289, %v3449
        %v3451 = vpop.f32.mrb[0].mxu0
        %v3452 = vpop.f32.mrb[0].mxu0
        %v3453 = vadd.f32 %v3292, %v3452
        %v3454 = vpop.f32.mrb[0].mxu0
        %3455 = vmatprep.mubr.bf16.mxu0 %v2551
        %3456 = vmatmul.mubr.bf16.gmra.mrb[0].mxu0 %v2550
        %v3457 = vpop.f32.mrb[0].mxu0
        %v3458 = vadd.f32 %v3297, %v3457
        %v3459 = vpop.f32.mrb[0].mxu0
        %v3460 = vpop.f32.mrb[0].mxu0
        %v3461 = vadd.f32 %v3300, %v3460
        %v3462 = vpop.f32.mrb[0].mxu0
        %3463 = vmatprep.mubr.bf16.mxu0 %v2560
        %3464 = vmatmul.mubr.bf16.gmra.mrb[0].mxu0 %v2559
        %v3465 = vpop.f32.mrb[0].mxu0
        %v3466 = vadd.f32 %v3305, %v3465
        %v3467 = vpop.f32.mrb[0].mxu0
        %v3468 = vpop.f32.mrb[0].mxu0
        %v3469 = vadd.f32 %v3308, %v3468
        %v3470 = vpop.f32.mrb[0].mxu0
        %3471 = vmatprep.mubr.bf16.mxu0 %v2569
        %3472 = vmatmul.mubr.bf16.gmra.mrb[0].mxu0 %v2568
        %v3473 = vpop.f32.mrb[0].mxu0
        %v3474 = vadd.f32 %v3313, %v3473
        %v3475 = vpop.f32.mrb[0].mxu0
        %v3476 = vpop.f32.mrb[0].mxu0
        %v3477 = vadd.f32 %v3316, %v3476
        %v3478 = vpop.f32.mrb[0].mxu0
        %3479 = vdwg.mxu0
        %3480 = vmatprep.subr.bf16.mxu0 0
        %3481 = vmatpush1.bf16.msra.mxu0 %v3046
        %3482 = vmatprep.subr.bf16.mxu0 0
        %3483 = vmatpush1.bf16.msra.mxu0 %v3047
        %3484 = vmatprep.subr.bf16.mxu0 0
        %3485 = vmatpush1.bf16.msra.mxu0 %v3048
        %3486 = vmatprep.subr.bf16.mxu0 0
        %3487 = vmatpush1.bf16.msra.mxu0 %v3049
        %3488 = vmatprep.subr.bf16.mxu0 0
        %3489 = vmatpush1.bf16.msra.mxu0 %v3050
        %3490 = vmatprep.subr.bf16.mxu0 0
        %3491 = vmatpush1.bf16.msra.mxu0 %v3051
        %3492 = vmatprep.subr.bf16.mxu0 0
        %3493 = vmatpush1.bf16.msra.mxu0 %v3052
        %3494 = vmatprep.subr.bf16.mxu0 0
        %3495 = vmatpush1.bf16.msra.mxu0 %v3053
        %3496 = vmatprep.subr.bf16.mxu0 0
        %3497 = vmatpush1.bf16.msra.mxu0 %v3054
        %3498 = vmatprep.subr.bf16.mxu0 0
        %3499 = vmatpush1.bf16.msra.mxu0 %v3055
        %3500 = vmatprep.subr.bf16.mxu0 0
        %3501 = vmatpush1.bf16.msra.mxu0 %v3056
        %3502 = vmatprep.subr.bf16.mxu0 0
        %3503 = vmatpush1.bf16.msra.mxu0 %v3057
        %3504 = vmatprep.subr.bf16.mxu0 0
        %3505 = vmatpush1.bf16.msra.mxu0 %v3058
        %3506 = vmatprep.subr.bf16.mxu0 0
        %3507 = vmatpush1.bf16.msra.mxu0 %v3059
        %3508 = vmatprep.subr.bf16.mxu0 0
        %3509 = vmatpush1.bf16.msra.mxu0 %v3060
        %3510 = vmatprep.subr.bf16.mxu0 0
        %3511 = vmatpush1.bf16.msra.mxu0 %v3061
        %3512 = vmatprep.mubr.bf16.mxu0 %v2436
        %3513 = vmatmul.mubr.bf16.gmra.mrb[0].mxu0 %v2435
        %v3514 = vpop.f32.mrb[0].mxu0
        %v3515 = vadd.f32 %v3354, %v3514
        %v3516 = vpop.f32.mrb[0].mxu0
        %v3517 = vpop.f32.mrb[0].mxu0
        %v3518 = vadd.f32 %v3357, %v3517
        %v3519 = vpop.f32.mrb[0].mxu0
        %3520 = vmatprep.mubr.bf16.mxu0 %v2445
        %3521 = vmatmul.mubr.bf16.gmra.mrb[0].mxu0 %v2444
        %v3522 = vpop.f32.mrb[0].mxu0
        %v3523 = vadd.f32 %v3362, %v3522
        %v3524 = vpop.f32.mrb[0].mxu0
        %v3525 = vpop.f32.mrb[0].mxu0
        %v3526 = vadd.f32 %v3365, %v3525
        %v3527 = vpop.f32.mrb[0].mxu0
        %3528 = vmatprep.mubr.bf16.mxu0 %v2454
        %3529 = vmatmul.mubr.bf16.gmra.mrb[0].mxu0 %v2453
        %v3530 = vpop.f32.mrb[0].mxu0
        %v3531 = vadd.f32 %v3370, %v3530
        %v3532 = vpop.f32.mrb[0].mxu0
        %v3533 = vpop.f32.mrb[0].mxu0
        %v3534 = vadd.f32 %v3373, %v3533
        %v3535 = vpop.f32.mrb[0].mxu0
        %3536 = vmatprep.mubr.bf16.mxu0 %v2463
        %3537 = vmatmul.mubr.bf16.gmra.mrb[0].mxu0 %v2462
        %v3538 = vpop.f32.mrb[0].mxu0
        %v3539 = vadd.f32 %v3378, %v3538
        %v3540 = vpop.f32.mrb[0].mxu0
        %v3541 = vpop.f32.mrb[0].mxu0
        %v3542 = vadd.f32 %v3381, %v3541
        %v3543 = vpop.f32.mrb[0].mxu0
        %3544 = vmatprep.mubr.bf16.mxu0 %v2472
        %3545 = vmatmul.mubr.bf16.gmra.mrb[0].mxu0 %v2471
        %v3546 = vpop.f32.mrb[0].mxu0
        %v3547 = vadd.f32 %v3386, %v3546
        %v3548 = vpop.f32.mrb[0].mxu0
        %v3549 = vpop.f32.mrb[0].mxu0
        %v3550 = vadd.f32 %v3389, %v3549
        %v3551 = vpop.f32.mrb[0].mxu0
        %3552 = vmatprep.mubr.bf16.mxu0 %v2481
        %3553 = vmatmul.mubr.bf16.gmra.mrb[0].mxu0 %v2480
        %v3554 = vpop.f32.mrb[0].mxu0
        %v3555 = vadd.f32 %v3394, %v3554
        %v3556 = vpop.f32.mrb[0].mxu0
        %v3557 = vpop.f32.mrb[0].mxu0
        %v3558 = vadd.f32 %v3397, %v3557
        %v3559 = vpop.f32.mrb[0].mxu0
        %3560 = vmatprep.mubr.bf16.mxu0 %v2490
        %3561 = vmatmul.mubr.bf16.gmra.mrb[0].mxu0 %v2489
        %v3562 = vpop.f32.mrb[0].mxu0
        %v3563 = vadd.f32 %v3402, %v3562
        %v3564 = vpop.f32.mrb[0].mxu0
        %v3565 = vpop.f32.mrb[0].mxu0
        %v3566 = vadd.f32 %v3405, %v3565
        %v3567 = vpop.f32.mrb[0].mxu0
        %3568 = vmatprep.mubr.bf16.mxu0 %v2499
        %3569 = vmatmul.mubr.bf16.gmra.mrb[0].mxu0 %v2498
        %v3570 = vpop.f32.mrb[0].mxu0
        %v3571 = vadd.f32 %v3410, %v3570
        %v3572 = vpop.f32.mrb[0].mxu0
        %v3573 = vpop.f32.mrb[0].mxu0
        %v3574 = vadd.f32 %v3413, %v3573
        %v3575 = vpop.f32.mrb[0].mxu0
        %3576 = vmatprep.mubr.bf16.mxu0 %v2508
        %3577 = vmatmul.mubr.bf16.gmra.mrb[0].mxu0 %v2507
        %v3578 = vpop.f32.mrb[0].mxu0
        %v3579 = vadd.f32 %v3418, %v3578
        %v3580 = vpop.f32.mrb[0].mxu0
        %v3581 = vpop.f32.mrb[0].mxu0
        %v3582 = vadd.f32 %v3421, %v3581
        %v3583 = vpop.f32.mrb[0].mxu0
        %3584 = vmatprep.mubr.bf16.mxu0 %v2517
        %3585 = vmatmul.mubr.bf16.gmra.mrb[0].mxu0 %v2516
        %v3586 = vpop.f32.mrb[0].mxu0
        %v3587 = vadd.f32 %v3426, %v3586
        %v3588 = vpop.f32.mrb[0].mxu0
        %v3589 = vpop.f32.mrb[0].mxu0
        %v3590 = vadd.f32 %v3429, %v3589
        %v3591 = vpop.f32.mrb[0].mxu0
        %3592 = vmatprep.mubr.bf16.mxu0 %v2526
        %3593 = vmatmul.mubr.bf16.gmra.mrb[0].mxu0 %v2525
        %v3594 = vpop.f32.mrb[0].mxu0
        %v3595 = vadd.f32 %v3434, %v3594
        %v3596 = vpop.f32.mrb[0].mxu0
        %v3597 = vpop.f32.mrb[0].mxu0
        %v3598 = vadd.f32 %v3437, %v3597
        %v3599 = vpop.f32.mrb[0].mxu0
        %3600 = vmatprep.mubr.bf16.mxu0 %v2535
        %3601 = vmatmul.mubr.bf16.gmra.mrb[0].mxu0 %v2534
        %v3602 = vpop.f32.mrb[0].mxu0
        %v3603 = vadd.f32 %v3442, %v3602
        %v3604 = vpop.f32.mrb[0].mxu0
        %v3605 = vpop.f32.mrb[0].mxu0
        %v3606 = vadd.f32 %v3445, %v3605
        %v3607 = vpop.f32.mrb[0].mxu0
        %3608 = vmatprep.mubr.bf16.mxu0 %v2544
        %3609 = vmatmul.mubr.bf16.gmra.mrb[0].mxu0 %v2543
        %v3610 = vpop.f32.mrb[0].mxu0
        %v3611 = vadd.f32 %v3450, %v3610
        %v3612 = vpop.f32.mrb[0].mxu0
        %v3613 = vpop.f32.mrb[0].mxu0
        %v3614 = vadd.f32 %v3453, %v3613
        %v3615 = vpop.f32.mrb[0].mxu0
        %3616 = vmatprep.mubr.bf16.mxu0 %v2553
        %3617 = vmatmul.mubr.bf16.gmra.mrb[0].mxu0 %v2552
        %v3618 = vpop.f32.mrb[0].mxu0
        %v3619 = vadd.f32 %v3458, %v3618
        %v3620 = vpop.f32.mrb[0].mxu0
        %v3621 = vpop.f32.mrb[0].mxu0
        %v3622 = vadd.f32 %v3461, %v3621
        %v3623 = vpop.f32.mrb[0].mxu0
        %3624 = vmatprep.mubr.bf16.mxu0 %v2562
        %3625 = vmatmul.mubr.bf16.gmra.mrb[0].mxu0 %v2561
        %v3626 = vpop.f32.mrb[0].mxu0
        %v3627 = vadd.f32 %v3466, %v3626
        %v3628 = vpop.f32.mrb[0].mxu0
        %v3629 = vpop.f32.mrb[0].mxu0
        %v3630 = vadd.f32 %v3469, %v3629
        %v3631 = vpop.f32.mrb[0].mxu0
        %3632 = vmatprep.mubr.bf16.mxu0 %v2571
        %3633 = vmatmul.mubr.bf16.gmra.mrb[0].mxu0 %v2570
        %v3634 = vpop.f32.mrb[0].mxu0
        %v3635 = vadd.f32 %v3474, %v3634
        %v3636 = vpop.f32.mrb[0].mxu0
        %v3637 = vpop.f32.mrb[0].mxu0
        %v3638 = vadd.f32 %v3477, %v3637
        %v3639 = vpop.f32.mrb[0].mxu0
        %3640 = vdwg.mxu0
        %3641 = vmatprep.subr.bf16.mxu0 0
        %3642 = vmatpush1.bf16.msra.mxu0 %v3062
        %3643 = vmatprep.subr.bf16.mxu0 0
        %3644 = vmatpush1.bf16.msra.mxu0 %v3063
        %3645 = vmatprep.subr.bf16.mxu0 0
        %3646 = vmatpush1.bf16.msra.mxu0 %v3064
        %3647 = vmatprep.subr.bf16.mxu0 0
        %3648 = vmatpush1.bf16.msra.mxu0 %v3065
        %3649 = vmatprep.subr.bf16.mxu0 0
        %3650 = vmatpush1.bf16.msra.mxu0 %v3066
        %3651 = vmatprep.subr.bf16.mxu0 0
        %3652 = vmatpush1.bf16.msra.mxu0 %v3067
        %3653 = vmatprep.subr.bf16.mxu0 0
        %3654 = vmatpush1.bf16.msra.mxu0 %v3068
        %3655 = vmatprep.subr.bf16.mxu0 0
        %3656 = vmatpush1.bf16.msra.mxu0 %v3069
        %3657 = vmatprep.subr.bf16.mxu0 0
        %3658 = vmatpush1.bf16.msra.mxu0 %v3070
        %3659 = vmatprep.subr.bf16.mxu0 0
        %3660 = vmatpush1.bf16.msra.mxu0 %v3071
        %3661 = vmatprep.subr.bf16.mxu0 0
        %3662 = vmatpush1.bf16.msra.mxu0 %v3072
        %3663 = vmatprep.subr.bf16.mxu0 0
        %3664 = vmatpush1.bf16.msra.mxu0 %v3073
        %3665 = vmatprep.subr.bf16.mxu0 0
        %3666 = vmatpush1.bf16.msra.mxu0 %v3074
        %3667 = vmatprep.subr.bf16.mxu0 0
        %3668 = vmatpush1.bf16.msra.mxu0 %v3075
        %3669 = vmatprep.subr.bf16.mxu0 0
        %3670 = vmatpush1.bf16.msra.mxu0 %v3076
        %3671 = vmatprep.subr.bf16.mxu0 0
        %3672 = vmatpush1.bf16.msra.mxu0 %v3077
        %3673 = vmatprep.mubr.bf16.mxu0 %v2438
        %3674 = vmatmul.mubr.bf16.gmra.mrb[0].mxu0 %v2437
        %v3675 = vpop.f32.mrb[0].mxu0
        %v3676 = vadd.f32 %v3515, %v3675
        %v3677 = vpop.f32.mrb[0].mxu0
        %v3678 = vpop.f32.mrb[0].mxu0
        %v3679 = vadd.f32 %v3518, %v3678
        %v3680 = vpop.f32.mrb[0].mxu0
        %3681 = vmatprep.mubr.bf16.mxu0 %v2447
        %3682 = vmatmul.mubr.bf16.gmra.mrb[0].mxu0 %v2446
        %v3683 = vpop.f32.mrb[0].mxu0
        %v3684 = vadd.f32 %v3523, %v3683
        %v3685 = vpop.f32.mrb[0].mxu0
        %v3686 = vpop.f32.mrb[0].mxu0
        %v3687 = vadd.f32 %v3526, %v3686
        %v3688 = vpop.f32.mrb[0].mxu0
        %3689 = vmatprep.mubr.bf16.mxu0 %v2456
        %3690 = vmatmul.mubr.bf16.gmra.mrb[0].mxu0 %v2455
        %v3691 = vpop.f32.mrb[0].mxu0
        %v3692 = vadd.f32 %v3531, %v3691
        %v3693 = vpop.f32.mrb[0].mxu0
        %v3694 = vpop.f32.mrb[0].mxu0
        %v3695 = vadd.f32 %v3534, %v3694
        %v3696 = vpop.f32.mrb[0].mxu0
        %3697 = vmatprep.mubr.bf16.mxu0 %v2465
        %3698 = vmatmul.mubr.bf16.gmra.mrb[0].mxu0 %v2464
        %v3699 = vpop.f32.mrb[0].mxu0
        %v3700 = vadd.f32 %v3539, %v3699
        %v3701 = vpop.f32.mrb[0].mxu0
        %v3702 = vpop.f32.mrb[0].mxu0
        %v3703 = vadd.f32 %v3542, %v3702
        %v3704 = vpop.f32.mrb[0].mxu0
        %3705 = vmatprep.mubr.bf16.mxu0 %v2474
        %3706 = vmatmul.mubr.bf16.gmra.mrb[0].mxu0 %v2473
        %v3707 = vpop.f32.mrb[0].mxu0
        %v3708 = vadd.f32 %v3547, %v3707
        %v3709 = vpop.f32.mrb[0].mxu0
        %v3710 = vpop.f32.mrb[0].mxu0
        %v3711 = vadd.f32 %v3550, %v3710
        %v3712 = vpop.f32.mrb[0].mxu0
        %3713 = vmatprep.mubr.bf16.mxu0 %v2483
        %3714 = vmatmul.mubr.bf16.gmra.mrb[0].mxu0 %v2482
        %v3715 = vpop.f32.mrb[0].mxu0
        %v3716 = vadd.f32 %v3555, %v3715
        %v3717 = vpop.f32.mrb[0].mxu0
        %v3718 = vpop.f32.mrb[0].mxu0
        %v3719 = vadd.f32 %v3558, %v3718
        %v3720 = vpop.f32.mrb[0].mxu0
        %3721 = vmatprep.mubr.bf16.mxu0 %v2492
        %3722 = vmatmul.mubr.bf16.gmra.mrb[0].mxu0 %v2491
        %v3723 = vpop.f32.mrb[0].mxu0
        %v3724 = vadd.f32 %v3563, %v3723
        %v3725 = vpop.f32.mrb[0].mxu0
        %v3726 = vpop.f32.mrb[0].mxu0
        %v3727 = vadd.f32 %v3566, %v3726
        %v3728 = vpop.f32.mrb[0].mxu0
        %3729 = vmatprep.mubr.bf16.mxu0 %v2501
        %3730 = vmatmul.mubr.bf16.gmra.mrb[0].mxu0 %v2500
        %v3731 = vpop.f32.mrb[0].mxu0
        %v3732 = vadd.f32 %v3571, %v3731
        %v3733 = vpop.f32.mrb[0].mxu0
        %v3734 = vpop.f32.mrb[0].mxu0
        %v3735 = vadd.f32 %v3574, %v3734
        %v3736 = vpop.f32.mrb[0].mxu0
        %3737 = vmatprep.mubr.bf16.mxu0 %v2510
        %3738 = vmatmul.mubr.bf16.gmra.mrb[0].mxu0 %v2509
        %v3739 = vpop.f32.mrb[0].mxu0
        %v3740 = vadd.f32 %v3579, %v3739
        %v3741 = vpop.f32.mrb[0].mxu0
        %v3742 = vpop.f32.mrb[0].mxu0
        %v3743 = vadd.f32 %v3582, %v3742
        %v3744 = vpop.f32.mrb[0].mxu0
        %3745 = vmatprep.mubr.bf16.mxu0 %v2519
        %3746 = vmatmul.mubr.bf16.gmra.mrb[0].mxu0 %v2518
        %v3747 = vpop.f32.mrb[0].mxu0
        %v3748 = vadd.f32 %v3587, %v3747
        %v3749 = vpop.f32.mrb[0].mxu0
        %v3750 = vpop.f32.mrb[0].mxu0
        %v3751 = vadd.f32 %v3590, %v3750
        %v3752 = vpop.f32.mrb[0].mxu0
        %3753 = vmatprep.mubr.bf16.mxu0 %v2528
        %3754 = vmatmul.mubr.bf16.gmra.mrb[0].mxu0 %v2527
        %v3755 = vpop.f32.mrb[0].mxu0
        %v3756 = vadd.f32 %v3595, %v3755
        %v3757 = vpop.f32.mrb[0].mxu0
        %v3758 = vpop.f32.mrb[0].mxu0
        %v3759 = vadd.f32 %v3598, %v3758
        %v3760 = vpop.f32.mrb[0].mxu0
        %3761 = vmatprep.mubr.bf16.mxu0 %v2537
        %3762 = vmatmul.mubr.bf16.gmra.mrb[0].mxu0 %v2536
        %v3763 = vpop.f32.mrb[0].mxu0
        %v3764 = vadd.f32 %v3603, %v3763
        %v3765 = vpop.f32.mrb[0].mxu0
        %v3766 = vpop.f32.mrb[0].mxu0
        %v3767 = vadd.f32 %v3606, %v3766
        %v3768 = vpop.f32.mrb[0].mxu0
        %3769 = vmatprep.mubr.bf16.mxu0 %v2546
        %3770 = vmatmul.mubr.bf16.gmra.mrb[0].mxu0 %v2545
        %v3771 = vpop.f32.mrb[0].mxu0
        %v3772 = vadd.f32 %v3611, %v3771
        %v3773 = vpop.f32.mrb[0].mxu0
        %v3774 = vpop.f32.mrb[0].mxu0
        %v3775 = vadd.f32 %v3614, %v3774
        %v3776 = vpop.f32.mrb[0].mxu0
        %3777 = vmatprep.mubr.bf16.mxu0 %v2555
        %3778 = vmatmul.mubr.bf16.gmra.mrb[0].mxu0 %v2554
        %v3779 = vpop.f32.mrb[0].mxu0
        %v3780 = vadd.f32 %v3619, %v3779
        %v3781 = vpop.f32.mrb[0].mxu0
        %v3782 = vpop.f32.mrb[0].mxu0
        %v3783 = vadd.f32 %v3622, %v3782
        %v3784 = vpop.f32.mrb[0].mxu0
        %3785 = vmatprep.mubr.bf16.mxu0 %v2564
        %3786 = vmatmul.mubr.bf16.gmra.mrb[0].mxu0 %v2563
        %v3787 = vpop.f32.mrb[0].mxu0
        %v3788 = vadd.f32 %v3627, %v3787
        %v3789 = vpop.f32.mrb[0].mxu0
        %v3790 = vpop.f32.mrb[0].mxu0
        %v3791 = vadd.f32 %v3630, %v3790
        %v3792 = vpop.f32.mrb[0].mxu0
        %3793 = vmatprep.mubr.bf16.mxu0 %v2573
        %3794 = vmatmul.mubr.bf16.gmra.mrb[0].mxu0 %v2572
        %v3795 = vpop.f32.mrb[0].mxu0
        %v3796 = vadd.f32 %v3635, %v3795
        %v3797 = vpop.f32.mrb[0].mxu0
        %v3798 = vpop.f32.mrb[0].mxu0
        %v3799 = vadd.f32 %v3638, %v3798
        %v3800 = vpop.f32.mrb[0].mxu0
        %3801 = vdwg.mxu0
        %3802 = vmatprep.subr.bf16.mxu0 0
        %3803 = vmatpush1.bf16.msra.mxu0 %v3078
        %3804 = vmatprep.subr.bf16.mxu0 0
        %3805 = vmatpush1.bf16.msra.mxu0 %v3079
        %3806 = vmatprep.subr.bf16.mxu0 0
        %3807 = vmatpush1.bf16.msra.mxu0 %v3080
        %3808 = vmatprep.subr.bf16.mxu0 0
        %3809 = vmatpush1.bf16.msra.mxu0 %v3081
        %3810 = vmatprep.subr.bf16.mxu0 0
        %3811 = vmatpush1.bf16.msra.mxu0 %v3082
        %3812 = vmatprep.subr.bf16.mxu0 0
        %3813 = vmatpush1.bf16.msra.mxu0 %v3083
        %3814 = vmatprep.subr.bf16.mxu0 0
        %3815 = vmatpush1.bf16.msra.mxu0 %v3084
        %3816 = vmatprep.subr.bf16.mxu0 0
        %3817 = vmatpush1.bf16.msra.mxu0 %v3085
        %3818 = vmatprep.subr.bf16.mxu0 0
        %3819 = vmatpush1.bf16.msra.mxu0 0
        %3820 = vmatprep.subr.bf16.mxu0 0
        %3821 = vmatpush1.bf16.msra.mxu0 0
        %3822 = vmatprep.subr.bf16.mxu0 0
        %3823 = vmatpush1.bf16.msra.mxu0 0
        %3824 = vmatprep.subr.bf16.mxu0 0
        %3825 = vmatpush1.bf16.msra.mxu0 0
        %3826 = vmatprep.subr.bf16.mxu0 0
        %3827 = vmatpush1.bf16.msra.mxu0 0
        %3828 = vmatprep.subr.bf16.mxu0 0
        %3829 = vmatpush1.bf16.msra.mxu0 0
        %3830 = vmatprep.subr.bf16.mxu0 0
        %3831 = vmatpush1.bf16.msra.mxu0 0
        %3832 = vmatprep.subr.bf16.mxu0 0
        %3833 = vmatpush1.bf16.msra.mxu0 0
        %3834 = vmatprep.mubr.bf16.mxu0 0
        %3835 = vmatmul.mubr.bf16.gmra.mrb[0].mxu0 %v2439
        %v3836 = vpop.f32.mrb[0].mxu0
        %v3837 = vadd.f32 %v3676, %v3836
        %v3838 = vpop.f32.mrb[0].mxu0
        %v3839 = vpop.f32.mrb[0].mxu0
        %v3840 = vadd.f32 %v3679, %v3839
        %v3841 = vpop.f32.mrb[0].mxu0
        %3842 = vmatprep.mubr.bf16.mxu0 0
        %3843 = vmatmul.mubr.bf16.gmra.mrb[0].mxu0 %v2448
        %v3844 = vpop.f32.mrb[0].mxu0
        %v3845 = vadd.f32 %v3684, %v3844
        %v3846 = vpop.f32.mrb[0].mxu0
        %v3847 = vpop.f32.mrb[0].mxu0
        %v3848 = vadd.f32 %v3687, %v3847
        %v3849 = vpop.f32.mrb[0].mxu0
        %3850 = vmatprep.mubr.bf16.mxu0 0
        %3851 = vmatmul.mubr.bf16.gmra.mrb[0].mxu0 %v2457
        %v3852 = vpop.f32.mrb[0].mxu0
        %v3853 = vadd.f32 %v3692, %v3852
        %v3854 = vpop.f32.mrb[0].mxu0
        %v3855 = vpop.f32.mrb[0].mxu0
        %v3856 = vadd.f32 %v3695, %v3855
        %v3857 = vpop.f32.mrb[0].mxu0
        %3858 = vmatprep.mubr.bf16.mxu0 0
        %3859 = vmatmul.mubr.bf16.gmra.mrb[0].mxu0 %v2466
        %v3860 = vpop.f32.mrb[0].mxu0
        %v3861 = vadd.f32 %v3700, %v3860
        %v3862 = vpop.f32.mrb[0].mxu0
        %v3863 = vpop.f32.mrb[0].mxu0
        %v3864 = vadd.f32 %v3703, %v3863
        %v3865 = vpop.f32.mrb[0].mxu0
        %3866 = vmatprep.mubr.bf16.mxu0 0
        %3867 = vmatmul.mubr.bf16.gmra.mrb[0].mxu0 %v2475
        %v3868 = vpop.f32.mrb[0].mxu0
        %v3869 = vadd.f32 %v3708, %v3868
        %v3870 = vpop.f32.mrb[0].mxu0
        %v3871 = vpop.f32.mrb[0].mxu0
        %v3872 = vadd.f32 %v3711, %v3871
        %v3873 = vpop.f32.mrb[0].mxu0
        %3874 = vmatprep.mubr.bf16.mxu0 0
        %3875 = vmatmul.mubr.bf16.gmra.mrb[0].mxu0 %v2484
        %v3876 = vpop.f32.mrb[0].mxu0
        %v3877 = vadd.f32 %v3716, %v3876
        %v3878 = vpop.f32.mrb[0].mxu0
        %v3879 = vpop.f32.mrb[0].mxu0
        %v3880 = vadd.f32 %v3719, %v3879
        %v3881 = vpop.f32.mrb[0].mxu0
        %3882 = vmatprep.mubr.bf16.mxu0 0
        %3883 = vmatmul.mubr.bf16.gmra.mrb[0].mxu0 %v2493
        %v3884 = vpop.f32.mrb[0].mxu0
        %v3885 = vadd.f32 %v3724, %v3884
        %v3886 = vpop.f32.mrb[0].mxu0
        %v3887 = vpop.f32.mrb[0].mxu0
        %v3888 = vadd.f32 %v3727, %v3887
        %v3889 = vpop.f32.mrb[0].mxu0
        %3890 = vmatprep.mubr.bf16.mxu0 0
        %3891 = vmatmul.mubr.bf16.gmra.mrb[0].mxu0 %v2502
        %v3892 = vpop.f32.mrb[0].mxu0
        %v3893 = vadd.f32 %v3732, %v3892
        %v3894 = vpop.f32.mrb[0].mxu0
        %v3895 = vpop.f32.mrb[0].mxu0
        %v3896 = vadd.f32 %v3735, %v3895
        %v3897 = vpop.f32.mrb[0].mxu0
        %3898 = vmatprep.mubr.bf16.mxu0 0
        %3899 = vmatmul.mubr.bf16.gmra.mrb[0].mxu0 %v2511
        %v3900 = vpop.f32.mrb[0].mxu0
        %v3901 = vadd.f32 %v3740, %v3900
        %v3902 = vpop.f32.mrb[0].mxu0
        %v3903 = vpop.f32.mrb[0].mxu0
        %v3904 = vadd.f32 %v3743, %v3903
        %v3905 = vpop.f32.mrb[0].mxu0
        %3906 = vmatprep.mubr.bf16.mxu0 0
        %3907 = vmatmul.mubr.bf16.gmra.mrb[0].mxu0 %v2520
        %v3908 = vpop.f32.mrb[0].mxu0
        %v3909 = vadd.f32 %v3748, %v3908
        %v3910 = vpop.f32.mrb[0].mxu0
        %v3911 = vpop.f32.mrb[0].mxu0
        %v3912 = vadd.f32 %v3751, %v3911
        %v3913 = vpop.f32.mrb[0].mxu0
        %3914 = vmatprep.mubr.bf16.mxu0 0
        %3915 = vmatmul.mubr.bf16.gmra.mrb[0].mxu0 %v2529
        %v3916 = vpop.f32.mrb[0].mxu0
        %v3917 = vadd.f32 %v3756, %v3916
        %v3918 = vpop.f32.mrb[0].mxu0
        %v3919 = vpop.f32.mrb[0].mxu0
        %v3920 = vadd.f32 %v3759, %v3919
        %v3921 = vpop.f32.mrb[0].mxu0
        %3922 = vmatprep.mubr.bf16.mxu0 0
        %3923 = vmatmul.mubr.bf16.gmra.mrb[0].mxu0 %v2538
        %v3924 = vpop.f32.mrb[0].mxu0
        %v3925 = vadd.f32 %v3764, %v3924
        %v3926 = vpop.f32.mrb[0].mxu0
        %v3927 = vpop.f32.mrb[0].mxu0
        %v3928 = vadd.f32 %v3767, %v3927
        %v3929 = vpop.f32.mrb[0].mxu0
        %3930 = vmatprep.mubr.bf16.mxu0 0
        %3931 = vmatmul.mubr.bf16.gmra.mrb[0].mxu0 %v2547
        %v3932 = vpop.f32.mrb[0].mxu0
        %v3933 = vadd.f32 %v3772, %v3932
        %v3934 = vpop.f32.mrb[0].mxu0
        %v3935 = vpop.f32.mrb[0].mxu0
        %v3936 = vadd.f32 %v3775, %v3935
        %v3937 = vpop.f32.mrb[0].mxu0
        %3938 = vmatprep.mubr.bf16.mxu0 0
        %3939 = vmatmul.mubr.bf16.gmra.mrb[0].mxu0 %v2556
        %v3940 = vpop.f32.mrb[0].mxu0
        %v3941 = vadd.f32 %v3780, %v3940
        %v3942 = vpop.f32.mrb[0].mxu0
        %v3943 = vpop.f32.mrb[0].mxu0
        %v3944 = vadd.f32 %v3783, %v3943
        %v3945 = vpop.f32.mrb[0].mxu0
        %3946 = vmatprep.mubr.bf16.mxu0 0
        %3947 = vmatmul.mubr.bf16.gmra.mrb[0].mxu0 %v2565
        %v3948 = vpop.f32.mrb[0].mxu0
        %v3949 = vadd.f32 %v3788, %v3948
        %v3950 = vpop.f32.mrb[0].mxu0
        %v3951 = vpop.f32.mrb[0].mxu0
        %v3952 = vadd.f32 %v3791, %v3951
        %v3953 = vpop.f32.mrb[0].mxu0
        %3954 = vmatprep.mubr.bf16.mxu0 0
        %3955 = vmatmul.mubr.bf16.gmra.mrb[0].mxu0 %v2574
        %v3956 = vpop.f32.mrb[0].mxu0
        %v3957 = vadd.f32 %v3796, %v3956
        %v3958 = vpop.f32.mrb[0].mxu0
        %v3959 = vpop.f32.mrb[0].mxu0
        %v3960 = vadd.f32 %v3799, %v3959
        %v3961 = vpop.f32.mrb[0].mxu0
        %3962 = vdwg.mxu0
        %v3963 = vmax.f32 %v3837, 0.0
        %v3964 = vmax.f32 %v3840, 0.0
        %v3965 = vmax.f32 %v3845, 0.0
        %v3966 = vmax.f32 %v3848, 0.0
        %v3967 = vmax.f32 %v3853, 0.0
        %v3968 = vmax.f32 %v3856, 0.0
        %v3969 = vmax.f32 %v3861, 0.0
        %v3970 = vmax.f32 %v3864, 0.0
        %v3971 = vmax.f32 %v3869, 0.0
        %v3972 = vmax.f32 %v3872, 0.0
        %v3973 = vmax.f32 %v3877, 0.0
        %v3974 = vmax.f32 %v3880, 0.0
        %v3975 = vmax.f32 %v3885, 0.0
        %v3976 = vmax.f32 %v3888, 0.0
        %v3977 = vmax.f32 %v3893, 0.0
        %v3978 = vmax.f32 %v3896, 0.0
        %v3979 = vmax.f32 %v3901, 0.0
        %v3980 = vmax.f32 %v3904, 0.0
        %v3981 = vmax.f32 %v3909, 0.0
        %v3982 = vmax.f32 %v3912, 0.0
        %v3983 = vmax.f32 %v3917, 0.0
        %v3984 = vmax.f32 %v3920, 0.0
        %v3985 = vmax.f32 %v3925, 0.0
        %v3986 = vmax.f32 %v3928, 0.0
        %v3987 = vmax.f32 %v3933, 0.0
        %v3988 = vmax.f32 %v3936, 0.0
        %v3989 = vmax.f32 %v3941, 0.0
        %v3990 = vmax.f32 %v3944, 0.0
        %v3991 = vmax.f32 %v3949, 0.0
        %v3992 = vmax.f32 %v3952, 0.0
        %v3993 = vmax.f32 %v3957, 0.0
        %v3994 = vmax.f32 %v3960, 0.0
        %3995 = vst [vmem:[#allocation4] sm:$0xff] 0.0
        %3996 = vst [vmem:[#allocation4 + $0x8] sm:$0xff] 0.0
        %3997 = vst [vmem:[#allocation4 + $0x10] sm:$0x3] 0.0
        %3998 = vst [vmem:[#allocation4 + $0x18] sm:$0xff] 0.0
        %3999 = vst [vmem:[#allocation4 + $0x20] sm:$0xff] 0.0
        %4000 = vst [vmem:[#allocation4 + $0x28] sm:$0x3] 0.0
        %4001 = vst [vmem:[#allocation4 + $0x30] sm:$0xff] 0.0
        %4002 = vst [vmem:[#allocation4 + $0x38] sm:$0xff] 0.0
        %4003 = vst [vmem:[#allocation4 + $0x40] sm:$0x3] 0.0
        %4004 = vst [vmem:[#allocation4 + $0x48] sm:$0xff] 0.0
        %4005 = vst [vmem:[#allocation4 + $0x50] sm:$0xff] 0.0
        %4006 = vst [vmem:[#allocation4 + $0x58] sm:$0x3] 0.0
        %4007 = vst [vmem:[#allocation4 + $0x60] sm:$0xff] 0.0
        %4008 = vst [vmem:[#allocation4 + $0x68] sm:$0xff] 0.0
        %4009 = vst [vmem:[#allocation4 + $0x70] sm:$0x3] 0.0
        %4010 = vst [vmem:[#allocation4 + $0x78] sm:$0xff] 0.0
        %4011 = vst [vmem:[#allocation4 + $0x80] sm:$0xff] 0.0
        %4012 = vst [vmem:[#allocation4 + $0x88] sm:$0x3] 0.0
        %4013 = vst [vmem:[#allocation4 + $0x90] sm:$0xff] 0.0
        %4014 = vst [vmem:[#allocation4 + $0x98] sm:$0xff] 0.0
        %4015 = vst [vmem:[#allocation4 + $0xa0] sm:$0x3] 0.0
        %4016 = vst [vmem:[#allocation4 + $0xa8] sm:$0xff] 0.0
        %4017 = vst [vmem:[#allocation4 + $0xb0] sm:$0xff] 0.0
        %4018 = vst [vmem:[#allocation4 + $0xb8] sm:$0x3] 0.0
        %4019 = vst [vmem:[#allocation4 + $0xc0] sm:$0xff] 0.0
        %4020 = vst [vmem:[#allocation4 + $0xc8] sm:$0xff] 0.0
        %4021 = vst [vmem:[#allocation4 + $0xd0] sm:$0x3] 0.0
        %4022 = vst [vmem:[#allocation4 + $0xd8] sm:$0xff] 0.0
        %4023 = vst [vmem:[#allocation4 + $0xe0] sm:$0xff] 0.0
        %4024 = vst [vmem:[#allocation4 + $0xe8] sm:$0x3] 0.0
        %4025 = vst [vmem:[#allocation4 + $0xf0] sm:$0xff] 0.0
        %4026 = vst [vmem:[#allocation4 + $0xf8] sm:$0xff] 0.0
        %4027 = vst [vmem:[#allocation4 + $0x100] sm:$0x3] 0.0
        %4028 = vst [vmem:[#allocation4 + $0x108] sm:$0xff] 0.0
        %4029 = vst [vmem:[#allocation4 + $0x110] sm:$0xff] 0.0
        %4030 = vst [vmem:[#allocation4 + $0x118] sm:$0x3] 0.0
        %4031 = vst [vmem:[#allocation4 + $0x120] sm:$0xff] 0.0
        %4032 = vst [vmem:[#allocation4 + $0x128] sm:$0xff] 0.0
        %4033 = vst [vmem:[#allocation4 + $0x130] sm:$0x3] 0.0
        %4034 = vst [vmem:[#allocation4 + $0x138] sm:$0xff] 0.0
        %4035 = vst [vmem:[#allocation4 + $0x140] sm:$0xff] 0.0
        %4036 = vst [vmem:[#allocation4 + $0x148] sm:$0x3] 0.0
        %4037 = vst [vmem:[#allocation4 + $0x150] sm:$0xff] 0.0
        %4038 = vst [vmem:[#allocation4 + $0x158] sm:$0xff] 0.0
        %4039 = vst [vmem:[#allocation4 + $0x160] sm:$0x3] 0.0
        %4040 = vst [vmem:[#allocation4 + $0x168] sm:$0xff] 0.0
        %4041 = vst [vmem:[#allocation4 + $0x170] sm:$0xff] 0.0
        %4042 = vst [vmem:[#allocation4 + $0x178] sm:$0x3] 0.0
        %4043 = vst [vmem:[#allocation4 + $0x180] sm:$0xff] 0.0
        %4044 = vst [vmem:[#allocation4 + $0x188] sm:$0xff] 0.0
        %4045 = vst [vmem:[#allocation4 + $0x190] sm:$0x3] 0.0
        %4046 = vst [vmem:[#allocation4 + $0x198] sm:$0xff] 0.0
        %4047 = vst [vmem:[#allocation4 + $0x1a0] sm:$0xff] 0.0
        %4048 = vst [vmem:[#allocation4 + $0x1a8] sm:$0x3] 0.0
        %s4049 = scalar_lea.vmem [#allocation4], 24
        %4050 = vst [vmem:[%s4049 + $0x1] sm:$0xff] %v3963
        %4051 = vst [vmem:[%s4049 + $0x9] sm:$0xff] %v3964
        %4052 = vst [vmem:[%s4049 + $0x19] sm:$0xff] %v3965
        %4053 = vst [vmem:[%s4049 + $0x21] sm:$0xff] %v3966
        %4054 = vst [vmem:[%s4049 + $0x31] sm:$0xff] %v3967
        %4055 = vst [vmem:[%s4049 + $0x39] sm:$0xff] %v3968
        %4056 = vst [vmem:[%s4049 + $0x49] sm:$0xff] %v3969
        %4057 = vst [vmem:[%s4049 + $0x51] sm:$0xff] %v3970
        %4058 = vst [vmem:[%s4049 + $0x61] sm:$0xff] %v3971
        %4059 = vst [vmem:[%s4049 + $0x69] sm:$0xff] %v3972
        %4060 = vst [vmem:[%s4049 + $0x79] sm:$0xff] %v3973
        %4061 = vst [vmem:[%s4049 + $0x81] sm:$0xff] %v3974
        %4062 = vst [vmem:[%s4049 + $0x91] sm:$0xff] %v3975
        %4063 = vst [vmem:[%s4049 + $0x99] sm:$0xff] %v3976
        %4064 = vst [vmem:[%s4049 + $0xa9] sm:$0xff] %v3977
        %4065 = vst [vmem:[%s4049 + $0xb1] sm:$0xff] %v3978
        %4066 = vst [vmem:[%s4049 + $0xc1] sm:$0xff] %v3979
        %4067 = vst [vmem:[%s4049 + $0xc9] sm:$0xff] %v3980
        %4068 = vst [vmem:[%s4049 + $0xd9] sm:$0xff] %v3981
        %4069 = vst [vmem:[%s4049 + $0xe1] sm:$0xff] %v3982
        %4070 = vst [vmem:[%s4049 + $0xf1] sm:$0xff] %v3983
        %4071 = vst [vmem:[%s4049 + $0xf9] sm:$0xff] %v3984
        %4072 = vst [vmem:[%s4049 + $0x109] sm:$0xff] %v3985
        %4073 = vst [vmem:[%s4049 + $0x111] sm:$0xff] %v3986
        %4074 = vst [vmem:[%s4049 + $0x121] sm:$0xff] %v3987
        %4075 = vst [vmem:[%s4049 + $0x129] sm:$0xff] %v3988
        %4076 = vst [vmem:[%s4049 + $0x139] sm:$0xff] %v3989
        %4077 = vst [vmem:[%s4049 + $0x141] sm:$0xff] %v3990
        %4078 = vst [vmem:[%s4049 + $0x151] sm:$0xff] %v3991
        %4079 = vst [vmem:[%s4049 + $0x159] sm:$0xff] %v3992
        %4080 = vst [vmem:[%s4049 + $0x169] sm:$0xff] %v3993
        %4081 = vst [vmem:[%s4049 + $0x171] sm:$0xff] %v3994
        %v4082 = vld [vmem:[#allocation4] sm:$0xff]
        %v4083 = vld [vmem:[#allocation4 + $0x8] sm:$0xff]
        %v4084 = vld [vmem:[#allocation4 + $0x18] sm:$0xff]
        %v4085 = vld [vmem:[#allocation4 + $0x20] sm:$0xff]
        %v4086 = vld [vmem:[#allocation4 + $0x30] sm:$0xff]
        %v4087 = vld [vmem:[#allocation4 + $0x38] sm:$0xff]
        %v4088 = vld [vmem:[#allocation4 + $0x48] sm:$0xff]
        %v4089 = vld [vmem:[#allocation4 + $0x50] sm:$0xff]
        %v4090 = vld [vmem:[#allocation4 + $0x60] sm:$0xff]
        %v4091 = vld [vmem:[#allocation4 + $0x68] sm:$0xff]
        %v4092 = vld [vmem:[#allocation4 + $0x78] sm:$0xff]
        %v4093 = vld [vmem:[#allocation4 + $0x80] sm:$0xff]
        %v4094 = vld [vmem:[#allocation4 + $0x90] sm:$0xff]
        %v4095 = vld [vmem:[#allocation4 + $0x98] sm:$0xff]
        %v4096 = vld [vmem:[#allocation4 + $0xa8] sm:$0xff]
        %v4097 = vld [vmem:[#allocation4 + $0xb0] sm:$0xff]
        %v4098 = vld [vmem:[#allocation4 + $0xc0] sm:$0xff]
        %v4099 = vld [vmem:[#allocation4 + $0xc8] sm:$0xff]
        %v4100 = vld [vmem:[#allocation4 + $0xd8] sm:$0xff]
        %v4101 = vld [vmem:[#allocation4 + $0xe0] sm:$0xff]
        %v4102 = vld [vmem:[#allocation4 + $0xf0] sm:$0xff]
        %v4103 = vld [vmem:[#allocation4 + $0xf8] sm:$0xff]
        %v4104 = vld [vmem:[#allocation4 + $0x108] sm:$0xff]
        %v4105 = vld [vmem:[#allocation4 + $0x110] sm:$0xff]
        %v4106 = vld [vmem:[#allocation4 + $0x120] sm:$0xff]
        %v4107 = vld [vmem:[#allocation4 + $0x128] sm:$0xff]
        %v4108 = vld [vmem:[#allocation4 + $0x138] sm:$0xff]
        %v4109 = vld [vmem:[#allocation4 + $0x140] sm:$0xff]
        %v4110 = vld [vmem:[#allocation4 + $0x150] sm:$0xff]
        %v4111 = vld [vmem:[#allocation4 + $0x158] sm:$0xff]
        %v4112 = vld [vmem:[#allocation4 + $0x168] sm:$0xff]
        %v4113 = vld [vmem:[#allocation4 + $0x170] sm:$0xff]
        %v4114 = vld [vmem:[#allocation4 + $0x180] sm:$0xff]
        %v4115 = vld [vmem:[#allocation4 + $0x188] sm:$0xff]
        %v4116 = vld [vmem:[#allocation4 + $0x198] sm:$0xff]
        %v4117 = vld [vmem:[#allocation4 + $0x1a0] sm:$0xff]
        %v4118 = vpack.c.bf16 %v4083, %v4082
        %v4119 = vpack.c.bf16 %v4085, %v4084
        %v4120 = vpack.c.bf16 %v4087, %v4086
        %v4121 = vpack.c.bf16 %v4089, %v4088
        %v4122 = vpack.c.bf16 %v4091, %v4090
        %v4123 = vpack.c.bf16 %v4093, %v4092
        %v4124 = vpack.c.bf16 %v4095, %v4094
        %v4125 = vpack.c.bf16 %v4097, %v4096
        %v4126 = vpack.c.bf16 %v4099, %v4098
        %v4127 = vpack.c.bf16 %v4101, %v4100
        %v4128 = vpack.c.bf16 %v4103, %v4102
        %v4129 = vpack.c.bf16 %v4105, %v4104
        %v4130 = vpack.c.bf16 %v4107, %v4106
        %v4131 = vpack.c.bf16 %v4109, %v4108
        %v4132 = vpack.c.bf16 %v4111, %v4110
        %v4133 = vpack.c.bf16 %v4113, %v4112
        %v4134 = vpack.c.bf16 %v4115, %v4114
        %v4135 = vpack.c.bf16 %v4117, %v4116
        %4136 = vst [vmem:[#allocation3] sm:$0xff] %v4118
        %4137 = vst [vmem:[#allocation3 + $0x48] sm:$0xff] %v4119
        %4138 = vst [vmem:[#allocation3 + $0x90] sm:$0xff] %v4120
        %4139 = vst [vmem:[#allocation3 + $0xd8] sm:$0xff] %v4121
        %4140 = vst [vmem:[#allocation3 + $0x120] sm:$0xff] %v4122
        %4141 = vst [vmem:[#allocation3 + $0x168] sm:$0xff] %v4123
        %4142 = vst [vmem:[#allocation3 + $0x1b0] sm:$0xff] %v4124
        %4143 = vst [vmem:[#allocation3 + $0x1f8] sm:$0xff] %v4125
        %4144 = vst [vmem:[#allocation3 + $0x240] sm:$0xff] %v4126
        %4145 = vst [vmem:[#allocation3 + $0x288] sm:$0xff] %v4127
        %4146 = vst [vmem:[#allocation3 + $0x2d0] sm:$0xff] %v4128
        %4147 = vst [vmem:[#allocation3 + $0x318] sm:$0xff] %v4129
        %4148 = vst [vmem:[#allocation3 + $0x360] sm:$0xff] %v4130
        %4149 = vst [vmem:[#allocation3 + $0x3a8] sm:$0xff] %v4131
        %4150 = vst [vmem:[#allocation3 + $0x3f0] sm:$0xff] %v4132
        %4151 = vst [vmem:[#allocation3 + $0x438] sm:$0xff] %v4133
        %4152 = vst [vmem:[#allocation3 + $0x18] sm:$0xff] %v4119
        %4153 = vst [vmem:[#allocation3 + $0x60] sm:$0xff] %v4120
        %4154 = vst [vmem:[#allocation3 + $0xa8] sm:$0xff] %v4121
        %4155 = vst [vmem:[#allocation3 + $0xf0] sm:$0xff] %v4122
        %4156 = vst [vmem:[#allocation3 + $0x138] sm:$0xff] %v4123
        %4157 = vst [vmem:[#allocation3 + $0x180] sm:$0xff] %v4124
        %4158 = vst [vmem:[#allocation3 + $0x1c8] sm:$0xff] %v4125
        %4159 = vst [vmem:[#allocation3 + $0x210] sm:$0xff] %v4126
        %4160 = vst [vmem:[#allocation3 + $0x258] sm:$0xff] %v4127
        %4161 = vst [vmem:[#allocation3 + $0x2a0] sm:$0xff] %v4128
        %4162 = vst [vmem:[#allocation3 + $0x2e8] sm:$0xff] %v4129
        %4163 = vst [vmem:[#allocation3 + $0x330] sm:$0xff] %v4130
        %4164 = vst [vmem:[#allocation3 + $0x378] sm:$0xff] %v4131
        %4165 = vst [vmem:[#allocation3 + $0x3c0] sm:$0xff] %v4132
        %4166 = vst [vmem:[#allocation3 + $0x408] sm:$0xff] %v4133
        %4167 = vst [vmem:[#allocation3 + $0x450] sm:$0xff] %v4134
        %4168 = vst [vmem:[#allocation3 + $0x30] sm:$0xff] %v4120
        %4169 = vst [vmem:[#allocation3 + $0x78] sm:$0xff] %v4121
        %4170 = vst [vmem:[#allocation3 + $0xc0] sm:$0xff] %v4122
        %4171 = vst [vmem:[#allocation3 + $0x108] sm:$0xff] %v4123
        %4172 = vst [vmem:[#allocation3 + $0x150] sm:$0xff] %v4124
        %4173 = vst [vmem:[#allocation3 + $0x198] sm:$0xff] %v4125
        %4174 = vst [vmem:[#allocation3 + $0x1e0] sm:$0xff] %v4126
        %4175 = vst [vmem:[#allocation3 + $0x228] sm:$0xff] %v4127
        %4176 = vst [vmem:[#allocation3 + $0x270] sm:$0xff] %v4128
        %4177 = vst [vmem:[#allocation3 + $0x2b8] sm:$0xff] %v4129
        %4178 = vst [vmem:[#allocation3 + $0x300] sm:$0xff] %v4130
        %4179 = vst [vmem:[#allocation3 + $0x348] sm:$0xff] %v4131
        %4180 = vst [vmem:[#allocation3 + $0x390] sm:$0xff] %v4132
        %4181 = vst [vmem:[#allocation3 + $0x3d8] sm:$0xff] %v4133
        %4182 = vst [vmem:[#allocation3 + $0x420] sm:$0xff] %v4134
        %4183 = vst [vmem:[#allocation3 + $0x468] sm:$0xff] %v4135
        %v4184 = vld [vmem:[#allocation4 + $0x1] sm:$0xff]
        %v4185 = vld [vmem:[#allocation4 + $0x9] sm:$0xff]
        %v4186 = vld [vmem:[#allocation4 + $0x19] sm:$0xff]
        %v4187 = vld [vmem:[#allocation4 + $0x21] sm:$0xff]
        %v4188 = vld [vmem:[#allocation4 + $0x31] sm:$0xff]
        %v4189 = vld [vmem:[#allocation4 + $0x39] sm:$0xff]
        %v4190 = vld [vmem:[#allocation4 + $0x49] sm:$0xff]
        %v4191 = vld [vmem:[#allocation4 + $0x51] sm:$0xff]
        %v4192 = vld [vmem:[#allocation4 + $0x61] sm:$0xff]
        %v4193 = vld [vmem:[#allocation4 + $0x69] sm:$0xff]
        %v4194 = vld [vmem:[#allocation4 + $0x79] sm:$0xff]
        %v4195 = vld [vmem:[#allocation4 + $0x81] sm:$0xff]
        %v4196 = vld [vmem:[#allocation4 + $0x91] sm:$0xff]
        %v4197 = vld [vmem:[#allocation4 + $0x99] sm:$0xff]
        %v4198 = vld [vmem:[#allocation4 + $0xa9] sm:$0xff]
        %v4199 = vld [vmem:[#allocation4 + $0xb1] sm:$0xff]
        %v4200 = vld [vmem:[#allocation4 + $0xc1] sm:$0xff]
        %v4201 = vld [vmem:[#allocation4 + $0xc9] sm:$0xff]
        %v4202 = vld [vmem:[#allocation4 + $0xd9] sm:$0xff]
        %v4203 = vld [vmem:[#allocation4 + $0xe1] sm:$0xff]
        %v4204 = vld [vmem:[#allocation4 + $0xf1] sm:$0xff]
        %v4205 = vld [vmem:[#allocation4 + $0xf9] sm:$0xff]
        %v4206 = vld [vmem:[#allocation4 + $0x109] sm:$0xff]
        %v4207 = vld [vmem:[#allocation4 + $0x111] sm:$0xff]
        %v4208 = vld [vmem:[#allocation4 + $0x121] sm:$0xff]
        %v4209 = vld [vmem:[#allocation4 + $0x129] sm:$0xff]
        %v4210 = vld [vmem:[#allocation4 + $0x139] sm:$0xff]
        %v4211 = vld [vmem:[#allocation4 + $0x141] sm:$0xff]
        %v4212 = vld [vmem:[#allocation4 + $0x151] sm:$0xff]
        %v4213 = vld [vmem:[#allocation4 + $0x159] sm:$0xff]
        %v4214 = vld [vmem:[#allocation4 + $0x169] sm:$0xff]
        %v4215 = vld [vmem:[#allocation4 + $0x171] sm:$0xff]
        %v4216 = vld [vmem:[#allocation4 + $0x181] sm:$0xff]
        %v4217 = vld [vmem:[#allocation4 + $0x189] sm:$0xff]
        %v4218 = vld [vmem:[#allocation4 + $0x199] sm:$0xff]
        %v4219 = vld [vmem:[#allocation4 + $0x1a1] sm:$0xff]
        %v4220 = vpack.c.bf16 %v4185, %v4184
        %v4221 = vpack.c.bf16 %v4187, %v4186
        %v4222 = vpack.c.bf16 %v4189, %v4188
        %v4223 = vpack.c.bf16 %v4191, %v4190
        %v4224 = vpack.c.bf16 %v4193, %v4192
        %v4225 = vpack.c.bf16 %v4195, %v4194
        %v4226 = vpack.c.bf16 %v4197, %v4196
        %v4227 = vpack.c.bf16 %v4199, %v4198
        %v4228 = vpack.c.bf16 %v4201, %v4200
        %v4229 = vpack.c.bf16 %v4203, %v4202
        %v4230 = vpack.c.bf16 %v4205, %v4204
        %v4231 = vpack.c.bf16 %v4207, %v4206
        %v4232 = vpack.c.bf16 %v4209, %v4208
        %v4233 = vpack.c.bf16 %v4211, %v4210
        %v4234 = vpack.c.bf16 %v4213, %v4212
        %v4235 = vpack.c.bf16 %v4215, %v4214
        %v4236 = vpack.c.bf16 %v4217, %v4216
        %v4237 = vpack.c.bf16 %v4219, %v4218
        %4238 = vst [vmem:[#allocation3 + $0x8] sm:$0xff] %v4220
        %4239 = vst [vmem:[#allocation3 + $0x50] sm:$0xff] %v4221
        %4240 = vst [vmem:[#allocation3 + $0x98] sm:$0xff] %v4222
        %4241 = vst [vmem:[#allocation3 + $0xe0] sm:$0xff] %v4223
        %4242 = vst [vmem:[#allocation3 + $0x128] sm:$0xff] %v4224
        %4243 = vst [vmem:[#allocation3 + $0x170] sm:$0xff] %v4225
        %4244 = vst [vmem:[#allocation3 + $0x1b8] sm:$0xff] %v4226
        %4245 = vst [vmem:[#allocation3 + $0x200] sm:$0xff] %v4227
        %4246 = vst [vmem:[#allocation3 + $0x248] sm:$0xff] %v4228
        %4247 = vst [vmem:[#allocation3 + $0x290] sm:$0xff] %v4229
        %4248 = vst [vmem:[#allocation3 + $0x2d8] sm:$0xff] %v4230
        %4249 = vst [vmem:[#allocation3 + $0x320] sm:$0xff] %v4231
        %4250 = vst [vmem:[#allocation3 + $0x368] sm:$0xff] %v4232
        %4251 = vst [vmem:[#allocation3 + $0x3b0] sm:$0xff] %v4233
        %4252 = vst [vmem:[#allocation3 + $0x3f8] sm:$0xff] %v4234
        %4253 = vst [vmem:[#allocation3 + $0x440] sm:$0xff] %v4235
        %4254 = vst [vmem:[#allocation3 + $0x20] sm:$0xff] %v4221
        %4255 = vst [vmem:[#allocation3 + $0x68] sm:$0xff] %v4222
        %4256 = vst [vmem:[#allocation3 + $0xb0] sm:$0xff] %v4223
        %4257 = vst [vmem:[#allocation3 + $0xf8] sm:$0xff] %v4224
        %4258 = vst [vmem:[#allocation3 + $0x140] sm:$0xff] %v4225
        %4259 = vst [vmem:[#allocation3 + $0x188] sm:$0xff] %v4226
        %4260 = vst [vmem:[#allocation3 + $0x1d0] sm:$0xff] %v4227
        %4261 = vst [vmem:[#allocation3 + $0x218] sm:$0xff] %v4228
        %4262 = vst [vmem:[#allocation3 + $0x260] sm:$0xff] %v4229
        %4263 = vst [vmem:[#allocation3 + $0x2a8] sm:$0xff] %v4230
        %4264 = vst [vmem:[#allocation3 + $0x2f0] sm:$0xff] %v4231
        %4265 = vst [vmem:[#allocation3 + $0x338] sm:$0xff] %v4232
        %4266 = vst [vmem:[#allocation3 + $0x380] sm:$0xff] %v4233
        %4267 = vst [vmem:[#allocation3 + $0x3c8] sm:$0xff] %v4234
        %4268 = vst [vmem:[#allocation3 + $0x410] sm:$0xff] %v4235
        %4269 = vst [vmem:[#allocation3 + $0x458] sm:$0xff] %v4236
        %4270 = vst [vmem:[#allocation3 + $0x38] sm:$0xff] %v4222
        %4271 = vst [vmem:[#allocation3 + $0x80] sm:$0xff] %v4223
        %4272 = vst [vmem:[#allocation3 + $0xc8] sm:$0xff] %v4224
        %4273 = vst [vmem:[#allocation3 + $0x110] sm:$0xff] %v4225
        %4274 = vst [vmem:[#allocation3 + $0x158] sm:$0xff] %v4226
        %4275 = vst [vmem:[#allocation3 + $0x1a0] sm:$0xff] %v4227
        %4276 = vst [vmem:[#allocation3 + $0x1e8] sm:$0xff] %v4228
        %4277 = vst [vmem:[#allocation3 + $0x230] sm:$0xff] %v4229
        %4278 = vst [vmem:[#allocation3 + $0x278] sm:$0xff] %v4230
        %4279 = vst [vmem:[#allocation3 + $0x2c0] sm:$0xff] %v4231
        %4280 = vst [vmem:[#allocation3 + $0x308] sm:$0xff] %v4232
        %4281 = vst [vmem:[#allocation3 + $0x350] sm:$0xff] %v4233
        %4282 = vst [vmem:[#allocation3 + $0x398] sm:$0xff] %v4234
        %4283 = vst [vmem:[#allocation3 + $0x3e0] sm:$0xff] %v4235
        %4284 = vst [vmem:[#allocation3 + $0x428] sm:$0xff] %v4236
        %4285 = vst [vmem:[#allocation3 + $0x470] sm:$0xff] %v4237
        %v4286 = vld [vmem:[#allocation4 + $0x2] sm:$0xff]
        %v4287 = vld [vmem:[#allocation4 + $0xa] sm:$0xff]
        %v4288 = vld [vmem:[#allocation4 + $0x1a] sm:$0xff]
        %v4289 = vld [vmem:[#allocation4 + $0x22] sm:$0xff]
        %v4290 = vld [vmem:[#allocation4 + $0x32] sm:$0xff]
        %v4291 = vld [vmem:[#allocation4 + $0x3a] sm:$0xff]
        %v4292 = vld [vmem:[#allocation4 + $0x4a] sm:$0xff]
        %v4293 = vld [vmem:[#allocation4 + $0x52] sm:$0xff]
        %v4294 = vld [vmem:[#allocation4 + $0x62] sm:$0xff]
        %v4295 = vld [vmem:[#allocation4 + $0x6a] sm:$0xff]
        %v4296 = vld [vmem:[#allocation4 + $0x7a] sm:$0xff]
        %v4297 = vld [vmem:[#allocation4 + $0x82] sm:$0xff]
        %v4298 = vld [vmem:[#allocation4 + $0x92] sm:$0xff]
        %v4299 = vld [vmem:[#allocation4 + $0x9a] sm:$0xff]
        %v4300 = vld [vmem:[#allocation4 + $0xaa] sm:$0xff]
        %v4301 = vld [vmem:[#allocation4 + $0xb2] sm:$0xff]
        %v4302 = vld [vmem:[#allocation4 + $0xc2] sm:$0xff]
        %v4303 = vld [vmem:[#allocation4 + $0xca] sm:$0xff]
        %v4304 = vld [vmem:[#allocation4 + $0xda] sm:$0xff]
        %v4305 = vld [vmem:[#allocation4 + $0xe2] sm:$0xff]
        %v4306 = vld [vmem:[#allocation4 + $0xf2] sm:$0xff]
        %v4307 = vld [vmem:[#allocation4 + $0xfa] sm:$0xff]
        %v4308 = vld [vmem:[#allocation4 + $0x10a] sm:$0xff]
        %v4309 = vld [vmem:[#allocation4 + $0x112] sm:$0xff]
        %v4310 = vld [vmem:[#allocation4 + $0x122] sm:$0xff]
        %v4311 = vld [vmem:[#allocation4 + $0x12a] sm:$0xff]
        %v4312 = vld [vmem:[#allocation4 + $0x13a] sm:$0xff]
        %v4313 = vld [vmem:[#allocation4 + $0x142] sm:$0xff]
        %v4314 = vld [vmem:[#allocation4 + $0x152] sm:$0xff]
        %v4315 = vld [vmem:[#allocation4 + $0x15a] sm:$0xff]
        %v4316 = vld [vmem:[#allocation4 + $0x16a] sm:$0xff]
        %v4317 = vld [vmem:[#allocation4 + $0x172] sm:$0xff]
        %v4318 = vld [vmem:[#allocation4 + $0x182] sm:$0xff]
        %v4319 = vld [vmem:[#allocation4 + $0x18a] sm:$0xff]
        %v4320 = vld [vmem:[#allocation4 + $0x19a] sm:$0xff]
        %v4321 = vld [vmem:[#allocation4 + $0x1a2] sm:$0xff]
        %v4322 = vpack.c.bf16 %v4287, %v4286
        %v4323 = vpack.c.bf16 %v4289, %v4288
        %v4324 = vpack.c.bf16 %v4291, %v4290
        %v4325 = vpack.c.bf16 %v4293, %v4292
        %v4326 = vpack.c.bf16 %v4295, %v4294
        %v4327 = vpack.c.bf16 %v4297, %v4296
        %v4328 = vpack.c.bf16 %v4299, %v4298
        %v4329 = vpack.c.bf16 %v4301, %v4300
        %v4330 = vpack.c.bf16 %v4303, %v4302
        %v4331 = vpack.c.bf16 %v4305, %v4304
        %v4332 = vpack.c.bf16 %v4307, %v4306
        %v4333 = vpack.c.bf16 %v4309, %v4308
        %v4334 = vpack.c.bf16 %v4311, %v4310
        %v4335 = vpack.c.bf16 %v4313, %v4312
        %v4336 = vpack.c.bf16 %v4315, %v4314
        %v4337 = vpack.c.bf16 %v4317, %v4316
        %v4338 = vpack.c.bf16 %v4319, %v4318
        %v4339 = vpack.c.bf16 %v4321, %v4320
        %4340 = vst [vmem:[#allocation3 + $0x10] sm:$0xff] %v4322
        %4341 = vst [vmem:[#allocation3 + $0x58] sm:$0xff] %v4323
        %4342 = vst [vmem:[#allocation3 + $0xa0] sm:$0xff] %v4324
        %4343 = vst [vmem:[#allocation3 + $0xe8] sm:$0xff] %v4325
        %4344 = vst [vmem:[#allocation3 + $0x130] sm:$0xff] %v4326
        %4345 = vst [vmem:[#allocation3 + $0x178] sm:$0xff] %v4327
        %4346 = vst [vmem:[#allocation3 + $0x1c0] sm:$0xff] %v4328
        %4347 = vst [vmem:[#allocation3 + $0x208] sm:$0xff] %v4329
        %4348 = vst [vmem:[#allocation3 + $0x250] sm:$0xff] %v4330
        %4349 = vst [vmem:[#allocation3 + $0x298] sm:$0xff] %v4331
        %4350 = vst [vmem:[#allocation3 + $0x2e0] sm:$0xff] %v4332
        %4351 = vst [vmem:[#allocation3 + $0x328] sm:$0xff] %v4333
        %4352 = vst [vmem:[#allocation3 + $0x370] sm:$0xff] %v4334
        %4353 = vst [vmem:[#allocation3 + $0x3b8] sm:$0xff] %v4335
        %4354 = vst [vmem:[#allocation3 + $0x400] sm:$0xff] %v4336
        %4355 = vst [vmem:[#allocation3 + $0x448] sm:$0xff] %v4337
        %4356 = vst [vmem:[#allocation3 + $0x28] sm:$0xff] %v4323
        %4357 = vst [vmem:[#allocation3 + $0x70] sm:$0xff] %v4324
        %4358 = vst [vmem:[#allocation3 + $0xb8] sm:$0xff] %v4325
        %4359 = vst [vmem:[#allocation3 + $0x100] sm:$0xff] %v4326
        %4360 = vst [vmem:[#allocation3 + $0x148] sm:$0xff] %v4327
        %4361 = vst [vmem:[#allocation3 + $0x190] sm:$0xff] %v4328
        %4362 = vst [vmem:[#allocation3 + $0x1d8] sm:$0xff] %v4329
        %4363 = vst [vmem:[#allocation3 + $0x220] sm:$0xff] %v4330
        %4364 = vst [vmem:[#allocation3 + $0x268] sm:$0xff] %v4331
        %4365 = vst [vmem:[#allocation3 + $0x2b0] sm:$0xff] %v4332
        %4366 = vst [vmem:[#allocation3 + $0x2f8] sm:$0xff] %v4333
        %4367 = vst [vmem:[#allocation3 + $0x340] sm:$0xff] %v4334
        %4368 = vst [vmem:[#allocation3 + $0x388] sm:$0xff] %v4335
        %4369 = vst [vmem:[#allocation3 + $0x3d0] sm:$0xff] %v4336
        %4370 = vst [vmem:[#allocation3 + $0x418] sm:$0xff] %v4337
        %4371 = vst [vmem:[#allocation3 + $0x460] sm:$0xff] %v4338
        %4372 = vst [vmem:[#allocation3 + $0x40] sm:$0xff] %v4324
        %4373 = vst [vmem:[#allocation3 + $0x88] sm:$0xff] %v4325
        %4374 = vst [vmem:[#allocation3 + $0xd0] sm:$0xff] %v4326
        %4375 = vst [vmem:[#allocation3 + $0x118] sm:$0xff] %v4327
        %4376 = vst [vmem:[#allocation3 + $0x160] sm:$0xff] %v4328
        %4377 = vst [vmem:[#allocation3 + $0x1a8] sm:$0xff] %v4329
        %4378 = vst [vmem:[#allocation3 + $0x1f0] sm:$0xff] %v4330
        %4379 = vst [vmem:[#allocation3 + $0x238] sm:$0xff] %v4331
        %4380 = vst [vmem:[#allocation3 + $0x280] sm:$0xff] %v4332
        %4381 = vst [vmem:[#allocation3 + $0x2c8] sm:$0xff] %v4333
        %4382 = vst [vmem:[#allocation3 + $0x310] sm:$0xff] %v4334
        %4383 = vst [vmem:[#allocation3 + $0x358] sm:$0xff] %v4335
        %4384 = vst [vmem:[#allocation3 + $0x3a0] sm:$0xff] %v4336
        %4385 = vst [vmem:[#allocation3 + $0x3e8] sm:$0xff] %v4337
        %4386 = vst [vmem:[#allocation3 + $0x430] sm:$0xff] %v4338
        %4387 = vst [vmem:[#allocation3 + $0x478] sm:$0xff] %v4339
        %v4388 = vld [vmem:[#allocation3] sm:$0xff]
        %v4389 = vld [vmem:[#allocation3 + $0x8] sm:$0xff]
        %v4390 = vld [vmem:[#allocation3 + $0x10] sm:$0xff]
        %v4391 = vld [vmem:[#allocation3 + $0x18] sm:$0xff]
        %v4392 = vld [vmem:[#allocation3 + $0x20] sm:$0xff]
        %v4393 = vld [vmem:[#allocation3 + $0x28] sm:$0xff]
        %v4394 = vld [vmem:[#allocation3 + $0x30] sm:$0xff]
        %v4395 = vld [vmem:[#allocation3 + $0x38] sm:$0xff]
        %v4396 = vld [vmem:[#allocation3 + $0x40] sm:$0xff]
        %v4397 = vld [vmem:[#allocation3 + $0x48] sm:$0xff]
        %v4398 = vld [vmem:[#allocation3 + $0x50] sm:$0xff]
        %v4399 = vld [vmem:[#allocation3 + $0x58] sm:$0xff]
        %v4400 = vld [vmem:[#allocation3 + $0x60] sm:$0xff]
        %v4401 = vld [vmem:[#allocation3 + $0x68] sm:$0xff]
        %v4402 = vld [vmem:[#allocation3 + $0x70] sm:$0xff]
        %v4403 = vld [vmem:[#allocation3 + $0x78] sm:$0xff]
        %v4404 = vld [vmem:[#allocation3 + $0x80] sm:$0xff]
        %v4405 = vld [vmem:[#allocation3 + $0x88] sm:$0xff]
        %v4406 = vld [vmem:[#allocation3 + $0x90] sm:$0xff]
        %v4407 = vld [vmem:[#allocation3 + $0x98] sm:$0xff]
        %v4408 = vld [vmem:[#allocation3 + $0xa0] sm:$0xff]
        %v4409 = vld [vmem:[#allocation3 + $0xa8] sm:$0xff]
        %v4410 = vld [vmem:[#allocation3 + $0xb0] sm:$0xff]
        %v4411 = vld [vmem:[#allocation3 + $0xb8] sm:$0xff]
        %v4412 = vld [vmem:[#allocation3 + $0xc0] sm:$0xff]
        %v4413 = vld [vmem:[#allocation3 + $0xc8] sm:$0xff]
        %v4414 = vld [vmem:[#allocation3 + $0xd0] sm:$0xff]
        %v4415 = vld [vmem:[#allocation3 + $0xd8] sm:$0xff]
        %v4416 = vld [vmem:[#allocation3 + $0xe0] sm:$0xff]
        %v4417 = vld [vmem:[#allocation3 + $0xe8] sm:$0xff]
        %v4418 = vld [vmem:[#allocation3 + $0xf0] sm:$0xff]
        %v4419 = vld [vmem:[#allocation3 + $0xf8] sm:$0xff]
        %v4420 = vld [vmem:[#allocation3 + $0x100] sm:$0xff]
        %v4421 = vld [vmem:[#allocation3 + $0x108] sm:$0xff]
        %v4422 = vld [vmem:[#allocation3 + $0x110] sm:$0xff]
        %v4423 = vld [vmem:[#allocation3 + $0x118] sm:$0xff]
        %v4424 = vld [vmem:[#allocation3 + $0x120] sm:$0xff]
        %v4425 = vld [vmem:[#allocation3 + $0x128] sm:$0xff]
        %v4426 = vld [vmem:[#allocation3 + $0x130] sm:$0xff]
        %v4427 = vld [vmem:[#allocation3 + $0x138] sm:$0xff]
        %v4428 = vld [vmem:[#allocation3 + $0x140] sm:$0xff]
        %v4429 = vld [vmem:[#allocation3 + $0x148] sm:$0xff]
        %v4430 = vld [vmem:[#allocation3 + $0x150] sm:$0xff]
        %v4431 = vld [vmem:[#allocation3 + $0x158] sm:$0xff]
        %v4432 = vld [vmem:[#allocation3 + $0x160] sm:$0xff]
        %v4433 = vld [vmem:[#allocation3 + $0x168] sm:$0xff]
        %v4434 = vld [vmem:[#allocation3 + $0x170] sm:$0xff]
        %v4435 = vld [vmem:[#allocation3 + $0x178] sm:$0xff]
        %v4436 = vld [vmem:[#allocation3 + $0x180] sm:$0xff]
        %v4437 = vld [vmem:[#allocation3 + $0x188] sm:$0xff]
        %v4438 = vld [vmem:[#allocation3 + $0x190] sm:$0xff]
        %v4439 = vld [vmem:[#allocation3 + $0x198] sm:$0xff]
        %v4440 = vld [vmem:[#allocation3 + $0x1a0] sm:$0xff]
        %v4441 = vld [vmem:[#allocation3 + $0x1a8] sm:$0xff]
        %v4442 = vld [vmem:[#allocation3 + $0x1b0] sm:$0xff]
        %v4443 = vld [vmem:[#allocation3 + $0x1b8] sm:$0xff]
        %v4444 = vld [vmem:[#allocation3 + $0x1c0] sm:$0xff]
        %v4445 = vld [vmem:[#allocation3 + $0x1c8] sm:$0xff]
        %v4446 = vld [vmem:[#allocation3 + $0x1d0] sm:$0xff]
        %v4447 = vld [vmem:[#allocation3 + $0x1d8] sm:$0xff]
        %v4448 = vld [vmem:[#allocation3 + $0x1e0] sm:$0xff]
        %v4449 = vld [vmem:[#allocation3 + $0x1e8] sm:$0xff]
        %v4450 = vld [vmem:[#allocation3 + $0x1f0] sm:$0xff]
        %v4451 = vld [vmem:[#allocation3 + $0x1f8] sm:$0xff]
        %v4452 = vld [vmem:[#allocation3 + $0x200] sm:$0xff]
        %v4453 = vld [vmem:[#allocation3 + $0x208] sm:$0xff]
        %v4454 = vld [vmem:[#allocation3 + $0x210] sm:$0xff]
        %v4455 = vld [vmem:[#allocation3 + $0x218] sm:$0xff]
        %v4456 = vld [vmem:[#allocation3 + $0x220] sm:$0xff]
        %v4457 = vld [vmem:[#allocation3 + $0x228] sm:$0xff]
        %v4458 = vld [vmem:[#allocation3 + $0x230] sm:$0xff]
        %v4459 = vld [vmem:[#allocation3 + $0x238] sm:$0xff]
        %v4460 = vld [vmem:[#allocation3 + $0x240] sm:$0xff]
        %v4461 = vld [vmem:[#allocation3 + $0x248] sm:$0xff]
        %v4462 = vld [vmem:[#allocation3 + $0x250] sm:$0xff]
        %v4463 = vld [vmem:[#allocation3 + $0x258] sm:$0xff]
        %v4464 = vld [vmem:[#allocation3 + $0x260] sm:$0xff]
        %v4465 = vld [vmem:[#allocation3 + $0x268] sm:$0xff]
        %v4466 = vld [vmem:[#allocation3 + $0x270] sm:$0xff]
        %v4467 = vld [vmem:[#allocation3 + $0x278] sm:$0xff]
        %v4468 = vld [vmem:[#allocation3 + $0x280] sm:$0xff]
        %v4469 = vld [vmem:[#allocation3 + $0x288] sm:$0xff]
        %v4470 = vld [vmem:[#allocation3 + $0x290] sm:$0xff]
        %v4471 = vld [vmem:[#allocation3 + $0x298] sm:$0xff]
        %v4472 = vld [vmem:[#allocation3 + $0x2a0] sm:$0xff]
        %v4473 = vld [vmem:[#allocation3 + $0x2a8] sm:$0xff]
        %v4474 = vld [vmem:[#allocation3 + $0x2b0] sm:$0xff]
        %v4475 = vld [vmem:[#allocation3 + $0x2b8] sm:$0xff]
        %v4476 = vld [vmem:[#allocation3 + $0x2c0] sm:$0xff]
        %v4477 = vld [vmem:[#allocation3 + $0x2c8] sm:$0xff]
        %v4478 = vld [vmem:[#allocation3 + $0x2d0] sm:$0xff]
        %v4479 = vld [vmem:[#allocation3 + $0x2d8] sm:$0xff]
        %v4480 = vld [vmem:[#allocation3 + $0x2e0] sm:$0xff]
        %v4481 = vld [vmem:[#allocation3 + $0x2e8] sm:$0xff]
        %v4482 = vld [vmem:[#allocation3 + $0x2f0] sm:$0xff]
        %v4483 = vld [vmem:[#allocation3 + $0x2f8] sm:$0xff]
        %v4484 = vld [vmem:[#allocation3 + $0x300] sm:$0xff]
        %v4485 = vld [vmem:[#allocation3 + $0x308] sm:$0xff]
        %v4486 = vld [vmem:[#allocation3 + $0x310] sm:$0xff]
        %v4487 = vld [vmem:[#allocation3 + $0x318] sm:$0xff]
        %v4488 = vld [vmem:[#allocation3 + $0x320] sm:$0xff]
        %v4489 = vld [vmem:[#allocation3 + $0x328] sm:$0xff]
        %v4490 = vld [vmem:[#allocation3 + $0x330] sm:$0xff]
        %v4491 = vld [vmem:[#allocation3 + $0x338] sm:$0xff]
        %v4492 = vld [vmem:[#allocation3 + $0x340] sm:$0xff]
        %v4493 = vld [vmem:[#allocation3 + $0x348] sm:$0xff]
        %v4494 = vld [vmem:[#allocation3 + $0x350] sm:$0xff]
        %v4495 = vld [vmem:[#allocation3 + $0x358] sm:$0xff]
        %v4496 = vld [vmem:[#allocation3 + $0x360] sm:$0xff]
        %v4497 = vld [vmem:[#allocation3 + $0x368] sm:$0xff]
        %v4498 = vld [vmem:[#allocation3 + $0x370] sm:$0xff]
        %v4499 = vld [vmem:[#allocation3 + $0x378] sm:$0xff]
        %v4500 = vld [vmem:[#allocation3 + $0x380] sm:$0xff]
        %v4501 = vld [vmem:[#allocation3 + $0x388] sm:$0xff]
        %v4502 = vld [vmem:[#allocation3 + $0x390] sm:$0xff]
        %v4503 = vld [vmem:[#allocation3 + $0x398] sm:$0xff]
        %v4504 = vld [vmem:[#allocation3 + $0x3a0] sm:$0xff]
        %v4505 = vld [vmem:[#allocation3 + $0x3a8] sm:$0xff]
        %v4506 = vld [vmem:[#allocation3 + $0x3b0] sm:$0xff]
        %v4507 = vld [vmem:[#allocation3 + $0x3b8] sm:$0xff]
        %v4508 = vld [vmem:[#allocation3 + $0x3c0] sm:$0xff]
        %v4509 = vld [vmem:[#allocation3 + $0x3c8] sm:$0xff]
        %v4510 = vld [vmem:[#allocation3 + $0x3d0] sm:$0xff]
        %v4511 = vld [vmem:[#allocation3 + $0x3d8] sm:$0xff]
        %v4512 = vld [vmem:[#allocation3 + $0x3e0] sm:$0xff]
        %v4513 = vld [vmem:[#allocation3 + $0x3e8] sm:$0xff]
        %v4514 = vld [vmem:[#allocation3 + $0x3f0] sm:$0xff]
        %v4515 = vld [vmem:[#allocation3 + $0x3f8] sm:$0xff]
        %v4516 = vld [vmem:[#allocation3 + $0x400] sm:$0xff]
        %v4517 = vld [vmem:[#allocation3 + $0x408] sm:$0xff]
        %v4518 = vld [vmem:[#allocation3 + $0x410] sm:$0xff]
        %v4519 = vld [vmem:[#allocation3 + $0x418] sm:$0xff]
        %v4520 = vld [vmem:[#allocation3 + $0x420] sm:$0xff]
        %v4521 = vld [vmem:[#allocation3 + $0x428] sm:$0xff]
        %v4522 = vld [vmem:[#allocation3 + $0x430] sm:$0xff]
        %v4523 = vld [vmem:[#allocation3 + $0x438] sm:$0xff]
        %v4524 = vld [vmem:[#allocation3 + $0x440] sm:$0xff]
        %v4525 = vld [vmem:[#allocation3 + $0x448] sm:$0xff]
        %v4526 = vld [vmem:[#allocation3 + $0x450] sm:$0xff]
        %v4527 = vld [vmem:[#allocation3 + $0x458] sm:$0xff]
        %v4528 = vld [vmem:[#allocation3 + $0x460] sm:$0xff]
        %v4529 = vld [vmem:[#allocation3 + $0x468] sm:$0xff]
        %v4530 = vld [vmem:[#allocation3 + $0x470] sm:$0xff]
        %v4531 = vld [vmem:[#allocation3 + $0x478] sm:$0xff]
        %v4532 = vld [vmem:[%s6] sm:$0xf]
        %v4533 = vld [vmem:[%s6 + $0x4] sm:$0xf]
        %v4534 = vld [vmem:[%s6 + $0x8] sm:$0xf]
        %v4535 = vld [vmem:[%s6 + $0xc] sm:$0xf]
        %v4536 = vld [vmem:[%s6 + $0x10] sm:$0xf]
        %v4537 = vld [vmem:[%s6 + $0x14] sm:$0xf]
        %v4538 = vld [vmem:[%s6 + $0x18] sm:$0xf]
        %v4539 = vld [vmem:[%s6 + $0x1c] sm:$0xf]
        %v4540 = vld [vmem:[%s6 + $0x20] sm:$0xf]
        %v4541 = vld [vmem:[%s6 + $0x24] sm:$0xf]
        %v4542 = vld [vmem:[%s6 + $0x28] sm:$0xf]
        %v4543 = vld [vmem:[%s6 + $0x2c] sm:$0xf]
        %v4544 = vld [vmem:[%s6 + $0x30] sm:$0xf]
        %v4545 = vld [vmem:[%s6 + $0x34] sm:$0xf]
        %v4546 = vld [vmem:[%s6 + $0x38] sm:$0xf]
        %v4547 = vld [vmem:[%s6 + $0x3c] sm:$0xf]
        %v4548 = vld [vmem:[%s6 + $0x40] sm:$0xf]
        %v4549 = vld [vmem:[%s6 + $0x44] sm:$0xf]
        %v4550 = vld [vmem:[%s6 + $0x48] sm:$0xf]
        %v4551 = vld [vmem:[%s6 + $0x4c] sm:$0xf]
        %v4552 = vld [vmem:[%s6 + $0x50] sm:$0xf]
        %v4553 = vld [vmem:[%s6 + $0x54] sm:$0xf]
        %v4554 = vld [vmem:[%s6 + $0x58] sm:$0xf]
        %v4555 = vld [vmem:[%s6 + $0x5c] sm:$0xf]
        %v4556 = vld [vmem:[%s6 + $0x60] sm:$0xf]
        %v4557 = vld [vmem:[%s6 + $0x64] sm:$0xf]
        %v4558 = vld [vmem:[%s6 + $0x68] sm:$0xf]
        %v4559 = vld [vmem:[%s6 + $0x6c] sm:$0xf]
        %v4560 = vld [vmem:[%s6 + $0x70] sm:$0xf]
        %v4561 = vld [vmem:[%s6 + $0x74] sm:$0xf]
        %v4562 = vld [vmem:[%s6 + $0x78] sm:$0xf]
        %v4563 = vld [vmem:[%s6 + $0x7c] sm:$0xf]
        %v4564 = vld [vmem:[%s6 + $0x80] sm:$0xf]
        %v4565 = vld [vmem:[%s6 + $0x84] sm:$0xf]
        %v4566 = vld [vmem:[%s6 + $0x88] sm:$0xf]
        %v4567 = vld [vmem:[%s6 + $0x8c] sm:$0xf]
        %v4568 = vld [vmem:[%s6 + $0x90] sm:$0xf]
        %v4569 = vld [vmem:[%s6 + $0x94] sm:$0xf]
        %v4570 = vld [vmem:[%s6 + $0x98] sm:$0xf]
        %v4571 = vld [vmem:[%s6 + $0x9c] sm:$0xf]
        %v4572 = vld [vmem:[%s6 + $0xa0] sm:$0xf]
        %v4573 = vld [vmem:[%s6 + $0xa4] sm:$0xf]
        %v4574 = vld [vmem:[%s6 + $0xa8] sm:$0xf]
        %v4575 = vld [vmem:[%s6 + $0xac] sm:$0xf]
        %v4576 = vld [vmem:[%s6 + $0xb0] sm:$0xf]
        %v4577 = vld [vmem:[%s6 + $0xb4] sm:$0xf]
        %v4578 = vld [vmem:[%s6 + $0xb8] sm:$0xf]
        %v4579 = vld [vmem:[%s6 + $0xbc] sm:$0xf]
        %v4580 = vld [vmem:[%s6 + $0xc0] sm:$0xf]
        %v4581 = vld [vmem:[%s6 + $0xc4] sm:$0xf]
        %v4582 = vld [vmem:[%s6 + $0xc8] sm:$0xf]
        %v4583 = vld [vmem:[%s6 + $0xcc] sm:$0xf]
        %v4584 = vld [vmem:[%s6 + $0xd0] sm:$0xf]
        %v4585 = vld [vmem:[%s6 + $0xd4] sm:$0xf]
        %v4586 = vld [vmem:[%s6 + $0xd8] sm:$0xf]
        %v4587 = vld [vmem:[%s6 + $0xdc] sm:$0xf]
        %v4588 = vld [vmem:[%s6 + $0xe0] sm:$0xf]
        %v4589 = vld [vmem:[%s6 + $0xe4] sm:$0xf]
        %v4590 = vld [vmem:[%s6 + $0xe8] sm:$0xf]
        %v4591 = vld [vmem:[%s6 + $0xec] sm:$0xf]
        %v4592 = vld [vmem:[%s6 + $0xf0] sm:$0xf]
        %v4593 = vld [vmem:[%s6 + $0xf4] sm:$0xf]
        %v4594 = vld [vmem:[%s6 + $0xf8] sm:$0xf]
        %v4595 = vld [vmem:[%s6 + $0xfc] sm:$0xf]
        %v4596 = vld [vmem:[%s6 + $0x100] sm:$0xf]
        %v4597 = vld [vmem:[%s6 + $0x104] sm:$0xf]
        %v4598 = vld [vmem:[%s6 + $0x108] sm:$0xf]
        %v4599 = vld [vmem:[%s6 + $0x10c] sm:$0xf]
        %v4600 = vld [vmem:[%s6 + $0x110] sm:$0xf]
        %v4601 = vld [vmem:[%s6 + $0x114] sm:$0xf]
        %v4602 = vld [vmem:[%s6 + $0x118] sm:$0xf]
        %v4603 = vld [vmem:[%s6 + $0x11c] sm:$0xf]
        %v4604 = vld [vmem:[%s6 + $0x120] sm:$0xf]
        %v4605 = vld [vmem:[%s6 + $0x124] sm:$0xf]
        %v4606 = vld [vmem:[%s6 + $0x128] sm:$0xf]
        %v4607 = vld [vmem:[%s6 + $0x12c] sm:$0xf]
        %v4608 = vld [vmem:[%s6 + $0x130] sm:$0xf]
        %v4609 = vld [vmem:[%s6 + $0x134] sm:$0xf]
        %v4610 = vld [vmem:[%s6 + $0x138] sm:$0xf]
        %v4611 = vld [vmem:[%s6 + $0x13c] sm:$0xf]
        %v4612 = vld [vmem:[%s6 + $0x140] sm:$0xf]
        %v4613 = vld [vmem:[%s6 + $0x144] sm:$0xf]
        %v4614 = vld [vmem:[%s6 + $0x148] sm:$0xf]
        %v4615 = vld [vmem:[%s6 + $0x14c] sm:$0xf]
        %v4616 = vld [vmem:[%s6 + $0x150] sm:$0xf]
        %v4617 = vld [vmem:[%s6 + $0x154] sm:$0xf]
        %v4618 = vld [vmem:[%s6 + $0x158] sm:$0xf]
        %v4619 = vld [vmem:[%s6 + $0x15c] sm:$0xf]
        %v4620 = vld [vmem:[%s6 + $0x160] sm:$0xf]
        %v4621 = vld [vmem:[%s6 + $0x164] sm:$0xf]
        %v4622 = vld [vmem:[%s6 + $0x168] sm:$0xf]
        %v4623 = vld [vmem:[%s6 + $0x16c] sm:$0xf]
        %v4624 = vld [vmem:[%s6 + $0x170] sm:$0xf]
        %v4625 = vld [vmem:[%s6 + $0x174] sm:$0xf]
        %v4626 = vld [vmem:[%s6 + $0x178] sm:$0xf]
        %v4627 = vld [vmem:[%s6 + $0x17c] sm:$0xf]
        %v4628 = vld [vmem:[%s6 + $0x180] sm:$0xf]
        %v4629 = vld [vmem:[%s6 + $0x184] sm:$0xf]
        %v4630 = vld [vmem:[%s6 + $0x188] sm:$0xf]
        %v4631 = vld [vmem:[%s6 + $0x18c] sm:$0xf]
        %v4632 = vld [vmem:[%s6 + $0x190] sm:$0xf]
        %v4633 = vld [vmem:[%s6 + $0x194] sm:$0xf]
        %v4634 = vld [vmem:[%s6 + $0x198] sm:$0xf]
        %v4635 = vld [vmem:[%s6 + $0x19c] sm:$0xf]
        %v4636 = vld [vmem:[%s6 + $0x1a0] sm:$0xf]
        %v4637 = vld [vmem:[%s6 + $0x1a4] sm:$0xf]
        %v4638 = vld [vmem:[%s6 + $0x1a8] sm:$0xf]
        %v4639 = vld [vmem:[%s6 + $0x1ac] sm:$0xf]
        %v4640 = vld [vmem:[%s6 + $0x1b0] sm:$0xf]
        %v4641 = vld [vmem:[%s6 + $0x1b4] sm:$0xf]
        %v4642 = vld [vmem:[%s6 + $0x1b8] sm:$0xf]
        %v4643 = vld [vmem:[%s6 + $0x1bc] sm:$0xf]
        %v4644 = vld [vmem:[%s6 + $0x1c0] sm:$0xf]
        %v4645 = vld [vmem:[%s6 + $0x1c4] sm:$0xf]
        %v4646 = vld [vmem:[%s6 + $0x1c8] sm:$0xf]
        %v4647 = vld [vmem:[%s6 + $0x1cc] sm:$0xf]
        %v4648 = vld [vmem:[%s6 + $0x1d0] sm:$0xf]
        %v4649 = vld [vmem:[%s6 + $0x1d4] sm:$0xf]
        %v4650 = vld [vmem:[%s6 + $0x1d8] sm:$0xf]
        %v4651 = vld [vmem:[%s6 + $0x1dc] sm:$0xf]
        %v4652 = vld [vmem:[%s6 + $0x1e0] sm:$0xf]
        %v4653 = vld [vmem:[%s6 + $0x1e4] sm:$0xf]
        %v4654 = vld [vmem:[%s6 + $0x1e8] sm:$0xf]
        %v4655 = vld [vmem:[%s6 + $0x1ec] sm:$0xf]
        %v4656 = vld [vmem:[%s6 + $0x1f0] sm:$0xf]
        %v4657 = vld [vmem:[%s6 + $0x1f4] sm:$0xf]
        %v4658 = vld [vmem:[%s6 + $0x1f8] sm:$0xf]
        %v4659 = vld [vmem:[%s6 + $0x1fc] sm:$0xf]
        %v4660 = vld [vmem:[%s6 + $0x200] sm:$0xf]
        %v4661 = vld [vmem:[%s6 + $0x204] sm:$0xf]
        %v4662 = vld [vmem:[%s6 + $0x208] sm:$0xf]
        %v4663 = vld [vmem:[%s6 + $0x20c] sm:$0xf]
        %v4664 = vld [vmem:[%s6 + $0x210] sm:$0xf]
        %v4665 = vld [vmem:[%s6 + $0x214] sm:$0xf]
        %v4666 = vld [vmem:[%s6 + $0x218] sm:$0xf]
        %v4667 = vld [vmem:[%s6 + $0x21c] sm:$0xf]
        %v4668 = vld [vmem:[%s6 + $0x220] sm:$0xf]
        %v4669 = vld [vmem:[%s6 + $0x224] sm:$0xf]
        %v4670 = vld [vmem:[%s6 + $0x228] sm:$0xf]
        %v4671 = vld [vmem:[%s6 + $0x22c] sm:$0xf]
        %v4672 = vld [vmem:[%s6 + $0x230] sm:$0xf]
        %v4673 = vld [vmem:[%s6 + $0x234] sm:$0xf]
        %v4674 = vld [vmem:[%s6 + $0x238] sm:$0xf]
        %v4675 = vld [vmem:[%s6 + $0x23c] sm:$0xf]
        %v4676 = vld [vmem:[%s7] sm:$0x1]
        %v4678 = vlaneseq
        %v4679 = vshrl.u32 %v4678, 7
        %v4680 = vsub.s32 0, %v4679
        %v4681 = vrot.slane %v4676, %v4680
        %v4827 = vunpack.c.l.b16 %v4532
        %v4828 = vunpack.c.l.b16 %v4533
        %v4829 = vunpack.c.l.b16 %v4534
        %v4830 = vunpack.c.l.b16 %v4535
        %v4831 = vunpack.c.l.b16 %v4536
        %v4832 = vunpack.c.l.b16 %v4537
        %v4833 = vunpack.c.l.b16 %v4538
        %v4834 = vunpack.c.l.b16 %v4539
        %v4835 = vunpack.c.l.b16 %v4540
        %v4836 = vunpack.c.l.b16 %v4541
        %v4837 = vunpack.c.l.b16 %v4542
        %v4838 = vunpack.c.l.b16 %v4543
        %v4839 = vunpack.c.l.b16 %v4544
        %v4840 = vunpack.c.l.b16 %v4545
        %v4841 = vunpack.c.l.b16 %v4546
        %v4842 = vunpack.c.l.b16 %v4547
        %v4843 = vunpack.c.l.b16 %v4548
        %v4844 = vunpack.c.l.b16 %v4549
        %v4845 = vunpack.c.l.b16 %v4550
        %v4846 = vunpack.c.l.b16 %v4551
        %v4847 = vunpack.c.l.b16 %v4552
        %v4848 = vunpack.c.l.b16 %v4553
        %v4849 = vunpack.c.l.b16 %v4554
        %v4850 = vunpack.c.l.b16 %v4555
        %v4851 = vunpack.c.l.b16 %v4556
        %v4852 = vunpack.c.l.b16 %v4557
        %v4853 = vunpack.c.l.b16 %v4558
        %v4854 = vunpack.c.l.b16 %v4559
        %v4855 = vunpack.c.l.b16 %v4560
        %v4856 = vunpack.c.l.b16 %v4561
        %v4857 = vunpack.c.l.b16 %v4562
        %v4858 = vunpack.c.l.b16 %v4563
        %v4859 = vunpack.c.l.b16 %v4564
        %v4860 = vunpack.c.l.b16 %v4565
        %v4861 = vunpack.c.l.b16 %v4566
        %v4862 = vunpack.c.l.b16 %v4567
        %v4863 = vunpack.c.l.b16 %v4568
        %v4864 = vunpack.c.l.b16 %v4569
        %v4865 = vunpack.c.l.b16 %v4570
        %v4866 = vunpack.c.l.b16 %v4571
        %v4867 = vunpack.c.l.b16 %v4572
        %v4868 = vunpack.c.l.b16 %v4573
        %v4869 = vunpack.c.l.b16 %v4574
        %v4870 = vunpack.c.l.b16 %v4575
        %v4871 = vunpack.c.l.b16 %v4576
        %v4872 = vunpack.c.l.b16 %v4577
        %v4873 = vunpack.c.l.b16 %v4578
        %v4874 = vunpack.c.l.b16 %v4579
        %v4875 = vunpack.c.l.b16 %v4580
        %v4876 = vunpack.c.l.b16 %v4581
        %v4877 = vunpack.c.l.b16 %v4582
        %v4878 = vunpack.c.l.b16 %v4583
        %v4879 = vunpack.c.l.b16 %v4584
        %v4880 = vunpack.c.l.b16 %v4585
        %v4881 = vunpack.c.l.b16 %v4586
        %v4882 = vunpack.c.l.b16 %v4587
        %v4883 = vunpack.c.l.b16 %v4588
        %v4884 = vunpack.c.l.b16 %v4589
        %v4885 = vunpack.c.l.b16 %v4590
        %v4886 = vunpack.c.l.b16 %v4591
        %v4887 = vunpack.c.l.b16 %v4592
        %v4888 = vunpack.c.l.b16 %v4593
        %v4889 = vunpack.c.l.b16 %v4594
        %v4890 = vunpack.c.l.b16 %v4595
        %v4891 = vunpack.c.l.b16 %v4596
        %v4892 = vunpack.c.l.b16 %v4597
        %v4893 = vunpack.c.l.b16 %v4598
        %v4894 = vunpack.c.l.b16 %v4599
        %v4895 = vunpack.c.l.b16 %v4600
        %v4896 = vunpack.c.l.b16 %v4601
        %v4897 = vunpack.c.l.b16 %v4602
        %v4898 = vunpack.c.l.b16 %v4603
        %v4899 = vunpack.c.l.b16 %v4604
        %v4900 = vunpack.c.l.b16 %v4605
        %v4901 = vunpack.c.l.b16 %v4606
        %v4902 = vunpack.c.l.b16 %v4607
        %v4903 = vunpack.c.l.b16 %v4608
        %v4904 = vunpack.c.l.b16 %v4609
        %v4905 = vunpack.c.l.b16 %v4610
        %v4906 = vunpack.c.l.b16 %v4611
        %v4907 = vunpack.c.l.b16 %v4612
        %v4908 = vunpack.c.l.b16 %v4613
        %v4909 = vunpack.c.l.b16 %v4614
        %v4910 = vunpack.c.l.b16 %v4615
        %v4911 = vunpack.c.l.b16 %v4616
        %v4912 = vunpack.c.l.b16 %v4617
        %v4913 = vunpack.c.l.b16 %v4618
        %v4914 = vunpack.c.l.b16 %v4619
        %v4915 = vunpack.c.l.b16 %v4620
        %v4916 = vunpack.c.l.b16 %v4621
        %v4917 = vunpack.c.l.b16 %v4622
        %v4918 = vunpack.c.l.b16 %v4623
        %v4919 = vunpack.c.l.b16 %v4624
        %v4920 = vunpack.c.l.b16 %v4625
        %v4921 = vunpack.c.l.b16 %v4626
        %v4922 = vunpack.c.l.b16 %v4627
        %v4923 = vunpack.c.l.b16 %v4628
        %v4924 = vunpack.c.l.b16 %v4629
        %v4925 = vunpack.c.l.b16 %v4630
        %v4926 = vunpack.c.l.b16 %v4631
        %v4927 = vunpack.c.l.b16 %v4632
        %v4928 = vunpack.c.l.b16 %v4633
        %v4929 = vunpack.c.l.b16 %v4634
        %v4930 = vunpack.c.l.b16 %v4635
        %v4931 = vunpack.c.l.b16 %v4636
        %v4932 = vunpack.c.l.b16 %v4637
        %v4933 = vunpack.c.l.b16 %v4638
        %v4934 = vunpack.c.l.b16 %v4639
        %v4935 = vunpack.c.l.b16 %v4640
        %v4936 = vunpack.c.l.b16 %v4641
        %v4937 = vunpack.c.l.b16 %v4642
        %v4938 = vunpack.c.l.b16 %v4643
        %v4939 = vunpack.c.l.b16 %v4644
        %v4940 = vunpack.c.l.b16 %v4645
        %v4941 = vunpack.c.l.b16 %v4646
        %v4942 = vunpack.c.l.b16 %v4647
        %v4943 = vunpack.c.l.b16 %v4648
        %v4944 = vunpack.c.l.b16 %v4649
        %v4945 = vunpack.c.l.b16 %v4650
        %v4946 = vunpack.c.l.b16 %v4651
        %v4947 = vunpack.c.l.b16 %v4652
        %v4948 = vunpack.c.l.b16 %v4653
        %v4949 = vunpack.c.l.b16 %v4654
        %v4950 = vunpack.c.l.b16 %v4655
        %v4951 = vunpack.c.l.b16 %v4656
        %v4952 = vunpack.c.l.b16 %v4657
        %v4953 = vunpack.c.l.b16 %v4658
        %v4954 = vunpack.c.l.b16 %v4659
        %v4955 = vunpack.c.l.b16 %v4660
        %v4956 = vunpack.c.l.b16 %v4661
        %v4957 = vunpack.c.l.b16 %v4662
        %v4958 = vunpack.c.l.b16 %v4663
        %v4959 = vunpack.c.l.b16 %v4664
        %v4960 = vunpack.c.l.b16 %v4665
        %v4961 = vunpack.c.l.b16 %v4666
        %v4962 = vunpack.c.l.b16 %v4667
        %v4963 = vunpack.c.l.b16 %v4668
        %v4964 = vunpack.c.l.b16 %v4669
        %v4965 = vunpack.c.l.b16 %v4670
        %v4966 = vunpack.c.l.b16 %v4671
        %v4967 = vunpack.c.l.b16 %v4672
        %v4968 = vunpack.c.l.b16 %v4673
        %v4969 = vunpack.c.l.b16 %v4674
        %v4970 = vunpack.c.l.b16 %v4675
        %v4971 = vpack.c.b16 %v4828, %v4827
        %v4972 = vpack.c.b16 %v4830, %v4829
        %v4973 = vpack.c.b16 %v4832, %v4831
        %v4974 = vpack.c.b16 %v4834, %v4833
        %v4975 = vpack.c.b16 %v4836, %v4835
        %v4976 = vpack.c.b16 %v4838, %v4837
        %v4977 = vpack.c.b16 %v4840, %v4839
        %v4978 = vpack.c.b16 %v4842, %v4841
        %v4979 = vpack.c.b16 %v4844, %v4843
        %v4980 = vpack.c.b16 %v4846, %v4845
        %v4981 = vpack.c.b16 %v4848, %v4847
        %v4982 = vpack.c.b16 %v4850, %v4849
        %v4983 = vpack.c.b16 %v4852, %v4851
        %v4984 = vpack.c.b16 %v4854, %v4853
        %v4985 = vpack.c.b16 %v4856, %v4855
        %v4986 = vpack.c.b16 %v4858, %v4857
        %v4987 = vpack.c.b16 %v4860, %v4859
        %v4988 = vpack.c.b16 %v4862, %v4861
        %v4989 = vpack.c.b16 %v4864, %v4863
        %v4990 = vpack.c.b16 %v4866, %v4865
        %v4991 = vpack.c.b16 %v4868, %v4867
        %v4992 = vpack.c.b16 %v4870, %v4869
        %v4993 = vpack.c.b16 %v4872, %v4871
        %v4994 = vpack.c.b16 %v4874, %v4873
        %v4995 = vpack.c.b16 %v4876, %v4875
        %v4996 = vpack.c.b16 %v4878, %v4877
        %v4997 = vpack.c.b16 %v4880, %v4879
        %v4998 = vpack.c.b16 %v4882, %v4881
        %v4999 = vpack.c.b16 %v4884, %v4883
        %v5000 = vpack.c.b16 %v4886, %v4885
        %v5001 = vpack.c.b16 %v4888, %v4887
        %v5002 = vpack.c.b16 %v4890, %v4889
        %v5003 = vpack.c.b16 %v4892, %v4891
        %v5004 = vpack.c.b16 %v4894, %v4893
        %v5005 = vpack.c.b16 %v4896, %v4895
        %v5006 = vpack.c.b16 %v4898, %v4897
        %v5007 = vpack.c.b16 %v4900, %v4899
        %v5008 = vpack.c.b16 %v4902, %v4901
        %v5009 = vpack.c.b16 %v4904, %v4903
        %v5010 = vpack.c.b16 %v4906, %v4905
        %v5011 = vpack.c.b16 %v4908, %v4907
        %v5012 = vpack.c.b16 %v4910, %v4909
        %v5013 = vpack.c.b16 %v4912, %v4911
        %v5014 = vpack.c.b16 %v4914, %v4913
        %v5015 = vpack.c.b16 %v4916, %v4915
        %v5016 = vpack.c.b16 %v4918, %v4917
        %v5017 = vpack.c.b16 %v4920, %v4919
        %v5018 = vpack.c.b16 %v4922, %v4921
        %v5019 = vpack.c.b16 %v4924, %v4923
        %v5020 = vpack.c.b16 %v4926, %v4925
        %v5021 = vpack.c.b16 %v4928, %v4927
        %v5022 = vpack.c.b16 %v4930, %v4929
        %v5023 = vpack.c.b16 %v4932, %v4931
        %v5024 = vpack.c.b16 %v4934, %v4933
        %v5025 = vpack.c.b16 %v4936, %v4935
        %v5026 = vpack.c.b16 %v4938, %v4937
        %v5027 = vpack.c.b16 %v4940, %v4939
        %v5028 = vpack.c.b16 %v4942, %v4941
        %v5029 = vpack.c.b16 %v4944, %v4943
        %v5030 = vpack.c.b16 %v4946, %v4945
        %v5031 = vpack.c.b16 %v4948, %v4947
        %v5032 = vpack.c.b16 %v4950, %v4949
        %v5033 = vpack.c.b16 %v4952, %v4951
        %v5034 = vpack.c.b16 %v4954, %v4953
        %v5035 = vpack.c.b16 %v4956, %v4955
        %v5036 = vpack.c.b16 %v4958, %v4957
        %v5037 = vpack.c.b16 %v4960, %v4959
        %v5038 = vpack.c.b16 %v4962, %v4961
        %v5039 = vpack.c.b16 %v4964, %v4963
        %v5040 = vpack.c.b16 %v4966, %v4965
        %v5041 = vpack.c.b16 %v4968, %v4967
        %v5042 = vpack.c.b16 %v4970, %v4969
        %5115 = vmatprep.subr.bf16.mxu0 0
        %5116 = vmatpush1.bf16.msra.mxu0 %v4971
        %5117 = vmatprep.subr.bf16.mxu0 0
        %5118 = vmatpush1.bf16.msra.mxu0 %v4972
        %5119 = vmatprep.subr.bf16.mxu0 0
        %5120 = vmatpush1.bf16.msra.mxu0 %v4973
        %5121 = vmatprep.subr.bf16.mxu0 0
        %5122 = vmatpush1.bf16.msra.mxu0 %v4974
        %5123 = vmatprep.subr.bf16.mxu0 0
        %5124 = vmatpush1.bf16.msra.mxu0 %v4975
        %5125 = vmatprep.subr.bf16.mxu0 0
        %5126 = vmatpush1.bf16.msra.mxu0 %v4976
        %5127 = vmatprep.subr.bf16.mxu0 0
        %5128 = vmatpush1.bf16.msra.mxu0 %v4977
        %5129 = vmatprep.subr.bf16.mxu0 0
        %5130 = vmatpush1.bf16.msra.mxu0 %v4978
        %5131 = vmatprep.subr.bf16.mxu0 0
        %5132 = vmatpush1.bf16.msra.mxu0 %v4979
        %5133 = vmatprep.subr.bf16.mxu0 0
        %5134 = vmatpush1.bf16.msra.mxu0 %v4980
        %5135 = vmatprep.subr.bf16.mxu0 0
        %5136 = vmatpush1.bf16.msra.mxu0 %v4981
        %5137 = vmatprep.subr.bf16.mxu0 0
        %5138 = vmatpush1.bf16.msra.mxu0 %v4982
        %5139 = vmatprep.subr.bf16.mxu0 0
        %5140 = vmatpush1.bf16.msra.mxu0 %v4983
        %5141 = vmatprep.subr.bf16.mxu0 0
        %5142 = vmatpush1.bf16.msra.mxu0 %v4984
        %5143 = vmatprep.subr.bf16.mxu0 0
        %5144 = vmatpush1.bf16.msra.mxu0 %v4985
        %5145 = vmatprep.subr.bf16.mxu0 0
        %5146 = vmatpush1.bf16.msra.mxu0 %v4986
        %5147 = vmatprep.mubr.bf16.mxu0 %v4389
        %5148 = vmatmul.mubr.bf16.gmra.mrb[0].mxu0 %v4388
        %v5149 = vpop.f32.mrb[0].mxu0
        %v5150 = vadd.f32 %v4681, %v5149
        %v5151 = vpop.f32.mrb[0].mxu0
        %v5152 = vpop.f32.mrb[0].mxu0
        %v5153 = vadd.f32 %v4681, %v5152
        %v5154 = vpop.f32.mrb[0].mxu0
        %5155 = vmatprep.mubr.bf16.mxu0 %v4398
        %5156 = vmatmul.mubr.bf16.gmra.mrb[0].mxu0 %v4397
        %v5157 = vpop.f32.mrb[0].mxu0
        %v5158 = vadd.f32 %v4681, %v5157
        %v5159 = vpop.f32.mrb[0].mxu0
        %v5160 = vpop.f32.mrb[0].mxu0
        %v5161 = vadd.f32 %v4681, %v5160
        %v5162 = vpop.f32.mrb[0].mxu0
        %5163 = vmatprep.mubr.bf16.mxu0 %v4407
        %5164 = vmatmul.mubr.bf16.gmra.mrb[0].mxu0 %v4406
        %v5165 = vpop.f32.mrb[0].mxu0
        %v5166 = vadd.f32 %v4681, %v5165
        %v5167 = vpop.f32.mrb[0].mxu0
        %v5168 = vpop.f32.mrb[0].mxu0
        %v5169 = vadd.f32 %v4681, %v5168
        %v5170 = vpop.f32.mrb[0].mxu0
        %5171 = vmatprep.mubr.bf16.mxu0 %v4416
        %5172 = vmatmul.mubr.bf16.gmra.mrb[0].mxu0 %v4415
        %v5173 = vpop.f32.mrb[0].mxu0
        %v5174 = vadd.f32 %v4681, %v5173
        %v5175 = vpop.f32.mrb[0].mxu0
        %v5176 = vpop.f32.mrb[0].mxu0
        %v5177 = vadd.f32 %v4681, %v5176
        %v5178 = vpop.f32.mrb[0].mxu0
        %5179 = vmatprep.mubr.bf16.mxu0 %v4425
        %5180 = vmatmul.mubr.bf16.gmra.mrb[0].mxu0 %v4424
        %v5181 = vpop.f32.mrb[0].mxu0
        %v5182 = vadd.f32 %v4681, %v5181
        %v5183 = vpop.f32.mrb[0].mxu0
        %v5184 = vpop.f32.mrb[0].mxu0
        %v5185 = vadd.f32 %v4681, %v5184
        %v5186 = vpop.f32.mrb[0].mxu0
        %5187 = vmatprep.mubr.bf16.mxu0 %v4434
        %5188 = vmatmul.mubr.bf16.gmra.mrb[0].mxu0 %v4433
        %v5189 = vpop.f32.mrb[0].mxu0
        %v5190 = vadd.f32 %v4681, %v5189
        %v5191 = vpop.f32.mrb[0].mxu0
        %v5192 = vpop.f32.mrb[0].mxu0
        %v5193 = vadd.f32 %v4681, %v5192
        %v5194 = vpop.f32.mrb[0].mxu0
        %5195 = vmatprep.mubr.bf16.mxu0 %v4443
        %5196 = vmatmul.mubr.bf16.gmra.mrb[0].mxu0 %v4442
        %v5197 = vpop.f32.mrb[0].mxu0
        %v5198 = vadd.f32 %v4681, %v5197
        %v5199 = vpop.f32.mrb[0].mxu0
        %v5200 = vpop.f32.mrb[0].mxu0
        %v5201 = vadd.f32 %v4681, %v5200
        %v5202 = vpop.f32.mrb[0].mxu0
        %5203 = vmatprep.mubr.bf16.mxu0 %v4452
        %5204 = vmatmul.mubr.bf16.gmra.mrb[0].mxu0 %v4451
        %v5205 = vpop.f32.mrb[0].mxu0
        %v5206 = vadd.f32 %v4681, %v5205
        %v5207 = vpop.f32.mrb[0].mxu0
        %v5208 = vpop.f32.mrb[0].mxu0
        %v5209 = vadd.f32 %v4681, %v5208
        %v5210 = vpop.f32.mrb[0].mxu0
        %5211 = vmatprep.mubr.bf16.mxu0 %v4461
        %5212 = vmatmul.mubr.bf16.gmra.mrb[0].mxu0 %v4460
        %v5213 = vpop.f32.mrb[0].mxu0
        %v5214 = vadd.f32 %v4681, %v5213
        %v5215 = vpop.f32.mrb[0].mxu0
        %v5216 = vpop.f32.mrb[0].mxu0
        %v5217 = vadd.f32 %v4681, %v5216
        %v5218 = vpop.f32.mrb[0].mxu0
        %5219 = vmatprep.mubr.bf16.mxu0 %v4470
        %5220 = vmatmul.mubr.bf16.gmra.mrb[0].mxu0 %v4469
        %v5221 = vpop.f32.mrb[0].mxu0
        %v5222 = vadd.f32 %v4681, %v5221
        %v5223 = vpop.f32.mrb[0].mxu0
        %v5224 = vpop.f32.mrb[0].mxu0
        %v5225 = vadd.f32 %v4681, %v5224
        %v5226 = vpop.f32.mrb[0].mxu0
        %5227 = vmatprep.mubr.bf16.mxu0 %v4479
        %5228 = vmatmul.mubr.bf16.gmra.mrb[0].mxu0 %v4478
        %v5229 = vpop.f32.mrb[0].mxu0
        %v5230 = vadd.f32 %v4681, %v5229
        %v5231 = vpop.f32.mrb[0].mxu0
        %v5232 = vpop.f32.mrb[0].mxu0
        %v5233 = vadd.f32 %v4681, %v5232
        %v5234 = vpop.f32.mrb[0].mxu0
        %5235 = vmatprep.mubr.bf16.mxu0 %v4488
        %5236 = vmatmul.mubr.bf16.gmra.mrb[0].mxu0 %v4487
        %v5237 = vpop.f32.mrb[0].mxu0
        %v5238 = vadd.f32 %v4681, %v5237
        %v5239 = vpop.f32.mrb[0].mxu0
        %v5240 = vpop.f32.mrb[0].mxu0
        %v5241 = vadd.f32 %v4681, %v5240
        %v5242 = vpop.f32.mrb[0].mxu0
        %5243 = vmatprep.mubr.bf16.mxu0 %v4497
        %5244 = vmatmul.mubr.bf16.gmra.mrb[0].mxu0 %v4496
        %v5245 = vpop.f32.mrb[0].mxu0
        %v5246 = vadd.f32 %v4681, %v5245
        %v5247 = vpop.f32.mrb[0].mxu0
        %v5248 = vpop.f32.mrb[0].mxu0
        %v5249 = vadd.f32 %v4681, %v5248
        %v5250 = vpop.f32.mrb[0].mxu0
        %5251 = vmatprep.mubr.bf16.mxu0 %v4506
        %5252 = vmatmul.mubr.bf16.gmra.mrb[0].mxu0 %v4505
        %v5253 = vpop.f32.mrb[0].mxu0
        %v5254 = vadd.f32 %v4681, %v5253
        %v5255 = vpop.f32.mrb[0].mxu0
        %v5256 = vpop.f32.mrb[0].mxu0
        %v5257 = vadd.f32 %v4681, %v5256
        %v5258 = vpop.f32.mrb[0].mxu0
        %5259 = vmatprep.mubr.bf16.mxu0 %v4515
        %5260 = vmatmul.mubr.bf16.gmra.mrb[0].mxu0 %v4514
        %v5261 = vpop.f32.mrb[0].mxu0
        %v5262 = vadd.f32 %v4681, %v5261
        %v5263 = vpop.f32.mrb[0].mxu0
        %v5264 = vpop.f32.mrb[0].mxu0
        %v5265 = vadd.f32 %v4681, %v5264
        %v5266 = vpop.f32.mrb[0].mxu0
        %5267 = vmatprep.mubr.bf16.mxu0 %v4524
        %5268 = vmatmul.mubr.bf16.gmra.mrb[0].mxu0 %v4523
        %v5269 = vpop.f32.mrb[0].mxu0
        %v5270 = vadd.f32 %v4681, %v5269
        %v5271 = vpop.f32.mrb[0].mxu0
        %v5272 = vpop.f32.mrb[0].mxu0
        %v5273 = vadd.f32 %v4681, %v5272
        %v5274 = vpop.f32.mrb[0].mxu0
        %5275 = vdwg.mxu0
        %5276 = vmatprep.subr.bf16.mxu0 0
        %5277 = vmatpush1.bf16.msra.mxu0 %v4987
        %5278 = vmatprep.subr.bf16.mxu0 0
        %5279 = vmatpush1.bf16.msra.mxu0 %v4988
        %5280 = vmatprep.subr.bf16.mxu0 0
        %5281 = vmatpush1.bf16.msra.mxu0 %v4989
        %5282 = vmatprep.subr.bf16.mxu0 0
        %5283 = vmatpush1.bf16.msra.mxu0 %v4990
        %5284 = vmatprep.subr.bf16.mxu0 0
        %5285 = vmatpush1.bf16.msra.mxu0 %v4991
        %5286 = vmatprep.subr.bf16.mxu0 0
        %5287 = vmatpush1.bf16.msra.mxu0 %v4992
        %5288 = vmatprep.subr.bf16.mxu0 0
        %5289 = vmatpush1.bf16.msra.mxu0 %v4993
        %5290 = vmatprep.subr.bf16.mxu0 0
        %5291 = vmatpush1.bf16.msra.mxu0 %v4994
        %5292 = vmatprep.subr.bf16.mxu0 0
        %5293 = vmatpush1.bf16.msra.mxu0 %v4995
        %5294 = vmatprep.subr.bf16.mxu0 0
        %5295 = vmatpush1.bf16.msra.mxu0 %v4996
        %5296 = vmatprep.subr.bf16.mxu0 0
        %5297 = vmatpush1.bf16.msra.mxu0 %v4997
        %5298 = vmatprep.subr.bf16.mxu0 0
        %5299 = vmatpush1.bf16.msra.mxu0 %v4998
        %5300 = vmatprep.subr.bf16.mxu0 0
        %5301 = vmatpush1.bf16.msra.mxu0 %v4999
        %5302 = vmatprep.subr.bf16.mxu0 0
        %5303 = vmatpush1.bf16.msra.mxu0 %v5000
        %5304 = vmatprep.subr.bf16.mxu0 0
        %5305 = vmatpush1.bf16.msra.mxu0 %v5001
        %5306 = vmatprep.subr.bf16.mxu0 0
        %5307 = vmatpush1.bf16.msra.mxu0 %v5002
        %5308 = vmatprep.mubr.bf16.mxu0 %v4391
        %5309 = vmatmul.mubr.bf16.gmra.mrb[0].mxu0 %v4390
        %v5310 = vpop.f32.mrb[0].mxu0
        %v5311 = vadd.f32 %v5150, %v5310
        %v5312 = vpop.f32.mrb[0].mxu0
        %v5313 = vpop.f32.mrb[0].mxu0
        %v5314 = vadd.f32 %v5153, %v5313
        %v5315 = vpop.f32.mrb[0].mxu0
        %5316 = vmatprep.mubr.bf16.mxu0 %v4400
        %5317 = vmatmul.mubr.bf16.gmra.mrb[0].mxu0 %v4399
        %v5318 = vpop.f32.mrb[0].mxu0
        %v5319 = vadd.f32 %v5158, %v5318
        %v5320 = vpop.f32.mrb[0].mxu0
        %v5321 = vpop.f32.mrb[0].mxu0
        %v5322 = vadd.f32 %v5161, %v5321
        %v5323 = vpop.f32.mrb[0].mxu0
        %5324 = vmatprep.mubr.bf16.mxu0 %v4409
        %5325 = vmatmul.mubr.bf16.gmra.mrb[0].mxu0 %v4408
        %v5326 = vpop.f32.mrb[0].mxu0
        %v5327 = vadd.f32 %v5166, %v5326
        %v5328 = vpop.f32.mrb[0].mxu0
        %v5329 = vpop.f32.mrb[0].mxu0
        %v5330 = vadd.f32 %v5169, %v5329
        %v5331 = vpop.f32.mrb[0].mxu0
        %5332 = vmatprep.mubr.bf16.mxu0 %v4418
        %5333 = vmatmul.mubr.bf16.gmra.mrb[0].mxu0 %v4417
        %v5334 = vpop.f32.mrb[0].mxu0
        %v5335 = vadd.f32 %v5174, %v5334
        %v5336 = vpop.f32.mrb[0].mxu0
        %v5337 = vpop.f32.mrb[0].mxu0
        %v5338 = vadd.f32 %v5177, %v5337
        %v5339 = vpop.f32.mrb[0].mxu0
        %5340 = vmatprep.mubr.bf16.mxu0 %v4427
        %5341 = vmatmul.mubr.bf16.gmra.mrb[0].mxu0 %v4426
        %v5342 = vpop.f32.mrb[0].mxu0
        %v5343 = vadd.f32 %v5182, %v5342
        %v5344 = vpop.f32.mrb[0].mxu0
        %v5345 = vpop.f32.mrb[0].mxu0
        %v5346 = vadd.f32 %v5185, %v5345
        %v5347 = vpop.f32.mrb[0].mxu0
        %5348 = vmatprep.mubr.bf16.mxu0 %v4436
        %5349 = vmatmul.mubr.bf16.gmra.mrb[0].mxu0 %v4435
        %v5350 = vpop.f32.mrb[0].mxu0
        %v5351 = vadd.f32 %v5190, %v5350
        %v5352 = vpop.f32.mrb[0].mxu0
        %v5353 = vpop.f32.mrb[0].mxu0
        %v5354 = vadd.f32 %v5193, %v5353
        %v5355 = vpop.f32.mrb[0].mxu0
        %5356 = vmatprep.mubr.bf16.mxu0 %v4445
        %5357 = vmatmul.mubr.bf16.gmra.mrb[0].mxu0 %v4444
        %v5358 = vpop.f32.mrb[0].mxu0
        %v5359 = vadd.f32 %v5198, %v5358
        %v5360 = vpop.f32.mrb[0].mxu0
        %v5361 = vpop.f32.mrb[0].mxu0
        %v5362 = vadd.f32 %v5201, %v5361
        %v5363 = vpop.f32.mrb[0].mxu0
        %5364 = vmatprep.mubr.bf16.mxu0 %v4454
        %5365 = vmatmul.mubr.bf16.gmra.mrb[0].mxu0 %v4453
        %v5366 = vpop.f32.mrb[0].mxu0
        %v5367 = vadd.f32 %v5206, %v5366
        %v5368 = vpop.f32.mrb[0].mxu0
        %v5369 = vpop.f32.mrb[0].mxu0
        %v5370 = vadd.f32 %v5209, %v5369
        %v5371 = vpop.f32.mrb[0].mxu0
        %5372 = vmatprep.mubr.bf16.mxu0 %v4463
        %5373 = vmatmul.mubr.bf16.gmra.mrb[0].mxu0 %v4462
        %v5374 = vpop.f32.mrb[0].mxu0
        %v5375 = vadd.f32 %v5214, %v5374
        %v5376 = vpop.f32.mrb[0].mxu0
        %v5377 = vpop.f32.mrb[0].mxu0
        %v5378 = vadd.f32 %v5217, %v5377
        %v5379 = vpop.f32.mrb[0].mxu0
        %5380 = vmatprep.mubr.bf16.mxu0 %v4472
        %5381 = vmatmul.mubr.bf16.gmra.mrb[0].mxu0 %v4471
        %v5382 = vpop.f32.mrb[0].mxu0
        %v5383 = vadd.f32 %v5222, %v5382
        %v5384 = vpop.f32.mrb[0].mxu0
        %v5385 = vpop.f32.mrb[0].mxu0
        %v5386 = vadd.f32 %v5225, %v5385
        %v5387 = vpop.f32.mrb[0].mxu0
        %5388 = vmatprep.mubr.bf16.mxu0 %v4481
        %5389 = vmatmul.mubr.bf16.gmra.mrb[0].mxu0 %v4480
        %v5390 = vpop.f32.mrb[0].mxu0
        %v5391 = vadd.f32 %v5230, %v5390
        %v5392 = vpop.f32.mrb[0].mxu0
        %v5393 = vpop.f32.mrb[0].mxu0
        %v5394 = vadd.f32 %v5233, %v5393
        %v5395 = vpop.f32.mrb[0].mxu0
        %5396 = vmatprep.mubr.bf16.mxu0 %v4490
        %5397 = vmatmul.mubr.bf16.gmra.mrb[0].mxu0 %v4489
        %v5398 = vpop.f32.mrb[0].mxu0
        %v5399 = vadd.f32 %v5238, %v5398
        %v5400 = vpop.f32.mrb[0].mxu0
        %v5401 = vpop.f32.mrb[0].mxu0
        %v5402 = vadd.f32 %v5241, %v5401
        %v5403 = vpop.f32.mrb[0].mxu0
        %5404 = vmatprep.mubr.bf16.mxu0 %v4499
        %5405 = vmatmul.mubr.bf16.gmra.mrb[0].mxu0 %v4498
        %v5406 = vpop.f32.mrb[0].mxu0
        %v5407 = vadd.f32 %v5246, %v5406
        %v5408 = vpop.f32.mrb[0].mxu0
        %v5409 = vpop.f32.mrb[0].mxu0
        %v5410 = vadd.f32 %v5249, %v5409
        %v5411 = vpop.f32.mrb[0].mxu0
        %5412 = vmatprep.mubr.bf16.mxu0 %v4508
        %5413 = vmatmul.mubr.bf16.gmra.mrb[0].mxu0 %v4507
        %v5414 = vpop.f32.mrb[0].mxu0
        %v5415 = vadd.f32 %v5254, %v5414
        %v5416 = vpop.f32.mrb[0].mxu0
        %v5417 = vpop.f32.mrb[0].mxu0
        %v5418 = vadd.f32 %v5257, %v5417
        %v5419 = vpop.f32.mrb[0].mxu0
        %5420 = vmatprep.mubr.bf16.mxu0 %v4517
        %5421 = vmatmul.mubr.bf16.gmra.mrb[0].mxu0 %v4516
        %v5422 = vpop.f32.mrb[0].mxu0
        %v5423 = vadd.f32 %v5262, %v5422
        %v5424 = vpop.f32.mrb[0].mxu0
        %v5425 = vpop.f32.mrb[0].mxu0
        %v5426 = vadd.f32 %v5265, %v5425
        %v5427 = vpop.f32.mrb[0].mxu0
        %5428 = vmatprep.mubr.bf16.mxu0 %v4526
        %5429 = vmatmul.mubr.bf16.gmra.mrb[0].mxu0 %v4525
        %v5430 = vpop.f32.mrb[0].mxu0
        %v5431 = vadd.f32 %v5270, %v5430
        %v5432 = vpop.f32.mrb[0].mxu0
        %v5433 = vpop.f32.mrb[0].mxu0
        %v5434 = vadd.f32 %v5273, %v5433
        %v5435 = vpop.f32.mrb[0].mxu0
        %5436 = vdwg.mxu0
        %5437 = vmatprep.subr.bf16.mxu0 0
        %5438 = vmatpush1.bf16.msra.mxu0 %v5003
        %5439 = vmatprep.subr.bf16.mxu0 0
        %5440 = vmatpush1.bf16.msra.mxu0 %v5004
        %5441 = vmatprep.subr.bf16.mxu0 0
        %5442 = vmatpush1.bf16.msra.mxu0 %v5005
        %5443 = vmatprep.subr.bf16.mxu0 0
        %5444 = vmatpush1.bf16.msra.mxu0 %v5006
        %5445 = vmatprep.subr.bf16.mxu0 0
        %5446 = vmatpush1.bf16.msra.mxu0 %v5007
        %5447 = vmatprep.subr.bf16.mxu0 0
        %5448 = vmatpush1.bf16.msra.mxu0 %v5008
        %5449 = vmatprep.subr.bf16.mxu0 0
        %5450 = vmatpush1.bf16.msra.mxu0 %v5009
        %5451 = vmatprep.subr.bf16.mxu0 0
        %5452 = vmatpush1.bf16.msra.mxu0 %v5010
        %5453 = vmatprep.subr.bf16.mxu0 0
        %5454 = vmatpush1.bf16.msra.mxu0 %v5011
        %5455 = vmatprep.subr.bf16.mxu0 0
        %5456 = vmatpush1.bf16.msra.mxu0 %v5012
        %5457 = vmatprep.subr.bf16.mxu0 0
        %5458 = vmatpush1.bf16.msra.mxu0 %v5013
        %5459 = vmatprep.subr.bf16.mxu0 0
        %5460 = vmatpush1.bf16.msra.mxu0 %v5014
        %5461 = vmatprep.subr.bf16.mxu0 0
        %5462 = vmatpush1.bf16.msra.mxu0 %v5015
        %5463 = vmatprep.subr.bf16.mxu0 0
        %5464 = vmatpush1.bf16.msra.mxu0 %v5016
        %5465 = vmatprep.subr.bf16.mxu0 0
        %5466 = vmatpush1.bf16.msra.mxu0 %v5017
        %5467 = vmatprep.subr.bf16.mxu0 0
        %5468 = vmatpush1.bf16.msra.mxu0 %v5018
        %5469 = vmatprep.mubr.bf16.mxu0 %v4393
        %5470 = vmatmul.mubr.bf16.gmra.mrb[0].mxu0 %v4392
        %v5471 = vpop.f32.mrb[0].mxu0
        %v5472 = vadd.f32 %v5311, %v5471
        %v5473 = vpop.f32.mrb[0].mxu0
        %v5474 = vpop.f32.mrb[0].mxu0
        %v5475 = vadd.f32 %v5314, %v5474
        %v5476 = vpop.f32.mrb[0].mxu0
        %5477 = vmatprep.mubr.bf16.mxu0 %v4402
        %5478 = vmatmul.mubr.bf16.gmra.mrb[0].mxu0 %v4401
        %v5479 = vpop.f32.mrb[0].mxu0
        %v5480 = vadd.f32 %v5319, %v5479
        %v5481 = vpop.f32.mrb[0].mxu0
        %v5482 = vpop.f32.mrb[0].mxu0
        %v5483 = vadd.f32 %v5322, %v5482
        %v5484 = vpop.f32.mrb[0].mxu0
        %5485 = vmatprep.mubr.bf16.mxu0 %v4411
        %5486 = vmatmul.mubr.bf16.gmra.mrb[0].mxu0 %v4410
        %v5487 = vpop.f32.mrb[0].mxu0
        %v5488 = vadd.f32 %v5327, %v5487
        %v5489 = vpop.f32.mrb[0].mxu0
        %v5490 = vpop.f32.mrb[0].mxu0
        %v5491 = vadd.f32 %v5330, %v5490
        %v5492 = vpop.f32.mrb[0].mxu0
        %5493 = vmatprep.mubr.bf16.mxu0 %v4420
        %5494 = vmatmul.mubr.bf16.gmra.mrb[0].mxu0 %v4419
        %v5495 = vpop.f32.mrb[0].mxu0
        %v5496 = vadd.f32 %v5335, %v5495
        %v5497 = vpop.f32.mrb[0].mxu0
        %v5498 = vpop.f32.mrb[0].mxu0
        %v5499 = vadd.f32 %v5338, %v5498
        %v5500 = vpop.f32.mrb[0].mxu0
        %5501 = vmatprep.mubr.bf16.mxu0 %v4429
        %5502 = vmatmul.mubr.bf16.gmra.mrb[0].mxu0 %v4428
        %v5503 = vpop.f32.mrb[0].mxu0
        %v5504 = vadd.f32 %v5343, %v5503
        %v5505 = vpop.f32.mrb[0].mxu0
        %v5506 = vpop.f32.mrb[0].mxu0
        %v5507 = vadd.f32 %v5346, %v5506
        %v5508 = vpop.f32.mrb[0].mxu0
        %5509 = vmatprep.mubr.bf16.mxu0 %v4438
        %5510 = vmatmul.mubr.bf16.gmra.mrb[0].mxu0 %v4437
        %v5511 = vpop.f32.mrb[0].mxu0
        %v5512 = vadd.f32 %v5351, %v5511
        %v5513 = vpop.f32.mrb[0].mxu0
        %v5514 = vpop.f32.mrb[0].mxu0
        %v5515 = vadd.f32 %v5354, %v5514
        %v5516 = vpop.f32.mrb[0].mxu0
        %5517 = vmatprep.mubr.bf16.mxu0 %v4447
        %5518 = vmatmul.mubr.bf16.gmra.mrb[0].mxu0 %v4446
        %v5519 = vpop.f32.mrb[0].mxu0
        %v5520 = vadd.f32 %v5359, %v5519
        %v5521 = vpop.f32.mrb[0].mxu0
        %v5522 = vpop.f32.mrb[0].mxu0
        %v5523 = vadd.f32 %v5362, %v5522
        %v5524 = vpop.f32.mrb[0].mxu0
        %5525 = vmatprep.mubr.bf16.mxu0 %v4456
        %5526 = vmatmul.mubr.bf16.gmra.mrb[0].mxu0 %v4455
        %v5527 = vpop.f32.mrb[0].mxu0
        %v5528 = vadd.f32 %v5367, %v5527
        %v5529 = vpop.f32.mrb[0].mxu0
        %v5530 = vpop.f32.mrb[0].mxu0
        %v5531 = vadd.f32 %v5370, %v5530
        %v5532 = vpop.f32.mrb[0].mxu0
        %5533 = vmatprep.mubr.bf16.mxu0 %v4465
        %5534 = vmatmul.mubr.bf16.gmra.mrb[0].mxu0 %v4464
        %v5535 = vpop.f32.mrb[0].mxu0
        %v5536 = vadd.f32 %v5375, %v5535
        %v5537 = vpop.f32.mrb[0].mxu0
        %v5538 = vpop.f32.mrb[0].mxu0
        %v5539 = vadd.f32 %v5378, %v5538
        %v5540 = vpop.f32.mrb[0].mxu0
        %5541 = vmatprep.mubr.bf16.mxu0 %v4474
        %5542 = vmatmul.mubr.bf16.gmra.mrb[0].mxu0 %v4473
        %v5543 = vpop.f32.mrb[0].mxu0
        %v5544 = vadd.f32 %v5383, %v5543
        %v5545 = vpop.f32.mrb[0].mxu0
        %v5546 = vpop.f32.mrb[0].mxu0
        %v5547 = vadd.f32 %v5386, %v5546
        %v5548 = vpop.f32.mrb[0].mxu0
        %5549 = vmatprep.mubr.bf16.mxu0 %v4483
        %5550 = vmatmul.mubr.bf16.gmra.mrb[0].mxu0 %v4482
        %v5551 = vpop.f32.mrb[0].mxu0
        %v5552 = vadd.f32 %v5391, %v5551
        %v5553 = vpop.f32.mrb[0].mxu0
        %v5554 = vpop.f32.mrb[0].mxu0
        %v5555 = vadd.f32 %v5394, %v5554
        %v5556 = vpop.f32.mrb[0].mxu0
        %5557 = vmatprep.mubr.bf16.mxu0 %v4492
        %5558 = vmatmul.mubr.bf16.gmra.mrb[0].mxu0 %v4491
        %v5559 = vpop.f32.mrb[0].mxu0
        %v5560 = vadd.f32 %v5399, %v5559
        %v5561 = vpop.f32.mrb[0].mxu0
        %v5562 = vpop.f32.mrb[0].mxu0
        %v5563 = vadd.f32 %v5402, %v5562
        %v5564 = vpop.f32.mrb[0].mxu0
        %5565 = vmatprep.mubr.bf16.mxu0 %v4501
        %5566 = vmatmul.mubr.bf16.gmra.mrb[0].mxu0 %v4500
        %v5567 = vpop.f32.mrb[0].mxu0
        %v5568 = vadd.f32 %v5407, %v5567
        %v5569 = vpop.f32.mrb[0].mxu0
        %v5570 = vpop.f32.mrb[0].mxu0
        %v5571 = vadd.f32 %v5410, %v5570
        %v5572 = vpop.f32.mrb[0].mxu0
        %5573 = vmatprep.mubr.bf16.mxu0 %v4510
        %5574 = vmatmul.mubr.bf16.gmra.mrb[0].mxu0 %v4509
        %v5575 = vpop.f32.mrb[0].mxu0
        %v5576 = vadd.f32 %v5415, %v5575
        %v5577 = vpop.f32.mrb[0].mxu0
        %v5578 = vpop.f32.mrb[0].mxu0
        %v5579 = vadd.f32 %v5418, %v5578
        %v5580 = vpop.f32.mrb[0].mxu0
        %5581 = vmatprep.mubr.bf16.mxu0 %v4519
        %5582 = vmatmul.mubr.bf16.gmra.mrb[0].mxu0 %v4518
        %v5583 = vpop.f32.mrb[0].mxu0
        %v5584 = vadd.f32 %v5423, %v5583
        %v5585 = vpop.f32.mrb[0].mxu0
        %v5586 = vpop.f32.mrb[0].mxu0
        %v5587 = vadd.f32 %v5426, %v5586
        %v5588 = vpop.f32.mrb[0].mxu0
        %5589 = vmatprep.mubr.bf16.mxu0 %v4528
        %5590 = vmatmul.mubr.bf16.gmra.mrb[0].mxu0 %v4527
        %v5591 = vpop.f32.mrb[0].mxu0
        %v5592 = vadd.f32 %v5431, %v5591
        %v5593 = vpop.f32.mrb[0].mxu0
        %v5594 = vpop.f32.mrb[0].mxu0
        %v5595 = vadd.f32 %v5434, %v5594
        %v5596 = vpop.f32.mrb[0].mxu0
        %5597 = vdwg.mxu0
        %5598 = vmatprep.subr.bf16.mxu0 0
        %5599 = vmatpush1.bf16.msra.mxu0 %v5019
        %5600 = vmatprep.subr.bf16.mxu0 0
        %5601 = vmatpush1.bf16.msra.mxu0 %v5020
        %5602 = vmatprep.subr.bf16.mxu0 0
        %5603 = vmatpush1.bf16.msra.mxu0 %v5021
        %5604 = vmatprep.subr.bf16.mxu0 0
        %5605 = vmatpush1.bf16.msra.mxu0 %v5022
        %5606 = vmatprep.subr.bf16.mxu0 0
        %5607 = vmatpush1.bf16.msra.mxu0 %v5023
        %5608 = vmatprep.subr.bf16.mxu0 0
        %5609 = vmatpush1.bf16.msra.mxu0 %v5024
        %5610 = vmatprep.subr.bf16.mxu0 0
        %5611 = vmatpush1.bf16.msra.mxu0 %v5025
        %5612 = vmatprep.subr.bf16.mxu0 0
        %5613 = vmatpush1.bf16.msra.mxu0 %v5026
        %5614 = vmatprep.subr.bf16.mxu0 0
        %5615 = vmatpush1.bf16.msra.mxu0 %v5027
        %5616 = vmatprep.subr.bf16.mxu0 0
        %5617 = vmatpush1.bf16.msra.mxu0 %v5028
        %5618 = vmatprep.subr.bf16.mxu0 0
        %5619 = vmatpush1.bf16.msra.mxu0 %v5029
        %5620 = vmatprep.subr.bf16.mxu0 0
        %5621 = vmatpush1.bf16.msra.mxu0 %v5030
        %5622 = vmatprep.subr.bf16.mxu0 0
        %5623 = vmatpush1.bf16.msra.mxu0 %v5031
        %5624 = vmatprep.subr.bf16.mxu0 0
        %5625 = vmatpush1.bf16.msra.mxu0 %v5032
        %5626 = vmatprep.subr.bf16.mxu0 0
        %5627 = vmatpush1.bf16.msra.mxu0 %v5033
        %5628 = vmatprep.subr.bf16.mxu0 0
        %5629 = vmatpush1.bf16.msra.mxu0 %v5034
        %5630 = vmatprep.mubr.bf16.mxu0 %v4395
        %5631 = vmatmul.mubr.bf16.gmra.mrb[0].mxu0 %v4394
        %v5632 = vpop.f32.mrb[0].mxu0
        %v5633 = vadd.f32 %v5472, %v5632
        %v5634 = vpop.f32.mrb[0].mxu0
        %v5635 = vpop.f32.mrb[0].mxu0
        %v5636 = vadd.f32 %v5475, %v5635
        %v5637 = vpop.f32.mrb[0].mxu0
        %5638 = vmatprep.mubr.bf16.mxu0 %v4404
        %5639 = vmatmul.mubr.bf16.gmra.mrb[0].mxu0 %v4403
        %v5640 = vpop.f32.mrb[0].mxu0
        %v5641 = vadd.f32 %v5480, %v5640
        %v5642 = vpop.f32.mrb[0].mxu0
        %v5643 = vpop.f32.mrb[0].mxu0
        %v5644 = vadd.f32 %v5483, %v5643
        %v5645 = vpop.f32.mrb[0].mxu0
        %5646 = vmatprep.mubr.bf16.mxu0 %v4413
        %5647 = vmatmul.mubr.bf16.gmra.mrb[0].mxu0 %v4412
        %v5648 = vpop.f32.mrb[0].mxu0
        %v5649 = vadd.f32 %v5488, %v5648
        %v5650 = vpop.f32.mrb[0].mxu0
        %v5651 = vpop.f32.mrb[0].mxu0
        %v5652 = vadd.f32 %v5491, %v5651
        %v5653 = vpop.f32.mrb[0].mxu0
        %5654 = vmatprep.mubr.bf16.mxu0 %v4422
        %5655 = vmatmul.mubr.bf16.gmra.mrb[0].mxu0 %v4421
        %v5656 = vpop.f32.mrb[0].mxu0
        %v5657 = vadd.f32 %v5496, %v5656
        %v5658 = vpop.f32.mrb[0].mxu0
        %v5659 = vpop.f32.mrb[0].mxu0
        %v5660 = vadd.f32 %v5499, %v5659
        %v5661 = vpop.f32.mrb[0].mxu0
        %5662 = vmatprep.mubr.bf16.mxu0 %v4431
        %5663 = vmatmul.mubr.bf16.gmra.mrb[0].mxu0 %v4430
        %v5664 = vpop.f32.mrb[0].mxu0
        %v5665 = vadd.f32 %v5504, %v5664
        %v5666 = vpop.f32.mrb[0].mxu0
        %v5667 = vpop.f32.mrb[0].mxu0
        %v5668 = vadd.f32 %v5507, %v5667
        %v5669 = vpop.f32.mrb[0].mxu0
        %5670 = vmatprep.mubr.bf16.mxu0 %v4440
        %5671 = vmatmul.mubr.bf16.gmra.mrb[0].mxu0 %v4439
        %v5672 = vpop.f32.mrb[0].mxu0
        %v5673 = vadd.f32 %v5512, %v5672
        %v5674 = vpop.f32.mrb[0].mxu0
        %v5675 = vpop.f32.mrb[0].mxu0
        %v5676 = vadd.f32 %v5515, %v5675
        %v5677 = vpop.f32.mrb[0].mxu0
        %5678 = vmatprep.mubr.bf16.mxu0 %v4449
        %5679 = vmatmul.mubr.bf16.gmra.mrb[0].mxu0 %v4448
        %v5680 = vpop.f32.mrb[0].mxu0
        %v5681 = vadd.f32 %v5520, %v5680
        %v5682 = vpop.f32.mrb[0].mxu0
        %v5683 = vpop.f32.mrb[0].mxu0
        %v5684 = vadd.f32 %v5523, %v5683
        %v5685 = vpop.f32.mrb[0].mxu0
        %5686 = vmatprep.mubr.bf16.mxu0 %v4458
        %5687 = vmatmul.mubr.bf16.gmra.mrb[0].mxu0 %v4457
        %v5688 = vpop.f32.mrb[0].mxu0
        %v5689 = vadd.f32 %v5528, %v5688
        %v5690 = vpop.f32.mrb[0].mxu0
        %v5691 = vpop.f32.mrb[0].mxu0
        %v5692 = vadd.f32 %v5531, %v5691
        %v5693 = vpop.f32.mrb[0].mxu0
        %5694 = vmatprep.mubr.bf16.mxu0 %v4467
        %5695 = vmatmul.mubr.bf16.gmra.mrb[0].mxu0 %v4466
        %v5696 = vpop.f32.mrb[0].mxu0
        %v5697 = vadd.f32 %v5536, %v5696
        %v5698 = vpop.f32.mrb[0].mxu0
        %v5699 = vpop.f32.mrb[0].mxu0
        %v5700 = vadd.f32 %v5539, %v5699
        %v5701 = vpop.f32.mrb[0].mxu0
        %5702 = vmatprep.mubr.bf16.mxu0 %v4476
        %5703 = vmatmul.mubr.bf16.gmra.mrb[0].mxu0 %v4475
        %v5704 = vpop.f32.mrb[0].mxu0
        %v5705 = vadd.f32 %v5544, %v5704
        %v5706 = vpop.f32.mrb[0].mxu0
        %v5707 = vpop.f32.mrb[0].mxu0
        %v5708 = vadd.f32 %v5547, %v5707
        %v5709 = vpop.f32.mrb[0].mxu0
        %5710 = vmatprep.mubr.bf16.mxu0 %v4485
        %5711 = vmatmul.mubr.bf16.gmra.mrb[0].mxu0 %v4484
        %v5712 = vpop.f32.mrb[0].mxu0
        %v5713 = vadd.f32 %v5552, %v5712
        %v5714 = vpop.f32.mrb[0].mxu0
        %v5715 = vpop.f32.mrb[0].mxu0
        %v5716 = vadd.f32 %v5555, %v5715
        %v5717 = vpop.f32.mrb[0].mxu0
        %5718 = vmatprep.mubr.bf16.mxu0 %v4494
        %5719 = vmatmul.mubr.bf16.gmra.mrb[0].mxu0 %v4493
        %v5720 = vpop.f32.mrb[0].mxu0
        %v5721 = vadd.f32 %v5560, %v5720
        %v5722 = vpop.f32.mrb[0].mxu0
        %v5723 = vpop.f32.mrb[0].mxu0
        %v5724 = vadd.f32 %v5563, %v5723
        %v5725 = vpop.f32.mrb[0].mxu0
        %5726 = vmatprep.mubr.bf16.mxu0 %v4503
        %5727 = vmatmul.mubr.bf16.gmra.mrb[0].mxu0 %v4502
        %v5728 = vpop.f32.mrb[0].mxu0
        %v5729 = vadd.f32 %v5568, %v5728
        %v5730 = vpop.f32.mrb[0].mxu0
        %v5731 = vpop.f32.mrb[0].mxu0
        %v5732 = vadd.f32 %v5571, %v5731
        %v5733 = vpop.f32.mrb[0].mxu0
        %5734 = vmatprep.mubr.bf16.mxu0 %v4512
        %5735 = vmatmul.mubr.bf16.gmra.mrb[0].mxu0 %v4511
        %v5736 = vpop.f32.mrb[0].mxu0
        %v5737 = vadd.f32 %v5576, %v5736
        %v5738 = vpop.f32.mrb[0].mxu0
        %v5739 = vpop.f32.mrb[0].mxu0
        %v5740 = vadd.f32 %v5579, %v5739
        %v5741 = vpop.f32.mrb[0].mxu0
        %5742 = vmatprep.mubr.bf16.mxu0 %v4521
        %5743 = vmatmul.mubr.bf16.gmra.mrb[0].mxu0 %v4520
        %v5744 = vpop.f32.mrb[0].mxu0
        %v5745 = vadd.f32 %v5584, %v5744
        %v5746 = vpop.f32.mrb[0].mxu0
        %v5747 = vpop.f32.mrb[0].mxu0
        %v5748 = vadd.f32 %v5587, %v5747
        %v5749 = vpop.f32.mrb[0].mxu0
        %5750 = vmatprep.mubr.bf16.mxu0 %v4530
        %5751 = vmatmul.mubr.bf16.gmra.mrb[0].mxu0 %v4529
        %v5752 = vpop.f32.mrb[0].mxu0
        %v5753 = vadd.f32 %v5592, %v5752
        %v5754 = vpop.f32.mrb[0].mxu0
        %v5755 = vpop.f32.mrb[0].mxu0
        %v5756 = vadd.f32 %v5595, %v5755
        %v5757 = vpop.f32.mrb[0].mxu0
        %5758 = vdwg.mxu0
        %5759 = vmatprep.subr.bf16.mxu0 0
        %5760 = vmatpush1.bf16.msra.mxu0 %v5035
        %5761 = vmatprep.subr.bf16.mxu0 0
        %5762 = vmatpush1.bf16.msra.mxu0 %v5036
        %5763 = vmatprep.subr.bf16.mxu0 0
        %5764 = vmatpush1.bf16.msra.mxu0 %v5037
        %5765 = vmatprep.subr.bf16.mxu0 0
        %5766 = vmatpush1.bf16.msra.mxu0 %v5038
        %5767 = vmatprep.subr.bf16.mxu0 0
        %5768 = vmatpush1.bf16.msra.mxu0 %v5039
        %5769 = vmatprep.subr.bf16.mxu0 0
        %5770 = vmatpush1.bf16.msra.mxu0 %v5040
        %5771 = vmatprep.subr.bf16.mxu0 0
        %5772 = vmatpush1.bf16.msra.mxu0 %v5041
        %5773 = vmatprep.subr.bf16.mxu0 0
        %5774 = vmatpush1.bf16.msra.mxu0 %v5042
        %5775 = vmatprep.subr.bf16.mxu0 0
        %5776 = vmatpush1.bf16.msra.mxu0 0
        %5777 = vmatprep.subr.bf16.mxu0 0
        %5778 = vmatpush1.bf16.msra.mxu0 0
        %5779 = vmatprep.subr.bf16.mxu0 0
        %5780 = vmatpush1.bf16.msra.mxu0 0
        %5781 = vmatprep.subr.bf16.mxu0 0
        %5782 = vmatpush1.bf16.msra.mxu0 0
        %5783 = vmatprep.subr.bf16.mxu0 0
        %5784 = vmatpush1.bf16.msra.mxu0 0
        %5785 = vmatprep.subr.bf16.mxu0 0
        %5786 = vmatpush1.bf16.msra.mxu0 0
        %5787 = vmatprep.subr.bf16.mxu0 0
        %5788 = vmatpush1.bf16.msra.mxu0 0
        %5789 = vmatprep.subr.bf16.mxu0 0
        %5790 = vmatpush1.bf16.msra.mxu0 0
        %5791 = vmatprep.mubr.bf16.mxu0 0
        %5792 = vmatmul.mubr.bf16.gmra.mrb[0].mxu0 %v4396
        %v5793 = vpop.f32.mrb[0].mxu0
        %v5794 = vadd.f32 %v5633, %v5793
        %v5795 = vpop.f32.mrb[0].mxu0
        %v5796 = vpop.f32.mrb[0].mxu0
        %v5797 = vadd.f32 %v5636, %v5796
        %v5798 = vpop.f32.mrb[0].mxu0
        %5799 = vmatprep.mubr.bf16.mxu0 0
        %5800 = vmatmul.mubr.bf16.gmra.mrb[0].mxu0 %v4405
        %v5801 = vpop.f32.mrb[0].mxu0
        %v5802 = vadd.f32 %v5641, %v5801
        %v5803 = vpop.f32.mrb[0].mxu0
        %v5804 = vpop.f32.mrb[0].mxu0
        %v5805 = vadd.f32 %v5644, %v5804
        %v5806 = vpop.f32.mrb[0].mxu0
        %5807 = vmatprep.mubr.bf16.mxu0 0
        %5808 = vmatmul.mubr.bf16.gmra.mrb[0].mxu0 %v4414
        %v5809 = vpop.f32.mrb[0].mxu0
        %v5810 = vadd.f32 %v5649, %v5809
        %v5811 = vpop.f32.mrb[0].mxu0
        %v5812 = vpop.f32.mrb[0].mxu0
        %v5813 = vadd.f32 %v5652, %v5812
        %v5814 = vpop.f32.mrb[0].mxu0
        %5815 = vmatprep.mubr.bf16.mxu0 0
        %5816 = vmatmul.mubr.bf16.gmra.mrb[0].mxu0 %v4423
        %v5817 = vpop.f32.mrb[0].mxu0
        %v5818 = vadd.f32 %v5657, %v5817
        %v5819 = vpop.f32.mrb[0].mxu0
        %v5820 = vpop.f32.mrb[0].mxu0
        %v5821 = vadd.f32 %v5660, %v5820
        %v5822 = vpop.f32.mrb[0].mxu0
        %5823 = vmatprep.mubr.bf16.mxu0 0
        %5824 = vmatmul.mubr.bf16.gmra.mrb[0].mxu0 %v4432
        %v5825 = vpop.f32.mrb[0].mxu0
        %v5826 = vadd.f32 %v5665, %v5825
        %v5827 = vpop.f32.mrb[0].mxu0
        %v5828 = vpop.f32.mrb[0].mxu0
        %v5829 = vadd.f32 %v5668, %v5828
        %v5830 = vpop.f32.mrb[0].mxu0
        %5831 = vmatprep.mubr.bf16.mxu0 0
        %5832 = vmatmul.mubr.bf16.gmra.mrb[0].mxu0 %v4441
        %v5833 = vpop.f32.mrb[0].mxu0
        %v5834 = vadd.f32 %v5673, %v5833
        %v5835 = vpop.f32.mrb[0].mxu0
        %v5836 = vpop.f32.mrb[0].mxu0
        %v5837 = vadd.f32 %v5676, %v5836
        %v5838 = vpop.f32.mrb[0].mxu0
        %5839 = vmatprep.mubr.bf16.mxu0 0
        %5840 = vmatmul.mubr.bf16.gmra.mrb[0].mxu0 %v4450
        %v5841 = vpop.f32.mrb[0].mxu0
        %v5842 = vadd.f32 %v5681, %v5841
        %v5843 = vpop.f32.mrb[0].mxu0
        %v5844 = vpop.f32.mrb[0].mxu0
        %v5845 = vadd.f32 %v5684, %v5844
        %v5846 = vpop.f32.mrb[0].mxu0
        %5847 = vmatprep.mubr.bf16.mxu0 0
        %5848 = vmatmul.mubr.bf16.gmra.mrb[0].mxu0 %v4459
        %v5849 = vpop.f32.mrb[0].mxu0
        %v5850 = vadd.f32 %v5689, %v5849
        %v5851 = vpop.f32.mrb[0].mxu0
        %v5852 = vpop.f32.mrb[0].mxu0
        %v5853 = vadd.f32 %v5692, %v5852
        %v5854 = vpop.f32.mrb[0].mxu0
        %5855 = vmatprep.mubr.bf16.mxu0 0
        %5856 = vmatmul.mubr.bf16.gmra.mrb[0].mxu0 %v4468
        %v5857 = vpop.f32.mrb[0].mxu0
        %v5858 = vadd.f32 %v5697, %v5857
        %v5859 = vpop.f32.mrb[0].mxu0
        %v5860 = vpop.f32.mrb[0].mxu0
        %v5861 = vadd.f32 %v5700, %v5860
        %v5862 = vpop.f32.mrb[0].mxu0
        %5863 = vmatprep.mubr.bf16.mxu0 0
        %5864 = vmatmul.mubr.bf16.gmra.mrb[0].mxu0 %v4477
        %v5865 = vpop.f32.mrb[0].mxu0
        %v5866 = vadd.f32 %v5705, %v5865
        %v5867 = vpop.f32.mrb[0].mxu0
        %v5868 = vpop.f32.mrb[0].mxu0
        %v5869 = vadd.f32 %v5708, %v5868
        %v5870 = vpop.f32.mrb[0].mxu0
        %5871 = vmatprep.mubr.bf16.mxu0 0
        %5872 = vmatmul.mubr.bf16.gmra.mrb[0].mxu0 %v4486
        %v5873 = vpop.f32.mrb[0].mxu0
        %v5874 = vadd.f32 %v5713, %v5873
        %v5875 = vpop.f32.mrb[0].mxu0
        %v5876 = vpop.f32.mrb[0].mxu0
        %v5877 = vadd.f32 %v5716, %v5876
        %v5878 = vpop.f32.mrb[0].mxu0
        %5879 = vmatprep.mubr.bf16.mxu0 0
        %5880 = vmatmul.mubr.bf16.gmra.mrb[0].mxu0 %v4495
        %v5881 = vpop.f32.mrb[0].mxu0
        %v5882 = vadd.f32 %v5721, %v5881
        %v5883 = vpop.f32.mrb[0].mxu0
        %v5884 = vpop.f32.mrb[0].mxu0
        %v5885 = vadd.f32 %v5724, %v5884
        %v5886 = vpop.f32.mrb[0].mxu0
        %5887 = vmatprep.mubr.bf16.mxu0 0
        %5888 = vmatmul.mubr.bf16.gmra.mrb[0].mxu0 %v4504
        %v5889 = vpop.f32.mrb[0].mxu0
        %v5890 = vadd.f32 %v5729, %v5889
        %v5891 = vpop.f32.mrb[0].mxu0
        %v5892 = vpop.f32.mrb[0].mxu0
        %v5893 = vadd.f32 %v5732, %v5892
        %v5894 = vpop.f32.mrb[0].mxu0
        %5895 = vmatprep.mubr.bf16.mxu0 0
        %5896 = vmatmul.mubr.bf16.gmra.mrb[0].mxu0 %v4513
        %v5897 = vpop.f32.mrb[0].mxu0
        %v5898 = vadd.f32 %v5737, %v5897
        %v5899 = vpop.f32.mrb[0].mxu0
        %v5900 = vpop.f32.mrb[0].mxu0
        %v5901 = vadd.f32 %v5740, %v5900
        %v5902 = vpop.f32.mrb[0].mxu0
        %5903 = vmatprep.mubr.bf16.mxu0 0
        %5904 = vmatmul.mubr.bf16.gmra.mrb[0].mxu0 %v4522
        %v5905 = vpop.f32.mrb[0].mxu0
        %v5906 = vadd.f32 %v5745, %v5905
        %v5907 = vpop.f32.mrb[0].mxu0
        %v5908 = vpop.f32.mrb[0].mxu0
        %v5909 = vadd.f32 %v5748, %v5908
        %v5910 = vpop.f32.mrb[0].mxu0
        %5911 = vmatprep.mubr.bf16.mxu0 0
        %5912 = vmatmul.mubr.bf16.gmra.mrb[0].mxu0 %v4531
        %v5913 = vpop.f32.mrb[0].mxu0
        %v5914 = vadd.f32 %v5753, %v5913
        %v5915 = vpop.f32.mrb[0].mxu0
        %v5916 = vpop.f32.mrb[0].mxu0
        %v5917 = vadd.f32 %v5756, %v5916
        %v5918 = vpop.f32.mrb[0].mxu0
        %5919 = vdwg.mxu0
        %v5920 = vmax.f32 %v5794, 0.0
        %v5921 = vmax.f32 %v5797, 0.0
        %v5922 = vmax.f32 %v5802, 0.0
        %v5923 = vmax.f32 %v5805, 0.0
        %v5924 = vmax.f32 %v5810, 0.0
        %v5925 = vmax.f32 %v5813, 0.0
        %v5926 = vmax.f32 %v5818, 0.0
        %v5927 = vmax.f32 %v5821, 0.0
        %v5928 = vmax.f32 %v5826, 0.0
        %v5929 = vmax.f32 %v5829, 0.0
        %v5930 = vmax.f32 %v5834, 0.0
        %v5931 = vmax.f32 %v5837, 0.0
        %v5932 = vmax.f32 %v5842, 0.0
        %v5933 = vmax.f32 %v5845, 0.0
        %v5934 = vmax.f32 %v5850, 0.0
        %v5935 = vmax.f32 %v5853, 0.0
        %v5936 = vmax.f32 %v5858, 0.0
        %v5937 = vmax.f32 %v5861, 0.0
        %v5938 = vmax.f32 %v5866, 0.0
        %v5939 = vmax.f32 %v5869, 0.0
        %v5940 = vmax.f32 %v5874, 0.0
        %v5941 = vmax.f32 %v5877, 0.0
        %v5942 = vmax.f32 %v5882, 0.0
        %v5943 = vmax.f32 %v5885, 0.0
        %v5944 = vmax.f32 %v5890, 0.0
        %v5945 = vmax.f32 %v5893, 0.0
        %v5946 = vmax.f32 %v5898, 0.0
        %v5947 = vmax.f32 %v5901, 0.0
        %v5948 = vmax.f32 %v5906, 0.0
        %v5949 = vmax.f32 %v5909, 0.0
        %v5950 = vmax.f32 %v5914, 0.0
        %v5951 = vmax.f32 %v5917, 0.0
        %5952 = vst [vmem:[%s328] sm:$0xff] %v5920
        %5953 = vst [vmem:[%s328 + $0x8] sm:$0xff] %v5921
        %5954 = vst [vmem:[%s328 + $0x10] sm:$0xff] %v5922
        %5955 = vst [vmem:[%s328 + $0x18] sm:$0xff] %v5923
        %5956 = vst [vmem:[%s328 + $0x20] sm:$0xff] %v5924
        %5957 = vst [vmem:[%s328 + $0x28] sm:$0xff] %v5925
        %5958 = vst [vmem:[%s328 + $0x30] sm:$0xff] %v5926
        %5959 = vst [vmem:[%s328 + $0x38] sm:$0xff] %v5927
        %5960 = vst [vmem:[%s328 + $0x40] sm:$0xff] %v5928
        %5961 = vst [vmem:[%s328 + $0x48] sm:$0xff] %v5929
        %5962 = vst [vmem:[%s328 + $0x50] sm:$0xff] %v5930
        %5963 = vst [vmem:[%s328 + $0x58] sm:$0xff] %v5931
        %5964 = vst [vmem:[%s328 + $0x60] sm:$0xff] %v5932
        %5965 = vst [vmem:[%s328 + $0x68] sm:$0xff] %v5933
        %5966 = vst [vmem:[%s328 + $0x70] sm:$0xff] %v5934
        %5967 = vst [vmem:[%s328 + $0x78] sm:$0xff] %v5935
        %5968 = vst [vmem:[%s328 + $0x80] sm:$0xff] %v5936
        %5969 = vst [vmem:[%s328 + $0x88] sm:$0xff] %v5937
        %5970 = vst [vmem:[%s328 + $0x90] sm:$0xff] %v5938
        %5971 = vst [vmem:[%s328 + $0x98] sm:$0xff] %v5939
        %5972 = vst [vmem:[%s328 + $0xa0] sm:$0xff] %v5940
        %5973 = vst [vmem:[%s328 + $0xa8] sm:$0xff] %v5941
        %5974 = vst [vmem:[%s328 + $0xb0] sm:$0xff] %v5942
        %5975 = vst [vmem:[%s328 + $0xb8] sm:$0xff] %v5943
        %5976 = vst [vmem:[%s328 + $0xc0] sm:$0xff] %v5944
        %5977 = vst [vmem:[%s328 + $0xc8] sm:$0xff] %v5945
        %5978 = vst [vmem:[%s328 + $0xd0] sm:$0xff] %v5946
        %5979 = vst [vmem:[%s328 + $0xd8] sm:$0xff] %v5947
        %5980 = vst [vmem:[%s328 + $0xe0] sm:$0xff] %v5948
        %5981 = vst [vmem:[%s328 + $0xe8] sm:$0xff] %v5949
        %5982 = vst [vmem:[%s328 + $0xf0] sm:$0xff] %v5950
        %5983 = vst [vmem:[%s328 + $0xf8] sm:$0xff] %v5951
        %s5984 = sand.u32 %s213, 1
        %s5985 = scalar_lea.sflag [#allocation6], %s5984
        %s5986 = sand.u32 %s213, 1
        %s5987 = smul.addr %s5986, 256
        %s5988 = scalar_lea.vmem [#allocation5], %s5987
        // Predicated region
        $region53: #{up_affine_with_relu.3} parent=51 // pred_check
          %p5989 = pneg %p223
        $region54: #{up_affine_with_relu.3} parent=51 // pred_check_branch
          %5991 = sbr.rel (%p5989) target = $region56
        $region55: #{up_affine_with_relu.3} parent=51 // pred_region
          %s5993 = ssub.s32 4096, 4096
          %5994 = vsyncadd %s5985, %s5993
          %s5995 = smul.addr %s22, 32
          %s5996 = smul.addr %s5995, 128
          %s5997 = scalar_lea.hbm %s8, %s5996
          %s5998 = sshll.u32 %s5988, 4
          %s5999 = int_to_ptr.vmem [resolvable:$true] %s5998
          %6004 = dma.vmem_to_hbm [thread:$0]  %s5999, 4096, %s5997, %s5985, 128, 128, 8
        $region56: #{up_affine_with_relu.3} parent=51 // pred_fallthru
          _
      $region52: #{up_affine_with_relu.3} parent=5 // pred_fallthru
        _
      %p6005 = scmp.le.s32.totalorder 2, %s17
      // Predicated region
      $region57: #{up_affine_with_relu.3} parent=5 // pred_check
        %p6006 = pneg %p6005
      $region58: #{up_affine_with_relu.3} parent=5 // pred_check_branch
        %6008 = sbr.rel (%p6006) target = $region60
      $region59: #{up_affine_with_relu.3} parent=5 // pred_region
        %s6009 = ssub.s32 %s17, 2
        // Predicated region
        $region61: #{up_affine_with_relu.3} parent=59 // pred_check
          %p6010 = pneg %p229
        $region62: #{up_affine_with_relu.3} parent=59 // pred_check_branch
          %6012 = sbr.rel (%p6010) target = $region64
        $region63: #{up_affine_with_relu.3} parent=59 // pred_region
          %s6013 = sand.u32 %s214, 1
          %s6014 = scalar_lea.sflag [#allocation6], %s6013
          %s6015 = sand.u32 %s214, 1
          %s6016 = smul.addr %s6015, 256
          %s6017 = scalar_lea.vmem [#allocation5], %s6016
          %6018 = dma.done %s6014, 4096
        $region64: #{up_affine_with_relu.3} parent=59 // pred_fallthru
          _
      $region60: #{up_affine_with_relu.3} parent=5 // pred_fallthru
        _
    $region6: #{up_affine_with_relu.3} parent=1 // loop_footer
      %s21 = sadd.s32 1, %s17
    $region7: #{up_affine_with_relu.3} parent=1 // loop_footer_branch
      %16 = sbr.rel target = $region3
    $region8: #{up_affine_with_relu.3} parent=1 // loop_exit
      _
    %6019 = vsyncpa [#allocation6], 1
    %s6020 = scalar_lea.sflag [#allocation6], 1
    %6021 = vsyncpa %s6020, 1

</llo_original>
